<compile_context>
chip_gen: v7x
topology: tpu7x:2x2x1
jax: 0.10.0
libtpu: 0.0.40
codegen_flags: <defaults>
</compile_context>

<pallas_src>
import functools

import numpy as np
import jax
import jax.numpy as jnp
from jax.experimental import pallas as pl
from jax.experimental.pallas import tpu as pltpu

EPS = 1e-8


# --------------------------------------------------------------------------- constant
# index-shuffle patterns for the per-row 3-vector / 3x3 algebra (built once, host side)
def _build_patterns():
    uexp = np.zeros((3, 9), np.float32)    # u[k]        -> lane k*3+l
    tilel = np.zeros((3, 9), np.float32)   # a[l]        -> lane k*3+l
    expk9 = np.zeros((9, 27), np.float32)  # O[k*3+l]    -> lane k*9+l*3+m
    expm9 = np.zeros((9, 27), np.float32)  # V[k*3+m]    -> lane k*9+l*3+m
    tile9 = np.zeros((9, 27), np.float32)  # g[l*3+m]    -> lane k*9+l*3+m
    for k in range(3):
        for l in range(3):
            uexp[k, k * 3 + l] = 1.0
            tilel[l, k * 3 + l] = 1.0
            for m in range(3):
                expk9[k * 3 + l, k * 9 + l * 3 + m] = 1.0
                expm9[k * 3 + m, k * 9 + l * 3 + m] = 1.0
                tile9[l * 3 + m, k * 9 + l * 3 + m] = 1.0
    return uexp, tilel, expk9, expm9, tile9


_PATTERNS = _build_patterns()


# --------------------------------------------------------------------------- kernel
def _fwd_bwd_kernel(dr_ref, ori_ref, nori_ref, seg_ref,
                    pW1a_ref, pW1b_ref, pW1c_ref, pW2_ref,
                    eW1a_ref, eW1b_ref, eW1c_ref, eW2_ref,
                    vec_ref, uexp_ref, tilel_ref, expk9_ref, expm9_ref, tile9_ref,
                    out_ref, *, bfac):
    f32 = jnp.float32
    Hp = pW2_ref.shape[0]
    He = eW2_ref.shape[0]

    def mm(a, b):                               # a @ b
        return jnp.dot(a, b, preferred_element_type=f32)

    def mmt(a, b):                              # a @ b.T (contract last dims, no explicit transpose)
        return jax.lax.dot_general(a, b, (((1,), (1,)), ((), ())),
                                   preferred_element_type=f32)

    # packed small parameters (one consolidated operand)
    pb1 = vec_ref[0:1, 0:Hp]
    pb2 = vec_ref[1:2, 0:Hp]
    eb1 = vec_ref[2:3, 0:He]
    eb2 = vec_ref[3:4, 0:He]
    f1sq = vec_ref[4:5, 0:3]
    f2sq = vec_ref[5:6, 0:3]
    pW3r = vec_ref[6:7, 0:Hp]
    eW3r = vec_ref[7:8, 0:He]
    eW1r = vec_ref[8:9, 0:He]
    pb3 = vec_ref[9:10, 0:1]
    eb3 = vec_ref[10:11, 0:1]

    UEXP = uexp_ref[...]
    TILEL = tilel_ref[...]
    EXPK9 = expk9_ref[...]
    EXPM9 = expm9_ref[...]
    TILE9 = tile9_ref[...]

    # ---- per-row geometry (rows = TB*Nb) -------------------------------------
    d = dr_ref[...] + EPS                        # epsilon on components, exactly as in torch
    orir = ori_ref[...]                          # (M,9)  O[k,l] at k*3+l
    norif = nori_ref[...]                        # (M,9)  V[k,m] at k*3+m
    R = jnp.sqrt(jnp.sum(d * d, axis=1, keepdims=True))     # (M,1)
    invR = 1.0 / R
    u = d * invR                                 # (M,3)

    # rotation-invariant features
    UE = mm(u, UEXP)                             # (M,9)  u[k] at k*3+l
    f_p = mmt(UE * orir, TILEL)                  # (M,3)  sum_k u_k O[k,l]
    f_n = mmt(UE * norif, TILEL)                 # (M,3)  sum_k u_k V[k,m]
    OL = mm(orir, EXPK9)                         # (M,27) O[k,l] at k*9+l*3+m
    NM = mm(norif, EXPM9)                        # (M,27) V[k,m] at k*9+l*3+m
    f_pn = mmt(OL * NM, TILE9)                   # (M,9)  sum_k O[k,l] V[k,m]
    fp2 = f_p * f_p
    fn2 = f_n * f_n
    fpn2 = f_pn * f_pn                           # Ecin, kept split 3/3/9 (no concat)

    # ---- prior net: Linear-tanh-Linear-tanh-Linear, outer tanh, power prior ----
    a1 = jnp.tanh(mm(fp2, pW1a_ref[...]) + mm(fn2, pW1b_ref[...])
                  + mm(fpn2, pW1c_ref[...]) + pb1)
    a2 = jnp.tanh(mm(a1, pW2_ref[...]) + pb2)
    enc = jnp.tanh(jnp.sum(a2 * pW3r, axis=1, keepdims=True) + pb3)
    ecode = enc * enc + EPS
    base = R - ecode
    # ((f1^2+eps) * base) ** (-(f2^2+eps));  exp/log form == torch.pow for base > 0
    pv = jnp.exp(-f2sq * jnp.log(f1sq * base))   # (M,3)
    prior_row = jnp.sum(pv, axis=1, keepdims=True)

    # ---- energy net on [R, Ecin] ----------------------------------------------
    e1 = jnp.tanh(R * eW1r + mm(fp2, eW1a_ref[...]) + mm(fn2, eW1b_ref[...])
                  + mm(fpn2, eW1c_ref[...]) + eb1)
    e2 = jnp.tanh(mm(e1, eW2_ref[...]) + eb2)
    sym_row = jnp.sum(e2 * eW3r, axis=1, keepdims=True) + eb3

    # ---- analytic backward of  L = predicted_energy.sum()
    #      predicted_energy_b = sum(all sym rows) + prior_b  (global sym scalar, as in torch)
    #      => dL/d(sym_row) = B for every row, dL/d(pv) = 1.
    g_z2e = (bfac * eW3r) * (1.0 - e2 * e2)                      # (M,He)
    g_z1e = mmt(g_z2e, eW2_ref[...]) * (1.0 - e1 * e1)           # (M,He)
    gR_e = jnp.sum(g_z1e * eW1r, axis=1, keepdims=True)          # (M,1)

    g_base = -jnp.sum(pv * f2sq, axis=1, keepdims=True) / base   # (M,1)
    g_z3p = (-2.0 * enc * g_base) * (1.0 - enc * enc)            # (M,1)
    g_z2p = (g_z3p * pW3r) * (1.0 - a2 * a2)                     # (M,Hp)
    g_z1p = mmt(g_z2p, pW2_ref[...]) * (1.0 - a1 * a1)           # (M,Hp)

    g_fp = 2.0 * f_p * (mmt(g_z1p, pW1a_ref[...]) + mmt(g_z1e, eW1a_ref[...]))
    g_fn = 2.0 * f_n * (mmt(g_z1p, pW1b_ref[...]) + mmt(g_z1e, eW1b_ref[...]))
    g_fpn = 2.0 * f_pn * (mmt(g_z1p, pW1c_ref[...]) + mmt(g_z1e, eW1c_ref[...]))

    gR = gR_e + g_base
    GT = mm(g_fp, TILEL)                                         # (M,9) g_fp[l] at k*3+l
    gu = mmt(GT * orir, UEXP) + mmt(mm(g_fn, TILEL) * norif, UEXP)        # (M,3)
    gO_row = GT * UE + mmt(mm(g_fpn, TILE9) * NM, EXPK9)                  # (M,9) dL/dO[k,l]
    # d/d(dr):  u = d/R, R = |d|
    g_d = gR * u + (gu - jnp.sum(gu * u, axis=1, keepdims=True) * u) * invR   # (M,3)

    # ---- per-particle reductions over the Nb neighbours (one MXU pass each) ----
    seg = seg_ref[...]                                           # (TB, M) one-hot segments
    out_ref[:, 0:1] = mm(seg, prior_row)                         # prior sum per particle
    out_ref[:, 1:2] = mm(seg, sym_row)                           # sym sum per particle
    out_ref[:, 2:5] = mm(seg, g_d)                               # force  (+grad, torch convention)
    out_ref[:, 5:14] = mm(seg, gO_row)                           # dE_sum/dOrientation


# --------------------------------------------------------------------------- wrapper
def particle_energy_forward(dr, orientation, n_orientation, params, *, tile_b=16):
    """Forward of ParticleEnergyPredictor_New: returns (force, torque, energy)."""
    B, Nb, _ = dr.shape
    Hp = params['pW2'].shape[0]
    He = params['eW2'].shape[0]
    assert Hp <= 128 and He <= 128, "packed-vector operand assumes hidden dims <= 128"

    TB = max(8, int(tile_b))                 # particles per grid step (multiple of 8)
    Bp = ((B + TB - 1) // TB) * TB
    pad = Bp - B
    if pad:
        dr_p = jnp.concatenate([dr, jnp.broadcast_to(dr[:1], (pad, Nb, 3))], axis=0)
        ori_p = jnp.concatenate(
            [orientation, jnp.broadcast_to(orientation[:1], (pad, 3, 3))], axis=0)
        nori_p = jnp.concatenate(
            [n_orientation, jnp.broadcast_to(n_orientation[:1], (pad, Nb, 3, 3))], axis=0)
    else:
        dr_p, ori_p, nori_p = dr, orientation, n_orientation

    M = TB * Nb                              # neighbour rows per grid step
    NR = Bp * Nb
    dr_rows = dr_p.reshape(NR, 3).astype(jnp.float32)
    ori_rows = jnp.broadcast_to(ori_p[:, None], (Bp, Nb, 3, 3)).reshape(NR, 9).astype(jnp.float32)
    nori_rows = nori_p.reshape(NR, 9).astype(jnp.float32)

    # one-hot segment matrix: row b sums that particle's Nb neighbour rows
    seg = (jax.lax.broadcasted_iota(jnp.int32, (TB, M), 1) // Nb
           == jax.lax.broadcasted_iota(jnp.int32, (TB, M), 0)).astype(jnp.float32)

    # ---- parameter repacking (layout plumbing only) ----
    pW1, pW2, pW3 = params['pW1'], params['pW2'], params['pW3']
    eW1, eW2, eW3 = params['eW1'], params['eW2'], params['eW3']
    pW1a, pW1b, pW1c = pW1[0:3], pW1[3:6], pW1[6:15]          # Ecin split 3/3/9
    eW1r, eW1a, eW1b, eW1c = eW1[0:1], eW1[1:4], eW1[4:7], eW1[7:16]   # [R | Ecin]
    f1sq = params['f1'].reshape(3) ** 2 + EPS
    f2sq = params['f2'].reshape(3) ** 2 + EPS

    def _row(v):
        v = jnp.asarray(v, jnp.float32).reshape(-1)
        return jnp.pad(v, (0, 128 - v.shape[0]))

    vecs = jnp.stack([
        _row(params['pb1']), _row(params['pb2']),
        _row(params['eb1']), _row(params['eb2']),
        _row(f1sq), _row(f2sq),
        _row(pW3.reshape(-1)), _row(eW3.reshape(-1)), _row(eW1r.reshape(-1)),
        _row(params['pb3']), _row(params['eb3']),
    ])                                                           # (11, 128)

    uexp, tilel, expk9, expm9, tile9 = (jnp.asarray(x) for x in _PATTERNS)

    row_spec = lambda c: pl.BlockSpec((M, c), lambda i: (i, 0))
    full = lambda a: pl.BlockSpec(a.shape, lambda i, _n=a.ndim: (0,) * _n)

    kernel = functools.partial(_fwd_bwd_kernel, bfac=float(B))
    out = pl.pallas_call(
        kernel,
        out_shape=jax.ShapeDtypeStruct((Bp, 14), jnp.float32),
        grid=(Bp // TB,),
        in_specs=[
            row_spec(3), row_spec(9), row_spec(9), full(seg),
            full(pW1a), full(pW1b), full(pW1c), full(pW2),
            full(eW1a), full(eW1b), full(eW1c), full(eW2),
            full(vecs), full(uexp), full(tilel), full(expk9), full(expm9), full(tile9),
        ],
        out_specs=pl.BlockSpec((TB, 14), lambda i: (i, 0)),
        compiler_params=pltpu.CompilerParams(dimension_semantics=("parallel",)),
    )(dr_rows, ori_rows, nori_rows, seg,
      pW1a, pW1b, pW1c, pW2, eW1a, eW1b, eW1c, eW2,
      vecs, uexp, tilel, expk9, expm9, tile9)

    out = out[:B]
    prior_b = out[:, 0:1]
    energy = jnp.sum(out[:, 1]) + prior_b                        # (B,1): global sym + per-particle prior
    force = out[:, 2:5]                                          # +grad, as in the torch module
    G = out[:, 5:14].reshape(B, 3, 3)                            # dE_sum / dOrientation
    torque = (jnp.cross(G[:, :, 0], orientation[:, :, 0]) +
              jnp.cross(G[:, :, 1], orientation[:, :, 1]) +
              jnp.cross(G[:, :, 2], orientation[:, :, 2]))
    return force, torque, energy


# --------------------------------------------------------------- pure-JAX reference (checks only)
def energy_ref(dr, orientation, n_orientation, p):
    HI = jax.lax.Precision.HIGHEST
    B, Nb, _ = dr.shape
    d = dr + EPS
    R = jnp.sqrt(jnp.sum(d * d, axis=2, keepdims=True))
    u = d / R
    f_p = jnp.einsum('bnk,bkl->bnl', u, orientation, precision=HI)
    f_n = jnp.einsum('bnk,bnkm->bnm', u, n_orientation, precision=HI)
    f_pn = jnp.einsum('bkl,bnkm->bnlm', orientation, n_orientation,
                      precision=HI).reshape(B, Nb, 9)
    ecin = jnp.concatenate([f_p, f_n, f_pn], axis=-1) ** 2
    a1 = jnp.tanh(jnp.einsum('bni,ih->bnh', ecin, p['pW1'], precision=HI) + p['pb1'])
    a2 = jnp.tanh(jnp.einsum('bnh,hj->bnj', a1, p['pW2'], precision=HI) + p['pb2'])
    enc = jnp.tanh(jnp.einsum('bnh,ho->bno', a2, p['pW3'], precision=HI) + p['pb3'])
    base = R - (enc * enc + EPS)
    f1sq = p['f1'].reshape(1, 1, 3) ** 2 + EPS
    f2sq = p['f2'].reshape(1, 1, 3) ** 2 + EPS
    prior = jnp.sum((f1sq * base) ** (-f2sq), axis=(1, 2))[:, None]
    x = jnp.concatenate([R, ecin], axis=-1)
    e1 = jnp.tanh(jnp.einsum('bni,ih->bnh', x, p['eW1'], precision=HI) + p['eb1'])
    e2 = jnp.tanh(jnp.einsum('bnh,hj->bnj', e1, p['eW2'], precision=HI) + p['eb2'])
    sym = jnp.einsum('bnh,ho->bno', e2, p['eW3'], precision=HI) + p['eb3']
    return jnp.sum(sym) + prior                                  # (B, 1)


def ref_outputs(dr, orientation, n_orientation, p):
    energy = energy_ref(dr, orientation, n_orientation, p)
    g_dr, g_ori = jax.grad(
        lambda d_, o_: jnp.sum(energy_ref(d_, o_, n_orientation, p)),
        argnums=(0, 1))(dr, orientation)
    force = jnp.sum(g_dr, axis=1)
    torque = (jnp.cross(g_ori[:, :, 0], orientation[:, :, 0]) +
              jnp.cross(g_ori[:, :, 1], orientation[:, :, 1]) +
              jnp.cross(g_ori[:, :, 2], orientation[:, :, 2]))
    return force, torque, energy


# --------------------------------------------------------------------------- main
if __name__ == "__main__":
    key = jax.random.PRNGKey(0)
    B, Nb, Hp, He = 64, 8, 32, 64          # 512 neighbour rows, 4 grid steps of 128 rows
    ks = jax.random.split(key, 20)

    # dr components in [0.9, 2.5] => R > 1 > ecode, so the power-law prior stays finite
    dr = jax.random.uniform(ks[0], (B, Nb, 3), jnp.float32, 0.9, 2.5)

    def unit_columns(k, shape):
        m = jax.random.normal(k, shape, jnp.float32)
        return m / jnp.linalg.norm(m, axis=-2, keepdims=True)

    orientation = unit_columns(ks[1], (B, 3, 3))
    n_orientation = unit_columns(ks[2], (B, Nb, 3, 3))

    def lin(kw, kb, fan_in, shape_w, shape_b):   # default torch.nn.Linear init
        lim = 1.0 / np.sqrt(fan_in)
        return (jax.random.uniform(kw, shape_w, jnp.float32, -lim, lim),
                jax.random.uniform(kb, shape_b, jnp.float32, -lim, lim))

    pW1, pb1 = lin(ks[3], ks[4], 15, (15, Hp), (Hp,))
    pW2, pb2 = lin(ks[5], ks[6], Hp, (Hp, Hp), (Hp,))
    pW3, pb3 = lin(ks[7], ks[8], Hp, (Hp, 1), (1,))
    eW1, eb1 = lin(ks[9], ks[10], 16, (16, He), (He,))
    eW2, eb2 = lin(ks[11], ks[12], He, (He, He), (He,))
    eW3, eb3 = lin(ks[13], ks[14], He, (He, 1), (1,))
    params = dict(pW1=pW1, pb1=pb1, pW2=pW2, pb2=pb2, pW3=pW3, pb3=pb3,
                  eW1=eW1, eb1=eb1, eW2=eW2, eb2=eb2, eW3=eW3, eb3=eb3,
                  f1=jax.random.uniform(ks[15], (3, 1), jnp.float32),   # torch.rand
                  f2=jax.random.uniform(ks[16], (3, 1), jnp.float32))

    fwd = jax.jit(particle_energy_forward)
    force, torque, energy = fwd(dr, orientation, n_orientation, params)
    jax.block_until_ready((force, torque, energy))

    f_ref, t_ref, e_ref = ref_outputs(dr, orientation, n_orientation, params)
    assert energy.shape == (B, 1) and force.shape == (B, 3) and torque.shape == (B, 3)
    assert bool(jnp.allclose(energy, e_ref, rtol=1e-3, atol=1e-3)), (energy[:2], e_ref[:2])
    assert bool(jnp.allclose(force, f_ref, rtol=3e-3, atol=3e-3)), (force[:2], f_ref[:2])
    assert bool(jnp.allclose(torque, t_ref, rtol=3e-3, atol=3e-3)), (torque[:2], t_ref[:2])
    print("KERNEL_OK")
</pallas_src>

<mosaic_0001>
module attributes {stable_mosaic.version = 11 : i64} {
  func.func @_fwd_bwd_kernel(%arg0: i32, %arg1: memref<128x3xf32, #tpu.memory_space<vmem>>, %arg2: memref<128x9xf32, #tpu.memory_space<vmem>>, %arg3: memref<128x9xf32, #tpu.memory_space<vmem>>, %arg4: memref<16x128xf32, #tpu.memory_space<vmem>>, %arg5: memref<3x32xf32, #tpu.memory_space<vmem>>, %arg6: memref<3x32xf32, #tpu.memory_space<vmem>>, %arg7: memref<9x32xf32, #tpu.memory_space<vmem>>, %arg8: memref<32x32xf32, #tpu.memory_space<vmem>>, %arg9: memref<3x64xf32, #tpu.memory_space<vmem>>, %arg10: memref<3x64xf32, #tpu.memory_space<vmem>>, %arg11: memref<9x64xf32, #tpu.memory_space<vmem>>, %arg12: memref<64x64xf32, #tpu.memory_space<vmem>>, %arg13: memref<11x128xf32, #tpu.memory_space<vmem>>, %arg14: memref<3x9xf32, #tpu.memory_space<vmem>>, %arg15: memref<3x9xf32, #tpu.memory_space<vmem>>, %arg16: memref<9x27xf32, #tpu.memory_space<vmem>>, %arg17: memref<9x27xf32, #tpu.memory_space<vmem>>, %arg18: memref<9x27xf32, #tpu.memory_space<vmem>>, %arg19: memref<16x14xf32, #tpu.memory_space<vmem>>) attributes {dimension_semantics = [#tpu.dimension_semantics<parallel>], iteration_bounds = array<i64: 4>, scalar_prefetch = 0 : i64, scratch_operands = 0 : i64, tpu.core_type = #tpu.core_type<tc>, window_params = [{transform_indices = @transform_0, window_bounds = array<i64: 128, 3>}, {transform_indices = @transform_1, window_bounds = array<i64: 128, 9>}, {transform_indices = @transform_2, window_bounds = array<i64: 128, 9>}, {pipeline_mode = #tpu.pipeline_mode<synchronous>, transform_indices = @transform_3, window_bounds = array<i64: 16, 128>}, {pipeline_mode = #tpu.pipeline_mode<synchronous>, transform_indices = @transform_4, window_bounds = array<i64: 3, 32>}, {pipeline_mode = #tpu.pipeline_mode<synchronous>, transform_indices = @transform_5, window_bounds = array<i64: 3, 32>}, {pipeline_mode = #tpu.pipeline_mode<synchronous>, transform_indices = @transform_6, window_bounds = array<i64: 9, 32>}, {pipeline_mode = #tpu.pipeline_mode<synchronous>, transform_indices = @transform_7, window_bounds = array<i64: 32, 32>}, {pipeline_mode = #tpu.pipeline_mode<synchronous>, transform_indices = @transform_8, window_bounds = array<i64: 3, 64>}, {pipeline_mode = #tpu.pipeline_mode<synchronous>, transform_indices = @transform_9, window_bounds = array<i64: 3, 64>}, {pipeline_mode = #tpu.pipeline_mode<synchronous>, transform_indices = @transform_10, window_bounds = array<i64: 9, 64>}, {pipeline_mode = #tpu.pipeline_mode<synchronous>, transform_indices = @transform_11, window_bounds = array<i64: 64, 64>}, {pipeline_mode = #tpu.pipeline_mode<synchronous>, transform_indices = @transform_12, window_bounds = array<i64: 11, 128>}, {pipeline_mode = #tpu.pipeline_mode<synchronous>, transform_indices = @transform_13, window_bounds = array<i64: 3, 9>}, {pipeline_mode = #tpu.pipeline_mode<synchronous>, transform_indices = @transform_14, window_bounds = array<i64: 3, 9>}, {pipeline_mode = #tpu.pipeline_mode<synchronous>, transform_indices = @transform_15, window_bounds = array<i64: 9, 27>}, {pipeline_mode = #tpu.pipeline_mode<synchronous>, transform_indices = @transform_16, window_bounds = array<i64: 9, 27>}, {pipeline_mode = #tpu.pipeline_mode<synchronous>, transform_indices = @transform_17, window_bounds = array<i64: 9, 27>}, {transform_indices = @transform_18, window_bounds = array<i64: 16, 14>}]} {
    %c0 = arith.constant 0 : index
    %c0_0 = arith.constant 0 : index
    %0 = vector.load %arg13[%c0, %c0_0] : memref<11x128xf32, #tpu.memory_space<vmem>>, vector<1x32xf32>
    %c1 = arith.constant 1 : index
    %c0_1 = arith.constant 0 : index
    %1 = vector.load %arg13[%c1, %c0_1] : memref<11x128xf32, #tpu.memory_space<vmem>>, vector<1x32xf32>
    %c2 = arith.constant 2 : index
    %c0_2 = arith.constant 0 : index
    %2 = vector.load %arg13[%c2, %c0_2] : memref<11x128xf32, #tpu.memory_space<vmem>>, vector<1x64xf32>
    %c3 = arith.constant 3 : index
    %c0_3 = arith.constant 0 : index
    %3 = vector.load %arg13[%c3, %c0_3] : memref<11x128xf32, #tpu.memory_space<vmem>>, vector<1x64xf32>
    %c4 = arith.constant 4 : index
    %c0_4 = arith.constant 0 : index
    %4 = vector.load %arg13[%c4, %c0_4] : memref<11x128xf32, #tpu.memory_space<vmem>>, vector<1x3xf32>
    %c5 = arith.constant 5 : index
    %c0_5 = arith.constant 0 : index
    %5 = vector.load %arg13[%c5, %c0_5] : memref<11x128xf32, #tpu.memory_space<vmem>>, vector<1x3xf32>
    %c6 = arith.constant 6 : index
    %c0_6 = arith.constant 0 : index
    %6 = vector.load %arg13[%c6, %c0_6] : memref<11x128xf32, #tpu.memory_space<vmem>>, vector<1x32xf32>
    %c7 = arith.constant 7 : index
    %c0_7 = arith.constant 0 : index
    %7 = vector.load %arg13[%c7, %c0_7] : memref<11x128xf32, #tpu.memory_space<vmem>>, vector<1x64xf32>
    %c8 = arith.constant 8 : index
    %c0_8 = arith.constant 0 : index
    %8 = vector.load %arg13[%c8, %c0_8] : memref<11x128xf32, #tpu.memory_space<vmem>>, vector<1x64xf32>
    %c9 = arith.constant 9 : index
    %c0_9 = arith.constant 0 : index
    %9 = vector.load %arg13[%c9, %c0_9] : memref<11x128xf32, #tpu.memory_space<vmem>>, vector<1x1xf32>
    %c10 = arith.constant 10 : index
    %c0_10 = arith.constant 0 : index
    %10 = vector.load %arg13[%c10, %c0_10] : memref<11x128xf32, #tpu.memory_space<vmem>>, vector<1x1xf32>
    %c0_11 = arith.constant 0 : index
    %c0_12 = arith.constant 0 : index
    %11 = vector.load %arg14[%c0_11, %c0_12] : memref<3x9xf32, #tpu.memory_space<vmem>>, vector<3x9xf32>
    %c0_13 = arith.constant 0 : index
    %c0_14 = arith.constant 0 : index
    %12 = vector.load %arg15[%c0_13, %c0_14] : memref<3x9xf32, #tpu.memory_space<vmem>>, vector<3x9xf32>
    %c0_15 = arith.constant 0 : index
    %c0_16 = arith.constant 0 : index
    %13 = vector.load %arg16[%c0_15, %c0_16] : memref<9x27xf32, #tpu.memory_space<vmem>>, vector<9x27xf32>
    %c0_17 = arith.constant 0 : index
    %c0_18 = arith.constant 0 : index
    %14 = vector.load %arg17[%c0_17, %c0_18] : memref<9x27xf32, #tpu.memory_space<vmem>>, vector<9x27xf32>
    %c0_19 = arith.constant 0 : index
    %c0_20 = arith.constant 0 : index
    %15 = vector.load %arg18[%c0_19, %c0_20] : memref<9x27xf32, #tpu.memory_space<vmem>>, vector<9x27xf32>
    %c0_21 = arith.constant 0 : index
    %c0_22 = arith.constant 0 : index
    %16 = vector.load %arg1[%c0_21, %c0_22] : memref<128x3xf32, #tpu.memory_space<vmem>>, vector<128x3xf32>
    %cst = arith.constant 9.99999993E-9 : f32
    %17 = vector.broadcast %cst : f32 to vector<128x3xf32>
    %18 = arith.addf %16, %17 : vector<128x3xf32>
    %c0_23 = arith.constant 0 : index
    %c0_24 = arith.constant 0 : index
    %19 = vector.load %arg2[%c0_23, %c0_24] : memref<128x9xf32, #tpu.memory_space<vmem>>, vector<128x9xf32>
    %c0_25 = arith.constant 0 : index
    %c0_26 = arith.constant 0 : index
    %20 = vector.load %arg3[%c0_25, %c0_26] : memref<128x9xf32, #tpu.memory_space<vmem>>, vector<128x9xf32>
    %21 = arith.mulf %18, %18 : vector<128x3xf32>
    %cst_27 = arith.constant dense<0.000000e+00> : vector<128xf32>
    %22 = vector.multi_reduction <add>, %21, %cst_27 [1] : vector<128x3xf32> to vector<128xf32>
    %23 = vector.shape_cast %22 : vector<128xf32> to vector<128x1xf32>
    %24 = math.sqrt %23 : vector<128x1xf32>
    %cst_28 = arith.constant 1.000000e+00 : f32
    %25 = vector.broadcast %cst_28 : f32 to vector<128x1xf32>
    %26 = arith.divf %25, %24 : vector<128x1xf32>
    %27 = vector.broadcast %26 : vector<128x1xf32> to vector<128x3xf32>
    %28 = arith.mulf %18, %27 : vector<128x3xf32>
    %cst_29 = arith.constant dense<0.000000e+00> : vector<128x9xf32>
    %29 = tpu.matmul %28, %11, %cst_29 {dimension_numbers = #tpu.dot_dimension_numbers<[1], [0], [0], [1], [0, 0, 1, 1], [], []>} : vector<128x3xf32>, vector<3x9xf32>, vector<128x9xf32> -> vector<128x9xf32>
    %30 = arith.mulf %29, %19 : vector<128x9xf32>
    %cst_30 = arith.constant dense<0.000000e+00> : vector<128x3xf32>
    %31 = tpu.matmul %30, %12, %cst_30 {dimension_numbers = #tpu.dot_dimension_numbers<[1], [1], [0], [0], [0, 0, 1, 0], [], []>} : vector<128x9xf32>, vector<3x9xf32>, vector<128x3xf32> -> vector<128x3xf32>
    %32 = arith.mulf %29, %20 : vector<128x9xf32>
    %cst_31 = arith.constant dense<0.000000e+00> : vector<128x3xf32>
    %33 = tpu.matmul %32, %12, %cst_31 {dimension_numbers = #tpu.dot_dimension_numbers<[1], [1], [0], [0], [0, 0, 1, 0], [], []>} : vector<128x9xf32>, vector<3x9xf32>, vector<128x3xf32> -> vector<128x3xf32>
    %cst_32 = arith.constant dense<0.000000e+00> : vector<128x27xf32>
    %34 = tpu.matmul %19, %13, %cst_32 {dimension_numbers = #tpu.dot_dimension_numbers<[1], [0], [0], [1], [0, 0, 1, 1], [], []>} : vector<128x9xf32>, vector<9x27xf32>, vector<128x27xf32> -> vector<128x27xf32>
    %cst_33 = arith.constant dense<0.000000e+00> : vector<128x27xf32>
    %35 = tpu.matmul %20, %14, %cst_33 {dimension_numbers = #tpu.dot_dimension_numbers<[1], [0], [0], [1], [0, 0, 1, 1], [], []>} : vector<128x9xf32>, vector<9x27xf32>, vector<128x27xf32> -> vector<128x27xf32>
    %36 = arith.mulf %34, %35 : vector<128x27xf32>
    %cst_34 = arith.constant dense<0.000000e+00> : vector<128x9xf32>
    %37 = tpu.matmul %36, %15, %cst_34 {dimension_numbers = #tpu.dot_dimension_numbers<[1], [1], [0], [0], [0, 0, 1, 0], [], []>} : vector<128x27xf32>, vector<9x27xf32>, vector<128x9xf32> -> vector<128x9xf32>
    %38 = arith.mulf %31, %31 : vector<128x3xf32>
    %39 = arith.mulf %33, %33 : vector<128x3xf32>
    %40 = arith.mulf %37, %37 : vector<128x9xf32>
    %c0_35 = arith.constant 0 : index
    %c0_36 = arith.constant 0 : index
    %41 = vector.load %arg5[%c0_35, %c0_36] : memref<3x32xf32, #tpu.memory_space<vmem>>, vector<3x32xf32>
    %cst_37 = arith.constant dense<0.000000e+00> : vector<128x32xf32>
    %42 = tpu.matmul %38, %41, %cst_37 {dimension_numbers = #tpu.dot_dimension_numbers<[1], [0], [0], [1], [0, 0, 1, 1], [], []>} : vector<128x3xf32>, vector<3x32xf32>, vector<128x32xf32> -> vector<128x32xf32>
    %c0_38 = arith.constant 0 : index
    %c0_39 = arith.constant 0 : index
    %43 = vector.load %arg6[%c0_38, %c0_39] : memref<3x32xf32, #tpu.memory_space<vmem>>, vector<3x32xf32>
    %cst_40 = arith.constant dense<0.000000e+00> : vector<128x32xf32>
    %44 = tpu.matmul %39, %43, %cst_40 {dimension_numbers = #tpu.dot_dimension_numbers<[1], [0], [0], [1], [0, 0, 1, 1], [], []>} : vector<128x3xf32>, vector<3x32xf32>, vector<128x32xf32> -> vector<128x32xf32>
    %45 = arith.addf %42, %44 : vector<128x32xf32>
    %c0_41 = arith.constant 0 : index
    %c0_42 = arith.constant 0 : index
    %46 = vector.load %arg7[%c0_41, %c0_42] : memref<9x32xf32, #tpu.memory_space<vmem>>, vector<9x32xf32>
    %cst_43 = arith.constant dense<0.000000e+00> : vector<128x32xf32>
    %47 = tpu.matmul %40, %46, %cst_43 {dimension_numbers = #tpu.dot_dimension_numbers<[1], [0], [0], [1], [0, 0, 1, 1], [], []>} : vector<128x9xf32>, vector<9x32xf32>, vector<128x32xf32> -> vector<128x32xf32>
    %48 = arith.addf %45, %47 : vector<128x32xf32>
    %49 = vector.broadcast %0 : vector<1x32xf32> to vector<128x32xf32>
    %50 = arith.addf %48, %49 : vector<128x32xf32>
    %51 = math.tanh %50 : vector<128x32xf32>
    %c0_44 = arith.constant 0 : index
    %c0_45 = arith.constant 0 : index
    %52 = vector.load %arg8[%c0_44, %c0_45] : memref<32x32xf32, #tpu.memory_space<vmem>>, vector<32x32xf32>
    %cst_46 = arith.constant dense<0.000000e+00> : vector<128x32xf32>
    %53 = tpu.matmul %51, %52, %cst_46 {dimension_numbers = #tpu.dot_dimension_numbers<[1], [0], [0], [1], [0, 0, 1, 1], [], []>} : vector<128x32xf32>, vector<32x32xf32>, vector<128x32xf32> -> vector<128x32xf32>
    %54 = vector.broadcast %1 : vector<1x32xf32> to vector<128x32xf32>
    %55 = arith.addf %53, %54 : vector<128x32xf32>
    %56 = math.tanh %55 : vector<128x32xf32>
    %57 = vector.broadcast %6 : vector<1x32xf32> to vector<128x32xf32>
    %58 = arith.mulf %56, %57 : vector<128x32xf32>
    %cst_47 = arith.constant dense<0.000000e+00> : vector<128xf32>
    %59 = vector.multi_reduction <add>, %58, %cst_47 [1] : vector<128x32xf32> to vector<128xf32>
    %60 = vector.shape_cast %59 : vector<128xf32> to vector<128x1xf32>
    %61 = vector.broadcast %9 : vector<1x1xf32> to vector<128x1xf32>
    %62 = arith.addf %60, %61 : vector<128x1xf32>
    %63 = math.tanh %62 : vector<128x1xf32>
    %64 = arith.mulf %63, %63 : vector<128x1xf32>
    %cst_48 = arith.constant 9.99999993E-9 : f32
    %65 = vector.broadcast %cst_48 : f32 to vector<128x1xf32>
    %66 = arith.addf %64, %65 : vector<128x1xf32>
    %67 = arith.subf %24, %66 : vector<128x1xf32>
    %cst_49 = arith.constant 0.000000e+00 : f32
    %68 = vector.broadcast %cst_49 : f32 to vector<1x3xf32>
    %69 = arith.subf %68, %5 : vector<1x3xf32>
    %70 = vector.broadcast %4 : vector<1x3xf32> to vector<128x3xf32>
    %71 = vector.broadcast %67 : vector<128x1xf32> to vector<128x3xf32>
    %72 = arith.mulf %70, %71 : vector<128x3xf32>
    %73 = math.log %72 : vector<128x3xf32>
    %74 = vector.broadcast %69 : vector<1x3xf32> to vector<128x3xf32>
    %75 = arith.mulf %74, %73 : vector<128x3xf32>
    %76 = math.exp %75 : vector<128x3xf32>
    %cst_50 = arith.constant dense<0.000000e+00> : vector<128xf32>
    %77 = vector.multi_reduction <add>, %76, %cst_50 [1] : vector<128x3xf32> to vector<128xf32>
    %78 = vector.shape_cast %77 : vector<128xf32> to vector<128x1xf32>
    %79 = vector.broadcast %24 : vector<128x1xf32> to vector<128x64xf32>
    %80 = vector.broadcast %8 : vector<1x64xf32> to vector<128x64xf32>
    %81 = arith.mulf %79, %80 : vector<128x64xf32>
    %c0_51 = arith.constant 0 : index
    %c0_52 = arith.constant 0 : index
    %82 = vector.load %arg9[%c0_51, %c0_52] : memref<3x64xf32, #tpu.memory_space<vmem>>, vector<3x64xf32>
    %cst_53 = arith.constant dense<0.000000e+00> : vector<128x64xf32>
    %83 = tpu.matmul %38, %82, %cst_53 {dimension_numbers = #tpu.dot_dimension_numbers<[1], [0], [0], [1], [0, 0, 1, 1], [], []>} : vector<128x3xf32>, vector<3x64xf32>, vector<128x64xf32> -> vector<128x64xf32>
    %84 = arith.addf %81, %83 : vector<128x64xf32>
    %c0_54 = arith.constant 0 : index
    %c0_55 = arith.constant 0 : index
    %85 = vector.load %arg10[%c0_54, %c0_55] : memref<3x64xf32, #tpu.memory_space<vmem>>, vector<3x64xf32>
    %cst_56 = arith.constant dense<0.000000e+00> : vector<128x64xf32>
    %86 = tpu.matmul %39, %85, %cst_56 {dimension_numbers = #tpu.dot_dimension_numbers<[1], [0], [0], [1], [0, 0, 1, 1], [], []>} : vector<128x3xf32>, vector<3x64xf32>, vector<128x64xf32> -> vector<128x64xf32>
    %87 = arith.addf %84, %86 : vector<128x64xf32>
    %c0_57 = arith.constant 0 : index
    %c0_58 = arith.constant 0 : index
    %88 = vector.load %arg11[%c0_57, %c0_58] : memref<9x64xf32, #tpu.memory_space<vmem>>, vector<9x64xf32>
    %cst_59 = arith.constant dense<0.000000e+00> : vector<128x64xf32>
    %89 = tpu.matmul %40, %88, %cst_59 {dimension_numbers = #tpu.dot_dimension_numbers<[1], [0], [0], [1], [0, 0, 1, 1], [], []>} : vector<128x9xf32>, vector<9x64xf32>, vector<128x64xf32> -> vector<128x64xf32>
    %90 = arith.addf %87, %89 : vector<128x64xf32>
    %91 = vector.broadcast %2 : vector<1x64xf32> to vector<128x64xf32>
    %92 = arith.addf %90, %91 : vector<128x64xf32>
    %93 = math.tanh %92 : vector<128x64xf32>
    %c0_60 = arith.constant 0 : index
    %c0_61 = arith.constant 0 : index
    %94 = vector.load %arg12[%c0_60, %c0_61] : memref<64x64xf32, #tpu.memory_space<vmem>>, vector<64x64xf32>
    %cst_62 = arith.constant dense<0.000000e+00> : vector<128x64xf32>
    %95 = tpu.matmul %93, %94, %cst_62 {dimension_numbers = #tpu.dot_dimension_numbers<[1], [0], [0], [1], [0, 0, 1, 1], [], []>} : vector<128x64xf32>, vector<64x64xf32>, vector<128x64xf32> -> vector<128x64xf32>
    %96 = vector.broadcast %3 : vector<1x64xf32> to vector<128x64xf32>
    %97 = arith.addf %95, %96 : vector<128x64xf32>
    %98 = math.tanh %97 : vector<128x64xf32>
    %99 = vector.broadcast %7 : vector<1x64xf32> to vector<128x64xf32>
    %100 = arith.mulf %98, %99 : vector<128x64xf32>
    %cst_63 = arith.constant dense<0.000000e+00> : vector<128xf32>
    %101 = vector.multi_reduction <add>, %100, %cst_63 [1] : vector<128x64xf32> to vector<128xf32>
    %102 = vector.shape_cast %101 : vector<128xf32> to vector<128x1xf32>
    %103 = vector.broadcast %10 : vector<1x1xf32> to vector<128x1xf32>
    %104 = arith.addf %102, %103 : vector<128x1xf32>
    %cst_64 = arith.constant 6.400000e+01 : f32
    %105 = vector.broadcast %cst_64 : f32 to vector<1x64xf32>
    %106 = arith.mulf %105, %7 : vector<1x64xf32>
    %107 = arith.mulf %98, %98 : vector<128x64xf32>
    %cst_65 = arith.constant 1.000000e+00 : f32
    %108 = vector.broadcast %cst_65 : f32 to vector<128x64xf32>
    %109 = arith.subf %108, %107 : vector<128x64xf32>
    %110 = vector.broadcast %106 : vector<1x64xf32> to vector<128x64xf32>
    %111 = arith.mulf %110, %109 : vector<128x64xf32>
    %c0_66 = arith.constant 0 : index
    %c0_67 = arith.constant 0 : index
    %112 = vector.load %arg12[%c0_66, %c0_67] : memref<64x64xf32, #tpu.memory_space<vmem>>, vector<64x64xf32>
    %cst_68 = arith.constant dense<0.000000e+00> : vector<128x64xf32>
    %113 = tpu.matmul %111, %112, %cst_68 {dimension_numbers = #tpu.dot_dimension_numbers<[1], [1], [0], [0], [0, 0, 1, 0], [], []>} : vector<128x64xf32>, vector<64x64xf32>, vector<128x64xf32> -> vector<128x64xf32>
    %114 = arith.mulf %93, %93 : vector<128x64xf32>
    %cst_69 = arith.constant 1.000000e+00 : f32
    %115 = vector.broadcast %cst_69 : f32 to vector<128x64xf32>
    %116 = arith.subf %115, %114 : vector<128x64xf32>
    %117 = arith.mulf %113, %116 : vector<128x64xf32>
    %118 = vector.broadcast %8 : vector<1x64xf32> to vector<128x64xf32>
    %119 = arith.mulf %117, %118 : vector<128x64xf32>
    %cst_70 = arith.constant dense<0.000000e+00> : vector<128xf32>
    %120 = vector.multi_reduction <add>, %119, %cst_70 [1] : vector<128x64xf32> to vector<128xf32>
    %121 = vector.shape_cast %120 : vector<128xf32> to vector<128x1xf32>
    %122 = vector.broadcast %5 : vector<1x3xf32> to vector<128x3xf32>
    %123 = arith.mulf %76, %122 : vector<128x3xf32>
    %cst_71 = arith.constant dense<0.000000e+00> : vector<128xf32>
    %124 = vector.multi_reduction <add>, %123, %cst_71 [1] : vector<128x3xf32> to vector<128xf32>
    %125 = vector.shape_cast %124 : vector<128xf32> to vector<128x1xf32>
    %cst_72 = arith.constant 0.000000e+00 : f32
    %126 = vector.broadcast %cst_72 : f32 to vector<128x1xf32>
    %127 = arith.subf %126, %125 : vector<128x1xf32>
    %128 = arith.divf %127, %67 : vector<128x1xf32>
    %cst_73 = arith.constant -2.000000e+00 : f32
    %129 = vector.broadcast %cst_73 : f32 to vector<128x1xf32>
    %130 = arith.mulf %129, %63 : vector<128x1xf32>
    %131 = arith.mulf %130, %128 : vector<128x1xf32>
    %132 = arith.mulf %63, %63 : vector<128x1xf32>
    %cst_74 = arith.constant 1.000000e+00 : f32
    %133 = vector.broadcast %cst_74 : f32 to vector<128x1xf32>
    %134 = arith.subf %133, %132 : vector<128x1xf32>
    %135 = arith.mulf %131, %134 : vector<128x1xf32>
    %136 = vector.broadcast %135 : vector<128x1xf32> to vector<128x32xf32>
    %137 = vector.broadcast %6 : vector<1x32xf32> to vector<128x32xf32>
    %138 = arith.mulf %136, %137 : vector<128x32xf32>
    %139 = arith.mulf %56, %56 : vector<128x32xf32>
    %cst_75 = arith.constant 1.000000e+00 : f32
    %140 = vector.broadcast %cst_75 : f32 to vector<128x32xf32>
    %141 = arith.subf %140, %139 : vector<128x32xf32>
    %142 = arith.mulf %138, %141 : vector<128x32xf32>
    %c0_76 = arith.constant 0 : index
    %c0_77 = arith.constant 0 : index
    %143 = vector.load %arg8[%c0_76, %c0_77] : memref<32x32xf32, #tpu.memory_space<vmem>>, vector<32x32xf32>
    %cst_78 = arith.constant dense<0.000000e+00> : vector<128x32xf32>
    %144 = tpu.matmul %142, %143, %cst_78 {dimension_numbers = #tpu.dot_dimension_numbers<[1], [1], [0], [0], [0, 0, 1, 0], [], []>} : vector<128x32xf32>, vector<32x32xf32>, vector<128x32xf32> -> vector<128x32xf32>
    %145 = arith.mulf %51, %51 : vector<128x32xf32>
    %cst_79 = arith.constant 1.000000e+00 : f32
    %146 = vector.broadcast %cst_79 : f32 to vector<128x32xf32>
    %147 = arith.subf %146, %145 : vector<128x32xf32>
    %148 = arith.mulf %144, %147 : vector<128x32xf32>
    %cst_80 = arith.constant 2.000000e+00 : f32
    %149 = vector.broadcast %cst_80 : f32 to vector<128x3xf32>
    %150 = arith.mulf %149, %31 : vector<128x3xf32>
    %c0_81 = arith.constant 0 : index
    %c0_82 = arith.constant 0 : index
    %151 = vector.load %arg5[%c0_81, %c0_82] : memref<3x32xf32, #tpu.memory_space<vmem>>, vector<3x32xf32>
    %cst_83 = arith.constant dense<0.000000e+00> : vector<128x3xf32>
    %152 = tpu.matmul %148, %151, %cst_83 {dimension_numbers = #tpu.dot_dimension_numbers<[1], [1], [0], [0], [0, 0, 1, 0], [], []>} : vector<128x32xf32>, vector<3x32xf32>, vector<128x3xf32> -> vector<128x3xf32>
    %c0_84 = arith.constant 0 : index
    %c0_85 = arith.constant 0 : index
    %153 = vector.load %arg9[%c0_84, %c0_85] : memref<3x64xf32, #tpu.memory_space<vmem>>, vector<3x64xf32>
    %cst_86 = arith.constant dense<0.000000e+00> : vector<128x3xf32>
    %154 = tpu.matmul %117, %153, %cst_86 {dimension_numbers = #tpu.dot_dimension_numbers<[1], [1], [0], [0], [0, 0, 1, 0], [], []>} : vector<128x64xf32>, vector<3x64xf32>, vector<128x3xf32> -> vector<128x3xf32>
    %155 = arith.addf %152, %154 : vector<128x3xf32>
    %156 = arith.mulf %150, %155 : vector<128x3xf32>
    %cst_87 = arith.constant 2.000000e+00 : f32
    %157 = vector.broadcast %cst_87 : f32 to vector<128x3xf32>
    %158 = arith.mulf %157, %33 : vector<128x3xf32>
    %c0_88 = arith.constant 0 : index
    %c0_89 = arith.constant 0 : index
    %159 = vector.load %arg6[%c0_88, %c0_89] : memref<3x32xf32, #tpu.memory_space<vmem>>, vector<3x32xf32>
    %cst_90 = arith.constant dense<0.000000e+00> : vector<128x3xf32>
    %160 = tpu.matmul %148, %159, %cst_90 {dimension_numbers = #tpu.dot_dimension_numbers<[1], [1], [0], [0], [0, 0, 1, 0], [], []>} : vector<128x32xf32>, vector<3x32xf32>, vector<128x3xf32> -> vector<128x3xf32>
    %c0_91 = arith.constant 0 : index
    %c0_92 = arith.constant 0 : index
    %161 = vector.load %arg10[%c0_91, %c0_92] : memref<3x64xf32, #tpu.memory_space<vmem>>, vector<3x64xf32>
    %cst_93 = arith.constant dense<0.000000e+00> : vector<128x3xf32>
    %162 = tpu.matmul %117, %161, %cst_93 {dimension_numbers = #tpu.dot_dimension_numbers<[1], [1], [0], [0], [0, 0, 1, 0], [], []>} : vector<128x64xf32>, vector<3x64xf32>, vector<128x3xf32> -> vector<128x3xf32>
    %163 = arith.addf %160, %162 : vector<128x3xf32>
    %164 = arith.mulf %158, %163 : vector<128x3xf32>
    %cst_94 = arith.constant 2.000000e+00 : f32
    %165 = vector.broadcast %cst_94 : f32 to vector<128x9xf32>
    %166 = arith.mulf %165, %37 : vector<128x9xf32>
    %c0_95 = arith.constant 0 : index
    %c0_96 = arith.constant 0 : index
    %167 = vector.load %arg7[%c0_95, %c0_96] : memref<9x32xf32, #tpu.memory_space<vmem>>, vector<9x32xf32>
    %cst_97 = arith.constant dense<0.000000e+00> : vector<128x9xf32>
    %168 = tpu.matmul %148, %167, %cst_97 {dimension_numbers = #tpu.dot_dimension_numbers<[1], [1], [0], [0], [0, 0, 1, 0], [], []>} : vector<128x32xf32>, vector<9x32xf32>, vector<128x9xf32> -> vector<128x9xf32>
    %c0_98 = arith.constant 0 : index
    %c0_99 = arith.constant 0 : index
    %169 = vector.load %arg11[%c0_98, %c0_99] : memref<9x64xf32, #tpu.memory_space<vmem>>, vector<9x64xf32>
    %cst_100 = arith.constant dense<0.000000e+00> : vector<128x9xf32>
    %170 = tpu.matmul %117, %169, %cst_100 {dimension_numbers = #tpu.dot_dimension_numbers<[1], [1], [0], [0], [0, 0, 1, 0], [], []>} : vector<128x64xf32>, vector<9x64xf32>, vector<128x9xf32> -> vector<128x9xf32>
    %171 = arith.addf %168, %170 : vector<128x9xf32>
    %172 = arith.mulf %166, %171 : vector<128x9xf32>
    %173 = arith.addf %121, %128 : vector<128x1xf32>
    %cst_101 = arith.constant dense<0.000000e+00> : vector<128x9xf32>
    %174 = tpu.matmul %156, %12, %cst_101 {dimension_numbers = #tpu.dot_dimension_numbers<[1], [0], [0], [1], [0, 0, 1, 1], [], []>} : vector<128x3xf32>, vector<3x9xf32>, vector<128x9xf32> -> vector<128x9xf32>
    %175 = arith.mulf %174, %19 : vector<128x9xf32>
    %cst_102 = arith.constant dense<0.000000e+00> : vector<128x3xf32>
    %176 = tpu.matmul %175, %11, %cst_102 {dimension_numbers = #tpu.dot_dimension_numbers<[1], [1], [0], [0], [0, 0, 1, 0], [], []>} : vector<128x9xf32>, vector<3x9xf32>, vector<128x3xf32> -> vector<128x3xf32>
    %cst_103 = arith.constant dense<0.000000e+00> : vector<128x9xf32>
    %177 = tpu.matmul %164, %12, %cst_103 {dimension_numbers = #tpu.dot_dimension_numbers<[1], [0], [0], [1], [0, 0, 1, 1], [], []>} : vector<128x3xf32>, vector<3x9xf32>, vector<128x9xf32> -> vector<128x9xf32>
    %178 = arith.mulf %177, %20 : vector<128x9xf32>
    %cst_104 = arith.constant dense<0.000000e+00> : vector<128x3xf32>
    %179 = tpu.matmul %178, %11, %cst_104 {dimension_numbers = #tpu.dot_dimension_numbers<[1], [1], [0], [0], [0, 0, 1, 0], [], []>} : vector<128x9xf32>, vector<3x9xf32>, vector<128x3xf32> -> vector<128x3xf32>
    %180 = arith.addf %176, %179 : vector<128x3xf32>
    %181 = arith.mulf %174, %29 : vector<128x9xf32>
    %cst_105 = arith.constant dense<0.000000e+00> : vector<128x27xf32>
    %182 = tpu.matmul %172, %15, %cst_105 {dimension_numbers = #tpu.dot_dimension_numbers<[1], [0], [0], [1], [0, 0, 1, 1], [], []>} : vector<128x9xf32>, vector<9x27xf32>, vector<128x27xf32> -> vector<128x27xf32>
    %183 = arith.mulf %182, %35 : vector<128x27xf32>
    %cst_106 = arith.constant dense<0.000000e+00> : vector<128x9xf32>
    %184 = tpu.matmul %183, %13, %cst_106 {dimension_numbers = #tpu.dot_dimension_numbers<[1], [1], [0], [0], [0, 0, 1, 0], [], []>} : vector<128x27xf32>, vector<9x27xf32>, vector<128x9xf32> -> vector<128x9xf32>
    %185 = arith.addf %181, %184 : vector<128x9xf32>
    %186 = vector.broadcast %173 : vector<128x1xf32> to vector<128x3xf32>
    %187 = arith.mulf %186, %28 : vector<128x3xf32>
    %188 = arith.mulf %180, %28 : vector<128x3xf32>
    %cst_107 = arith.constant dense<0.000000e+00> : vector<128xf32>
    %189 = vector.multi_reduction <add>, %188, %cst_107 [1] : vector<128x3xf32> to vector<128xf32>
    %190 = vector.shape_cast %189 : vector<128xf32> to vector<128x1xf32>
    %191 = vector.broadcast %190 : vector<128x1xf32> to vector<128x3xf32>
    %192 = arith.mulf %191, %28 : vector<128x3xf32>
    %193 = arith.subf %180, %192 : vector<128x3xf32>
    %194 = vector.broadcast %26 : vector<128x1xf32> to vector<128x3xf32>
    %195 = arith.mulf %193, %194 : vector<128x3xf32>
    %196 = arith.addf %187, %195 : vector<128x3xf32>
    %c0_108 = arith.constant 0 : index
    %c0_109 = arith.constant 0 : index
    %197 = vector.load %arg4[%c0_108, %c0_109] : memref<16x128xf32, #tpu.memory_space<vmem>>, vector<16x128xf32>
    %cst_110 = arith.constant dense<0.000000e+00> : vector<16x1xf32>
    %198 = tpu.matmul %197, %78, %cst_110 {dimension_numbers = #tpu.dot_dimension_numbers<[1], [0], [0], [1], [0, 0, 1, 1], [], []>} : vector<16x128xf32>, vector<128x1xf32>, vector<16x1xf32> -> vector<16x1xf32>
    %c0_111 = arith.constant 0 : index
    %c0_112 = arith.constant 0 : index
    %199 = vector.load %arg19[%c0_111, %c0_112] : memref<16x14xf32, #tpu.memory_space<vmem>>, vector<16x1xf32>
    tpu.vector_store %arg19[%c0_111, %c0_112], %198 {strides = array<i32>} : memref<16x14xf32, #tpu.memory_space<vmem>>, vector<16x1xf32>,
    %cst_113 = arith.constant dense<0.000000e+00> : vector<16x1xf32>
    %200 = tpu.matmul %197, %104, %cst_113 {dimension_numbers = #tpu.dot_dimension_numbers<[1], [0], [0], [1], [0, 0, 1, 1], [], []>} : vector<16x128xf32>, vector<128x1xf32>, vector<16x1xf32> -> vector<16x1xf32>
    %c0_114 = arith.constant 0 : index
    %c1_115 = arith.constant 1 : index
    %201 = vector.load %arg19[%c0_114, %c1_115] : memref<16x14xf32, #tpu.memory_space<vmem>>, vector<16x1xf32>
    tpu.vector_store %arg19[%c0_114, %c1_115], %200 {strides = array<i32>} : memref<16x14xf32, #tpu.memory_space<vmem>>, vector<16x1xf32>,
    %cst_116 = arith.constant dense<0.000000e+00> : vector<16x3xf32>
    %202 = tpu.matmul %197, %196, %cst_116 {dimension_numbers = #tpu.dot_dimension_numbers<[1], [0], [0], [1], [0, 0, 1, 1], [], []>} : vector<16x128xf32>, vector<128x3xf32>, vector<16x3xf32> -> vector<16x3xf32>
    %c0_117 = arith.constant 0 : index
    %c2_118 = arith.constant 2 : index
    %203 = vector.load %arg19[%c0_117, %c2_118] : memref<16x14xf32, #tpu.memory_space<vmem>>, vector<16x3xf32>
    tpu.vector_store %arg19[%c0_117, %c2_118], %202 {strides = array<i32>} : memref<16x14xf32, #tpu.memory_space<vmem>>, vector<16x3xf32>,
    %cst_119 = arith.constant dense<0.000000e+00> : vector<16x9xf32>
    %204 = tpu.matmul %197, %185, %cst_119 {dimension_numbers = #tpu.dot_dimension_numbers<[1], [0], [0], [1], [0, 0, 1, 1], [], []>} : vector<16x128xf32>, vector<128x9xf32>, vector<16x9xf32> -> vector<16x9xf32>
    %c0_120 = arith.constant 0 : index
    %c5_121 = arith.constant 5 : index
    %205 = vector.load %arg19[%c0_120, %c5_121] : memref<16x14xf32, #tpu.memory_space<vmem>>, vector<16x9xf32>
    tpu.vector_store %arg19[%c0_120, %c5_121], %204 {strides = array<i32>} : memref<16x14xf32, #tpu.memory_space<vmem>>, vector<16x9xf32>,
    return
  }
  func.func @transform_0(%arg0: i32) -> (i32, i32) {
    %c0_i32 = arith.constant 0 : i32
    %c0_i32_0 = arith.constant 0 : i32
    return %arg0, %c0_i32 : i32, i32
  }
  func.func @transform_1(%arg0: i32) -> (i32, i32) {
    %c0_i32 = arith.constant 0 : i32
    %c0_i32_0 = arith.constant 0 : i32
    return %arg0, %c0_i32 : i32, i32
  }
  func.func @transform_2(%arg0: i32) -> (i32, i32) {
    %c0_i32 = arith.constant 0 : i32
    %c0_i32_0 = arith.constant 0 : i32
    return %arg0, %c0_i32 : i32, i32
  }
  func.func @transform_3(%arg0: i32) -> (i32, i32) {
    %c0_i32 = arith.constant 0 : i32
    %c0_i32_0 = arith.constant 0 : i32
    %c0_i32_1 = arith.constant 0 : i32
    return %c0_i32, %c0_i32_0 : i32, i32
  }
  func.func @transform_4(%arg0: i32) -> (i32, i32) {
    %c0_i32 = arith.constant 0 : i32
    %c0_i32_0 = arith.constant 0 : i32
    %c0_i32_1 = arith.constant 0 : i32
    return %c0_i32, %c0_i32_0 : i32, i32
  }
  func.func @transform_5(%arg0: i32) -> (i32, i32) {
    %c0_i32 = arith.constant 0 : i32
    %c0_i32_0 = arith.constant 0 : i32
    %c0_i32_1 = arith.constant 0 : i32
    return %c0_i32, %c0_i32_0 : i32, i32
  }
  func.func @transform_6(%arg0: i32) -> (i32, i32) {
    %c0_i32 = arith.constant 0 : i32
    %c0_i32_0 = arith.constant 0 : i32
    %c0_i32_1 = arith.constant 0 : i32
    return %c0_i32, %c0_i32_0 : i32, i32
  }
  func.func @transform_7(%arg0: i32) -> (i32, i32) {
    %c0_i32 = arith.constant 0 : i32
    %c0_i32_0 = arith.constant 0 : i32
    %c0_i32_1 = arith.constant 0 : i32
    return %c0_i32, %c0_i32_0 : i32, i32
  }
  func.func @transform_8(%arg0: i32) -> (i32, i32) {
    %c0_i32 = arith.constant 0 : i32
    %c0_i32_0 = arith.constant 0 : i32
    %c0_i32_1 = arith.constant 0 : i32
    return %c0_i32, %c0_i32_0 : i32, i32
  }
  func.func @transform_9(%arg0: i32) -> (i32, i32) {
    %c0_i32 = arith.constant 0 : i32
    %c0_i32_0 = arith.constant 0 : i32
    %c0_i32_1 = arith.constant 0 : i32
    return %c0_i32, %c0_i32_0 : i32, i32
  }
  func.func @transform_10(%arg0: i32) -> (i32, i32) {
    %c0_i32 = arith.constant 0 : i32
    %c0_i32_0 = arith.constant 0 : i32
    %c0_i32_1 = arith.constant 0 : i32
    return %c0_i32, %c0_i32_0 : i32, i32
  }
  func.func @transform_11(%arg0: i32) -> (i32, i32) {
    %c0_i32 = arith.constant 0 : i32
    %c0_i32_0 = arith.constant 0 : i32
    %c0_i32_1 = arith.constant 0 : i32
    return %c0_i32, %c0_i32_0 : i32, i32
  }
  func.func @transform_12(%arg0: i32) -> (i32, i32) {
    %c0_i32 = arith.constant 0 : i32
    %c0_i32_0 = arith.constant 0 : i32
    %c0_i32_1 = arith.constant 0 : i32
    return %c0_i32, %c0_i32_0 : i32, i32
  }
  func.func @transform_13(%arg0: i32) -> (i32, i32) {
    %c0_i32 = arith.constant 0 : i32
    %c0_i32_0 = arith.constant 0 : i32
    %c0_i32_1 = arith.constant 0 : i32
    return %c0_i32, %c0_i32_0 : i32, i32
  }
  func.func @transform_14(%arg0: i32) -> (i32, i32) {
    %c0_i32 = arith.constant 0 : i32
    %c0_i32_0 = arith.constant 0 : i32
    %c0_i32_1 = arith.constant 0 : i32
    return %c0_i32, %c0_i32_0 : i32, i32
  }
  func.func @transform_15(%arg0: i32) -> (i32, i32) {
    %c0_i32 = arith.constant 0 : i32
    %c0_i32_0 = arith.constant 0 : i32
    %c0_i32_1 = arith.constant 0 : i32
    return %c0_i32, %c0_i32_0 : i32, i32
  }
  func.func @transform_16(%arg0: i32) -> (i32, i32) {
    %c0_i32 = arith.constant 0 : i32
    %c0_i32_0 = arith.constant 0 : i32
    %c0_i32_1 = arith.constant 0 : i32
    return %c0_i32, %c0_i32_0 : i32, i32
  }
  func.func @transform_17(%arg0: i32) -> (i32, i32) {
    %c0_i32 = arith.constant 0 : i32
    %c0_i32_0 = arith.constant 0 : i32
    %c0_i32_1 = arith.constant 0 : i32
    return %c0_i32, %c0_i32_0 : i32, i32
  }
  func.func @transform_18(%arg0: i32) -> (i32, i32) {
    %c0_i32 = arith.constant 0 : i32
    %c0_i32_0 = arith.constant 0 : i32
    return %arg0, %c0_i32 : i32, i32
  }
}

</mosaic_0001>

<llo_original>
// kernel: particle_energy_forward.1
$region0: #{particle_energy_forward.1}
  #allocation0 [shape = 'u32[]', space=smem, size = 0x4, offset = 0x4, fixed_abs, tag = 'smem constant byte address 0x4 - core index']
  #allocation1 [shape = 'u32[144,128]{1,0:T(1,128)}', space=vmem, size = 0x12000, scoped, tag = 'internal scratch']
  %s0 = inlined_call_operand.vmem [shape: f32[512,3], index: 0, kind: input, shape index: {}]
  %s1 = inlined_call_operand.vmem [shape: f32[512,9], index: 1, kind: input, shape index: {}]
  %s2 = inlined_call_operand.vmem [shape: f32[512,9], index: 2, kind: input, shape index: {}]
  %s3 = inlined_call_operand.vmem [shape: f32[16,128], index: 3, kind: input, shape index: {}]
  %s4 = inlined_call_operand.vmem [shape: f32[3,32], index: 4, kind: input, shape index: {}]
  %s5 = inlined_call_operand.vmem [shape: f32[3,32], index: 5, kind: input, shape index: {}]
  %s6 = inlined_call_operand.vmem [shape: f32[9,32], index: 6, kind: input, shape index: {}]
  %s7 = inlined_call_operand.vmem [shape: f32[32,32], index: 7, kind: input, shape index: {}]
  %s8 = inlined_call_operand.vmem [shape: f32[3,64], index: 8, kind: input, shape index: {}]
  %s9 = inlined_call_operand.vmem [shape: f32[3,64], index: 9, kind: input, shape index: {}]
  %s10 = inlined_call_operand.vmem [shape: f32[9,64], index: 10, kind: input, shape index: {}]
  %s11 = inlined_call_operand.vmem [shape: f32[64,64], index: 11, kind: input, shape index: {}]
  %s12 = inlined_call_operand.vmem [shape: f32[11,128], index: 12, kind: input, shape index: {}]
  %s13 = inlined_call_operand.vmem [shape: f32[3,9], index: 13, kind: input, shape index: {}]
  %s14 = inlined_call_operand.vmem [shape: f32[3,9], index: 14, kind: input, shape index: {}]
  %s15 = inlined_call_operand.vmem [shape: f32[9,27], index: 15, kind: input, shape index: {}]
  %s16 = inlined_call_operand.vmem [shape: f32[9,27], index: 16, kind: input, shape index: {}]
  %s17 = inlined_call_operand.vmem [shape: f32[9,27], index: 17, kind: input, shape index: {}]
  %s18 = inlined_call_operand.vmem [shape: f32[64,14], index: 18, kind: output, shape index: {}]
  %s19 = sld [smem:[#allocation0]]
  $region105: #{particle_energy_forward.1} parent=0
    _
  %s21 = ssub.s32 1, %s19
  %s22 = scalar_select 0, %s21, %s19
  loop: start=0, step=1, limit=6
  $region2: #{particle_energy_forward.1} parent=0 // loop_pre_header
    _
  $region3: #{particle_energy_forward.1} parent=0 // loop_header
    %s24 = sphi 0, %s28
    %p25 = scmp.ge.s32.totalorder %s24, 6
    %s34 = sphi 0, %s36
    %s37 = sphi 0, %s34
    %s38 = sphi 0, %s37
    %s54 = sphi 0, %s38
    %s60 = sphi 0, %s62
    %s63 = sphi 0, %s60
    %s64 = sphi 0, %s63
    %s80 = sphi 0, %s64
    %s86 = sphi 0, %s88
    %s89 = sphi 0, %s86
    %s90 = sphi 0, %s89
    %s106 = sphi 0, %s90
    %s110 = sphi 0, %s110
    %s112 = sphi 0, %s110
    %s113 = sphi 0, %s112
    %s127 = sphi 0, %s113
    %s131 = sphi 0, %s131
    %s133 = sphi 0, %s131
    %s134 = sphi 0, %s133
    %s148 = sphi 0, %s134
    %s152 = sphi 0, %s152
    %s154 = sphi 0, %s152
    %s155 = sphi 0, %s154
    %s169 = sphi 0, %s155
    %s173 = sphi 0, %s173
    %s175 = sphi 0, %s173
    %s176 = sphi 0, %s175
    %s190 = sphi 0, %s176
    %s194 = sphi 0, %s194
    %s196 = sphi 0, %s194
    %s197 = sphi 0, %s196
    %s211 = sphi 0, %s197
    %s215 = sphi 0, %s215
    %s217 = sphi 0, %s215
    %s218 = sphi 0, %s217
    %s232 = sphi 0, %s218
    %s236 = sphi 0, %s236
    %s238 = sphi 0, %s236
    %s239 = sphi 0, %s238
    %s253 = sphi 0, %s239
    %s257 = sphi 0, %s257
    %s259 = sphi 0, %s257
    %s260 = sphi 0, %s259
    %s274 = sphi 0, %s260
    %s278 = sphi 0, %s278
    %s280 = sphi 0, %s278
    %s281 = sphi 0, %s280
    %s295 = sphi 0, %s281
    %s299 = sphi 0, %s299
    %s301 = sphi 0, %s299
    %s302 = sphi 0, %s301
    %s316 = sphi 0, %s302
    %s320 = sphi 0, %s320
    %s322 = sphi 0, %s320
    %s323 = sphi 0, %s322
    %s337 = sphi 0, %s323
    %s341 = sphi 0, %s341
    %s343 = sphi 0, %s341
    %s344 = sphi 0, %s343
    %s358 = sphi 0, %s344
    %s362 = sphi 0, %s362
    %s364 = sphi 0, %s362
    %s365 = sphi 0, %s364
    %s379 = sphi 0, %s365
    %s383 = sphi 0, %s383
    %s385 = sphi 0, %s383
    %s386 = sphi 0, %s385
    %s400 = sphi 0, %s386
    %s404 = sphi 0, %s404
    %s406 = sphi 0, %s404
    %s407 = sphi 0, %s406
    %s421 = sphi 0, %s407
    %s427 = sphi 0, %s429
    %s430 = sphi 0, %s427
    %s431 = sphi 0, %s430
    %s447 = sphi 0, %s431
  $region4: #{particle_energy_forward.1} parent=0 // loop_header_branch
    %27 = sbr.rel (%p25) target = $region8
  $region5: #{particle_energy_forward.1} parent=0 // loop_body
    %s29 = ssub.s32 %s24, 1
    %s30 = ssub.s32 %s24, 2
    %s31 = sadd.s32 %s24, 1
    %s32 = ssub.s32 %s24, %s31
    %p33 = scmp.eq.s32.totalorder %s32, 0
    %s35 = sadd.s32 %s34, 1
    %s36 = scalar_select %p33, %s34, %s35
    %p39 = pneg %p33
    %p40 = scmp.eq.s32.totalorder %s24, 3
    %p41 = por %p39, %p40
    %p42 = scmp.ne.s32.totalorder %s34, %s37
    %p43 = scmp.eq.s32.totalorder %s24, 0
    %p44 = por %p42, %p43
    %p45 = scmp.ne.s32.totalorder %s34, %s37
    %p46 = scmp.eq.s32.totalorder %s29, 3
    %p47 = por %p45, %p46
    %p48 = scmp.ne.s32.totalorder %s37, %s38
    %p49 = scmp.eq.s32.totalorder %s29, 0
    %p50 = por %p48, %p49
    %p51 = scmp.ne.s32.totalorder %s37, %s38
    %p52 = scmp.eq.s32.totalorder %s30, 3
    %p53 = por %p51, %p52
    %p55 = scmp.ne.s32.totalorder %s38, %s54
    %p56 = scmp.eq.s32.totalorder %s30, 0
    %p57 = por %p55, %p56
    %s58 = ssub.s32 %s24, %s31
    %p59 = scmp.eq.s32.totalorder %s58, 0
    %s61 = sadd.s32 %s60, 1
    %s62 = scalar_select %p59, %s60, %s61
    %p65 = pneg %p59
    %p66 = scmp.eq.s32.totalorder %s24, 3
    %p67 = por %p65, %p66
    %p68 = scmp.ne.s32.totalorder %s60, %s63
    %p69 = scmp.eq.s32.totalorder %s24, 0
    %p70 = por %p68, %p69
    %p71 = scmp.ne.s32.totalorder %s60, %s63
    %p72 = scmp.eq.s32.totalorder %s29, 3
    %p73 = por %p71, %p72
    %p74 = scmp.ne.s32.totalorder %s63, %s64
    %p75 = scmp.eq.s32.totalorder %s29, 0
    %p76 = por %p74, %p75
    %p77 = scmp.ne.s32.totalorder %s63, %s64
    %p78 = scmp.eq.s32.totalorder %s30, 3
    %p79 = por %p77, %p78
    %p81 = scmp.ne.s32.totalorder %s64, %s80
    %p82 = scmp.eq.s32.totalorder %s30, 0
    %p83 = por %p81, %p82
    %s84 = ssub.s32 %s24, %s31
    %p85 = scmp.eq.s32.totalorder %s84, 0
    %s87 = sadd.s32 %s86, 1
    %s88 = scalar_select %p85, %s86, %s87
    %p91 = pneg %p85
    %p92 = scmp.eq.s32.totalorder %s24, 3
    %p93 = por %p91, %p92
    %p94 = scmp.ne.s32.totalorder %s86, %s89
    %p95 = scmp.eq.s32.totalorder %s24, 0
    %p96 = por %p94, %p95
    %p97 = scmp.ne.s32.totalorder %s86, %s89
    %p98 = scmp.eq.s32.totalorder %s29, 3
    %p99 = por %p97, %p98
    %p100 = scmp.ne.s32.totalorder %s89, %s90
    %p101 = scmp.eq.s32.totalorder %s29, 0
    %p102 = por %p100, %p101
    %p103 = scmp.ne.s32.totalorder %s89, %s90
    %p104 = scmp.eq.s32.totalorder %s30, 3
    %p105 = por %p103, %p104
    %p107 = scmp.ne.s32.totalorder %s90, %s106
    %p108 = scmp.eq.s32.totalorder %s30, 0
    %p109 = por %p107, %p108
    %s111 = sadd.s32 %s110, 1
    %p114 = scmp.eq.s32.totalorder %s24, 3
    %p115 = scmp.ne.s32.totalorder %s110, %s112
    %p116 = scmp.eq.s32.totalorder %s24, 0
    %p117 = por %p115, %p116
    %p118 = scmp.ne.s32.totalorder %s110, %s112
    %p119 = scmp.eq.s32.totalorder %s29, 3
    %p120 = por %p118, %p119
    %p121 = scmp.ne.s32.totalorder %s112, %s113
    %p122 = scmp.eq.s32.totalorder %s29, 0
    %p123 = por %p121, %p122
    %p124 = scmp.ne.s32.totalorder %s112, %s113
    %p125 = scmp.eq.s32.totalorder %s30, 3
    %p126 = por %p124, %p125
    %p128 = scmp.ne.s32.totalorder %s113, %s127
    %p129 = scmp.eq.s32.totalorder %s30, 0
    %p130 = por %p128, %p129
    %s132 = sadd.s32 %s131, 1
    %p135 = scmp.eq.s32.totalorder %s24, 3
    %p136 = scmp.ne.s32.totalorder %s131, %s133
    %p137 = scmp.eq.s32.totalorder %s24, 0
    %p138 = por %p136, %p137
    %p139 = scmp.ne.s32.totalorder %s131, %s133
    %p140 = scmp.eq.s32.totalorder %s29, 3
    %p141 = por %p139, %p140
    %p142 = scmp.ne.s32.totalorder %s133, %s134
    %p143 = scmp.eq.s32.totalorder %s29, 0
    %p144 = por %p142, %p143
    %p145 = scmp.ne.s32.totalorder %s133, %s134
    %p146 = scmp.eq.s32.totalorder %s30, 3
    %p147 = por %p145, %p146
    %p149 = scmp.ne.s32.totalorder %s134, %s148
    %p150 = scmp.eq.s32.totalorder %s30, 0
    %p151 = por %p149, %p150
    %s153 = sadd.s32 %s152, 1
    %p156 = scmp.eq.s32.totalorder %s24, 3
    %p157 = scmp.ne.s32.totalorder %s152, %s154
    %p158 = scmp.eq.s32.totalorder %s24, 0
    %p159 = por %p157, %p158
    %p160 = scmp.ne.s32.totalorder %s152, %s154
    %p161 = scmp.eq.s32.totalorder %s29, 3
    %p162 = por %p160, %p161
    %p163 = scmp.ne.s32.totalorder %s154, %s155
    %p164 = scmp.eq.s32.totalorder %s29, 0
    %p165 = por %p163, %p164
    %p166 = scmp.ne.s32.totalorder %s154, %s155
    %p167 = scmp.eq.s32.totalorder %s30, 3
    %p168 = por %p166, %p167
    %p170 = scmp.ne.s32.totalorder %s155, %s169
    %p171 = scmp.eq.s32.totalorder %s30, 0
    %p172 = por %p170, %p171
    %s174 = sadd.s32 %s173, 1
    %p177 = scmp.eq.s32.totalorder %s24, 3
    %p178 = scmp.ne.s32.totalorder %s173, %s175
    %p179 = scmp.eq.s32.totalorder %s24, 0
    %p180 = por %p178, %p179
    %p181 = scmp.ne.s32.totalorder %s173, %s175
    %p182 = scmp.eq.s32.totalorder %s29, 3
    %p183 = por %p181, %p182
    %p184 = scmp.ne.s32.totalorder %s175, %s176
    %p185 = scmp.eq.s32.totalorder %s29, 0
    %p186 = por %p184, %p185
    %p187 = scmp.ne.s32.totalorder %s175, %s176
    %p188 = scmp.eq.s32.totalorder %s30, 3
    %p189 = por %p187, %p188
    %p191 = scmp.ne.s32.totalorder %s176, %s190
    %p192 = scmp.eq.s32.totalorder %s30, 0
    %p193 = por %p191, %p192
    %s195 = sadd.s32 %s194, 1
    %p198 = scmp.eq.s32.totalorder %s24, 3
    %p199 = scmp.ne.s32.totalorder %s194, %s196
    %p200 = scmp.eq.s32.totalorder %s24, 0
    %p201 = por %p199, %p200
    %p202 = scmp.ne.s32.totalorder %s194, %s196
    %p203 = scmp.eq.s32.totalorder %s29, 3
    %p204 = por %p202, %p203
    %p205 = scmp.ne.s32.totalorder %s196, %s197
    %p206 = scmp.eq.s32.totalorder %s29, 0
    %p207 = por %p205, %p206
    %p208 = scmp.ne.s32.totalorder %s196, %s197
    %p209 = scmp.eq.s32.totalorder %s30, 3
    %p210 = por %p208, %p209
    %p212 = scmp.ne.s32.totalorder %s197, %s211
    %p213 = scmp.eq.s32.totalorder %s30, 0
    %p214 = por %p212, %p213
    %s216 = sadd.s32 %s215, 1
    %p219 = scmp.eq.s32.totalorder %s24, 3
    %p220 = scmp.ne.s32.totalorder %s215, %s217
    %p221 = scmp.eq.s32.totalorder %s24, 0
    %p222 = por %p220, %p221
    %p223 = scmp.ne.s32.totalorder %s215, %s217
    %p224 = scmp.eq.s32.totalorder %s29, 3
    %p225 = por %p223, %p224
    %p226 = scmp.ne.s32.totalorder %s217, %s218
    %p227 = scmp.eq.s32.totalorder %s29, 0
    %p228 = por %p226, %p227
    %p229 = scmp.ne.s32.totalorder %s217, %s218
    %p230 = scmp.eq.s32.totalorder %s30, 3
    %p231 = por %p229, %p230
    %p233 = scmp.ne.s32.totalorder %s218, %s232
    %p234 = scmp.eq.s32.totalorder %s30, 0
    %p235 = por %p233, %p234
    %s237 = sadd.s32 %s236, 1
    %p240 = scmp.eq.s32.totalorder %s24, 3
    %p241 = scmp.ne.s32.totalorder %s236, %s238
    %p242 = scmp.eq.s32.totalorder %s24, 0
    %p243 = por %p241, %p242
    %p244 = scmp.ne.s32.totalorder %s236, %s238
    %p245 = scmp.eq.s32.totalorder %s29, 3
    %p246 = por %p244, %p245
    %p247 = scmp.ne.s32.totalorder %s238, %s239
    %p248 = scmp.eq.s32.totalorder %s29, 0
    %p249 = por %p247, %p248
    %p250 = scmp.ne.s32.totalorder %s238, %s239
    %p251 = scmp.eq.s32.totalorder %s30, 3
    %p252 = por %p250, %p251
    %p254 = scmp.ne.s32.totalorder %s239, %s253
    %p255 = scmp.eq.s32.totalorder %s30, 0
    %p256 = por %p254, %p255
    %s258 = sadd.s32 %s257, 1
    %p261 = scmp.eq.s32.totalorder %s24, 3
    %p262 = scmp.ne.s32.totalorder %s257, %s259
    %p263 = scmp.eq.s32.totalorder %s24, 0
    %p264 = por %p262, %p263
    %p265 = scmp.ne.s32.totalorder %s257, %s259
    %p266 = scmp.eq.s32.totalorder %s29, 3
    %p267 = por %p265, %p266
    %p268 = scmp.ne.s32.totalorder %s259, %s260
    %p269 = scmp.eq.s32.totalorder %s29, 0
    %p270 = por %p268, %p269
    %p271 = scmp.ne.s32.totalorder %s259, %s260
    %p272 = scmp.eq.s32.totalorder %s30, 3
    %p273 = por %p271, %p272
    %p275 = scmp.ne.s32.totalorder %s260, %s274
    %p276 = scmp.eq.s32.totalorder %s30, 0
    %p277 = por %p275, %p276
    %s279 = sadd.s32 %s278, 1
    %p282 = scmp.eq.s32.totalorder %s24, 3
    %p283 = scmp.ne.s32.totalorder %s278, %s280
    %p284 = scmp.eq.s32.totalorder %s24, 0
    %p285 = por %p283, %p284
    %p286 = scmp.ne.s32.totalorder %s278, %s280
    %p287 = scmp.eq.s32.totalorder %s29, 3
    %p288 = por %p286, %p287
    %p289 = scmp.ne.s32.totalorder %s280, %s281
    %p290 = scmp.eq.s32.totalorder %s29, 0
    %p291 = por %p289, %p290
    %p292 = scmp.ne.s32.totalorder %s280, %s281
    %p293 = scmp.eq.s32.totalorder %s30, 3
    %p294 = por %p292, %p293
    %p296 = scmp.ne.s32.totalorder %s281, %s295
    %p297 = scmp.eq.s32.totalorder %s30, 0
    %p298 = por %p296, %p297
    %s300 = sadd.s32 %s299, 1
    %p303 = scmp.eq.s32.totalorder %s24, 3
    %p304 = scmp.ne.s32.totalorder %s299, %s301
    %p305 = scmp.eq.s32.totalorder %s24, 0
    %p306 = por %p304, %p305
    %p307 = scmp.ne.s32.totalorder %s299, %s301
    %p308 = scmp.eq.s32.totalorder %s29, 3
    %p309 = por %p307, %p308
    %p310 = scmp.ne.s32.totalorder %s301, %s302
    %p311 = scmp.eq.s32.totalorder %s29, 0
    %p312 = por %p310, %p311
    %p313 = scmp.ne.s32.totalorder %s301, %s302
    %p314 = scmp.eq.s32.totalorder %s30, 3
    %p315 = por %p313, %p314
    %p317 = scmp.ne.s32.totalorder %s302, %s316
    %p318 = scmp.eq.s32.totalorder %s30, 0
    %p319 = por %p317, %p318
    %s321 = sadd.s32 %s320, 1
    %p324 = scmp.eq.s32.totalorder %s24, 3
    %p325 = scmp.ne.s32.totalorder %s320, %s322
    %p326 = scmp.eq.s32.totalorder %s24, 0
    %p327 = por %p325, %p326
    %p328 = scmp.ne.s32.totalorder %s320, %s322
    %p329 = scmp.eq.s32.totalorder %s29, 3
    %p330 = por %p328, %p329
    %p331 = scmp.ne.s32.totalorder %s322, %s323
    %p332 = scmp.eq.s32.totalorder %s29, 0
    %p333 = por %p331, %p332
    %p334 = scmp.ne.s32.totalorder %s322, %s323
    %p335 = scmp.eq.s32.totalorder %s30, 3
    %p336 = por %p334, %p335
    %p338 = scmp.ne.s32.totalorder %s323, %s337
    %p339 = scmp.eq.s32.totalorder %s30, 0
    %p340 = por %p338, %p339
    %s342 = sadd.s32 %s341, 1
    %p345 = scmp.eq.s32.totalorder %s24, 3
    %p346 = scmp.ne.s32.totalorder %s341, %s343
    %p347 = scmp.eq.s32.totalorder %s24, 0
    %p348 = por %p346, %p347
    %p349 = scmp.ne.s32.totalorder %s341, %s343
    %p350 = scmp.eq.s32.totalorder %s29, 3
    %p351 = por %p349, %p350
    %p352 = scmp.ne.s32.totalorder %s343, %s344
    %p353 = scmp.eq.s32.totalorder %s29, 0
    %p354 = por %p352, %p353
    %p355 = scmp.ne.s32.totalorder %s343, %s344
    %p356 = scmp.eq.s32.totalorder %s30, 3
    %p357 = por %p355, %p356
    %p359 = scmp.ne.s32.totalorder %s344, %s358
    %p360 = scmp.eq.s32.totalorder %s30, 0
    %p361 = por %p359, %p360
    %s363 = sadd.s32 %s362, 1
    %p366 = scmp.eq.s32.totalorder %s24, 3
    %p367 = scmp.ne.s32.totalorder %s362, %s364
    %p368 = scmp.eq.s32.totalorder %s24, 0
    %p369 = por %p367, %p368
    %p370 = scmp.ne.s32.totalorder %s362, %s364
    %p371 = scmp.eq.s32.totalorder %s29, 3
    %p372 = por %p370, %p371
    %p373 = scmp.ne.s32.totalorder %s364, %s365
    %p374 = scmp.eq.s32.totalorder %s29, 0
    %p375 = por %p373, %p374
    %p376 = scmp.ne.s32.totalorder %s364, %s365
    %p377 = scmp.eq.s32.totalorder %s30, 3
    %p378 = por %p376, %p377
    %p380 = scmp.ne.s32.totalorder %s365, %s379
    %p381 = scmp.eq.s32.totalorder %s30, 0
    %p382 = por %p380, %p381
    %s384 = sadd.s32 %s383, 1
    %p387 = scmp.eq.s32.totalorder %s24, 3
    %p388 = scmp.ne.s32.totalorder %s383, %s385
    %p389 = scmp.eq.s32.totalorder %s24, 0
    %p390 = por %p388, %p389
    %p391 = scmp.ne.s32.totalorder %s383, %s385
    %p392 = scmp.eq.s32.totalorder %s29, 3
    %p393 = por %p391, %p392
    %p394 = scmp.ne.s32.totalorder %s385, %s386
    %p395 = scmp.eq.s32.totalorder %s29, 0
    %p396 = por %p394, %p395
    %p397 = scmp.ne.s32.totalorder %s385, %s386
    %p398 = scmp.eq.s32.totalorder %s30, 3
    %p399 = por %p397, %p398
    %p401 = scmp.ne.s32.totalorder %s386, %s400
    %p402 = scmp.eq.s32.totalorder %s30, 0
    %p403 = por %p401, %p402
    %s405 = sadd.s32 %s404, 1
    %p408 = scmp.eq.s32.totalorder %s24, 3
    %p409 = scmp.ne.s32.totalorder %s404, %s406
    %p410 = scmp.eq.s32.totalorder %s24, 0
    %p411 = por %p409, %p410
    %p412 = scmp.ne.s32.totalorder %s404, %s406
    %p413 = scmp.eq.s32.totalorder %s29, 3
    %p414 = por %p412, %p413
    %p415 = scmp.ne.s32.totalorder %s406, %s407
    %p416 = scmp.eq.s32.totalorder %s29, 0
    %p417 = por %p415, %p416
    %p418 = scmp.ne.s32.totalorder %s406, %s407
    %p419 = scmp.eq.s32.totalorder %s30, 3
    %p420 = por %p418, %p419
    %p422 = scmp.ne.s32.totalorder %s407, %s421
    %p423 = scmp.eq.s32.totalorder %s30, 0
    %p424 = por %p422, %p423
    %s425 = ssub.s32 %s24, %s31
    %p426 = scmp.eq.s32.totalorder %s425, 0
    %s428 = sadd.s32 %s427, 1
    %s429 = scalar_select %p426, %s427, %s428
    %p432 = pneg %p426
    %p433 = scmp.eq.s32.totalorder %s24, 3
    %p434 = por %p432, %p433
    %p435 = scmp.ne.s32.totalorder %s427, %s430
    %p436 = scmp.eq.s32.totalorder %s24, 0
    %p437 = por %p435, %p436
    %p438 = scmp.ne.s32.totalorder %s427, %s430
    %p439 = scmp.eq.s32.totalorder %s29, 3
    %p440 = por %p438, %p439
    %p441 = scmp.ne.s32.totalorder %s430, %s431
    %p442 = scmp.eq.s32.totalorder %s29, 0
    %p443 = por %p441, %p442
    %p444 = scmp.ne.s32.totalorder %s430, %s431
    %p445 = scmp.eq.s32.totalorder %s30, 3
    %p446 = por %p444, %p445
    %p448 = scmp.ne.s32.totalorder %s431, %s447
    %p449 = scmp.eq.s32.totalorder %s30, 0
    %p450 = por %p448, %p449
    %p451 = scmp.le.s32.totalorder 1, %s24
    %p452 = scmp.lt.s32.totalorder %s24, 5
    %p453 = pnand %p451, %p452
    %p454 = pneg %p453
    // Predicated region
    $region9: #{particle_energy_forward.1} parent=5 // pred_check
      _
    $region10: #{particle_energy_forward.1} parent=5 // pred_check_branch
      %456 = sbr.rel (%p453) target = $region12
    $region11: #{particle_energy_forward.1} parent=5 // pred_region
      %s457 = ssub.s32 %s24, 1
      // Predicated region
      $region13: #{particle_energy_forward.1} parent=11 // pred_check
        %p458 = pneg %p123
      $region14: #{particle_energy_forward.1} parent=11 // pred_check_branch
        %460 = sbr.rel (%p458) target = $region16
      $region15: #{particle_energy_forward.1} parent=11 // pred_region
        _
      $region16: #{particle_energy_forward.1} parent=11 // pred_fallthru
        _
      // Predicated region
      $region17: #{particle_energy_forward.1} parent=11 // pred_check
        %p461 = pneg %p144
      $region18: #{particle_energy_forward.1} parent=11 // pred_check_branch
        %463 = sbr.rel (%p461) target = $region20
      $region19: #{particle_energy_forward.1} parent=11 // pred_region
        _
      $region20: #{particle_energy_forward.1} parent=11 // pred_fallthru
        _
      // Predicated region
      $region21: #{particle_energy_forward.1} parent=11 // pred_check
        %p464 = pneg %p165
      $region22: #{particle_energy_forward.1} parent=11 // pred_check_branch
        %466 = sbr.rel (%p464) target = $region24
      $region23: #{particle_energy_forward.1} parent=11 // pred_region
        _
      $region24: #{particle_energy_forward.1} parent=11 // pred_fallthru
        _
      // Predicated region
      $region25: #{particle_energy_forward.1} parent=11 // pred_check
        %p467 = pneg %p186
      $region26: #{particle_energy_forward.1} parent=11 // pred_check_branch
        %469 = sbr.rel (%p467) target = $region28
      $region27: #{particle_energy_forward.1} parent=11 // pred_region
        _
      $region28: #{particle_energy_forward.1} parent=11 // pred_fallthru
        _
      // Predicated region
      $region29: #{particle_energy_forward.1} parent=11 // pred_check
        %p470 = pneg %p207
      $region30: #{particle_energy_forward.1} parent=11 // pred_check_branch
        %472 = sbr.rel (%p470) target = $region32
      $region31: #{particle_energy_forward.1} parent=11 // pred_region
        _
      $region32: #{particle_energy_forward.1} parent=11 // pred_fallthru
        _
      // Predicated region
      $region33: #{particle_energy_forward.1} parent=11 // pred_check
        %p473 = pneg %p228
      $region34: #{particle_energy_forward.1} parent=11 // pred_check_branch
        %475 = sbr.rel (%p473) target = $region36
      $region35: #{particle_energy_forward.1} parent=11 // pred_region
        _
      $region36: #{particle_energy_forward.1} parent=11 // pred_fallthru
        _
      // Predicated region
      $region37: #{particle_energy_forward.1} parent=11 // pred_check
        %p476 = pneg %p249
      $region38: #{particle_energy_forward.1} parent=11 // pred_check_branch
        %478 = sbr.rel (%p476) target = $region40
      $region39: #{particle_energy_forward.1} parent=11 // pred_region
        _
      $region40: #{particle_energy_forward.1} parent=11 // pred_fallthru
        _
      // Predicated region
      $region41: #{particle_energy_forward.1} parent=11 // pred_check
        %p479 = pneg %p270
      $region42: #{particle_energy_forward.1} parent=11 // pred_check_branch
        %481 = sbr.rel (%p479) target = $region44
      $region43: #{particle_energy_forward.1} parent=11 // pred_region
        _
      $region44: #{particle_energy_forward.1} parent=11 // pred_fallthru
        _
      // Predicated region
      $region45: #{particle_energy_forward.1} parent=11 // pred_check
        %p482 = pneg %p291
      $region46: #{particle_energy_forward.1} parent=11 // pred_check_branch
        %484 = sbr.rel (%p482) target = $region48
      $region47: #{particle_energy_forward.1} parent=11 // pred_region
        _
      $region48: #{particle_energy_forward.1} parent=11 // pred_fallthru
        _
      // Predicated region
      $region49: #{particle_energy_forward.1} parent=11 // pred_check
        %p485 = pneg %p312
      $region50: #{particle_energy_forward.1} parent=11 // pred_check_branch
        %487 = sbr.rel (%p485) target = $region52
      $region51: #{particle_energy_forward.1} parent=11 // pred_region
        _
      $region52: #{particle_energy_forward.1} parent=11 // pred_fallthru
        _
      // Predicated region
      $region53: #{particle_energy_forward.1} parent=11 // pred_check
        %p488 = pneg %p333
      $region54: #{particle_energy_forward.1} parent=11 // pred_check_branch
        %490 = sbr.rel (%p488) target = $region56
      $region55: #{particle_energy_forward.1} parent=11 // pred_region
        _
      $region56: #{particle_energy_forward.1} parent=11 // pred_fallthru
        _
      // Predicated region
      $region57: #{particle_energy_forward.1} parent=11 // pred_check
        %p491 = pneg %p354
      $region58: #{particle_energy_forward.1} parent=11 // pred_check_branch
        %493 = sbr.rel (%p491) target = $region60
      $region59: #{particle_energy_forward.1} parent=11 // pred_region
        _
      $region60: #{particle_energy_forward.1} parent=11 // pred_fallthru
        _
      // Predicated region
      $region61: #{particle_energy_forward.1} parent=11 // pred_check
        %p494 = pneg %p375
      $region62: #{particle_energy_forward.1} parent=11 // pred_check_branch
        %496 = sbr.rel (%p494) target = $region64
      $region63: #{particle_energy_forward.1} parent=11 // pred_region
        _
      $region64: #{particle_energy_forward.1} parent=11 // pred_fallthru
        _
      // Predicated region
      $region65: #{particle_energy_forward.1} parent=11 // pred_check
        %p497 = pneg %p396
      $region66: #{particle_energy_forward.1} parent=11 // pred_check_branch
        %499 = sbr.rel (%p497) target = $region68
      $region67: #{particle_energy_forward.1} parent=11 // pred_region
        _
      $region68: #{particle_energy_forward.1} parent=11 // pred_fallthru
        _
      // Predicated region
      $region69: #{particle_energy_forward.1} parent=11 // pred_check
        %p500 = pneg %p417
      $region70: #{particle_energy_forward.1} parent=11 // pred_check_branch
        %502 = sbr.rel (%p500) target = $region72
      $region71: #{particle_energy_forward.1} parent=11 // pred_region
        _
      $region72: #{particle_energy_forward.1} parent=11 // pred_fallthru
        _
    $region12: #{particle_energy_forward.1} parent=5 // pred_fallthru
      _
    %p503 = scmp.lt.s32.totalorder %s24, 4
    // Predicated region
    $region73: #{particle_energy_forward.1} parent=5 // pred_check
      %p504 = pneg %p503
    $region74: #{particle_energy_forward.1} parent=5 // pred_check_branch
      %506 = sbr.rel (%p504) target = $region76
    $region75: #{particle_energy_forward.1} parent=5 // pred_region
      // Predicated region
      $region77: #{particle_energy_forward.1} parent=75 // pred_check
        %p507 = pneg %p44
      $region78: #{particle_energy_forward.1} parent=75 // pred_check_branch
        %509 = sbr.rel (%p507) target = $region80
      $region79: #{particle_energy_forward.1} parent=75 // pred_region
        %s510 = smul.u32 16, %s24
        %p511 = scmp.lt.s32.totalorder %s510, 63
        %s512 = scalar_select %p511, %s510, 63
        %s513 = smul.addr %s512, 8
        %s514 = scalar_lea.vmem %s0, %s513
        %s515 = smul.u32 16, %s24
      $region80: #{particle_energy_forward.1} parent=75 // pred_fallthru
        _
      // Predicated region
      $region81: #{particle_energy_forward.1} parent=75 // pred_check
        %p516 = pneg %p70
      $region82: #{particle_energy_forward.1} parent=75 // pred_check_branch
        %518 = sbr.rel (%p516) target = $region84
      $region83: #{particle_energy_forward.1} parent=75 // pred_region
        %s519 = smul.u32 16, %s24
        %p520 = scmp.lt.s32.totalorder %s519, 63
        %s521 = scalar_select %p520, %s519, 63
        %s522 = smul.addr %s521, 8
        %s523 = scalar_lea.vmem %s1, %s522
        %s524 = smul.u32 16, %s24
      $region84: #{particle_energy_forward.1} parent=75 // pred_fallthru
        _
      // Predicated region
      $region85: #{particle_energy_forward.1} parent=75 // pred_check
        %p525 = pneg %p96
      $region86: #{particle_energy_forward.1} parent=75 // pred_check_branch
        %527 = sbr.rel (%p525) target = $region88
      $region87: #{particle_energy_forward.1} parent=75 // pred_region
        %s528 = smul.u32 16, %s24
        %p529 = scmp.lt.s32.totalorder %s528, 63
        %s530 = scalar_select %p529, %s528, 63
        %s531 = smul.addr %s530, 8
        %s532 = scalar_lea.vmem %s2, %s531
        %s533 = smul.u32 16, %s24
      $region88: #{particle_energy_forward.1} parent=75 // pred_fallthru
        _
    $region76: #{particle_energy_forward.1} parent=5 // pred_fallthru
      _
    %p534 = scmp.le.s32.totalorder 1, %s24
    %p535 = scmp.lt.s32.totalorder %s24, 5
    %p536 = pnand %p534, %p535
    %p537 = pneg %p536
    // Predicated region
    $region89: #{particle_energy_forward.1} parent=5 // pred_check
      _
    $region90: #{particle_energy_forward.1} parent=5 // pred_check_branch
      %539 = sbr.rel (%p536) target = $region92
    $region91: #{particle_energy_forward.1} parent=5 // pred_region
      %s540 = ssub.s32 %s24, 1
      %s541 = smul.u32 16, %s29
      %p542 = scmp.lt.s32.totalorder %s541, 63
      %s543 = scalar_select %p542, %s541, 63
      %s544 = smul.addr %s543, 8
      %s545 = scalar_lea.vmem %s0, %s544
      %p546 = pneg %p50
      %p547 = pneg %p47
      %s548 = smul.u32 16, %s29
      %p549 = scmp.lt.s32.totalorder %s548, 63
      %s550 = scalar_select %p549, %s548, 63
      %s551 = smul.addr %s550, 8
      %s552 = scalar_lea.vmem %s1, %s551
      %p553 = pneg %p76
      %p554 = pneg %p73
      %s555 = smul.u32 16, %s29
      %p556 = scmp.lt.s32.totalorder %s555, 63
      %s557 = scalar_select %p556, %s555, 63
      %s558 = smul.addr %s557, 8
      %s559 = scalar_lea.vmem %s2, %s558
      %p560 = pneg %p102
      %p561 = pneg %p99
      %p562 = pneg %p123
      %p563 = pneg %p120
      %p564 = pneg %p144
      %p565 = pneg %p141
      %p566 = pneg %p165
      %p567 = pneg %p162
      %p568 = pneg %p186
      %p569 = pneg %p183
      %p570 = pneg %p207
      %p571 = pneg %p204
      %p572 = pneg %p228
      %p573 = pneg %p225
      %p574 = pneg %p249
      %p575 = pneg %p246
      %p576 = pneg %p270
      %p577 = pneg %p267
      %p578 = pneg %p291
      %p579 = pneg %p288
      %p580 = pneg %p312
      %p581 = pneg %p309
      %p582 = pneg %p333
      %p583 = pneg %p330
      %p584 = pneg %p354
      %p585 = pneg %p351
      %p586 = pneg %p375
      %p587 = pneg %p372
      %p588 = pneg %p396
      %p589 = pneg %p393
      %p590 = pneg %p417
      %p591 = pneg %p414
      %p592 = pneg %p443
      %p593 = pneg %p440
      %s594 = smul.u32 2, %s29
      %p595 = scmp.lt.s32.totalorder %s594, 7
      %s596 = scalar_select %p595, %s594, 7
      %s597 = smul.addr %s596, 8
      %s598 = scalar_lea.vmem %s18, %s597
      %s599 = smul.u32 16, %s29
      %p600 = scmp.lt.s32.totalorder %s599, 63
      %s601 = scalar_select %p600, %s599, 63
      %s602 = smul.addr %s601, 8
      %s603 = scalar_lea.vmem %s0, %s602
      %s604 = smul.u32 16, %s29
      %s605 = smul.u32 16, %s29
      %p606 = scmp.lt.s32.totalorder %s605, 63
      %s607 = scalar_select %p606, %s605, 63
      %s608 = smul.addr %s607, 8
      %s609 = scalar_lea.vmem %s1, %s608
      %s610 = smul.u32 16, %s29
      %s611 = smul.u32 16, %s29
      %p612 = scmp.lt.s32.totalorder %s611, 63
      %s613 = scalar_select %p612, %s611, 63
      %s614 = smul.addr %s613, 8
      %s615 = scalar_lea.vmem %s2, %s614
      %s616 = smul.u32 16, %s29
      %s617 = smul.u32 2, %s29
      %p618 = scmp.lt.s32.totalorder %s617, 7
      %s619 = scalar_select %p618, %s617, 7
      %s620 = smul.addr %s619, 8
      %s621 = scalar_lea.vmem %s18, %s620
      %s622 = smul.u32 2, %s29
      %v623 = vld [vmem:[%s12] sm:$0x1]
      %v624 = vld [vmem:[%s12 + $0x1] sm:$0x1]
      %v625 = vld [vmem:[%s12 + $0x2] sm:$0x1]
      %v626 = vld [vmem:[%s12 + $0x3] sm:$0x1]
      %v627 = vld [vmem:[%s12 + $0x4] sm:$0x1]
      %v628 = vld [vmem:[%s12 + $0x5] sm:$0x1]
      %v629 = vld [vmem:[%s12 + $0x6] sm:$0x1]
      %v630 = vld [vmem:[%s12 + $0x7] sm:$0x1]
      %v631 = vld [vmem:[%s12 + $0x8] sm:$0x1]
      %v632 = vld [vmem:[%s12 + $0x9] sm:$0x1]
      %v633 = vld [vmem:[%s12 + $0xa] sm:$0x1]
      %v634 = vld [vmem:[%s13] sm:$0x7]
      %v635 = vld [vmem:[%s14] sm:$0x7]
      %v636 = vld [vmem:[%s15] sm:$0xff]
      %v637 = vld [vmem:[%s15 + $0x8] sm:$0x1]
      %v638 = vld [vmem:[%s16] sm:$0xff]
      %v639 = vld [vmem:[%s16 + $0x8] sm:$0x1]
      %v640 = vld [vmem:[%s17] sm:$0xff]
      %v641 = vld [vmem:[%s17 + $0x8] sm:$0x1]
      %v642 = vld [vmem:[%s603] sm:$0xff]
      %v643 = vld [vmem:[%s603 + $0x8] sm:$0xff]
      %v644 = vld [vmem:[%s603 + $0x10] sm:$0xff]
      %v645 = vld [vmem:[%s603 + $0x18] sm:$0xff]
      %v646 = vld [vmem:[%s603 + $0x20] sm:$0xff]
      %v647 = vld [vmem:[%s603 + $0x28] sm:$0xff]
      %v648 = vld [vmem:[%s603 + $0x30] sm:$0xff]
      %v649 = vld [vmem:[%s603 + $0x38] sm:$0xff]
      %v650 = vld [vmem:[%s603 + $0x40] sm:$0xff]
      %v651 = vld [vmem:[%s603 + $0x48] sm:$0xff]
      %v652 = vld [vmem:[%s603 + $0x50] sm:$0xff]
      %v653 = vld [vmem:[%s603 + $0x58] sm:$0xff]
      %v654 = vld [vmem:[%s603 + $0x60] sm:$0xff]
      %v655 = vld [vmem:[%s603 + $0x68] sm:$0xff]
      %v656 = vld [vmem:[%s603 + $0x70] sm:$0xff]
      %v657 = vld [vmem:[%s603 + $0x78] sm:$0xff]
      %v658 = vadd.f32 %v642, 1e-08
      %v659 = vadd.f32 %v643, 1e-08
      %v660 = vadd.f32 %v644, 1e-08
      %v661 = vadd.f32 %v645, 1e-08
      %v662 = vadd.f32 %v646, 1e-08
      %v663 = vadd.f32 %v647, 1e-08
      %v664 = vadd.f32 %v648, 1e-08
      %v665 = vadd.f32 %v649, 1e-08
      %v666 = vadd.f32 %v650, 1e-08
      %v667 = vadd.f32 %v651, 1e-08
      %v668 = vadd.f32 %v652, 1e-08
      %v669 = vadd.f32 %v653, 1e-08
      %v670 = vadd.f32 %v654, 1e-08
      %v671 = vadd.f32 %v655, 1e-08
      %v672 = vadd.f32 %v656, 1e-08
      %v673 = vadd.f32 %v657, 1e-08
      %v674 = vld [vmem:[%s609] sm:$0xff]
      %v675 = vld [vmem:[%s609 + $0x8] sm:$0xff]
      %v676 = vld [vmem:[%s609 + $0x10] sm:$0xff]
      %v677 = vld [vmem:[%s609 + $0x18] sm:$0xff]
      %v678 = vld [vmem:[%s609 + $0x20] sm:$0xff]
      %v679 = vld [vmem:[%s609 + $0x28] sm:$0xff]
      %v680 = vld [vmem:[%s609 + $0x30] sm:$0xff]
      %v681 = vld [vmem:[%s609 + $0x38] sm:$0xff]
      %v682 = vld [vmem:[%s609 + $0x40] sm:$0xff]
      %v683 = vld [vmem:[%s609 + $0x48] sm:$0xff]
      %v684 = vld [vmem:[%s609 + $0x50] sm:$0xff]
      %v685 = vld [vmem:[%s609 + $0x58] sm:$0xff]
      %v686 = vld [vmem:[%s609 + $0x60] sm:$0xff]
      %v687 = vld [vmem:[%s609 + $0x68] sm:$0xff]
      %v688 = vld [vmem:[%s609 + $0x70] sm:$0xff]
      %v689 = vld [vmem:[%s609 + $0x78] sm:$0xff]
      %v690 = vld [vmem:[%s615] sm:$0xff]
      %v691 = vld [vmem:[%s615 + $0x8] sm:$0xff]
      %v692 = vld [vmem:[%s615 + $0x10] sm:$0xff]
      %v693 = vld [vmem:[%s615 + $0x18] sm:$0xff]
      %v694 = vld [vmem:[%s615 + $0x20] sm:$0xff]
      %v695 = vld [vmem:[%s615 + $0x28] sm:$0xff]
      %v696 = vld [vmem:[%s615 + $0x30] sm:$0xff]
      %v697 = vld [vmem:[%s615 + $0x38] sm:$0xff]
      %v698 = vld [vmem:[%s615 + $0x40] sm:$0xff]
      %v699 = vld [vmem:[%s615 + $0x48] sm:$0xff]
      %v700 = vld [vmem:[%s615 + $0x50] sm:$0xff]
      %v701 = vld [vmem:[%s615 + $0x58] sm:$0xff]
      %v702 = vld [vmem:[%s615 + $0x60] sm:$0xff]
      %v703 = vld [vmem:[%s615 + $0x68] sm:$0xff]
      %v704 = vld [vmem:[%s615 + $0x70] sm:$0xff]
      %v705 = vld [vmem:[%s615 + $0x78] sm:$0xff]
      %v706 = vmul.f32 %v658, %v658
      %v707 = vmul.f32 %v659, %v659
      %v708 = vmul.f32 %v660, %v660
      %v709 = vmul.f32 %v661, %v661
      %v710 = vmul.f32 %v662, %v662
      %v711 = vmul.f32 %v663, %v663
      %v712 = vmul.f32 %v664, %v664
      %v713 = vmul.f32 %v665, %v665
      %v714 = vmul.f32 %v666, %v666
      %v715 = vmul.f32 %v667, %v667
      %v716 = vmul.f32 %v668, %v668
      %v717 = vmul.f32 %v669, %v669
      %v718 = vmul.f32 %v670, %v670
      %v719 = vmul.f32 %v671, %v671
      %v720 = vmul.f32 %v672, %v672
      %v721 = vmul.f32 %v673, %v673
      %vm722 = vcmask 23552
      %v723 = vsel %vm722, %v706, 0.0
      %724 = vadd.xlane.f32.xlu0 %v723
      %v725 = vpop.xlane.xlu0 %724
      %v726 = vsel %vm722, %v707, 0.0
      %727 = vadd.xlane.f32.xlu0 %v726
      %v728 = vpop.xlane.xlu0 %727
      %v729 = vsel %vm722, %v708, 0.0
      %730 = vadd.xlane.f32.xlu0 %v729
      %v731 = vpop.xlane.xlu0 %730
      %v732 = vsel %vm722, %v709, 0.0
      %733 = vadd.xlane.f32.xlu0 %v732
      %v734 = vpop.xlane.xlu0 %733
      %v735 = vsel %vm722, %v710, 0.0
      %736 = vadd.xlane.f32.xlu0 %v735
      %v737 = vpop.xlane.xlu0 %736
      %v738 = vsel %vm722, %v711, 0.0
      %739 = vadd.xlane.f32.xlu0 %v738
      %v740 = vpop.xlane.xlu0 %739
      %v741 = vsel %vm722, %v712, 0.0
      %742 = vadd.xlane.f32.xlu0 %v741
      %v743 = vpop.xlane.xlu0 %742
      %v744 = vsel %vm722, %v713, 0.0
      %745 = vadd.xlane.f32.xlu0 %v744
      %v746 = vpop.xlane.xlu0 %745
      %v747 = vsel %vm722, %v714, 0.0
      %748 = vadd.xlane.f32.xlu0 %v747
      %v749 = vpop.xlane.xlu0 %748
      %v750 = vsel %vm722, %v715, 0.0
      %751 = vadd.xlane.f32.xlu0 %v750
      %v752 = vpop.xlane.xlu0 %751
      %v753 = vsel %vm722, %v716, 0.0
      %754 = vadd.xlane.f32.xlu0 %v753
      %v755 = vpop.xlane.xlu0 %754
      %v756 = vsel %vm722, %v717, 0.0
      %757 = vadd.xlane.f32.xlu0 %v756
      %v758 = vpop.xlane.xlu0 %757
      %v759 = vsel %vm722, %v718, 0.0
      %760 = vadd.xlane.f32.xlu0 %v759
      %v761 = vpop.xlane.xlu0 %760
      %v762 = vsel %vm722, %v719, 0.0
      %763 = vadd.xlane.f32.xlu0 %v762
      %v764 = vpop.xlane.xlu0 %763
      %v765 = vsel %vm722, %v720, 0.0
      %766 = vadd.xlane.f32.xlu0 %v765
      %v767 = vpop.xlane.xlu0 %766
      %v768 = vsel %vm722, %v721, 0.0
      %769 = vadd.xlane.f32.xlu0 %v768
      %v770 = vpop.xlane.xlu0 %769
      %v771 = vrsqrt.pop %v725
      %v772 = vmul.f32 %v725, %v771
      %vm773 = vcmp.eq.f32.partialorder %v725, inf
      %v774 = vsel %vm773, %v725, %v772
      %vm775 = vcmp.eq.f32.partialorder %v725, 0.0
      %v776 = vand.u32 %v725, 2147483648
      %v777 = vsel %vm775, %v776, %v774
      %v778 = vrsqrt.pop %v728
      %v779 = vmul.f32 %v728, %v778
      %vm780 = vcmp.eq.f32.partialorder %v728, inf
      %v781 = vsel %vm780, %v728, %v779
      %vm782 = vcmp.eq.f32.partialorder %v728, 0.0
      %v783 = vand.u32 %v728, 2147483648
      %v784 = vsel %vm782, %v783, %v781
      %v785 = vrsqrt.pop %v731
      %v786 = vmul.f32 %v731, %v785
      %vm787 = vcmp.eq.f32.partialorder %v731, inf
      %v788 = vsel %vm787, %v731, %v786
      %vm789 = vcmp.eq.f32.partialorder %v731, 0.0
      %v790 = vand.u32 %v731, 2147483648
      %v791 = vsel %vm789, %v790, %v788
      %v792 = vrsqrt.pop %v734
      %v793 = vmul.f32 %v734, %v792
      %vm794 = vcmp.eq.f32.partialorder %v734, inf
      %v795 = vsel %vm794, %v734, %v793
      %vm796 = vcmp.eq.f32.partialorder %v734, 0.0
      %v797 = vand.u32 %v734, 2147483648
      %v798 = vsel %vm796, %v797, %v795
      %v799 = vrsqrt.pop %v737
      %v800 = vmul.f32 %v737, %v799
      %vm801 = vcmp.eq.f32.partialorder %v737, inf
      %v802 = vsel %vm801, %v737, %v800
      %vm803 = vcmp.eq.f32.partialorder %v737, 0.0
      %v804 = vand.u32 %v737, 2147483648
      %v805 = vsel %vm803, %v804, %v802
      %v806 = vrsqrt.pop %v740
      %v807 = vmul.f32 %v740, %v806
      %vm808 = vcmp.eq.f32.partialorder %v740, inf
      %v809 = vsel %vm808, %v740, %v807
      %vm810 = vcmp.eq.f32.partialorder %v740, 0.0
      %v811 = vand.u32 %v740, 2147483648
      %v812 = vsel %vm810, %v811, %v809
      %v813 = vrsqrt.pop %v743
      %v814 = vmul.f32 %v743, %v813
      %vm815 = vcmp.eq.f32.partialorder %v743, inf
      %v816 = vsel %vm815, %v743, %v814
      %vm817 = vcmp.eq.f32.partialorder %v743, 0.0
      %v818 = vand.u32 %v743, 2147483648
      %v819 = vsel %vm817, %v818, %v816
      %v820 = vrsqrt.pop %v746
      %v821 = vmul.f32 %v746, %v820
      %vm822 = vcmp.eq.f32.partialorder %v746, inf
      %v823 = vsel %vm822, %v746, %v821
      %vm824 = vcmp.eq.f32.partialorder %v746, 0.0
      %v825 = vand.u32 %v746, 2147483648
      %v826 = vsel %vm824, %v825, %v823
      %v827 = vrsqrt.pop %v749
      %v828 = vmul.f32 %v749, %v827
      %vm829 = vcmp.eq.f32.partialorder %v749, inf
      %v830 = vsel %vm829, %v749, %v828
      %vm831 = vcmp.eq.f32.partialorder %v749, 0.0
      %v832 = vand.u32 %v749, 2147483648
      %v833 = vsel %vm831, %v832, %v830
      %v834 = vrsqrt.pop %v752
      %v835 = vmul.f32 %v752, %v834
      %vm836 = vcmp.eq.f32.partialorder %v752, inf
      %v837 = vsel %vm836, %v752, %v835
      %vm838 = vcmp.eq.f32.partialorder %v752, 0.0
      %v839 = vand.u32 %v752, 2147483648
      %v840 = vsel %vm838, %v839, %v837
      %v841 = vrsqrt.pop %v755
      %v842 = vmul.f32 %v755, %v841
      %vm843 = vcmp.eq.f32.partialorder %v755, inf
      %v844 = vsel %vm843, %v755, %v842
      %vm845 = vcmp.eq.f32.partialorder %v755, 0.0
      %v846 = vand.u32 %v755, 2147483648
      %v847 = vsel %vm845, %v846, %v844
      %v848 = vrsqrt.pop %v758
      %v849 = vmul.f32 %v758, %v848
      %vm850 = vcmp.eq.f32.partialorder %v758, inf
      %v851 = vsel %vm850, %v758, %v849
      %vm852 = vcmp.eq.f32.partialorder %v758, 0.0
      %v853 = vand.u32 %v758, 2147483648
      %v854 = vsel %vm852, %v853, %v851
      %v855 = vrsqrt.pop %v761
      %v856 = vmul.f32 %v761, %v855
      %vm857 = vcmp.eq.f32.partialorder %v761, inf
      %v858 = vsel %vm857, %v761, %v856
      %vm859 = vcmp.eq.f32.partialorder %v761, 0.0
      %v860 = vand.u32 %v761, 2147483648
      %v861 = vsel %vm859, %v860, %v858
      %v862 = vrsqrt.pop %v764
      %v863 = vmul.f32 %v764, %v862
      %vm864 = vcmp.eq.f32.partialorder %v764, inf
      %v865 = vsel %vm864, %v764, %v863
      %vm866 = vcmp.eq.f32.partialorder %v764, 0.0
      %v867 = vand.u32 %v764, 2147483648
      %v868 = vsel %vm866, %v867, %v865
      %v869 = vrsqrt.pop %v767
      %v870 = vmul.f32 %v767, %v869
      %vm871 = vcmp.eq.f32.partialorder %v767, inf
      %v872 = vsel %vm871, %v767, %v870
      %vm873 = vcmp.eq.f32.partialorder %v767, 0.0
      %v874 = vand.u32 %v767, 2147483648
      %v875 = vsel %vm873, %v874, %v872
      %v876 = vrsqrt.pop %v770
      %v877 = vmul.f32 %v770, %v876
      %vm878 = vcmp.eq.f32.partialorder %v770, inf
      %v879 = vsel %vm878, %v770, %v877
      %vm880 = vcmp.eq.f32.partialorder %v770, 0.0
      %v881 = vand.u32 %v770, 2147483648
      %v882 = vsel %vm880, %v881, %v879
      %v883 = vrcp.pop %v777
      %v884 = vmul.f32 1.0, %v883
      %v885 = vrcp.pop %v784
      %v886 = vmul.f32 1.0, %v885
      %v887 = vrcp.pop %v791
      %v888 = vmul.f32 1.0, %v887
      %v889 = vrcp.pop %v798
      %v890 = vmul.f32 1.0, %v889
      %v891 = vrcp.pop %v805
      %v892 = vmul.f32 1.0, %v891
      %v893 = vrcp.pop %v812
      %v894 = vmul.f32 1.0, %v893
      %v895 = vrcp.pop %v819
      %v896 = vmul.f32 1.0, %v895
      %v897 = vrcp.pop %v826
      %v898 = vmul.f32 1.0, %v897
      %v899 = vrcp.pop %v833
      %v900 = vmul.f32 1.0, %v899
      %v901 = vrcp.pop %v840
      %v902 = vmul.f32 1.0, %v901
      %v903 = vrcp.pop %v847
      %v904 = vmul.f32 1.0, %v903
      %v905 = vrcp.pop %v854
      %v906 = vmul.f32 1.0, %v905
      %v907 = vrcp.pop %v861
      %v908 = vmul.f32 1.0, %v907
      %v909 = vrcp.pop %v868
      %v910 = vmul.f32 1.0, %v909
      %v911 = vrcp.pop %v875
      %v912 = vmul.f32 1.0, %v911
      %v913 = vrcp.pop %v882
      %v914 = vmul.f32 1.0, %v913
      %v915 = vmul.f32 %v658, %v884
      %v916 = vmul.f32 %v659, %v886
      %v917 = vmul.f32 %v660, %v888
      %v918 = vmul.f32 %v661, %v890
      %v919 = vmul.f32 %v662, %v892
      %v920 = vmul.f32 %v663, %v894
      %v921 = vmul.f32 %v664, %v896
      %v922 = vmul.f32 %v665, %v898
      %v923 = vmul.f32 %v666, %v900
      %v924 = vmul.f32 %v667, %v902
      %v925 = vmul.f32 %v668, %v904
      %v926 = vmul.f32 %v669, %v906
      %v927 = vmul.f32 %v670, %v908
      %v928 = vmul.f32 %v671, %v910
      %v929 = vmul.f32 %v672, %v912
      %v930 = vmul.f32 %v673, %v914
      %v932 = vsel %vm722, %v915, 0
      %v935 = vsel %vm722, %v916, 0
      %v938 = vsel %vm722, %v917, 0
      %v941 = vsel %vm722, %v918, 0
      %v944 = vsel %vm722, %v919, 0
      %v947 = vsel %vm722, %v920, 0
      %v950 = vsel %vm722, %v921, 0
      %v953 = vsel %vm722, %v922, 0
      %v956 = vsel %vm722, %v923, 0
      %v959 = vsel %vm722, %v924, 0
      %v962 = vsel %vm722, %v925, 0
      %v965 = vsel %vm722, %v926, 0
      %v968 = vsel %vm722, %v927, 0
      %v971 = vsel %vm722, %v928, 0
      %v974 = vsel %vm722, %v929, 0
      %v977 = vsel %vm722, %v930, 0
      %vm979 = vcmask 1042432
      %v981 = vsel %vm979, %v634, 0
      %983 = vmatprep.subr.mxu0 0.0
      %984 = vmatpush1.msra.mxu0 %v981
      %985 = vmatprep.subr.mxu0 0.0
      %986 = vmatpush1.msra.mxu0 0.0
      %987 = vmatprep.subr.mxu0 0.0
      %988 = vmatpush1.msra.mxu0 0.0
      %989 = vmatprep.subr.mxu0 0.0
      %990 = vmatpush1.msra.mxu0 0.0
      %991 = vmatprep.subr.mxu0 0.0
      %992 = vmatpush1.msra.mxu0 0.0
      %993 = vmatprep.subr.mxu0 0.0
      %994 = vmatpush1.msra.mxu0 0.0
      %995 = vmatprep.subr.mxu0 0.0
      %996 = vmatpush1.msra.mxu0 0.0
      %997 = vmatprep.subr.mxu0 0.0
      %998 = vmatpush1.msra.mxu0 0.0
      %999 = vmatprep.subr.mxu0 0.0
      %1000 = vmatpush1.msra.mxu0 0.0
      %1001 = vmatprep.subr.mxu0 0.0
      %1002 = vmatpush1.msra.mxu0 0.0
      %1003 = vmatprep.subr.mxu0 0.0
      %1004 = vmatpush1.msra.mxu0 0.0
      %1005 = vmatprep.subr.mxu0 0.0
      %1006 = vmatpush1.msra.mxu0 0.0
      %1007 = vmatprep.subr.mxu0 0.0
      %1008 = vmatpush1.msra.mxu0 0.0
      %1009 = vmatprep.subr.mxu0 0.0
      %1010 = vmatpush1.msra.mxu0 0.0
      %1011 = vmatprep.subr.mxu0 0.0
      %1012 = vmatpush1.msra.mxu0 0.0
      %1013 = vmatprep.subr.mxu0 0.0
      %1014 = vmatpush1.msra.mxu0 0.0
      %1015 = vmatprep.subr.mxu0 0.0
      %1016 = vmatpush1.msra.mxu0 0.0
      %1017 = vmatprep.subr.mxu0 0.0
      %1018 = vmatpush1.msra.mxu0 0.0
      %1019 = vmatprep.subr.mxu0 0.0
      %1020 = vmatpush1.msra.mxu0 0.0
      %1021 = vmatprep.subr.mxu0 0.0
      %1022 = vmatpush1.msra.mxu0 0.0
      %1023 = vmatprep.subr.mxu0 0.0
      %1024 = vmatpush1.msra.mxu0 0.0
      %1025 = vmatprep.subr.mxu0 0.0
      %1026 = vmatpush1.msra.mxu0 0.0
      %1027 = vmatprep.subr.mxu0 0.0
      %1028 = vmatpush1.msra.mxu0 0.0
      %1029 = vmatprep.subr.mxu0 0.0
      %1030 = vmatpush1.msra.mxu0 0.0
      %1031 = vmatprep.subr.mxu0 0.0
      %1032 = vmatpush1.msra.mxu0 0.0
      %1033 = vmatprep.subr.mxu0 0.0
      %1034 = vmatpush1.msra.mxu0 0.0
      %1035 = vmatprep.subr.mxu0 0.0
      %1036 = vmatpush1.msra.mxu0 0.0
      %1037 = vmatprep.subr.mxu0 0.0
      %1038 = vmatpush1.msra.mxu0 0.0
      %1039 = vmatprep.subr.mxu0 0.0
      %1040 = vmatpush1.msra.mxu0 0.0
      %1041 = vmatprep.subr.mxu0 0.0
      %1042 = vmatpush1.msra.mxu0 0.0
      %1043 = vmatprep.subr.mxu0 0.0
      %1044 = vmatpush1.msra.mxu0 0.0
      %1045 = vmatprep.subr.mxu0 0.0
      %1046 = vmatpush1.msra.mxu0 0.0
      %1047 = vmatprep.mubr.f32.mxu0 0.0
      %1048 = vmatmul.mubr.f32.gmra.mrb[0].mxu0 %v932
      %v1049 = vpop.f32.mrb[0].mxu0
      %v1050 = vadd.f32 0.0, %v1049
      %v1051 = vpop.f32.mrb[0].mxu0
      %1052 = vmatprep.mubr.f32.mxu0 0.0
      %1053 = vmatmul.mubr.f32.gmra.mrb[0].mxu0 %v935
      %v1054 = vpop.f32.mrb[0].mxu0
      %v1055 = vadd.f32 0.0, %v1054
      %v1056 = vpop.f32.mrb[0].mxu0
      %1057 = vmatprep.mubr.f32.mxu0 0.0
      %1058 = vmatmul.mubr.f32.gmra.mrb[0].mxu0 %v938
      %v1059 = vpop.f32.mrb[0].mxu0
      %v1060 = vadd.f32 0.0, %v1059
      %v1061 = vpop.f32.mrb[0].mxu0
      %1062 = vmatprep.mubr.f32.mxu0 0.0
      %1063 = vmatmul.mubr.f32.gmra.mrb[0].mxu0 %v941
      %v1064 = vpop.f32.mrb[0].mxu0
      %v1065 = vadd.f32 0.0, %v1064
      %v1066 = vpop.f32.mrb[0].mxu0
      %1067 = vmatprep.mubr.f32.mxu0 0.0
      %1068 = vmatmul.mubr.f32.gmra.mrb[0].mxu0 %v944
      %v1069 = vpop.f32.mrb[0].mxu0
      %v1070 = vadd.f32 0.0, %v1069
      %v1071 = vpop.f32.mrb[0].mxu0
      %1072 = vmatprep.mubr.f32.mxu0 0.0
      %1073 = vmatmul.mubr.f32.gmra.mrb[0].mxu0 %v947
      %v1074 = vpop.f32.mrb[0].mxu0
      %v1075 = vadd.f32 0.0, %v1074
      %v1076 = vpop.f32.mrb[0].mxu0
      %1077 = vmatprep.mubr.f32.mxu0 0.0
      %1078 = vmatmul.mubr.f32.gmra.mrb[0].mxu0 %v950
      %v1079 = vpop.f32.mrb[0].mxu0
      %v1080 = vadd.f32 0.0, %v1079
      %v1081 = vpop.f32.mrb[0].mxu0
      %1082 = vmatprep.mubr.f32.mxu0 0.0
      %1083 = vmatmul.mubr.f32.gmra.mrb[0].mxu0 %v953
      %v1084 = vpop.f32.mrb[0].mxu0
      %v1085 = vadd.f32 0.0, %v1084
      %v1086 = vpop.f32.mrb[0].mxu0
      %1087 = vmatprep.mubr.f32.mxu0 0.0
      %1088 = vmatmul.mubr.f32.gmra.mrb[0].mxu0 %v956
      %v1089 = vpop.f32.mrb[0].mxu0
      %v1090 = vadd.f32 0.0, %v1089
      %v1091 = vpop.f32.mrb[0].mxu0
      %1092 = vmatprep.mubr.f32.mxu0 0.0
      %1093 = vmatmul.mubr.f32.gmra.mrb[0].mxu0 %v959
      %v1094 = vpop.f32.mrb[0].mxu0
      %v1095 = vadd.f32 0.0, %v1094
      %v1096 = vpop.f32.mrb[0].mxu0
      %1097 = vmatprep.mubr.f32.mxu0 0.0
      %1098 = vmatmul.mubr.f32.gmra.mrb[0].mxu0 %v962
      %v1099 = vpop.f32.mrb[0].mxu0
      %v1100 = vadd.f32 0.0, %v1099
      %v1101 = vpop.f32.mrb[0].mxu0
      %1102 = vmatprep.mubr.f32.mxu0 0.0
      %1103 = vmatmul.mubr.f32.gmra.mrb[0].mxu0 %v965
      %v1104 = vpop.f32.mrb[0].mxu0
      %v1105 = vadd.f32 0.0, %v1104
      %v1106 = vpop.f32.mrb[0].mxu0
      %1107 = vmatprep.mubr.f32.mxu0 0.0
      %1108 = vmatmul.mubr.f32.gmra.mrb[0].mxu0 %v968
      %v1109 = vpop.f32.mrb[0].mxu0
      %v1110 = vadd.f32 0.0, %v1109
      %v1111 = vpop.f32.mrb[0].mxu0
      %1112 = vmatprep.mubr.f32.mxu0 0.0
      %1113 = vmatmul.mubr.f32.gmra.mrb[0].mxu0 %v971
      %v1114 = vpop.f32.mrb[0].mxu0
      %v1115 = vadd.f32 0.0, %v1114
      %v1116 = vpop.f32.mrb[0].mxu0
      %1117 = vmatprep.mubr.f32.mxu0 0.0
      %1118 = vmatmul.mubr.f32.gmra.mrb[0].mxu0 %v974
      %v1119 = vpop.f32.mrb[0].mxu0
      %v1120 = vadd.f32 0.0, %v1119
      %v1121 = vpop.f32.mrb[0].mxu0
      %1122 = vmatprep.mubr.f32.mxu0 0.0
      %1123 = vmatmul.mubr.f32.gmra.mrb[0].mxu0 %v977
      %v1124 = vpop.f32.mrb[0].mxu0
      %v1125 = vadd.f32 0.0, %v1124
      %v1126 = vpop.f32.mrb[0].mxu0
      %1127 = vdwg.mxu0
      %v1128 = vmul.f32 %v1050, %v674
      %v1129 = vmul.f32 %v1055, %v675
      %v1130 = vmul.f32 %v1060, %v676
      %v1131 = vmul.f32 %v1065, %v677
      %v1132 = vmul.f32 %v1070, %v678
      %v1133 = vmul.f32 %v1075, %v679
      %v1134 = vmul.f32 %v1080, %v680
      %v1135 = vmul.f32 %v1085, %v681
      %v1136 = vmul.f32 %v1090, %v682
      %v1137 = vmul.f32 %v1095, %v683
      %v1138 = vmul.f32 %v1100, %v684
      %v1139 = vmul.f32 %v1105, %v685
      %v1140 = vmul.f32 %v1110, %v686
      %v1141 = vmul.f32 %v1115, %v687
      %v1142 = vmul.f32 %v1120, %v688
      %v1143 = vmul.f32 %v1125, %v689
      %vm1144 = vcmask 72704
      %v1146 = vsel %vm1144, %v1128, 0
      %v1149 = vsel %vm1144, %v1129, 0
      %v1152 = vsel %vm1144, %v1130, 0
      %v1155 = vsel %vm1144, %v1131, 0
      %v1158 = vsel %vm1144, %v1132, 0
      %v1161 = vsel %vm1144, %v1133, 0
      %v1164 = vsel %vm1144, %v1134, 0
      %v1167 = vsel %vm1144, %v1135, 0
      %v1170 = vsel %vm1144, %v1136, 0
      %v1173 = vsel %vm1144, %v1137, 0
      %v1176 = vsel %vm1144, %v1138, 0
      %v1179 = vsel %vm1144, %v1139, 0
      %v1182 = vsel %vm1144, %v1140, 0
      %v1185 = vsel %vm1144, %v1141, 0
      %v1188 = vsel %vm1144, %v1142, 0
      %v1191 = vsel %vm1144, %v1143, 0
      %v1194 = vsel %vm1144, %v635, 0
      %1196 = vmatprep.subr.mxu0 0.0
      %1197 = vmatpush1.xpose.msra.mxu0 %v1194
      %1198 = vmatprep.subr.mxu0 0.0
      %1199 = vmatpush1.xpose.msra.mxu0 0.0
      %1200 = vmatprep.subr.mxu0 0.0
      %1201 = vmatpush1.xpose.msra.mxu0 0.0
      %1202 = vmatprep.subr.mxu0 0.0
      %1203 = vmatpush1.xpose.msra.mxu0 0.0
      %1204 = vmatprep.subr.mxu0 0.0
      %1205 = vmatpush1.xpose.msra.mxu0 0.0
      %1206 = vmatprep.subr.mxu0 0.0
      %1207 = vmatpush1.xpose.msra.mxu0 0.0
      %1208 = vmatprep.subr.mxu0 0.0
      %1209 = vmatpush1.xpose.msra.mxu0 0.0
      %1210 = vmatprep.subr.mxu0 0.0
      %1211 = vmatpush1.xpose.msra.mxu0 0.0
      %1212 = vmatprep.subr.mxu0 0.0
      %1213 = vmatpush1.xpose.msra.mxu0 0.0
      %1214 = vmatprep.subr.mxu0 0.0
      %1215 = vmatpush1.xpose.msra.mxu0 0.0
      %1216 = vmatprep.subr.mxu0 0.0
      %1217 = vmatpush1.xpose.msra.mxu0 0.0
      %1218 = vmatprep.subr.mxu0 0.0
      %1219 = vmatpush1.xpose.msra.mxu0 0.0
      %1220 = vmatprep.subr.mxu0 0.0
      %1221 = vmatpush1.xpose.msra.mxu0 0.0
      %1222 = vmatprep.subr.mxu0 0.0
      %1223 = vmatpush1.xpose.msra.mxu0 0.0
      %1224 = vmatprep.subr.mxu0 0.0
      %1225 = vmatpush1.xpose.msra.mxu0 0.0
      %1226 = vmatprep.subr.mxu0 0.0
      %1227 = vmatpush1.xpose.msra.mxu0 0.0
      %1228 = vmatprep.subr.mxu0 0.0
      %1229 = vmatpush1.xpose.msra.mxu0 0.0
      %1230 = vmatprep.subr.mxu0 0.0
      %1231 = vmatpush1.xpose.msra.mxu0 0.0
      %1232 = vmatprep.subr.mxu0 0.0
      %1233 = vmatpush1.xpose.msra.mxu0 0.0
      %1234 = vmatprep.subr.mxu0 0.0
      %1235 = vmatpush1.xpose.msra.mxu0 0.0
      %1236 = vmatprep.subr.mxu0 0.0
      %1237 = vmatpush1.xpose.msra.mxu0 0.0
      %1238 = vmatprep.subr.mxu0 0.0
      %1239 = vmatpush1.xpose.msra.mxu0 0.0
      %1240 = vmatprep.subr.mxu0 0.0
      %1241 = vmatpush1.xpose.msra.mxu0 0.0
      %1242 = vmatprep.subr.mxu0 0.0
      %1243 = vmatpush1.xpose.msra.mxu0 0.0
      %1244 = vmatprep.subr.mxu0 0.0
      %1245 = vmatpush1.xpose.msra.mxu0 0.0
      %1246 = vmatprep.subr.mxu0 0.0
      %1247 = vmatpush1.xpose.msra.mxu0 0.0
      %1248 = vmatprep.subr.mxu0 0.0
      %1249 = vmatpush1.xpose.msra.mxu0 0.0
      %1250 = vmatprep.subr.mxu0 0.0
      %1251 = vmatpush1.xpose.msra.mxu0 0.0
      %1252 = vmatprep.subr.mxu0 0.0
      %1253 = vmatpush1.xpose.msra.mxu0 0.0
      %1254 = vmatprep.subr.mxu0 0.0
      %1255 = vmatpush1.xpose.msra.mxu0 0.0
      %1256 = vmatprep.subr.mxu0 0.0
      %1257 = vmatpush1.xpose.msra.mxu0 0.0
      %1258 = vmatprep.subr.mxu0 0.0
      %1259 = vmatpush1.xpose.msra.mxu0 0.0
      %1260 = vmatprep.mubr.f32.mxu0 0.0
      %1261 = vmatmul.mubr.f32.gmra.mrb[0].mxu0 %v1146
      %v1262 = vpop.f32.mrb[0].mxu0
      %v1263 = vadd.f32 0.0, %v1262
      %v1264 = vpop.f32.mrb[0].mxu0
      %1265 = vmatprep.mubr.f32.mxu0 0.0
      %1266 = vmatmul.mubr.f32.gmra.mrb[0].mxu0 %v1149
      %v1267 = vpop.f32.mrb[0].mxu0
      %v1268 = vadd.f32 0.0, %v1267
      %v1269 = vpop.f32.mrb[0].mxu0
      %1270 = vmatprep.mubr.f32.mxu0 0.0
      %1271 = vmatmul.mubr.f32.gmra.mrb[0].mxu0 %v1152
      %v1272 = vpop.f32.mrb[0].mxu0
      %v1273 = vadd.f32 0.0, %v1272
      %v1274 = vpop.f32.mrb[0].mxu0
      %1275 = vmatprep.mubr.f32.mxu0 0.0
      %1276 = vmatmul.mubr.f32.gmra.mrb[0].mxu0 %v1155
      %v1277 = vpop.f32.mrb[0].mxu0
      %v1278 = vadd.f32 0.0, %v1277
      %v1279 = vpop.f32.mrb[0].mxu0
      %1280 = vmatprep.mubr.f32.mxu0 0.0
      %1281 = vmatmul.mubr.f32.gmra.mrb[0].mxu0 %v1158
      %v1282 = vpop.f32.mrb[0].mxu0
      %v1283 = vadd.f32 0.0, %v1282
      %v1284 = vpop.f32.mrb[0].mxu0
      %1285 = vmatprep.mubr.f32.mxu0 0.0
      %1286 = vmatmul.mubr.f32.gmra.mrb[0].mxu0 %v1161
      %v1287 = vpop.f32.mrb[0].mxu0
      %v1288 = vadd.f32 0.0, %v1287
      %v1289 = vpop.f32.mrb[0].mxu0
      %1290 = vmatprep.mubr.f32.mxu0 0.0
      %1291 = vmatmul.mubr.f32.gmra.mrb[0].mxu0 %v1164
      %v1292 = vpop.f32.mrb[0].mxu0
      %v1293 = vadd.f32 0.0, %v1292
      %v1294 = vpop.f32.mrb[0].mxu0
      %1295 = vmatprep.mubr.f32.mxu0 0.0
      %1296 = vmatmul.mubr.f32.gmra.mrb[0].mxu0 %v1167
      %v1297 = vpop.f32.mrb[0].mxu0
      %v1298 = vadd.f32 0.0, %v1297
      %v1299 = vpop.f32.mrb[0].mxu0
      %1300 = vmatprep.mubr.f32.mxu0 0.0
      %1301 = vmatmul.mubr.f32.gmra.mrb[0].mxu0 %v1170
      %v1302 = vpop.f32.mrb[0].mxu0
      %v1303 = vadd.f32 0.0, %v1302
      %v1304 = vpop.f32.mrb[0].mxu0
      %1305 = vmatprep.mubr.f32.mxu0 0.0
      %1306 = vmatmul.mubr.f32.gmra.mrb[0].mxu0 %v1173
      %v1307 = vpop.f32.mrb[0].mxu0
      %v1308 = vadd.f32 0.0, %v1307
      %v1309 = vpop.f32.mrb[0].mxu0
      %1310 = vmatprep.mubr.f32.mxu0 0.0
      %1311 = vmatmul.mubr.f32.gmra.mrb[0].mxu0 %v1176
      %v1312 = vpop.f32.mrb[0].mxu0
      %v1313 = vadd.f32 0.0, %v1312
      %v1314 = vpop.f32.mrb[0].mxu0
      %1315 = vmatprep.mubr.f32.mxu0 0.0
      %1316 = vmatmul.mubr.f32.gmra.mrb[0].mxu0 %v1179
      %v1317 = vpop.f32.mrb[0].mxu0
      %v1318 = vadd.f32 0.0, %v1317
      %v1319 = vpop.f32.mrb[0].mxu0
      %1320 = vmatprep.mubr.f32.mxu0 0.0
      %1321 = vmatmul.mubr.f32.gmra.mrb[0].mxu0 %v1182
      %v1322 = vpop.f32.mrb[0].mxu0
      %v1323 = vadd.f32 0.0, %v1322
      %v1324 = vpop.f32.mrb[0].mxu0
      %1325 = vmatprep.mubr.f32.mxu0 0.0
      %1326 = vmatmul.mubr.f32.gmra.mrb[0].mxu0 %v1185
      %v1327 = vpop.f32.mrb[0].mxu0
      %v1328 = vadd.f32 0.0, %v1327
      %v1329 = vpop.f32.mrb[0].mxu0
      %1330 = vmatprep.mubr.f32.mxu0 0.0
      %1331 = vmatmul.mubr.f32.gmra.mrb[0].mxu0 %v1188
      %v1332 = vpop.f32.mrb[0].mxu0
      %v1333 = vadd.f32 0.0, %v1332
      %v1334 = vpop.f32.mrb[0].mxu0
      %1335 = vmatprep.mubr.f32.mxu0 0.0
      %1336 = vmatmul.mubr.f32.gmra.mrb[0].mxu0 %v1191
      %v1337 = vpop.f32.mrb[0].mxu0
      %v1338 = vadd.f32 0.0, %v1337
      %v1339 = vpop.f32.mrb[0].mxu0
      %1340 = vdwg.mxu0
      %v1341 = vmul.f32 %v1050, %v690
      %v1342 = vmul.f32 %v1055, %v691
      %v1343 = vmul.f32 %v1060, %v692
      %v1344 = vmul.f32 %v1065, %v693
      %v1345 = vmul.f32 %v1070, %v694
      %v1346 = vmul.f32 %v1075, %v695
      %v1347 = vmul.f32 %v1080, %v696
      %v1348 = vmul.f32 %v1085, %v697
      %v1349 = vmul.f32 %v1090, %v698
      %v1350 = vmul.f32 %v1095, %v699
      %v1351 = vmul.f32 %v1100, %v700
      %v1352 = vmul.f32 %v1105, %v701
      %v1353 = vmul.f32 %v1110, %v702
      %v1354 = vmul.f32 %v1115, %v703
      %v1355 = vmul.f32 %v1120, %v704
      %v1356 = vmul.f32 %v1125, %v705
      %v1358 = vsel %vm1144, %v1341, 0
      %v1361 = vsel %vm1144, %v1342, 0
      %v1364 = vsel %vm1144, %v1343, 0
      %v1367 = vsel %vm1144, %v1344, 0
      %v1370 = vsel %vm1144, %v1345, 0
      %v1373 = vsel %vm1144, %v1346, 0
      %v1376 = vsel %vm1144, %v1347, 0
      %v1379 = vsel %vm1144, %v1348, 0
      %v1382 = vsel %vm1144, %v1349, 0
      %v1385 = vsel %vm1144, %v1350, 0
      %v1388 = vsel %vm1144, %v1351, 0
      %v1391 = vsel %vm1144, %v1352, 0
      %v1394 = vsel %vm1144, %v1353, 0
      %v1397 = vsel %vm1144, %v1354, 0
      %v1400 = vsel %vm1144, %v1355, 0
      %v1403 = vsel %vm1144, %v1356, 0
      %1405 = vmatprep.subr.mxu0 0.0
      %1406 = vmatpush1.xpose.msra.mxu0 %v1194
      %1407 = vmatprep.subr.mxu0 0.0
      %1408 = vmatpush1.xpose.msra.mxu0 0.0
      %1409 = vmatprep.subr.mxu0 0.0
      %1410 = vmatpush1.xpose.msra.mxu0 0.0
      %1411 = vmatprep.subr.mxu0 0.0
      %1412 = vmatpush1.xpose.msra.mxu0 0.0
      %1413 = vmatprep.subr.mxu0 0.0
      %1414 = vmatpush1.xpose.msra.mxu0 0.0
      %1415 = vmatprep.subr.mxu0 0.0
      %1416 = vmatpush1.xpose.msra.mxu0 0.0
      %1417 = vmatprep.subr.mxu0 0.0
      %1418 = vmatpush1.xpose.msra.mxu0 0.0
      %1419 = vmatprep.subr.mxu0 0.0
      %1420 = vmatpush1.xpose.msra.mxu0 0.0
      %1421 = vmatprep.subr.mxu0 0.0
      %1422 = vmatpush1.xpose.msra.mxu0 0.0
      %1423 = vmatprep.subr.mxu0 0.0
      %1424 = vmatpush1.xpose.msra.mxu0 0.0
      %1425 = vmatprep.subr.mxu0 0.0
      %1426 = vmatpush1.xpose.msra.mxu0 0.0
      %1427 = vmatprep.subr.mxu0 0.0
      %1428 = vmatpush1.xpose.msra.mxu0 0.0
      %1429 = vmatprep.subr.mxu0 0.0
      %1430 = vmatpush1.xpose.msra.mxu0 0.0
      %1431 = vmatprep.subr.mxu0 0.0
      %1432 = vmatpush1.xpose.msra.mxu0 0.0
      %1433 = vmatprep.subr.mxu0 0.0
      %1434 = vmatpush1.xpose.msra.mxu0 0.0
      %1435 = vmatprep.subr.mxu0 0.0
      %1436 = vmatpush1.xpose.msra.mxu0 0.0
      %1437 = vmatprep.subr.mxu0 0.0
      %1438 = vmatpush1.xpose.msra.mxu0 0.0
      %1439 = vmatprep.subr.mxu0 0.0
      %1440 = vmatpush1.xpose.msra.mxu0 0.0
      %1441 = vmatprep.subr.mxu0 0.0
      %1442 = vmatpush1.xpose.msra.mxu0 0.0
      %1443 = vmatprep.subr.mxu0 0.0
      %1444 = vmatpush1.xpose.msra.mxu0 0.0
      %1445 = vmatprep.subr.mxu0 0.0
      %1446 = vmatpush1.xpose.msra.mxu0 0.0
      %1447 = vmatprep.subr.mxu0 0.0
      %1448 = vmatpush1.xpose.msra.mxu0 0.0
      %1449 = vmatprep.subr.mxu0 0.0
      %1450 = vmatpush1.xpose.msra.mxu0 0.0
      %1451 = vmatprep.subr.mxu0 0.0
      %1452 = vmatpush1.xpose.msra.mxu0 0.0
      %1453 = vmatprep.subr.mxu0 0.0
      %1454 = vmatpush1.xpose.msra.mxu0 0.0
      %1455 = vmatprep.subr.mxu0 0.0
      %1456 = vmatpush1.xpose.msra.mxu0 0.0
      %1457 = vmatprep.subr.mxu0 0.0
      %1458 = vmatpush1.xpose.msra.mxu0 0.0
      %1459 = vmatprep.subr.mxu0 0.0
      %1460 = vmatpush1.xpose.msra.mxu0 0.0
      %1461 = vmatprep.subr.mxu0 0.0
      %1462 = vmatpush1.xpose.msra.mxu0 0.0
      %1463 = vmatprep.subr.mxu0 0.0
      %1464 = vmatpush1.xpose.msra.mxu0 0.0
      %1465 = vmatprep.subr.mxu0 0.0
      %1466 = vmatpush1.xpose.msra.mxu0 0.0
      %1467 = vmatprep.subr.mxu0 0.0
      %1468 = vmatpush1.xpose.msra.mxu0 0.0
      %1469 = vmatprep.mubr.f32.mxu0 0.0
      %1470 = vmatmul.mubr.f32.gmra.mrb[0].mxu0 %v1358
      %v1471 = vpop.f32.mrb[0].mxu0
      %v1472 = vadd.f32 0.0, %v1471
      %v1473 = vpop.f32.mrb[0].mxu0
      %1474 = vmatprep.mubr.f32.mxu0 0.0
      %1475 = vmatmul.mubr.f32.gmra.mrb[0].mxu0 %v1361
      %v1476 = vpop.f32.mrb[0].mxu0
      %v1477 = vadd.f32 0.0, %v1476
      %v1478 = vpop.f32.mrb[0].mxu0
      %1479 = vmatprep.mubr.f32.mxu0 0.0
      %1480 = vmatmul.mubr.f32.gmra.mrb[0].mxu0 %v1364
      %v1481 = vpop.f32.mrb[0].mxu0
      %v1482 = vadd.f32 0.0, %v1481
      %v1483 = vpop.f32.mrb[0].mxu0
      %1484 = vmatprep.mubr.f32.mxu0 0.0
      %1485 = vmatmul.mubr.f32.gmra.mrb[0].mxu0 %v1367
      %v1486 = vpop.f32.mrb[0].mxu0
      %v1487 = vadd.f32 0.0, %v1486
      %v1488 = vpop.f32.mrb[0].mxu0
      %1489 = vmatprep.mubr.f32.mxu0 0.0
      %1490 = vmatmul.mubr.f32.gmra.mrb[0].mxu0 %v1370
      %v1491 = vpop.f32.mrb[0].mxu0
      %v1492 = vadd.f32 0.0, %v1491
      %v1493 = vpop.f32.mrb[0].mxu0
      %1494 = vmatprep.mubr.f32.mxu0 0.0
      %1495 = vmatmul.mubr.f32.gmra.mrb[0].mxu0 %v1373
      %v1496 = vpop.f32.mrb[0].mxu0
      %v1497 = vadd.f32 0.0, %v1496
      %v1498 = vpop.f32.mrb[0].mxu0
      %1499 = vmatprep.mubr.f32.mxu0 0.0
      %1500 = vmatmul.mubr.f32.gmra.mrb[0].mxu0 %v1376
      %v1501 = vpop.f32.mrb[0].mxu0
      %v1502 = vadd.f32 0.0, %v1501
      %v1503 = vpop.f32.mrb[0].mxu0
      %1504 = vmatprep.mubr.f32.mxu0 0.0
      %1505 = vmatmul.mubr.f32.gmra.mrb[0].mxu0 %v1379
      %v1506 = vpop.f32.mrb[0].mxu0
      %v1507 = vadd.f32 0.0, %v1506
      %v1508 = vpop.f32.mrb[0].mxu0
      %1509 = vmatprep.mubr.f32.mxu0 0.0
      %1510 = vmatmul.mubr.f32.gmra.mrb[0].mxu0 %v1382
      %v1511 = vpop.f32.mrb[0].mxu0
      %v1512 = vadd.f32 0.0, %v1511
      %v1513 = vpop.f32.mrb[0].mxu0
      %1514 = vmatprep.mubr.f32.mxu0 0.0
      %1515 = vmatmul.mubr.f32.gmra.mrb[0].mxu0 %v1385
      %v1516 = vpop.f32.mrb[0].mxu0
      %v1517 = vadd.f32 0.0, %v1516
      %v1518 = vpop.f32.mrb[0].mxu0
      %1519 = vmatprep.mubr.f32.mxu0 0.0
      %1520 = vmatmul.mubr.f32.gmra.mrb[0].mxu0 %v1388
      %v1521 = vpop.f32.mrb[0].mxu0
      %v1522 = vadd.f32 0.0, %v1521
      %v1523 = vpop.f32.mrb[0].mxu0
      %1524 = vmatprep.mubr.f32.mxu0 0.0
      %1525 = vmatmul.mubr.f32.gmra.mrb[0].mxu0 %v1391
      %v1526 = vpop.f32.mrb[0].mxu0
      %v1527 = vadd.f32 0.0, %v1526
      %v1528 = vpop.f32.mrb[0].mxu0
      %1529 = vmatprep.mubr.f32.mxu0 0.0
      %1530 = vmatmul.mubr.f32.gmra.mrb[0].mxu0 %v1394
      %v1531 = vpop.f32.mrb[0].mxu0
      %v1532 = vadd.f32 0.0, %v1531
      %v1533 = vpop.f32.mrb[0].mxu0
      %1534 = vmatprep.mubr.f32.mxu0 0.0
      %1535 = vmatmul.mubr.f32.gmra.mrb[0].mxu0 %v1397
      %v1536 = vpop.f32.mrb[0].mxu0
      %v1537 = vadd.f32 0.0, %v1536
      %v1538 = vpop.f32.mrb[0].mxu0
      %1539 = vmatprep.mubr.f32.mxu0 0.0
      %1540 = vmatmul.mubr.f32.gmra.mrb[0].mxu0 %v1400
      %v1541 = vpop.f32.mrb[0].mxu0
      %v1542 = vadd.f32 0.0, %v1541
      %v1543 = vpop.f32.mrb[0].mxu0
      %1544 = vmatprep.mubr.f32.mxu0 0.0
      %1545 = vmatmul.mubr.f32.gmra.mrb[0].mxu0 %v1403
      %v1546 = vpop.f32.mrb[0].mxu0
      %v1547 = vadd.f32 0.0, %v1546
      %v1548 = vpop.f32.mrb[0].mxu0
      %1549 = vdwg.mxu0
      %v1551 = vsel %vm1144, %v674, 0
      %v1554 = vsel %vm1144, %v675, 0
      %v1557 = vsel %vm1144, %v676, 0
      %v1560 = vsel %vm1144, %v677, 0
      %v1563 = vsel %vm1144, %v678, 0
      %v1566 = vsel %vm1144, %v679, 0
      %v1569 = vsel %vm1144, %v680, 0
      %v1572 = vsel %vm1144, %v681, 0
      %v1575 = vsel %vm1144, %v682, 0
      %v1578 = vsel %vm1144, %v683, 0
      %v1581 = vsel %vm1144, %v684, 0
      %v1584 = vsel %vm1144, %v685, 0
      %v1587 = vsel %vm1144, %v686, 0
      %v1590 = vsel %vm1144, %v687, 0
      %v1593 = vsel %vm1144, %v688, 0
      %v1596 = vsel %vm1144, %v689, 0
      %vm1598 = vcmask 1040384
      %v1600 = vsel %vm1598, %v637, 0
      %1602 = vmatprep.subr.mxu0 0.0
      %1603 = vmatpush1.msra.mxu0 %v636
      %1604 = vmatprep.subr.mxu0 0.0
      %1605 = vmatpush1.msra.mxu0 %v1600
      %1606 = vmatprep.subr.mxu0 0.0
      %1607 = vmatpush1.msra.mxu0 0.0
      %1608 = vmatprep.subr.mxu0 0.0
      %1609 = vmatpush1.msra.mxu0 0.0
      %1610 = vmatprep.subr.mxu0 0.0
      %1611 = vmatpush1.msra.mxu0 0.0
      %1612 = vmatprep.subr.mxu0 0.0
      %1613 = vmatpush1.msra.mxu0 0.0
      %1614 = vmatprep.subr.mxu0 0.0
      %1615 = vmatpush1.msra.mxu0 0.0
      %1616 = vmatprep.subr.mxu0 0.0
      %1617 = vmatpush1.msra.mxu0 0.0
      %1618 = vmatprep.subr.mxu0 0.0
      %1619 = vmatpush1.msra.mxu0 0.0
      %1620 = vmatprep.subr.mxu0 0.0
      %1621 = vmatpush1.msra.mxu0 0.0
      %1622 = vmatprep.subr.mxu0 0.0
      %1623 = vmatpush1.msra.mxu0 0.0
      %1624 = vmatprep.subr.mxu0 0.0
      %1625 = vmatpush1.msra.mxu0 0.0
      %1626 = vmatprep.subr.mxu0 0.0
      %1627 = vmatpush1.msra.mxu0 0.0
      %1628 = vmatprep.subr.mxu0 0.0
      %1629 = vmatpush1.msra.mxu0 0.0
      %1630 = vmatprep.subr.mxu0 0.0
      %1631 = vmatpush1.msra.mxu0 0.0
      %1632 = vmatprep.subr.mxu0 0.0
      %1633 = vmatpush1.msra.mxu0 0.0
      %1634 = vmatprep.subr.mxu0 0.0
      %1635 = vmatpush1.msra.mxu0 0.0
      %1636 = vmatprep.subr.mxu0 0.0
      %1637 = vmatpush1.msra.mxu0 0.0
      %1638 = vmatprep.subr.mxu0 0.0
      %1639 = vmatpush1.msra.mxu0 0.0
      %1640 = vmatprep.subr.mxu0 0.0
      %1641 = vmatpush1.msra.mxu0 0.0
      %1642 = vmatprep.subr.mxu0 0.0
      %1643 = vmatpush1.msra.mxu0 0.0
      %1644 = vmatprep.subr.mxu0 0.0
      %1645 = vmatpush1.msra.mxu0 0.0
      %1646 = vmatprep.subr.mxu0 0.0
      %1647 = vmatpush1.msra.mxu0 0.0
      %1648 = vmatprep.subr.mxu0 0.0
      %1649 = vmatpush1.msra.mxu0 0.0
      %1650 = vmatprep.subr.mxu0 0.0
      %1651 = vmatpush1.msra.mxu0 0.0
      %1652 = vmatprep.subr.mxu0 0.0
      %1653 = vmatpush1.msra.mxu0 0.0
      %1654 = vmatprep.subr.mxu0 0.0
      %1655 = vmatpush1.msra.mxu0 0.0
      %1656 = vmatprep.subr.mxu0 0.0
      %1657 = vmatpush1.msra.mxu0 0.0
      %1658 = vmatprep.subr.mxu0 0.0
      %1659 = vmatpush1.msra.mxu0 0.0
      %1660 = vmatprep.subr.mxu0 0.0
      %1661 = vmatpush1.msra.mxu0 0.0
      %1662 = vmatprep.subr.mxu0 0.0
      %1663 = vmatpush1.msra.mxu0 0.0
      %1664 = vmatprep.subr.mxu0 0.0
      %1665 = vmatpush1.msra.mxu0 0.0
      %1666 = vmatprep.mubr.f32.mxu0 0.0
      %1667 = vmatmul.mubr.f32.gmra.mrb[0].mxu0 %v1551
      %v1668 = vpop.f32.mrb[0].mxu0
      %v1669 = vadd.f32 0.0, %v1668
      %v1670 = vpop.f32.mrb[0].mxu0
      %1671 = vmatprep.mubr.f32.mxu0 0.0
      %1672 = vmatmul.mubr.f32.gmra.mrb[0].mxu0 %v1554
      %v1673 = vpop.f32.mrb[0].mxu0
      %v1674 = vadd.f32 0.0, %v1673
      %v1675 = vpop.f32.mrb[0].mxu0
      %1676 = vmatprep.mubr.f32.mxu0 0.0
      %1677 = vmatmul.mubr.f32.gmra.mrb[0].mxu0 %v1557
      %v1678 = vpop.f32.mrb[0].mxu0
      %v1679 = vadd.f32 0.0, %v1678
      %v1680 = vpop.f32.mrb[0].mxu0
      %1681 = vmatprep.mubr.f32.mxu0 0.0
      %1682 = vmatmul.mubr.f32.gmra.mrb[0].mxu0 %v1560
      %v1683 = vpop.f32.mrb[0].mxu0
      %v1684 = vadd.f32 0.0, %v1683
      %v1685 = vpop.f32.mrb[0].mxu0
      %1686 = vmatprep.mubr.f32.mxu0 0.0
      %1687 = vmatmul.mubr.f32.gmra.mrb[0].mxu0 %v1563
      %v1688 = vpop.f32.mrb[0].mxu0
      %v1689 = vadd.f32 0.0, %v1688
      %v1690 = vpop.f32.mrb[0].mxu0
      %1691 = vmatprep.mubr.f32.mxu0 0.0
      %1692 = vmatmul.mubr.f32.gmra.mrb[0].mxu0 %v1566
      %v1693 = vpop.f32.mrb[0].mxu0
      %v1694 = vadd.f32 0.0, %v1693
      %v1695 = vpop.f32.mrb[0].mxu0
      %1696 = vmatprep.mubr.f32.mxu0 0.0
      %1697 = vmatmul.mubr.f32.gmra.mrb[0].mxu0 %v1569
      %v1698 = vpop.f32.mrb[0].mxu0
      %v1699 = vadd.f32 0.0, %v1698
      %v1700 = vpop.f32.mrb[0].mxu0
      %1701 = vmatprep.mubr.f32.mxu0 0.0
      %1702 = vmatmul.mubr.f32.gmra.mrb[0].mxu0 %v1572
      %v1703 = vpop.f32.mrb[0].mxu0
      %v1704 = vadd.f32 0.0, %v1703
      %v1705 = vpop.f32.mrb[0].mxu0
      %1706 = vmatprep.mubr.f32.mxu0 0.0
      %1707 = vmatmul.mubr.f32.gmra.mrb[0].mxu0 %v1575
      %v1708 = vpop.f32.mrb[0].mxu0
      %v1709 = vadd.f32 0.0, %v1708
      %v1710 = vpop.f32.mrb[0].mxu0
      %1711 = vmatprep.mubr.f32.mxu0 0.0
      %1712 = vmatmul.mubr.f32.gmra.mrb[0].mxu0 %v1578
      %v1713 = vpop.f32.mrb[0].mxu0
      %v1714 = vadd.f32 0.0, %v1713
      %v1715 = vpop.f32.mrb[0].mxu0
      %1716 = vmatprep.mubr.f32.mxu0 0.0
      %1717 = vmatmul.mubr.f32.gmra.mrb[0].mxu0 %v1581
      %v1718 = vpop.f32.mrb[0].mxu0
      %v1719 = vadd.f32 0.0, %v1718
      %v1720 = vpop.f32.mrb[0].mxu0
      %1721 = vmatprep.mubr.f32.mxu0 0.0
      %1722 = vmatmul.mubr.f32.gmra.mrb[0].mxu0 %v1584
      %v1723 = vpop.f32.mrb[0].mxu0
      %v1724 = vadd.f32 0.0, %v1723
      %v1725 = vpop.f32.mrb[0].mxu0
      %1726 = vmatprep.mubr.f32.mxu0 0.0
      %1727 = vmatmul.mubr.f32.gmra.mrb[0].mxu0 %v1587
      %v1728 = vpop.f32.mrb[0].mxu0
      %v1729 = vadd.f32 0.0, %v1728
      %v1730 = vpop.f32.mrb[0].mxu0
      %1731 = vmatprep.mubr.f32.mxu0 0.0
      %1732 = vmatmul.mubr.f32.gmra.mrb[0].mxu0 %v1590
      %v1733 = vpop.f32.mrb[0].mxu0
      %v1734 = vadd.f32 0.0, %v1733
      %v1735 = vpop.f32.mrb[0].mxu0
      %1736 = vmatprep.mubr.f32.mxu0 0.0
      %1737 = vmatmul.mubr.f32.gmra.mrb[0].mxu0 %v1593
      %v1738 = vpop.f32.mrb[0].mxu0
      %v1739 = vadd.f32 0.0, %v1738
      %v1740 = vpop.f32.mrb[0].mxu0
      %1741 = vmatprep.mubr.f32.mxu0 0.0
      %1742 = vmatmul.mubr.f32.gmra.mrb[0].mxu0 %v1596
      %v1743 = vpop.f32.mrb[0].mxu0
      %v1744 = vadd.f32 0.0, %v1743
      %v1745 = vpop.f32.mrb[0].mxu0
      %1746 = vdwg.mxu0
      %v1748 = vsel %vm1144, %v690, 0
      %v1751 = vsel %vm1144, %v691, 0
      %v1754 = vsel %vm1144, %v692, 0
      %v1757 = vsel %vm1144, %v693, 0
      %v1760 = vsel %vm1144, %v694, 0
      %v1763 = vsel %vm1144, %v695, 0
      %v1766 = vsel %vm1144, %v696, 0
      %v1769 = vsel %vm1144, %v697, 0
      %v1772 = vsel %vm1144, %v698, 0
      %v1775 = vsel %vm1144, %v699, 0
      %v1778 = vsel %vm1144, %v700, 0
      %v1781 = vsel %vm1144, %v701, 0
      %v1784 = vsel %vm1144, %v702, 0
      %v1787 = vsel %vm1144, %v703, 0
      %v1790 = vsel %vm1144, %v704, 0
      %v1793 = vsel %vm1144, %v705, 0
      %v1796 = vsel %vm1598, %v639, 0
      %1798 = vmatprep.subr.mxu0 0.0
      %1799 = vmatpush1.msra.mxu0 %v638
      %1800 = vmatprep.subr.mxu0 0.0
      %1801 = vmatpush1.msra.mxu0 %v1796
      %1802 = vmatprep.subr.mxu0 0.0
      %1803 = vmatpush1.msra.mxu0 0.0
      %1804 = vmatprep.subr.mxu0 0.0
      %1805 = vmatpush1.msra.mxu0 0.0
      %1806 = vmatprep.subr.mxu0 0.0
      %1807 = vmatpush1.msra.mxu0 0.0
      %1808 = vmatprep.subr.mxu0 0.0
      %1809 = vmatpush1.msra.mxu0 0.0
      %1810 = vmatprep.subr.mxu0 0.0
      %1811 = vmatpush1.msra.mxu0 0.0
      %1812 = vmatprep.subr.mxu0 0.0
      %1813 = vmatpush1.msra.mxu0 0.0
      %1814 = vmatprep.subr.mxu0 0.0
      %1815 = vmatpush1.msra.mxu0 0.0
      %1816 = vmatprep.subr.mxu0 0.0
      %1817 = vmatpush1.msra.mxu0 0.0
      %1818 = vmatprep.subr.mxu0 0.0
      %1819 = vmatpush1.msra.mxu0 0.0
      %1820 = vmatprep.subr.mxu0 0.0
      %1821 = vmatpush1.msra.mxu0 0.0
      %1822 = vmatprep.subr.mxu0 0.0
      %1823 = vmatpush1.msra.mxu0 0.0
      %1824 = vmatprep.subr.mxu0 0.0
      %1825 = vmatpush1.msra.mxu0 0.0
      %1826 = vmatprep.subr.mxu0 0.0
      %1827 = vmatpush1.msra.mxu0 0.0
      %1828 = vmatprep.subr.mxu0 0.0
      %1829 = vmatpush1.msra.mxu0 0.0
      %1830 = vmatprep.subr.mxu0 0.0
      %1831 = vmatpush1.msra.mxu0 0.0
      %1832 = vmatprep.subr.mxu0 0.0
      %1833 = vmatpush1.msra.mxu0 0.0
      %1834 = vmatprep.subr.mxu0 0.0
      %1835 = vmatpush1.msra.mxu0 0.0
      %1836 = vmatprep.subr.mxu0 0.0
      %1837 = vmatpush1.msra.mxu0 0.0
      %1838 = vmatprep.subr.mxu0 0.0
      %1839 = vmatpush1.msra.mxu0 0.0
      %1840 = vmatprep.subr.mxu0 0.0
      %1841 = vmatpush1.msra.mxu0 0.0
      %1842 = vmatprep.subr.mxu0 0.0
      %1843 = vmatpush1.msra.mxu0 0.0
      %1844 = vmatprep.subr.mxu0 0.0
      %1845 = vmatpush1.msra.mxu0 0.0
      %1846 = vmatprep.subr.mxu0 0.0
      %1847 = vmatpush1.msra.mxu0 0.0
      %1848 = vmatprep.subr.mxu0 0.0
      %1849 = vmatpush1.msra.mxu0 0.0
      %1850 = vmatprep.subr.mxu0 0.0
      %1851 = vmatpush1.msra.mxu0 0.0
      %1852 = vmatprep.subr.mxu0 0.0
      %1853 = vmatpush1.msra.mxu0 0.0
      %1854 = vmatprep.subr.mxu0 0.0
      %1855 = vmatpush1.msra.mxu0 0.0
      %1856 = vmatprep.subr.mxu0 0.0
      %1857 = vmatpush1.msra.mxu0 0.0
      %1858 = vmatprep.subr.mxu0 0.0
      %1859 = vmatpush1.msra.mxu0 0.0
      %1860 = vmatprep.subr.mxu0 0.0
      %1861 = vmatpush1.msra.mxu0 0.0
      %1862 = vmatprep.mubr.f32.mxu0 0.0
      %1863 = vmatmul.mubr.f32.gmra.mrb[0].mxu0 %v1748
      %v1864 = vpop.f32.mrb[0].mxu0
      %v1865 = vadd.f32 0.0, %v1864
      %v1866 = vpop.f32.mrb[0].mxu0
      %1867 = vmatprep.mubr.f32.mxu0 0.0
      %1868 = vmatmul.mubr.f32.gmra.mrb[0].mxu0 %v1751
      %v1869 = vpop.f32.mrb[0].mxu0
      %v1870 = vadd.f32 0.0, %v1869
      %v1871 = vpop.f32.mrb[0].mxu0
      %1872 = vmatprep.mubr.f32.mxu0 0.0
      %1873 = vmatmul.mubr.f32.gmra.mrb[0].mxu0 %v1754
      %v1874 = vpop.f32.mrb[0].mxu0
      %v1875 = vadd.f32 0.0, %v1874
      %v1876 = vpop.f32.mrb[0].mxu0
      %1877 = vmatprep.mubr.f32.mxu0 0.0
      %1878 = vmatmul.mubr.f32.gmra.mrb[0].mxu0 %v1757
      %v1879 = vpop.f32.mrb[0].mxu0
      %v1880 = vadd.f32 0.0, %v1879
      %v1881 = vpop.f32.mrb[0].mxu0
      %1882 = vmatprep.mubr.f32.mxu0 0.0
      %1883 = vmatmul.mubr.f32.gmra.mrb[0].mxu0 %v1760
      %v1884 = vpop.f32.mrb[0].mxu0
      %v1885 = vadd.f32 0.0, %v1884
      %v1886 = vpop.f32.mrb[0].mxu0
      %1887 = vmatprep.mubr.f32.mxu0 0.0
      %1888 = vmatmul.mubr.f32.gmra.mrb[0].mxu0 %v1763
      %v1889 = vpop.f32.mrb[0].mxu0
      %v1890 = vadd.f32 0.0, %v1889
      %v1891 = vpop.f32.mrb[0].mxu0
      %1892 = vmatprep.mubr.f32.mxu0 0.0
      %1893 = vmatmul.mubr.f32.gmra.mrb[0].mxu0 %v1766
      %v1894 = vpop.f32.mrb[0].mxu0
      %v1895 = vadd.f32 0.0, %v1894
      %v1896 = vpop.f32.mrb[0].mxu0
      %1897 = vmatprep.mubr.f32.mxu0 0.0
      %1898 = vmatmul.mubr.f32.gmra.mrb[0].mxu0 %v1769
      %v1899 = vpop.f32.mrb[0].mxu0
      %v1900 = vadd.f32 0.0, %v1899
      %v1901 = vpop.f32.mrb[0].mxu0
      %1902 = vmatprep.mubr.f32.mxu0 0.0
      %1903 = vmatmul.mubr.f32.gmra.mrb[0].mxu0 %v1772
      %v1904 = vpop.f32.mrb[0].mxu0
      %v1905 = vadd.f32 0.0, %v1904
      %v1906 = vpop.f32.mrb[0].mxu0
      %1907 = vmatprep.mubr.f32.mxu0 0.0
      %1908 = vmatmul.mubr.f32.gmra.mrb[0].mxu0 %v1775
      %v1909 = vpop.f32.mrb[0].mxu0
      %v1910 = vadd.f32 0.0, %v1909
      %v1911 = vpop.f32.mrb[0].mxu0
      %1912 = vmatprep.mubr.f32.mxu0 0.0
      %1913 = vmatmul.mubr.f32.gmra.mrb[0].mxu0 %v1778
      %v1914 = vpop.f32.mrb[0].mxu0
      %v1915 = vadd.f32 0.0, %v1914
      %v1916 = vpop.f32.mrb[0].mxu0
      %1917 = vmatprep.mubr.f32.mxu0 0.0
      %1918 = vmatmul.mubr.f32.gmra.mrb[0].mxu0 %v1781
      %v1919 = vpop.f32.mrb[0].mxu0
      %v1920 = vadd.f32 0.0, %v1919
      %v1921 = vpop.f32.mrb[0].mxu0
      %1922 = vmatprep.mubr.f32.mxu0 0.0
      %1923 = vmatmul.mubr.f32.gmra.mrb[0].mxu0 %v1784
      %v1924 = vpop.f32.mrb[0].mxu0
      %v1925 = vadd.f32 0.0, %v1924
      %v1926 = vpop.f32.mrb[0].mxu0
      %1927 = vmatprep.mubr.f32.mxu0 0.0
      %1928 = vmatmul.mubr.f32.gmra.mrb[0].mxu0 %v1787
      %v1929 = vpop.f32.mrb[0].mxu0
      %v1930 = vadd.f32 0.0, %v1929
      %v1931 = vpop.f32.mrb[0].mxu0
      %1932 = vmatprep.mubr.f32.mxu0 0.0
      %1933 = vmatmul.mubr.f32.gmra.mrb[0].mxu0 %v1790
      %v1934 = vpop.f32.mrb[0].mxu0
      %v1935 = vadd.f32 0.0, %v1934
      %v1936 = vpop.f32.mrb[0].mxu0
      %1937 = vmatprep.mubr.f32.mxu0 0.0
      %1938 = vmatmul.mubr.f32.gmra.mrb[0].mxu0 %v1793
      %v1939 = vpop.f32.mrb[0].mxu0
      %v1940 = vadd.f32 0.0, %v1939
      %v1941 = vpop.f32.mrb[0].mxu0
      %1942 = vdwg.mxu0
      %v1943 = vmul.f32 %v1669, %v1865
      %v1944 = vmul.f32 %v1674, %v1870
      %v1945 = vmul.f32 %v1679, %v1875
      %v1946 = vmul.f32 %v1684, %v1880
      %v1947 = vmul.f32 %v1689, %v1885
      %v1948 = vmul.f32 %v1694, %v1890
      %v1949 = vmul.f32 %v1699, %v1895
      %v1950 = vmul.f32 %v1704, %v1900
      %v1951 = vmul.f32 %v1709, %v1905
      %v1952 = vmul.f32 %v1714, %v1910
      %v1953 = vmul.f32 %v1719, %v1915
      %v1954 = vmul.f32 %v1724, %v1920
      %v1955 = vmul.f32 %v1729, %v1925
      %v1956 = vmul.f32 %v1734, %v1930
      %v1957 = vmul.f32 %v1739, %v1935
      %v1958 = vmul.f32 %v1744, %v1940
      %vm1959 = vcmask 220160
      %v1961 = vsel %vm1959, %v1943, 0
      %v1964 = vsel %vm1959, %v1944, 0
      %v1967 = vsel %vm1959, %v1945, 0
      %v1970 = vsel %vm1959, %v1946, 0
      %v1973 = vsel %vm1959, %v1947, 0
      %v1976 = vsel %vm1959, %v1948, 0
      %v1979 = vsel %vm1959, %v1949, 0
      %v1982 = vsel %vm1959, %v1950, 0
      %v1985 = vsel %vm1959, %v1951, 0
      %v1988 = vsel %vm1959, %v1952, 0
      %v1991 = vsel %vm1959, %v1953, 0
      %v1994 = vsel %vm1959, %v1954, 0
      %v1997 = vsel %vm1959, %v1955, 0
      %v2000 = vsel %vm1959, %v1956, 0
      %v2003 = vsel %vm1959, %v1957, 0
      %v2006 = vsel %vm1959, %v1958, 0
      %v2009 = vsel %vm1959, %v640, 0
      %v2012 = vsel %vm1959, %v641, 0
      %2014 = vmatprep.subr.mxu0 0.0
      %2015 = vmatpush1.xpose.msra.mxu0 %v2009
      %2016 = vmatprep.subr.mxu0 0.0
      %2017 = vmatpush1.xpose.msra.mxu0 %v2012
      %2018 = vmatprep.subr.mxu0 0.0
      %2019 = vmatpush1.xpose.msra.mxu0 0.0
      %2020 = vmatprep.subr.mxu0 0.0
      %2021 = vmatpush1.xpose.msra.mxu0 0.0
      %2022 = vmatprep.subr.mxu0 0.0
      %2023 = vmatpush1.xpose.msra.mxu0 0.0
      %2024 = vmatprep.subr.mxu0 0.0
      %2025 = vmatpush1.xpose.msra.mxu0 0.0
      %2026 = vmatprep.subr.mxu0 0.0
      %2027 = vmatpush1.xpose.msra.mxu0 0.0
      %2028 = vmatprep.subr.mxu0 0.0
      %2029 = vmatpush1.xpose.msra.mxu0 0.0
      %2030 = vmatprep.subr.mxu0 0.0
      %2031 = vmatpush1.xpose.msra.mxu0 0.0
      %2032 = vmatprep.subr.mxu0 0.0
      %2033 = vmatpush1.xpose.msra.mxu0 0.0
      %2034 = vmatprep.subr.mxu0 0.0
      %2035 = vmatpush1.xpose.msra.mxu0 0.0
      %2036 = vmatprep.subr.mxu0 0.0
      %2037 = vmatpush1.xpose.msra.mxu0 0.0
      %2038 = vmatprep.subr.mxu0 0.0
      %2039 = vmatpush1.xpose.msra.mxu0 0.0
      %2040 = vmatprep.subr.mxu0 0.0
      %2041 = vmatpush1.xpose.msra.mxu0 0.0
      %2042 = vmatprep.subr.mxu0 0.0
      %2043 = vmatpush1.xpose.msra.mxu0 0.0
      %2044 = vmatprep.subr.mxu0 0.0
      %2045 = vmatpush1.xpose.msra.mxu0 0.0
      %2046 = vmatprep.subr.mxu0 0.0
      %2047 = vmatpush1.xpose.msra.mxu0 0.0
      %2048 = vmatprep.subr.mxu0 0.0
      %2049 = vmatpush1.xpose.msra.mxu0 0.0
      %2050 = vmatprep.subr.mxu0 0.0
      %2051 = vmatpush1.xpose.msra.mxu0 0.0
      %2052 = vmatprep.subr.mxu0 0.0
      %2053 = vmatpush1.xpose.msra.mxu0 0.0
      %2054 = vmatprep.subr.mxu0 0.0
      %2055 = vmatpush1.xpose.msra.mxu0 0.0
      %2056 = vmatprep.subr.mxu0 0.0
      %2057 = vmatpush1.xpose.msra.mxu0 0.0
      %2058 = vmatprep.subr.mxu0 0.0
      %2059 = vmatpush1.xpose.msra.mxu0 0.0
      %2060 = vmatprep.subr.mxu0 0.0
      %2061 = vmatpush1.xpose.msra.mxu0 0.0
      %2062 = vmatprep.subr.mxu0 0.0
      %2063 = vmatpush1.xpose.msra.mxu0 0.0
      %2064 = vmatprep.subr.mxu0 0.0
      %2065 = vmatpush1.xpose.msra.mxu0 0.0
      %2066 = vmatprep.subr.mxu0 0.0
      %2067 = vmatpush1.xpose.msra.mxu0 0.0
      %2068 = vmatprep.subr.mxu0 0.0
      %2069 = vmatpush1.xpose.msra.mxu0 0.0
      %2070 = vmatprep.subr.mxu0 0.0
      %2071 = vmatpush1.xpose.msra.mxu0 0.0
      %2072 = vmatprep.subr.mxu0 0.0
      %2073 = vmatpush1.xpose.msra.mxu0 0.0
      %2074 = vmatprep.subr.mxu0 0.0
      %2075 = vmatpush1.xpose.msra.mxu0 0.0
      %2076 = vmatprep.subr.mxu0 0.0
      %2077 = vmatpush1.xpose.msra.mxu0 0.0
      %2078 = vmatprep.mubr.f32.mxu0 0.0
      %2079 = vmatmul.mubr.f32.gmra.mrb[0].mxu0 %v1961
      %v2080 = vpop.f32.mrb[0].mxu0
      %v2081 = vadd.f32 0.0, %v2080
      %v2082 = vpop.f32.mrb[0].mxu0
      %2083 = vmatprep.mubr.f32.mxu0 0.0
      %2084 = vmatmul.mubr.f32.gmra.mrb[0].mxu0 %v1964
      %v2085 = vpop.f32.mrb[0].mxu0
      %v2086 = vadd.f32 0.0, %v2085
      %v2087 = vpop.f32.mrb[0].mxu0
      %2088 = vmatprep.mubr.f32.mxu0 0.0
      %2089 = vmatmul.mubr.f32.gmra.mrb[0].mxu0 %v1967
      %v2090 = vpop.f32.mrb[0].mxu0
      %v2091 = vadd.f32 0.0, %v2090
      %v2092 = vpop.f32.mrb[0].mxu0
      %2093 = vmatprep.mubr.f32.mxu0 0.0
      %2094 = vmatmul.mubr.f32.gmra.mrb[0].mxu0 %v1970
      %v2095 = vpop.f32.mrb[0].mxu0
      %v2096 = vadd.f32 0.0, %v2095
      %v2097 = vpop.f32.mrb[0].mxu0
      %2098 = vmatprep.mubr.f32.mxu0 0.0
      %2099 = vmatmul.mubr.f32.gmra.mrb[0].mxu0 %v1973
      %v2100 = vpop.f32.mrb[0].mxu0
      %v2101 = vadd.f32 0.0, %v2100
      %v2102 = vpop.f32.mrb[0].mxu0
      %2103 = vmatprep.mubr.f32.mxu0 0.0
      %2104 = vmatmul.mubr.f32.gmra.mrb[0].mxu0 %v1976
      %v2105 = vpop.f32.mrb[0].mxu0
      %v2106 = vadd.f32 0.0, %v2105
      %v2107 = vpop.f32.mrb[0].mxu0
      %2108 = vmatprep.mubr.f32.mxu0 0.0
      %2109 = vmatmul.mubr.f32.gmra.mrb[0].mxu0 %v1979
      %v2110 = vpop.f32.mrb[0].mxu0
      %v2111 = vadd.f32 0.0, %v2110
      %v2112 = vpop.f32.mrb[0].mxu0
      %2113 = vmatprep.mubr.f32.mxu0 0.0
      %2114 = vmatmul.mubr.f32.gmra.mrb[0].mxu0 %v1982
      %v2115 = vpop.f32.mrb[0].mxu0
      %v2116 = vadd.f32 0.0, %v2115
      %v2117 = vpop.f32.mrb[0].mxu0
      %2118 = vmatprep.mubr.f32.mxu0 0.0
      %2119 = vmatmul.mubr.f32.gmra.mrb[0].mxu0 %v1985
      %v2120 = vpop.f32.mrb[0].mxu0
      %v2121 = vadd.f32 0.0, %v2120
      %v2122 = vpop.f32.mrb[0].mxu0
      %2123 = vmatprep.mubr.f32.mxu0 0.0
      %2124 = vmatmul.mubr.f32.gmra.mrb[0].mxu0 %v1988
      %v2125 = vpop.f32.mrb[0].mxu0
      %v2126 = vadd.f32 0.0, %v2125
      %v2127 = vpop.f32.mrb[0].mxu0
      %2128 = vmatprep.mubr.f32.mxu0 0.0
      %2129 = vmatmul.mubr.f32.gmra.mrb[0].mxu0 %v1991
      %v2130 = vpop.f32.mrb[0].mxu0
      %v2131 = vadd.f32 0.0, %v2130
      %v2132 = vpop.f32.mrb[0].mxu0
      %2133 = vmatprep.mubr.f32.mxu0 0.0
      %2134 = vmatmul.mubr.f32.gmra.mrb[0].mxu0 %v1994
      %v2135 = vpop.f32.mrb[0].mxu0
      %v2136 = vadd.f32 0.0, %v2135
      %v2137 = vpop.f32.mrb[0].mxu0
      %2138 = vmatprep.mubr.f32.mxu0 0.0
      %2139 = vmatmul.mubr.f32.gmra.mrb[0].mxu0 %v1997
      %v2140 = vpop.f32.mrb[0].mxu0
      %v2141 = vadd.f32 0.0, %v2140
      %v2142 = vpop.f32.mrb[0].mxu0
      %2143 = vmatprep.mubr.f32.mxu0 0.0
      %2144 = vmatmul.mubr.f32.gmra.mrb[0].mxu0 %v2000
      %v2145 = vpop.f32.mrb[0].mxu0
      %v2146 = vadd.f32 0.0, %v2145
      %v2147 = vpop.f32.mrb[0].mxu0
      %2148 = vmatprep.mubr.f32.mxu0 0.0
      %2149 = vmatmul.mubr.f32.gmra.mrb[0].mxu0 %v2003
      %v2150 = vpop.f32.mrb[0].mxu0
      %v2151 = vadd.f32 0.0, %v2150
      %v2152 = vpop.f32.mrb[0].mxu0
      %2153 = vmatprep.mubr.f32.mxu0 0.0
      %2154 = vmatmul.mubr.f32.gmra.mrb[0].mxu0 %v2006
      %v2155 = vpop.f32.mrb[0].mxu0
      %v2156 = vadd.f32 0.0, %v2155
      %v2157 = vpop.f32.mrb[0].mxu0
      %2158 = vdwg.mxu0
      %v2159 = vmul.f32 %v1263, %v1263
      %v2160 = vmul.f32 %v1268, %v1268
      %v2161 = vmul.f32 %v1273, %v1273
      %v2162 = vmul.f32 %v1278, %v1278
      %v2163 = vmul.f32 %v1283, %v1283
      %v2164 = vmul.f32 %v1288, %v1288
      %v2165 = vmul.f32 %v1293, %v1293
      %v2166 = vmul.f32 %v1298, %v1298
      %v2167 = vmul.f32 %v1303, %v1303
      %v2168 = vmul.f32 %v1308, %v1308
      %v2169 = vmul.f32 %v1313, %v1313
      %v2170 = vmul.f32 %v1318, %v1318
      %v2171 = vmul.f32 %v1323, %v1323
      %v2172 = vmul.f32 %v1328, %v1328
      %v2173 = vmul.f32 %v1333, %v1333
      %v2174 = vmul.f32 %v1338, %v1338
      %v2175 = vmul.f32 %v1472, %v1472
      %v2176 = vmul.f32 %v1477, %v1477
      %v2177 = vmul.f32 %v1482, %v1482
      %v2178 = vmul.f32 %v1487, %v1487
      %v2179 = vmul.f32 %v1492, %v1492
      %v2180 = vmul.f32 %v1497, %v1497
      %v2181 = vmul.f32 %v1502, %v1502
      %v2182 = vmul.f32 %v1507, %v1507
      %v2183 = vmul.f32 %v1512, %v1512
      %v2184 = vmul.f32 %v1517, %v1517
      %v2185 = vmul.f32 %v1522, %v1522
      %v2186 = vmul.f32 %v1527, %v1527
      %v2187 = vmul.f32 %v1532, %v1532
      %v2188 = vmul.f32 %v1537, %v1537
      %v2189 = vmul.f32 %v1542, %v1542
      %v2190 = vmul.f32 %v1547, %v1547
      %v2191 = vmul.f32 %v2081, %v2081
      %v2192 = vmul.f32 %v2086, %v2086
      %v2193 = vmul.f32 %v2091, %v2091
      %v2194 = vmul.f32 %v2096, %v2096
      %v2195 = vmul.f32 %v2101, %v2101
      %v2196 = vmul.f32 %v2106, %v2106
      %v2197 = vmul.f32 %v2111, %v2111
      %v2198 = vmul.f32 %v2116, %v2116
      %v2199 = vmul.f32 %v2121, %v2121
      %v2200 = vmul.f32 %v2126, %v2126
      %v2201 = vmul.f32 %v2131, %v2131
      %v2202 = vmul.f32 %v2136, %v2136
      %v2203 = vmul.f32 %v2141, %v2141
      %v2204 = vmul.f32 %v2146, %v2146
      %v2205 = vmul.f32 %v2151, %v2151
      %v2206 = vmul.f32 %v2156, %v2156
      %v2207 = vld [vmem:[%s4] sm:$0x7]
      %v2208 = vld [vmem:[%s5] sm:$0x7]
      %v2210 = vsel %vm722, %v2175, 0
      %v2213 = vsel %vm722, %v2176, 0
      %v2216 = vsel %vm722, %v2177, 0
      %v2219 = vsel %vm722, %v2178, 0
      %v2222 = vsel %vm722, %v2179, 0
      %v2225 = vsel %vm722, %v2180, 0
      %v2228 = vsel %vm722, %v2181, 0
      %v2231 = vsel %vm722, %v2182, 0
      %v2234 = vsel %vm722, %v2183, 0
      %v2237 = vsel %vm722, %v2184, 0
      %v2240 = vsel %vm722, %v2185, 0
      %v2243 = vsel %vm722, %v2186, 0
      %v2246 = vsel %vm722, %v2187, 0
      %v2249 = vsel %vm722, %v2188, 0
      %v2252 = vsel %vm722, %v2189, 0
      %v2255 = vsel %vm722, %v2190, 0
      %v2258 = vsel %vm979, %v2208, 0
      %2260 = vmatprep.subr.mxu0 0.0
      %2261 = vmatpush1.msra.mxu0 %v2258
      %2262 = vmatprep.subr.mxu0 0.0
      %2263 = vmatpush1.msra.mxu0 0.0
      %2264 = vmatprep.subr.mxu0 0.0
      %2265 = vmatpush1.msra.mxu0 0.0
      %2266 = vmatprep.subr.mxu0 0.0
      %2267 = vmatpush1.msra.mxu0 0.0
      %2268 = vmatprep.subr.mxu0 0.0
      %2269 = vmatpush1.msra.mxu0 0.0
      %2270 = vmatprep.subr.mxu0 0.0
      %2271 = vmatpush1.msra.mxu0 0.0
      %2272 = vmatprep.subr.mxu0 0.0
      %2273 = vmatpush1.msra.mxu0 0.0
      %2274 = vmatprep.subr.mxu0 0.0
      %2275 = vmatpush1.msra.mxu0 0.0
      %2276 = vmatprep.subr.mxu0 0.0
      %2277 = vmatpush1.msra.mxu0 0.0
      %2278 = vmatprep.subr.mxu0 0.0
      %2279 = vmatpush1.msra.mxu0 0.0
      %2280 = vmatprep.subr.mxu0 0.0
      %2281 = vmatpush1.msra.mxu0 0.0
      %2282 = vmatprep.subr.mxu0 0.0
      %2283 = vmatpush1.msra.mxu0 0.0
      %2284 = vmatprep.subr.mxu0 0.0
      %2285 = vmatpush1.msra.mxu0 0.0
      %2286 = vmatprep.subr.mxu0 0.0
      %2287 = vmatpush1.msra.mxu0 0.0
      %2288 = vmatprep.subr.mxu0 0.0
      %2289 = vmatpush1.msra.mxu0 0.0
      %2290 = vmatprep.subr.mxu0 0.0
      %2291 = vmatpush1.msra.mxu0 0.0
      %2292 = vmatprep.subr.mxu0 0.0
      %2293 = vmatpush1.msra.mxu0 0.0
      %2294 = vmatprep.subr.mxu0 0.0
      %2295 = vmatpush1.msra.mxu0 0.0
      %2296 = vmatprep.subr.mxu0 0.0
      %2297 = vmatpush1.msra.mxu0 0.0
      %2298 = vmatprep.subr.mxu0 0.0
      %2299 = vmatpush1.msra.mxu0 0.0
      %2300 = vmatprep.subr.mxu0 0.0
      %2301 = vmatpush1.msra.mxu0 0.0
      %2302 = vmatprep.subr.mxu0 0.0
      %2303 = vmatpush1.msra.mxu0 0.0
      %2304 = vmatprep.subr.mxu0 0.0
      %2305 = vmatpush1.msra.mxu0 0.0
      %2306 = vmatprep.subr.mxu0 0.0
      %2307 = vmatpush1.msra.mxu0 0.0
      %2308 = vmatprep.subr.mxu0 0.0
      %2309 = vmatpush1.msra.mxu0 0.0
      %2310 = vmatprep.subr.mxu0 0.0
      %2311 = vmatpush1.msra.mxu0 0.0
      %2312 = vmatprep.subr.mxu0 0.0
      %2313 = vmatpush1.msra.mxu0 0.0
      %2314 = vmatprep.subr.mxu0 0.0
      %2315 = vmatpush1.msra.mxu0 0.0
      %2316 = vmatprep.subr.mxu0 0.0
      %2317 = vmatpush1.msra.mxu0 0.0
      %2318 = vmatprep.subr.mxu0 0.0
      %2319 = vmatpush1.msra.mxu0 0.0
      %2320 = vmatprep.subr.mxu0 0.0
      %2321 = vmatpush1.msra.mxu0 0.0
      %2322 = vmatprep.subr.mxu0 0.0
      %2323 = vmatpush1.msra.mxu0 0.0
      %2324 = vmatprep.mubr.f32.mxu0 0.0
      %2325 = vmatmul.mubr.f32.gmra.mrb[0].mxu0 %v2210
      %v2326 = vpop.f32.mrb[0].mxu0
      %v2327 = vadd.f32 0.0, %v2326
      %v2328 = vpop.f32.mrb[0].mxu0
      %2329 = vmatprep.mubr.f32.mxu0 0.0
      %2330 = vmatmul.mubr.f32.gmra.mrb[0].mxu0 %v2213
      %v2331 = vpop.f32.mrb[0].mxu0
      %v2332 = vadd.f32 0.0, %v2331
      %v2333 = vpop.f32.mrb[0].mxu0
      %2334 = vmatprep.mubr.f32.mxu0 0.0
      %2335 = vmatmul.mubr.f32.gmra.mrb[0].mxu0 %v2216
      %v2336 = vpop.f32.mrb[0].mxu0
      %v2337 = vadd.f32 0.0, %v2336
      %v2338 = vpop.f32.mrb[0].mxu0
      %2339 = vmatprep.mubr.f32.mxu0 0.0
      %2340 = vmatmul.mubr.f32.gmra.mrb[0].mxu0 %v2219
      %v2341 = vpop.f32.mrb[0].mxu0
      %v2342 = vadd.f32 0.0, %v2341
      %v2343 = vpop.f32.mrb[0].mxu0
      %2344 = vmatprep.mubr.f32.mxu0 0.0
      %2345 = vmatmul.mubr.f32.gmra.mrb[0].mxu0 %v2222
      %v2346 = vpop.f32.mrb[0].mxu0
      %v2347 = vadd.f32 0.0, %v2346
      %v2348 = vpop.f32.mrb[0].mxu0
      %2349 = vmatprep.mubr.f32.mxu0 0.0
      %2350 = vmatmul.mubr.f32.gmra.mrb[0].mxu0 %v2225
      %v2351 = vpop.f32.mrb[0].mxu0
      %v2352 = vadd.f32 0.0, %v2351
      %v2353 = vpop.f32.mrb[0].mxu0
      %2354 = vmatprep.mubr.f32.mxu0 0.0
      %2355 = vmatmul.mubr.f32.gmra.mrb[0].mxu0 %v2228
      %v2356 = vpop.f32.mrb[0].mxu0
      %v2357 = vadd.f32 0.0, %v2356
      %v2358 = vpop.f32.mrb[0].mxu0
      %2359 = vmatprep.mubr.f32.mxu0 0.0
      %2360 = vmatmul.mubr.f32.gmra.mrb[0].mxu0 %v2231
      %v2361 = vpop.f32.mrb[0].mxu0
      %v2362 = vadd.f32 0.0, %v2361
      %v2363 = vpop.f32.mrb[0].mxu0
      %2364 = vmatprep.mubr.f32.mxu0 0.0
      %2365 = vmatmul.mubr.f32.gmra.mrb[0].mxu0 %v2234
      %v2366 = vpop.f32.mrb[0].mxu0
      %v2367 = vadd.f32 0.0, %v2366
      %v2368 = vpop.f32.mrb[0].mxu0
      %2369 = vmatprep.mubr.f32.mxu0 0.0
      %2370 = vmatmul.mubr.f32.gmra.mrb[0].mxu0 %v2237
      %v2371 = vpop.f32.mrb[0].mxu0
      %v2372 = vadd.f32 0.0, %v2371
      %v2373 = vpop.f32.mrb[0].mxu0
      %2374 = vmatprep.mubr.f32.mxu0 0.0
      %2375 = vmatmul.mubr.f32.gmra.mrb[0].mxu0 %v2240
      %v2376 = vpop.f32.mrb[0].mxu0
      %v2377 = vadd.f32 0.0, %v2376
      %v2378 = vpop.f32.mrb[0].mxu0
      %2379 = vmatprep.mubr.f32.mxu0 0.0
      %2380 = vmatmul.mubr.f32.gmra.mrb[0].mxu0 %v2243
      %v2381 = vpop.f32.mrb[0].mxu0
      %v2382 = vadd.f32 0.0, %v2381
      %v2383 = vpop.f32.mrb[0].mxu0
      %2384 = vmatprep.mubr.f32.mxu0 0.0
      %2385 = vmatmul.mubr.f32.gmra.mrb[0].mxu0 %v2246
      %v2386 = vpop.f32.mrb[0].mxu0
      %v2387 = vadd.f32 0.0, %v2386
      %v2388 = vpop.f32.mrb[0].mxu0
      %2389 = vmatprep.mubr.f32.mxu0 0.0
      %2390 = vmatmul.mubr.f32.gmra.mrb[0].mxu0 %v2249
      %v2391 = vpop.f32.mrb[0].mxu0
      %v2392 = vadd.f32 0.0, %v2391
      %v2393 = vpop.f32.mrb[0].mxu0
      %2394 = vmatprep.mubr.f32.mxu0 0.0
      %2395 = vmatmul.mubr.f32.gmra.mrb[0].mxu0 %v2252
      %v2396 = vpop.f32.mrb[0].mxu0
      %v2397 = vadd.f32 0.0, %v2396
      %v2398 = vpop.f32.mrb[0].mxu0
      %2399 = vmatprep.mubr.f32.mxu0 0.0
      %2400 = vmatmul.mubr.f32.gmra.mrb[0].mxu0 %v2255
      %v2401 = vpop.f32.mrb[0].mxu0
      %v2402 = vadd.f32 0.0, %v2401
      %v2403 = vpop.f32.mrb[0].mxu0
      %2404 = vdwg.mxu0
      %v2406 = vsel %vm722, %v2159, 0
      %v2409 = vsel %vm722, %v2160, 0
      %v2412 = vsel %vm722, %v2161, 0
      %v2415 = vsel %vm722, %v2162, 0
      %v2418 = vsel %vm722, %v2163, 0
      %v2421 = vsel %vm722, %v2164, 0
      %v2424 = vsel %vm722, %v2165, 0
      %v2427 = vsel %vm722, %v2166, 0
      %v2430 = vsel %vm722, %v2167, 0
      %v2433 = vsel %vm722, %v2168, 0
      %v2436 = vsel %vm722, %v2169, 0
      %v2439 = vsel %vm722, %v2170, 0
      %v2442 = vsel %vm722, %v2171, 0
      %v2445 = vsel %vm722, %v2172, 0
      %v2448 = vsel %vm722, %v2173, 0
      %v2451 = vsel %vm722, %v2174, 0
      %v2454 = vsel %vm979, %v2207, 0
      %2456 = vmatprep.subr.mxu0 0.0
      %2457 = vmatpush1.msra.mxu0 %v2454
      %2458 = vmatprep.subr.mxu0 0.0
      %2459 = vmatpush1.msra.mxu0 0.0
      %2460 = vmatprep.subr.mxu0 0.0
      %2461 = vmatpush1.msra.mxu0 0.0
      %2462 = vmatprep.subr.mxu0 0.0
      %2463 = vmatpush1.msra.mxu0 0.0
      %2464 = vmatprep.subr.mxu0 0.0
      %2465 = vmatpush1.msra.mxu0 0.0
      %2466 = vmatprep.subr.mxu0 0.0
      %2467 = vmatpush1.msra.mxu0 0.0
      %2468 = vmatprep.subr.mxu0 0.0
      %2469 = vmatpush1.msra.mxu0 0.0
      %2470 = vmatprep.subr.mxu0 0.0
      %2471 = vmatpush1.msra.mxu0 0.0
      %2472 = vmatprep.subr.mxu0 0.0
      %2473 = vmatpush1.msra.mxu0 0.0
      %2474 = vmatprep.subr.mxu0 0.0
      %2475 = vmatpush1.msra.mxu0 0.0
      %2476 = vmatprep.subr.mxu0 0.0
      %2477 = vmatpush1.msra.mxu0 0.0
      %2478 = vmatprep.subr.mxu0 0.0
      %2479 = vmatpush1.msra.mxu0 0.0
      %2480 = vmatprep.subr.mxu0 0.0
      %2481 = vmatpush1.msra.mxu0 0.0
      %2482 = vmatprep.subr.mxu0 0.0
      %2483 = vmatpush1.msra.mxu0 0.0
      %2484 = vmatprep.subr.mxu0 0.0
      %2485 = vmatpush1.msra.mxu0 0.0
      %2486 = vmatprep.subr.mxu0 0.0
      %2487 = vmatpush1.msra.mxu0 0.0
      %2488 = vmatprep.subr.mxu0 0.0
      %2489 = vmatpush1.msra.mxu0 0.0
      %2490 = vmatprep.subr.mxu0 0.0
      %2491 = vmatpush1.msra.mxu0 0.0
      %2492 = vmatprep.subr.mxu0 0.0
      %2493 = vmatpush1.msra.mxu0 0.0
      %2494 = vmatprep.subr.mxu0 0.0
      %2495 = vmatpush1.msra.mxu0 0.0
      %2496 = vmatprep.subr.mxu0 0.0
      %2497 = vmatpush1.msra.mxu0 0.0
      %2498 = vmatprep.subr.mxu0 0.0
      %2499 = vmatpush1.msra.mxu0 0.0
      %2500 = vmatprep.subr.mxu0 0.0
      %2501 = vmatpush1.msra.mxu0 0.0
      %2502 = vmatprep.subr.mxu0 0.0
      %2503 = vmatpush1.msra.mxu0 0.0
      %2504 = vmatprep.subr.mxu0 0.0
      %2505 = vmatpush1.msra.mxu0 0.0
      %2506 = vmatprep.subr.mxu0 0.0
      %2507 = vmatpush1.msra.mxu0 0.0
      %2508 = vmatprep.subr.mxu0 0.0
      %2509 = vmatpush1.msra.mxu0 0.0
      %2510 = vmatprep.subr.mxu0 0.0
      %2511 = vmatpush1.msra.mxu0 0.0
      %2512 = vmatprep.subr.mxu0 0.0
      %2513 = vmatpush1.msra.mxu0 0.0
      %2514 = vmatprep.subr.mxu0 0.0
      %2515 = vmatpush1.msra.mxu0 0.0
      %2516 = vmatprep.subr.mxu0 0.0
      %2517 = vmatpush1.msra.mxu0 0.0
      %2518 = vmatprep.subr.mxu0 0.0
      %2519 = vmatpush1.msra.mxu0 0.0
      %2520 = vmatprep.mubr.f32.mxu0 0.0
      %2521 = vmatmul.mubr.f32.gmra.mrb[0].mxu0 %v2406
      %v2522 = vpop.f32.mrb[0].mxu0
      %v2523 = vadd.f32 %v2327, %v2522
      %v2524 = vpop.f32.mrb[0].mxu0
      %2525 = vmatprep.mubr.f32.mxu0 0.0
      %2526 = vmatmul.mubr.f32.gmra.mrb[0].mxu0 %v2409
      %v2527 = vpop.f32.mrb[0].mxu0
      %v2528 = vadd.f32 %v2332, %v2527
      %v2529 = vpop.f32.mrb[0].mxu0
      %2530 = vmatprep.mubr.f32.mxu0 0.0
      %2531 = vmatmul.mubr.f32.gmra.mrb[0].mxu0 %v2412
      %v2532 = vpop.f32.mrb[0].mxu0
      %v2533 = vadd.f32 %v2337, %v2532
      %v2534 = vpop.f32.mrb[0].mxu0
      %2535 = vmatprep.mubr.f32.mxu0 0.0
      %2536 = vmatmul.mubr.f32.gmra.mrb[0].mxu0 %v2415
      %v2537 = vpop.f32.mrb[0].mxu0
      %v2538 = vadd.f32 %v2342, %v2537
      %v2539 = vpop.f32.mrb[0].mxu0
      %2540 = vmatprep.mubr.f32.mxu0 0.0
      %2541 = vmatmul.mubr.f32.gmra.mrb[0].mxu0 %v2418
      %v2542 = vpop.f32.mrb[0].mxu0
      %v2543 = vadd.f32 %v2347, %v2542
      %v2544 = vpop.f32.mrb[0].mxu0
      %2545 = vmatprep.mubr.f32.mxu0 0.0
      %2546 = vmatmul.mubr.f32.gmra.mrb[0].mxu0 %v2421
      %v2547 = vpop.f32.mrb[0].mxu0
      %v2548 = vadd.f32 %v2352, %v2547
      %v2549 = vpop.f32.mrb[0].mxu0
      %2550 = vmatprep.mubr.f32.mxu0 0.0
      %2551 = vmatmul.mubr.f32.gmra.mrb[0].mxu0 %v2424
      %v2552 = vpop.f32.mrb[0].mxu0
      %v2553 = vadd.f32 %v2357, %v2552
      %v2554 = vpop.f32.mrb[0].mxu0
      %2555 = vmatprep.mubr.f32.mxu0 0.0
      %2556 = vmatmul.mubr.f32.gmra.mrb[0].mxu0 %v2427
      %v2557 = vpop.f32.mrb[0].mxu0
      %v2558 = vadd.f32 %v2362, %v2557
      %v2559 = vpop.f32.mrb[0].mxu0
      %2560 = vmatprep.mubr.f32.mxu0 0.0
      %2561 = vmatmul.mubr.f32.gmra.mrb[0].mxu0 %v2430
      %v2562 = vpop.f32.mrb[0].mxu0
      %v2563 = vadd.f32 %v2367, %v2562
      %v2564 = vpop.f32.mrb[0].mxu0
      %2565 = vmatprep.mubr.f32.mxu0 0.0
      %2566 = vmatmul.mubr.f32.gmra.mrb[0].mxu0 %v2433
      %v2567 = vpop.f32.mrb[0].mxu0
      %v2568 = vadd.f32 %v2372, %v2567
      %v2569 = vpop.f32.mrb[0].mxu0
      %2570 = vmatprep.mubr.f32.mxu0 0.0
      %2571 = vmatmul.mubr.f32.gmra.mrb[0].mxu0 %v2436
      %v2572 = vpop.f32.mrb[0].mxu0
      %v2573 = vadd.f32 %v2377, %v2572
      %v2574 = vpop.f32.mrb[0].mxu0
      %2575 = vmatprep.mubr.f32.mxu0 0.0
      %2576 = vmatmul.mubr.f32.gmra.mrb[0].mxu0 %v2439
      %v2577 = vpop.f32.mrb[0].mxu0
      %v2578 = vadd.f32 %v2382, %v2577
      %v2579 = vpop.f32.mrb[0].mxu0
      %2580 = vmatprep.mubr.f32.mxu0 0.0
      %2581 = vmatmul.mubr.f32.gmra.mrb[0].mxu0 %v2442
      %v2582 = vpop.f32.mrb[0].mxu0
      %v2583 = vadd.f32 %v2387, %v2582
      %v2584 = vpop.f32.mrb[0].mxu0
      %2585 = vmatprep.mubr.f32.mxu0 0.0
      %2586 = vmatmul.mubr.f32.gmra.mrb[0].mxu0 %v2445
      %v2587 = vpop.f32.mrb[0].mxu0
      %v2588 = vadd.f32 %v2392, %v2587
      %v2589 = vpop.f32.mrb[0].mxu0
      %2590 = vmatprep.mubr.f32.mxu0 0.0
      %2591 = vmatmul.mubr.f32.gmra.mrb[0].mxu0 %v2448
      %v2592 = vpop.f32.mrb[0].mxu0
      %v2593 = vadd.f32 %v2397, %v2592
      %v2594 = vpop.f32.mrb[0].mxu0
      %2595 = vmatprep.mubr.f32.mxu0 0.0
      %2596 = vmatmul.mubr.f32.gmra.mrb[0].mxu0 %v2451
      %v2597 = vpop.f32.mrb[0].mxu0
      %v2598 = vadd.f32 %v2402, %v2597
      %v2599 = vpop.f32.mrb[0].mxu0
      %2600 = vdwg.mxu0
      %v2601 = vld [vmem:[%s6] sm:$0xff]
      %v2602 = vld [vmem:[%s6 + $0x8] sm:$0x1]
      %v2604 = vsel %vm1144, %v2191, 0
      %v2607 = vsel %vm1144, %v2192, 0
      %v2610 = vsel %vm1144, %v2193, 0
      %v2613 = vsel %vm1144, %v2194, 0
      %v2616 = vsel %vm1144, %v2195, 0
      %v2619 = vsel %vm1144, %v2196, 0
      %v2622 = vsel %vm1144, %v2197, 0
      %v2625 = vsel %vm1144, %v2198, 0
      %v2628 = vsel %vm1144, %v2199, 0
      %v2631 = vsel %vm1144, %v2200, 0
      %v2634 = vsel %vm1144, %v2201, 0
      %v2637 = vsel %vm1144, %v2202, 0
      %v2640 = vsel %vm1144, %v2203, 0
      %v2643 = vsel %vm1144, %v2204, 0
      %v2646 = vsel %vm1144, %v2205, 0
      %v2649 = vsel %vm1144, %v2206, 0
      %v2652 = vsel %vm1598, %v2602, 0
      %2654 = vmatprep.subr.mxu0 0.0
      %2655 = vmatpush1.msra.mxu0 %v2601
      %2656 = vmatprep.subr.mxu0 0.0
      %2657 = vmatpush1.msra.mxu0 %v2652
      %2658 = vmatprep.subr.mxu0 0.0
      %2659 = vmatpush1.msra.mxu0 0.0
      %2660 = vmatprep.subr.mxu0 0.0
      %2661 = vmatpush1.msra.mxu0 0.0
      %2662 = vmatprep.subr.mxu0 0.0
      %2663 = vmatpush1.msra.mxu0 0.0
      %2664 = vmatprep.subr.mxu0 0.0
      %2665 = vmatpush1.msra.mxu0 0.0
      %2666 = vmatprep.subr.mxu0 0.0
      %2667 = vmatpush1.msra.mxu0 0.0
      %2668 = vmatprep.subr.mxu0 0.0
      %2669 = vmatpush1.msra.mxu0 0.0
      %2670 = vmatprep.subr.mxu0 0.0
      %2671 = vmatpush1.msra.mxu0 0.0
      %2672 = vmatprep.subr.mxu0 0.0
      %2673 = vmatpush1.msra.mxu0 0.0
      %2674 = vmatprep.subr.mxu0 0.0
      %2675 = vmatpush1.msra.mxu0 0.0
      %2676 = vmatprep.subr.mxu0 0.0
      %2677 = vmatpush1.msra.mxu0 0.0
      %2678 = vmatprep.subr.mxu0 0.0
      %2679 = vmatpush1.msra.mxu0 0.0
      %2680 = vmatprep.subr.mxu0 0.0
      %2681 = vmatpush1.msra.mxu0 0.0
      %2682 = vmatprep.subr.mxu0 0.0
      %2683 = vmatpush1.msra.mxu0 0.0
      %2684 = vmatprep.subr.mxu0 0.0
      %2685 = vmatpush1.msra.mxu0 0.0
      %2686 = vmatprep.subr.mxu0 0.0
      %2687 = vmatpush1.msra.mxu0 0.0
      %2688 = vmatprep.subr.mxu0 0.0
      %2689 = vmatpush1.msra.mxu0 0.0
      %2690 = vmatprep.subr.mxu0 0.0
      %2691 = vmatpush1.msra.mxu0 0.0
      %2692 = vmatprep.subr.mxu0 0.0
      %2693 = vmatpush1.msra.mxu0 0.0
      %2694 = vmatprep.subr.mxu0 0.0
      %2695 = vmatpush1.msra.mxu0 0.0
      %2696 = vmatprep.subr.mxu0 0.0
      %2697 = vmatpush1.msra.mxu0 0.0
      %2698 = vmatprep.subr.mxu0 0.0
      %2699 = vmatpush1.msra.mxu0 0.0
      %2700 = vmatprep.subr.mxu0 0.0
      %2701 = vmatpush1.msra.mxu0 0.0
      %2702 = vmatprep.subr.mxu0 0.0
      %2703 = vmatpush1.msra.mxu0 0.0
      %2704 = vmatprep.subr.mxu0 0.0
      %2705 = vmatpush1.msra.mxu0 0.0
      %2706 = vmatprep.subr.mxu0 0.0
      %2707 = vmatpush1.msra.mxu0 0.0
      %2708 = vmatprep.subr.mxu0 0.0
      %2709 = vmatpush1.msra.mxu0 0.0
      %2710 = vmatprep.subr.mxu0 0.0
      %2711 = vmatpush1.msra.mxu0 0.0
      %2712 = vmatprep.subr.mxu0 0.0
      %2713 = vmatpush1.msra.mxu0 0.0
      %2714 = vmatprep.subr.mxu0 0.0
      %2715 = vmatpush1.msra.mxu0 0.0
      %2716 = vmatprep.subr.mxu0 0.0
      %2717 = vmatpush1.msra.mxu0 0.0
      %2718 = vmatprep.mubr.f32.mxu0 0.0
      %2719 = vmatmul.mubr.f32.gmra.mrb[0].mxu0 %v2604
      %v2720 = vpop.f32.mrb[0].mxu0
      %v2721 = vadd.f32 0.0, %v2720
      %v2722 = vpop.f32.mrb[0].mxu0
      %2723 = vmatprep.mubr.f32.mxu0 0.0
      %2724 = vmatmul.mubr.f32.gmra.mrb[0].mxu0 %v2607
      %v2725 = vpop.f32.mrb[0].mxu0
      %v2726 = vadd.f32 0.0, %v2725
      %v2727 = vpop.f32.mrb[0].mxu0
      %2728 = vmatprep.mubr.f32.mxu0 0.0
      %2729 = vmatmul.mubr.f32.gmra.mrb[0].mxu0 %v2610
      %v2730 = vpop.f32.mrb[0].mxu0
      %v2731 = vadd.f32 0.0, %v2730
      %v2732 = vpop.f32.mrb[0].mxu0
      %2733 = vmatprep.mubr.f32.mxu0 0.0
      %2734 = vmatmul.mubr.f32.gmra.mrb[0].mxu0 %v2613
      %v2735 = vpop.f32.mrb[0].mxu0
      %v2736 = vadd.f32 0.0, %v2735
      %v2737 = vpop.f32.mrb[0].mxu0
      %2738 = vmatprep.mubr.f32.mxu0 0.0
      %2739 = vmatmul.mubr.f32.gmra.mrb[0].mxu0 %v2616
      %v2740 = vpop.f32.mrb[0].mxu0
      %v2741 = vadd.f32 0.0, %v2740
      %v2742 = vpop.f32.mrb[0].mxu0
      %2743 = vmatprep.mubr.f32.mxu0 0.0
      %2744 = vmatmul.mubr.f32.gmra.mrb[0].mxu0 %v2619
      %v2745 = vpop.f32.mrb[0].mxu0
      %v2746 = vadd.f32 0.0, %v2745
      %v2747 = vpop.f32.mrb[0].mxu0
      %2748 = vmatprep.mubr.f32.mxu0 0.0
      %2749 = vmatmul.mubr.f32.gmra.mrb[0].mxu0 %v2622
      %v2750 = vpop.f32.mrb[0].mxu0
      %v2751 = vadd.f32 0.0, %v2750
      %v2752 = vpop.f32.mrb[0].mxu0
      %2753 = vmatprep.mubr.f32.mxu0 0.0
      %2754 = vmatmul.mubr.f32.gmra.mrb[0].mxu0 %v2625
      %v2755 = vpop.f32.mrb[0].mxu0
      %v2756 = vadd.f32 0.0, %v2755
      %v2757 = vpop.f32.mrb[0].mxu0
      %2758 = vmatprep.mubr.f32.mxu0 0.0
      %2759 = vmatmul.mubr.f32.gmra.mrb[0].mxu0 %v2628
      %v2760 = vpop.f32.mrb[0].mxu0
      %v2761 = vadd.f32 0.0, %v2760
      %v2762 = vpop.f32.mrb[0].mxu0
      %2763 = vmatprep.mubr.f32.mxu0 0.0
      %2764 = vmatmul.mubr.f32.gmra.mrb[0].mxu0 %v2631
      %v2765 = vpop.f32.mrb[0].mxu0
      %v2766 = vadd.f32 0.0, %v2765
      %v2767 = vpop.f32.mrb[0].mxu0
      %2768 = vmatprep.mubr.f32.mxu0 0.0
      %2769 = vmatmul.mubr.f32.gmra.mrb[0].mxu0 %v2634
      %v2770 = vpop.f32.mrb[0].mxu0
      %v2771 = vadd.f32 0.0, %v2770
      %v2772 = vpop.f32.mrb[0].mxu0
      %2773 = vmatprep.mubr.f32.mxu0 0.0
      %2774 = vmatmul.mubr.f32.gmra.mrb[0].mxu0 %v2637
      %v2775 = vpop.f32.mrb[0].mxu0
      %v2776 = vadd.f32 0.0, %v2775
      %v2777 = vpop.f32.mrb[0].mxu0
      %2778 = vmatprep.mubr.f32.mxu0 0.0
      %2779 = vmatmul.mubr.f32.gmra.mrb[0].mxu0 %v2640
      %v2780 = vpop.f32.mrb[0].mxu0
      %v2781 = vadd.f32 0.0, %v2780
      %v2782 = vpop.f32.mrb[0].mxu0
      %2783 = vmatprep.mubr.f32.mxu0 0.0
      %2784 = vmatmul.mubr.f32.gmra.mrb[0].mxu0 %v2643
      %v2785 = vpop.f32.mrb[0].mxu0
      %v2786 = vadd.f32 0.0, %v2785
      %v2787 = vpop.f32.mrb[0].mxu0
      %2788 = vmatprep.mubr.f32.mxu0 0.0
      %2789 = vmatmul.mubr.f32.gmra.mrb[0].mxu0 %v2646
      %v2790 = vpop.f32.mrb[0].mxu0
      %v2791 = vadd.f32 0.0, %v2790
      %v2792 = vpop.f32.mrb[0].mxu0
      %2793 = vmatprep.mubr.f32.mxu0 0.0
      %2794 = vmatmul.mubr.f32.gmra.mrb[0].mxu0 %v2649
      %v2795 = vpop.f32.mrb[0].mxu0
      %v2796 = vadd.f32 0.0, %v2795
      %v2797 = vpop.f32.mrb[0].mxu0
      %2798 = vdwg.mxu0
      %v2799 = vadd.f32 %v2523, %v2721
      %v2800 = vadd.f32 %v2528, %v2726
      %v2801 = vadd.f32 %v2533, %v2731
      %v2802 = vadd.f32 %v2538, %v2736
      %v2803 = vadd.f32 %v2543, %v2741
      %v2804 = vadd.f32 %v2548, %v2746
      %v2805 = vadd.f32 %v2553, %v2751
      %v2806 = vadd.f32 %v2558, %v2756
      %v2807 = vadd.f32 %v2563, %v2761
      %v2808 = vadd.f32 %v2568, %v2766
      %v2809 = vadd.f32 %v2573, %v2771
      %v2810 = vadd.f32 %v2578, %v2776
      %v2811 = vadd.f32 %v2583, %v2781
      %v2812 = vadd.f32 %v2588, %v2786
      %v2813 = vadd.f32 %v2593, %v2791
      %v2814 = vadd.f32 %v2598, %v2796
      %v2815 = vlaneseq
      %v2816 = vshrl.u32 %v2815, 7
      %v2817 = vsub.s32 0, %v2816
      %v2818 = vrot.slane %v623, %v2817
      %v2819 = vadd.f32 %v2799, %v2818
      %v2820 = vadd.f32 %v2800, %v2818
      %v2821 = vadd.f32 %v2801, %v2818
      %v2822 = vadd.f32 %v2802, %v2818
      %v2823 = vadd.f32 %v2803, %v2818
      %v2824 = vadd.f32 %v2804, %v2818
      %v2825 = vadd.f32 %v2805, %v2818
      %v2826 = vadd.f32 %v2806, %v2818
      %v2827 = vadd.f32 %v2807, %v2818
      %v2828 = vadd.f32 %v2808, %v2818
      %v2829 = vadd.f32 %v2809, %v2818
      %v2830 = vadd.f32 %v2810, %v2818
      %v2831 = vadd.f32 %v2811, %v2818
      %v2832 = vadd.f32 %v2812, %v2818
      %v2833 = vadd.f32 %v2813, %v2818
      %v2834 = vadd.f32 %v2814, %v2818
      %v2835 = vtanh.pop %v2819
      %v2836 = vtanh.pop %v2820
      %v2837 = vtanh.pop %v2821
      %v2838 = vtanh.pop %v2822
      %v2839 = vtanh.pop %v2823
      %v2840 = vtanh.pop %v2824
      %v2841 = vtanh.pop %v2825
      %v2842 = vtanh.pop %v2826
      %v2843 = vtanh.pop %v2827
      %v2844 = vtanh.pop %v2828
      %v2845 = vtanh.pop %v2829
      %v2846 = vtanh.pop %v2830
      %v2847 = vtanh.pop %v2831
      %v2848 = vtanh.pop %v2832
      %v2849 = vtanh.pop %v2833
      %v2850 = vtanh.pop %v2834
      %v2851 = vld [vmem:[%s7] sm:$0xff]
      %v2852 = vld [vmem:[%s7 + $0x8] sm:$0xff]
      %v2853 = vld [vmem:[%s7 + $0x10] sm:$0xff]
      %v2854 = vld [vmem:[%s7 + $0x18] sm:$0xff]
      %v2855 = vlaneseq
      %v2856 = vshrl.u32 %v2855, 7
      %v2857 = vsub.s32 0, %v2856
      %v2858 = vrot.slane %v624, %v2857
      %vm2859 = vcmask 261120
      %v2861 = vsel %vm2859, %v2835, 0
      %v2864 = vsel %vm2859, %v2836, 0
      %v2867 = vsel %vm2859, %v2837, 0
      %v2870 = vsel %vm2859, %v2838, 0
      %v2873 = vsel %vm2859, %v2839, 0
      %v2876 = vsel %vm2859, %v2840, 0
      %v2879 = vsel %vm2859, %v2841, 0
      %v2882 = vsel %vm2859, %v2842, 0
      %v2885 = vsel %vm2859, %v2843, 0
      %v2888 = vsel %vm2859, %v2844, 0
      %v2891 = vsel %vm2859, %v2845, 0
      %v2894 = vsel %vm2859, %v2846, 0
      %v2897 = vsel %vm2859, %v2847, 0
      %v2900 = vsel %vm2859, %v2848, 0
      %v2903 = vsel %vm2859, %v2849, 0
      %v2906 = vsel %vm2859, %v2850, 0
      %2908 = vmatprep.subr.mxu0 0.0
      %2909 = vmatpush1.msra.mxu0 %v2851
      %2910 = vmatprep.subr.mxu0 0.0
      %2911 = vmatpush1.msra.mxu0 %v2852
      %2912 = vmatprep.subr.mxu0 0.0
      %2913 = vmatpush1.msra.mxu0 %v2853
      %2914 = vmatprep.subr.mxu0 0.0
      %2915 = vmatpush1.msra.mxu0 %v2854
      %2916 = vmatprep.subr.mxu0 0.0
      %2917 = vmatpush1.msra.mxu0 0.0
      %2918 = vmatprep.subr.mxu0 0.0
      %2919 = vmatpush1.msra.mxu0 0.0
      %2920 = vmatprep.subr.mxu0 0.0
      %2921 = vmatpush1.msra.mxu0 0.0
      %2922 = vmatprep.subr.mxu0 0.0
      %2923 = vmatpush1.msra.mxu0 0.0
      %2924 = vmatprep.subr.mxu0 0.0
      %2925 = vmatpush1.msra.mxu0 0.0
      %2926 = vmatprep.subr.mxu0 0.0
      %2927 = vmatpush1.msra.mxu0 0.0
      %2928 = vmatprep.subr.mxu0 0.0
      %2929 = vmatpush1.msra.mxu0 0.0
      %2930 = vmatprep.subr.mxu0 0.0
      %2931 = vmatpush1.msra.mxu0 0.0
      %2932 = vmatprep.subr.mxu0 0.0
      %2933 = vmatpush1.msra.mxu0 0.0
      %2934 = vmatprep.subr.mxu0 0.0
      %2935 = vmatpush1.msra.mxu0 0.0
      %2936 = vmatprep.subr.mxu0 0.0
      %2937 = vmatpush1.msra.mxu0 0.0
      %2938 = vmatprep.subr.mxu0 0.0
      %2939 = vmatpush1.msra.mxu0 0.0
      %2940 = vmatprep.subr.mxu0 0.0
      %2941 = vmatpush1.msra.mxu0 0.0
      %2942 = vmatprep.subr.mxu0 0.0
      %2943 = vmatpush1.msra.mxu0 0.0
      %2944 = vmatprep.subr.mxu0 0.0
      %2945 = vmatpush1.msra.mxu0 0.0
      %2946 = vmatprep.subr.mxu0 0.0
      %2947 = vmatpush1.msra.mxu0 0.0
      %2948 = vmatprep.subr.mxu0 0.0
      %2949 = vmatpush1.msra.mxu0 0.0
      %2950 = vmatprep.subr.mxu0 0.0
      %2951 = vmatpush1.msra.mxu0 0.0
      %2952 = vmatprep.subr.mxu0 0.0
      %2953 = vmatpush1.msra.mxu0 0.0
      %2954 = vmatprep.subr.mxu0 0.0
      %2955 = vmatpush1.msra.mxu0 0.0
      %2956 = vmatprep.subr.mxu0 0.0
      %2957 = vmatpush1.msra.mxu0 0.0
      %2958 = vmatprep.subr.mxu0 0.0
      %2959 = vmatpush1.msra.mxu0 0.0
      %2960 = vmatprep.subr.mxu0 0.0
      %2961 = vmatpush1.msra.mxu0 0.0
      %2962 = vmatprep.subr.mxu0 0.0
      %2963 = vmatpush1.msra.mxu0 0.0
      %2964 = vmatprep.subr.mxu0 0.0
      %2965 = vmatpush1.msra.mxu0 0.0
      %2966 = vmatprep.subr.mxu0 0.0
      %2967 = vmatpush1.msra.mxu0 0.0
      %2968 = vmatprep.subr.mxu0 0.0
      %2969 = vmatpush1.msra.mxu0 0.0
      %2970 = vmatprep.subr.mxu0 0.0
      %2971 = vmatpush1.msra.mxu0 0.0
      %2972 = vmatprep.mubr.f32.mxu0 0.0
      %2973 = vmatmul.mubr.f32.gmra.mrb[0].mxu0 %v2861
      %v2974 = vpop.f32.mrb[0].mxu0
      %v2975 = vadd.f32 %v2858, %v2974
      %v2976 = vpop.f32.mrb[0].mxu0
      %2977 = vmatprep.mubr.f32.mxu0 0.0
      %2978 = vmatmul.mubr.f32.gmra.mrb[0].mxu0 %v2864
      %v2979 = vpop.f32.mrb[0].mxu0
      %v2980 = vadd.f32 %v2858, %v2979
      %v2981 = vpop.f32.mrb[0].mxu0
      %2982 = vmatprep.mubr.f32.mxu0 0.0
      %2983 = vmatmul.mubr.f32.gmra.mrb[0].mxu0 %v2867
      %v2984 = vpop.f32.mrb[0].mxu0
      %v2985 = vadd.f32 %v2858, %v2984
      %v2986 = vpop.f32.mrb[0].mxu0
      %2987 = vmatprep.mubr.f32.mxu0 0.0
      %2988 = vmatmul.mubr.f32.gmra.mrb[0].mxu0 %v2870
      %v2989 = vpop.f32.mrb[0].mxu0
      %v2990 = vadd.f32 %v2858, %v2989
      %v2991 = vpop.f32.mrb[0].mxu0
      %2992 = vmatprep.mubr.f32.mxu0 0.0
      %2993 = vmatmul.mubr.f32.gmra.mrb[0].mxu0 %v2873
      %v2994 = vpop.f32.mrb[0].mxu0
      %v2995 = vadd.f32 %v2858, %v2994
      %v2996 = vpop.f32.mrb[0].mxu0
      %2997 = vmatprep.mubr.f32.mxu0 0.0
      %2998 = vmatmul.mubr.f32.gmra.mrb[0].mxu0 %v2876
      %v2999 = vpop.f32.mrb[0].mxu0
      %v3000 = vadd.f32 %v2858, %v2999
      %v3001 = vpop.f32.mrb[0].mxu0
      %3002 = vmatprep.mubr.f32.mxu0 0.0
      %3003 = vmatmul.mubr.f32.gmra.mrb[0].mxu0 %v2879
      %v3004 = vpop.f32.mrb[0].mxu0
      %v3005 = vadd.f32 %v2858, %v3004
      %v3006 = vpop.f32.mrb[0].mxu0
      %3007 = vmatprep.mubr.f32.mxu0 0.0
      %3008 = vmatmul.mubr.f32.gmra.mrb[0].mxu0 %v2882
      %v3009 = vpop.f32.mrb[0].mxu0
      %v3010 = vadd.f32 %v2858, %v3009
      %v3011 = vpop.f32.mrb[0].mxu0
      %3012 = vmatprep.mubr.f32.mxu0 0.0
      %3013 = vmatmul.mubr.f32.gmra.mrb[0].mxu0 %v2885
      %v3014 = vpop.f32.mrb[0].mxu0
      %v3015 = vadd.f32 %v2858, %v3014
      %v3016 = vpop.f32.mrb[0].mxu0
      %3017 = vmatprep.mubr.f32.mxu0 0.0
      %3018 = vmatmul.mubr.f32.gmra.mrb[0].mxu0 %v2888
      %v3019 = vpop.f32.mrb[0].mxu0
      %v3020 = vadd.f32 %v2858, %v3019
      %v3021 = vpop.f32.mrb[0].mxu0
      %3022 = vmatprep.mubr.f32.mxu0 0.0
      %3023 = vmatmul.mubr.f32.gmra.mrb[0].mxu0 %v2891
      %v3024 = vpop.f32.mrb[0].mxu0
      %v3025 = vadd.f32 %v2858, %v3024
      %v3026 = vpop.f32.mrb[0].mxu0
      %3027 = vmatprep.mubr.f32.mxu0 0.0
      %3028 = vmatmul.mubr.f32.gmra.mrb[0].mxu0 %v2894
      %v3029 = vpop.f32.mrb[0].mxu0
      %v3030 = vadd.f32 %v2858, %v3029
      %v3031 = vpop.f32.mrb[0].mxu0
      %3032 = vmatprep.mubr.f32.mxu0 0.0
      %3033 = vmatmul.mubr.f32.gmra.mrb[0].mxu0 %v2897
      %v3034 = vpop.f32.mrb[0].mxu0
      %v3035 = vadd.f32 %v2858, %v3034
      %v3036 = vpop.f32.mrb[0].mxu0
      %3037 = vmatprep.mubr.f32.mxu0 0.0
      %3038 = vmatmul.mubr.f32.gmra.mrb[0].mxu0 %v2900
      %v3039 = vpop.f32.mrb[0].mxu0
      %v3040 = vadd.f32 %v2858, %v3039
      %v3041 = vpop.f32.mrb[0].mxu0
      %3042 = vmatprep.mubr.f32.mxu0 0.0
      %3043 = vmatmul.mubr.f32.gmra.mrb[0].mxu0 %v2903
      %v3044 = vpop.f32.mrb[0].mxu0
      %v3045 = vadd.f32 %v2858, %v3044
      %v3046 = vpop.f32.mrb[0].mxu0
      %3047 = vmatprep.mubr.f32.mxu0 0.0
      %3048 = vmatmul.mubr.f32.gmra.mrb[0].mxu0 %v2906
      %v3049 = vpop.f32.mrb[0].mxu0
      %v3050 = vadd.f32 %v2858, %v3049
      %v3051 = vpop.f32.mrb[0].mxu0
      %3052 = vdwg.mxu0
      %v3053 = vtanh.pop %v2975
      %v3054 = vtanh.pop %v2980
      %v3055 = vtanh.pop %v2985
      %v3056 = vtanh.pop %v2990
      %v3057 = vtanh.pop %v2995
      %v3058 = vtanh.pop %v3000
      %v3059 = vtanh.pop %v3005
      %v3060 = vtanh.pop %v3010
      %v3061 = vtanh.pop %v3015
      %v3062 = vtanh.pop %v3020
      %v3063 = vtanh.pop %v3025
      %v3064 = vtanh.pop %v3030
      %v3065 = vtanh.pop %v3035
      %v3066 = vtanh.pop %v3040
      %v3067 = vtanh.pop %v3045
      %v3068 = vtanh.pop %v3050
      %v3069 = vlaneseq
      %v3070 = vshrl.u32 %v3069, 7
      %v3071 = vsub.s32 0, %v3070
      %v3072 = vrot.slane %v629, %v3071
      %v3073 = vmul.f32 %v3053, %v3072
      %v3074 = vmul.f32 %v3054, %v3072
      %v3075 = vmul.f32 %v3055, %v3072
      %v3076 = vmul.f32 %v3056, %v3072
      %v3077 = vmul.f32 %v3057, %v3072
      %v3078 = vmul.f32 %v3058, %v3072
      %v3079 = vmul.f32 %v3059, %v3072
      %v3080 = vmul.f32 %v3060, %v3072
      %v3081 = vmul.f32 %v3061, %v3072
      %v3082 = vmul.f32 %v3062, %v3072
      %v3083 = vmul.f32 %v3063, %v3072
      %v3084 = vmul.f32 %v3064, %v3072
      %v3085 = vmul.f32 %v3065, %v3072
      %v3086 = vmul.f32 %v3066, %v3072
      %v3087 = vmul.f32 %v3067, %v3072
      %v3088 = vmul.f32 %v3068, %v3072
      %v3089 = vsel %vm2859, %v3073, 0.0
      %3090 = vadd.xlane.f32.xlu0 %v3089
      %v3091 = vpop.xlane.xlu0 %3090
      %v3092 = vsel %vm2859, %v3074, 0.0
      %3093 = vadd.xlane.f32.xlu0 %v3092
      %v3094 = vpop.xlane.xlu0 %3093
      %v3095 = vsel %vm2859, %v3075, 0.0
      %3096 = vadd.xlane.f32.xlu0 %v3095
      %v3097 = vpop.xlane.xlu0 %3096
      %v3098 = vsel %vm2859, %v3076, 0.0
      %3099 = vadd.xlane.f32.xlu0 %v3098
      %v3100 = vpop.xlane.xlu0 %3099
      %v3101 = vsel %vm2859, %v3077, 0.0
      %3102 = vadd.xlane.f32.xlu0 %v3101
      %v3103 = vpop.xlane.xlu0 %3102
      %v3104 = vsel %vm2859, %v3078, 0.0
      %3105 = vadd.xlane.f32.xlu0 %v3104
      %v3106 = vpop.xlane.xlu0 %3105
      %v3107 = vsel %vm2859, %v3079, 0.0
      %3108 = vadd.xlane.f32.xlu0 %v3107
      %v3109 = vpop.xlane.xlu0 %3108
      %v3110 = vsel %vm2859, %v3080, 0.0
      %3111 = vadd.xlane.f32.xlu0 %v3110
      %v3112 = vpop.xlane.xlu0 %3111
      %v3113 = vsel %vm2859, %v3081, 0.0
      %3114 = vadd.xlane.f32.xlu0 %v3113
      %v3115 = vpop.xlane.xlu0 %3114
      %v3116 = vsel %vm2859, %v3082, 0.0
      %3117 = vadd.xlane.f32.xlu0 %v3116
      %v3118 = vpop.xlane.xlu0 %3117
      %v3119 = vsel %vm2859, %v3083, 0.0
      %3120 = vadd.xlane.f32.xlu0 %v3119
      %v3121 = vpop.xlane.xlu0 %3120
      %v3122 = vsel %vm2859, %v3084, 0.0
      %3123 = vadd.xlane.f32.xlu0 %v3122
      %v3124 = vpop.xlane.xlu0 %3123
      %v3125 = vsel %vm2859, %v3085, 0.0
      %3126 = vadd.xlane.f32.xlu0 %v3125
      %v3127 = vpop.xlane.xlu0 %3126
      %v3128 = vsel %vm2859, %v3086, 0.0
      %3129 = vadd.xlane.f32.xlu0 %v3128
      %v3130 = vpop.xlane.xlu0 %3129
      %v3131 = vsel %vm2859, %v3087, 0.0
      %3132 = vadd.xlane.f32.xlu0 %v3131
      %v3133 = vpop.xlane.xlu0 %3132
      %v3134 = vsel %vm2859, %v3088, 0.0
      %3135 = vadd.xlane.f32.xlu0 %v3134
      %v3136 = vpop.xlane.xlu0 %3135
      %v3137 = vlaneseq
      %v3138 = vshrl.u32 %v3137, 7
      %v3139 = vsub.s32 0, %v3138
      %v3140 = vrot.slane %v632, %v3139
      %v3141 = vadd.f32 %v3091, %v3140
      %v3142 = vadd.f32 %v3094, %v3140
      %v3143 = vadd.f32 %v3097, %v3140
      %v3144 = vadd.f32 %v3100, %v3140
      %v3145 = vadd.f32 %v3103, %v3140
      %v3146 = vadd.f32 %v3106, %v3140
      %v3147 = vadd.f32 %v3109, %v3140
      %v3148 = vadd.f32 %v3112, %v3140
      %v3149 = vadd.f32 %v3115, %v3140
      %v3150 = vadd.f32 %v3118, %v3140
      %v3151 = vadd.f32 %v3121, %v3140
      %v3152 = vadd.f32 %v3124, %v3140
      %v3153 = vadd.f32 %v3127, %v3140
      %v3154 = vadd.f32 %v3130, %v3140
      %v3155 = vadd.f32 %v3133, %v3140
      %v3156 = vadd.f32 %v3136, %v3140
      %v3157 = vtanh.pop %v3141
      %v3158 = vtanh.pop %v3142
      %v3159 = vtanh.pop %v3143
      %v3160 = vtanh.pop %v3144
      %v3161 = vtanh.pop %v3145
      %v3162 = vtanh.pop %v3146
      %v3163 = vtanh.pop %v3147
      %v3164 = vtanh.pop %v3148
      %v3165 = vtanh.pop %v3149
      %v3166 = vtanh.pop %v3150
      %v3167 = vtanh.pop %v3151
      %v3168 = vtanh.pop %v3152
      %v3169 = vtanh.pop %v3153
      %v3170 = vtanh.pop %v3154
      %v3171 = vtanh.pop %v3155
      %v3172 = vtanh.pop %v3156
      %v3173 = vmul.f32 %v3157, %v3157
      %v3174 = vmul.f32 %v3158, %v3158
      %v3175 = vmul.f32 %v3159, %v3159
      %v3176 = vmul.f32 %v3160, %v3160
      %v3177 = vmul.f32 %v3161, %v3161
      %v3178 = vmul.f32 %v3162, %v3162
      %v3179 = vmul.f32 %v3163, %v3163
      %v3180 = vmul.f32 %v3164, %v3164
      %v3181 = vmul.f32 %v3165, %v3165
      %v3182 = vmul.f32 %v3166, %v3166
      %v3183 = vmul.f32 %v3167, %v3167
      %v3184 = vmul.f32 %v3168, %v3168
      %v3185 = vmul.f32 %v3169, %v3169
      %v3186 = vmul.f32 %v3170, %v3170
      %v3187 = vmul.f32 %v3171, %v3171
      %v3188 = vmul.f32 %v3172, %v3172
      %v3189 = vadd.f32 %v3173, 1e-08
      %v3190 = vadd.f32 %v3174, 1e-08
      %v3191 = vadd.f32 %v3175, 1e-08
      %v3192 = vadd.f32 %v3176, 1e-08
      %v3193 = vadd.f32 %v3177, 1e-08
      %v3194 = vadd.f32 %v3178, 1e-08
      %v3195 = vadd.f32 %v3179, 1e-08
      %v3196 = vadd.f32 %v3180, 1e-08
      %v3197 = vadd.f32 %v3181, 1e-08
      %v3198 = vadd.f32 %v3182, 1e-08
      %v3199 = vadd.f32 %v3183, 1e-08
      %v3200 = vadd.f32 %v3184, 1e-08
      %v3201 = vadd.f32 %v3185, 1e-08
      %v3202 = vadd.f32 %v3186, 1e-08
      %v3203 = vadd.f32 %v3187, 1e-08
      %v3204 = vadd.f32 %v3188, 1e-08
      %v3205 = vsub.f32 %v777, %v3189
      %v3206 = vsub.f32 %v784, %v3190
      %v3207 = vsub.f32 %v791, %v3191
      %v3208 = vsub.f32 %v798, %v3192
      %v3209 = vsub.f32 %v805, %v3193
      %v3210 = vsub.f32 %v812, %v3194
      %v3211 = vsub.f32 %v819, %v3195
      %v3212 = vsub.f32 %v826, %v3196
      %v3213 = vsub.f32 %v833, %v3197
      %v3214 = vsub.f32 %v840, %v3198
      %v3215 = vsub.f32 %v847, %v3199
      %v3216 = vsub.f32 %v854, %v3200
      %v3217 = vsub.f32 %v861, %v3201
      %v3218 = vsub.f32 %v868, %v3202
      %v3219 = vsub.f32 %v875, %v3203
      %v3220 = vsub.f32 %v882, %v3204
      %v3221 = vsub.f32 0.0, %v628
      %v3222 = vlaneseq
      %v3223 = vshrl.u32 %v3222, 7
      %v3224 = vsub.s32 0, %v3223
      %v3225 = vrot.slane %v627, %v3224
      %3227 = vset.pattern.permute.xlu0 0
      %3228 = vperm.xlu0 %3227, %v3205
      %v3229 = vpop.permute.xlu0 %3228
      %3232 = vset.pattern.permute.xlu0 0
      %3233 = vperm.xlu0 %3232, %v3206
      %v3234 = vpop.permute.xlu0 %3233
      %3237 = vset.pattern.permute.xlu0 0
      %3238 = vperm.xlu0 %3237, %v3207
      %v3239 = vpop.permute.xlu0 %3238
      %3242 = vset.pattern.permute.xlu0 0
      %3243 = vperm.xlu0 %3242, %v3208
      %v3244 = vpop.permute.xlu0 %3243
      %3247 = vset.pattern.permute.xlu0 0
      %3248 = vperm.xlu0 %3247, %v3209
      %v3249 = vpop.permute.xlu0 %3248
      %3252 = vset.pattern.permute.xlu0 0
      %3253 = vperm.xlu0 %3252, %v3210
      %v3254 = vpop.permute.xlu0 %3253
      %3257 = vset.pattern.permute.xlu0 0
      %3258 = vperm.xlu0 %3257, %v3211
      %v3259 = vpop.permute.xlu0 %3258
      %3262 = vset.pattern.permute.xlu0 0
      %3263 = vperm.xlu0 %3262, %v3212
      %v3264 = vpop.permute.xlu0 %3263
      %3267 = vset.pattern.permute.xlu0 0
      %3268 = vperm.xlu0 %3267, %v3213
      %v3269 = vpop.permute.xlu0 %3268
      %3272 = vset.pattern.permute.xlu0 0
      %3273 = vperm.xlu0 %3272, %v3214
      %v3274 = vpop.permute.xlu0 %3273
      %3277 = vset.pattern.permute.xlu0 0
      %3278 = vperm.xlu0 %3277, %v3215
      %v3279 = vpop.permute.xlu0 %3278
      %3282 = vset.pattern.permute.xlu0 0
      %3283 = vperm.xlu0 %3282, %v3216
      %v3284 = vpop.permute.xlu0 %3283
      %3287 = vset.pattern.permute.xlu0 0
      %3288 = vperm.xlu0 %3287, %v3217
      %v3289 = vpop.permute.xlu0 %3288
      %3292 = vset.pattern.permute.xlu0 0
      %3293 = vperm.xlu0 %3292, %v3218
      %v3294 = vpop.permute.xlu0 %3293
      %3297 = vset.pattern.permute.xlu0 0
      %3298 = vperm.xlu0 %3297, %v3219
      %v3299 = vpop.permute.xlu0 %3298
      %3302 = vset.pattern.permute.xlu0 0
      %3303 = vperm.xlu0 %3302, %v3220
      %v3304 = vpop.permute.xlu0 %3303
      %v3306 = vmul.f32 %v3225, %v3229
      %v3307 = vmul.f32 %v3225, %v3234
      %v3308 = vmul.f32 %v3225, %v3239
      %v3309 = vmul.f32 %v3225, %v3244
      %v3310 = vmul.f32 %v3225, %v3249
      %v3311 = vmul.f32 %v3225, %v3254
      %v3312 = vmul.f32 %v3225, %v3259
      %v3313 = vmul.f32 %v3225, %v3264
      %v3314 = vmul.f32 %v3225, %v3269
      %v3315 = vmul.f32 %v3225, %v3274
      %v3316 = vmul.f32 %v3225, %v3279
      %v3317 = vmul.f32 %v3225, %v3284
      %v3318 = vmul.f32 %v3225, %v3289
      %v3319 = vmul.f32 %v3225, %v3294
      %v3320 = vmul.f32 %v3225, %v3299
      %v3321 = vmul.f32 %v3225, %v3304
      %v3322 = vlog2.pop %v3306
      %v3323 = vmul.f32 %v3322, 0.6931472
      %v3324 = vlog2.pop %v3307
      %v3325 = vmul.f32 %v3324, 0.6931472
      %v3326 = vlog2.pop %v3308
      %v3327 = vmul.f32 %v3326, 0.6931472
      %v3328 = vlog2.pop %v3309
      %v3329 = vmul.f32 %v3328, 0.6931472
      %v3330 = vlog2.pop %v3310
      %v3331 = vmul.f32 %v3330, 0.6931472
      %v3332 = vlog2.pop %v3311
      %v3333 = vmul.f32 %v3332, 0.6931472
      %v3334 = vlog2.pop %v3312
      %v3335 = vmul.f32 %v3334, 0.6931472
      %v3336 = vlog2.pop %v3313
      %v3337 = vmul.f32 %v3336, 0.6931472
      %v3338 = vlog2.pop %v3314
      %v3339 = vmul.f32 %v3338, 0.6931472
      %v3340 = vlog2.pop %v3315
      %v3341 = vmul.f32 %v3340, 0.6931472
      %v3342 = vlog2.pop %v3316
      %v3343 = vmul.f32 %v3342, 0.6931472
      %v3344 = vlog2.pop %v3317
      %v3345 = vmul.f32 %v3344, 0.6931472
      %v3346 = vlog2.pop %v3318
      %v3347 = vmul.f32 %v3346, 0.6931472
      %v3348 = vlog2.pop %v3319
      %v3349 = vmul.f32 %v3348, 0.6931472
      %v3350 = vlog2.pop %v3320
      %v3351 = vmul.f32 %v3350, 0.6931472
      %v3352 = vlog2.pop %v3321
      %v3353 = vmul.f32 %v3352, 0.6931472
      %v3354 = vlaneseq
      %v3355 = vshrl.u32 %v3354, 7
      %v3356 = vsub.s32 0, %v3355
      %v3357 = vrot.slane %v3221, %v3356
      %v3358 = vmul.f32 %v3357, %v3323
      %v3359 = vmul.f32 %v3357, %v3325
      %v3360 = vmul.f32 %v3357, %v3327
      %v3361 = vmul.f32 %v3357, %v3329
      %v3362 = vmul.f32 %v3357, %v3331
      %v3363 = vmul.f32 %v3357, %v3333
      %v3364 = vmul.f32 %v3357, %v3335
      %v3365 = vmul.f32 %v3357, %v3337
      %v3366 = vmul.f32 %v3357, %v3339
      %v3367 = vmul.f32 %v3357, %v3341
      %v3368 = vmul.f32 %v3357, %v3343
      %v3369 = vmul.f32 %v3357, %v3345
      %v3370 = vmul.f32 %v3357, %v3347
      %v3371 = vmul.f32 %v3357, %v3349
      %v3372 = vmul.f32 %v3357, %v3351
      %v3373 = vmul.f32 %v3357, %v3353
      %v3374 = vmul.f32 %v3358, 1.442695
      %v3375 = vpow.pop %v3374
      %v3376 = vmul.f32 %v3359, 1.442695
      %v3377 = vpow.pop %v3376
      %v3378 = vmul.f32 %v3360, 1.442695
      %v3379 = vpow.pop %v3378
      %v3380 = vmul.f32 %v3361, 1.442695
      %v3381 = vpow.pop %v3380
      %v3382 = vmul.f32 %v3362, 1.442695
      %v3383 = vpow.pop %v3382
      %v3384 = vmul.f32 %v3363, 1.442695
      %v3385 = vpow.pop %v3384
      %v3386 = vmul.f32 %v3364, 1.442695
      %v3387 = vpow.pop %v3386
      %v3388 = vmul.f32 %v3365, 1.442695
      %v3389 = vpow.pop %v3388
      %v3390 = vmul.f32 %v3366, 1.442695
      %v3391 = vpow.pop %v3390
      %v3392 = vmul.f32 %v3367, 1.442695
      %v3393 = vpow.pop %v3392
      %v3394 = vmul.f32 %v3368, 1.442695
      %v3395 = vpow.pop %v3394
      %v3396 = vmul.f32 %v3369, 1.442695
      %v3397 = vpow.pop %v3396
      %v3398 = vmul.f32 %v3370, 1.442695
      %v3399 = vpow.pop %v3398
      %v3400 = vmul.f32 %v3371, 1.442695
      %v3401 = vpow.pop %v3400
      %v3402 = vmul.f32 %v3372, 1.442695
      %v3403 = vpow.pop %v3402
      %v3404 = vmul.f32 %v3373, 1.442695
      %v3405 = vpow.pop %v3404
      %v3406 = vsel %vm722, %v3375, 0.0
      %3407 = vadd.xlane.f32.xlu0 %v3406
      %v3408 = vpop.xlane.xlu0 %3407
      %v3409 = vsel %vm722, %v3377, 0.0
      %3410 = vadd.xlane.f32.xlu0 %v3409
      %v3411 = vpop.xlane.xlu0 %3410
      %v3412 = vsel %vm722, %v3379, 0.0
      %3413 = vadd.xlane.f32.xlu0 %v3412
      %v3414 = vpop.xlane.xlu0 %3413
      %v3415 = vsel %vm722, %v3381, 0.0
      %3416 = vadd.xlane.f32.xlu0 %v3415
      %v3417 = vpop.xlane.xlu0 %3416
      %v3418 = vsel %vm722, %v3383, 0.0
      %3419 = vadd.xlane.f32.xlu0 %v3418
      %v3420 = vpop.xlane.xlu0 %3419
      %v3421 = vsel %vm722, %v3385, 0.0
      %3422 = vadd.xlane.f32.xlu0 %v3421
      %v3423 = vpop.xlane.xlu0 %3422
      %v3424 = vsel %vm722, %v3387, 0.0
      %3425 = vadd.xlane.f32.xlu0 %v3424
      %v3426 = vpop.xlane.xlu0 %3425
      %v3427 = vsel %vm722, %v3389, 0.0
      %3428 = vadd.xlane.f32.xlu0 %v3427
      %v3429 = vpop.xlane.xlu0 %3428
      %v3430 = vsel %vm722, %v3391, 0.0
      %3431 = vadd.xlane.f32.xlu0 %v3430
      %v3432 = vpop.xlane.xlu0 %3431
      %v3433 = vsel %vm722, %v3393, 0.0
      %3434 = vadd.xlane.f32.xlu0 %v3433
      %v3435 = vpop.xlane.xlu0 %3434
      %v3436 = vsel %vm722, %v3395, 0.0
      %3437 = vadd.xlane.f32.xlu0 %v3436
      %v3438 = vpop.xlane.xlu0 %3437
      %v3439 = vsel %vm722, %v3397, 0.0
      %3440 = vadd.xlane.f32.xlu0 %v3439
      %v3441 = vpop.xlane.xlu0 %3440
      %v3442 = vsel %vm722, %v3399, 0.0
      %3443 = vadd.xlane.f32.xlu0 %v3442
      %v3444 = vpop.xlane.xlu0 %3443
      %v3445 = vsel %vm722, %v3401, 0.0
      %3446 = vadd.xlane.f32.xlu0 %v3445
      %v3447 = vpop.xlane.xlu0 %3446
      %v3448 = vsel %vm722, %v3403, 0.0
      %3449 = vadd.xlane.f32.xlu0 %v3448
      %v3450 = vpop.xlane.xlu0 %3449
      %v3451 = vsel %vm722, %v3405, 0.0
      %3452 = vadd.xlane.f32.xlu0 %v3451
      %v3453 = vpop.xlane.xlu0 %3452
      %v3454 = vlaneseq
      %v3455 = vshrl.u32 %v3454, 7
      %v3456 = vsub.s32 0, %v3455
      %v3457 = vrot.slane %v631, %v3456
      %v3458 = vmul.f32 %v777, %v3457
      %v3459 = vmul.f32 %v784, %v3457
      %v3460 = vmul.f32 %v791, %v3457
      %v3461 = vmul.f32 %v798, %v3457
      %v3462 = vmul.f32 %v805, %v3457
      %v3463 = vmul.f32 %v812, %v3457
      %v3464 = vmul.f32 %v819, %v3457
      %v3465 = vmul.f32 %v826, %v3457
      %v3466 = vmul.f32 %v833, %v3457
      %v3467 = vmul.f32 %v840, %v3457
      %v3468 = vmul.f32 %v847, %v3457
      %v3469 = vmul.f32 %v854, %v3457
      %v3470 = vmul.f32 %v861, %v3457
      %v3471 = vmul.f32 %v868, %v3457
      %v3472 = vmul.f32 %v875, %v3457
      %v3473 = vmul.f32 %v882, %v3457
      %v3474 = vld [vmem:[%s8] sm:$0x7]
      %v3476 = vsel %vm979, %v3474, 0
      %3478 = vmatprep.subr.mxu0 0.0
      %3479 = vmatpush1.msra.mxu0 %v3476
      %3480 = vmatprep.subr.mxu0 0.0
      %3481 = vmatpush1.msra.mxu0 0.0
      %3482 = vmatprep.subr.mxu0 0.0
      %3483 = vmatpush1.msra.mxu0 0.0
      %3484 = vmatprep.subr.mxu0 0.0
      %3485 = vmatpush1.msra.mxu0 0.0
      %3486 = vmatprep.subr.mxu0 0.0
      %3487 = vmatpush1.msra.mxu0 0.0
      %3488 = vmatprep.subr.mxu0 0.0
      %3489 = vmatpush1.msra.mxu0 0.0
      %3490 = vmatprep.subr.mxu0 0.0
      %3491 = vmatpush1.msra.mxu0 0.0
      %3492 = vmatprep.subr.mxu0 0.0
      %3493 = vmatpush1.msra.mxu0 0.0
      %3494 = vmatprep.subr.mxu0 0.0
      %3495 = vmatpush1.msra.mxu0 0.0
      %3496 = vmatprep.subr.mxu0 0.0
      %3497 = vmatpush1.msra.mxu0 0.0
      %3498 = vmatprep.subr.mxu0 0.0
      %3499 = vmatpush1.msra.mxu0 0.0
      %3500 = vmatprep.subr.mxu0 0.0
      %3501 = vmatpush1.msra.mxu0 0.0
      %3502 = vmatprep.subr.mxu0 0.0
      %3503 = vmatpush1.msra.mxu0 0.0
      %3504 = vmatprep.subr.mxu0 0.0
      %3505 = vmatpush1.msra.mxu0 0.0
      %3506 = vmatprep.subr.mxu0 0.0
      %3507 = vmatpush1.msra.mxu0 0.0
      %3508 = vmatprep.subr.mxu0 0.0
      %3509 = vmatpush1.msra.mxu0 0.0
      %3510 = vmatprep.subr.mxu0 0.0
      %3511 = vmatpush1.msra.mxu0 0.0
      %3512 = vmatprep.subr.mxu0 0.0
      %3513 = vmatpush1.msra.mxu0 0.0
      %3514 = vmatprep.subr.mxu0 0.0
      %3515 = vmatpush1.msra.mxu0 0.0
      %3516 = vmatprep.subr.mxu0 0.0
      %3517 = vmatpush1.msra.mxu0 0.0
      %3518 = vmatprep.subr.mxu0 0.0
      %3519 = vmatpush1.msra.mxu0 0.0
      %3520 = vmatprep.subr.mxu0 0.0
      %3521 = vmatpush1.msra.mxu0 0.0
      %3522 = vmatprep.subr.mxu0 0.0
      %3523 = vmatpush1.msra.mxu0 0.0
      %3524 = vmatprep.subr.mxu0 0.0
      %3525 = vmatpush1.msra.mxu0 0.0
      %3526 = vmatprep.subr.mxu0 0.0
      %3527 = vmatpush1.msra.mxu0 0.0
      %3528 = vmatprep.subr.mxu0 0.0
      %3529 = vmatpush1.msra.mxu0 0.0
      %3530 = vmatprep.subr.mxu0 0.0
      %3531 = vmatpush1.msra.mxu0 0.0
      %3532 = vmatprep.subr.mxu0 0.0
      %3533 = vmatpush1.msra.mxu0 0.0
      %3534 = vmatprep.subr.mxu0 0.0
      %3535 = vmatpush1.msra.mxu0 0.0
      %3536 = vmatprep.subr.mxu0 0.0
      %3537 = vmatpush1.msra.mxu0 0.0
      %3538 = vmatprep.subr.mxu0 0.0
      %3539 = vmatpush1.msra.mxu0 0.0
      %3540 = vmatprep.subr.mxu0 0.0
      %3541 = vmatpush1.msra.mxu0 0.0
      %3542 = vmatprep.mubr.f32.mxu0 0.0
      %3543 = vmatmul.mubr.f32.gmra.mrb[0].mxu0 %v2406
      %v3544 = vpop.f32.mrb[0].mxu0
      %v3545 = vadd.f32 0.0, %v3544
      %v3546 = vpop.f32.mrb[0].mxu0
      %3547 = vmatprep.mubr.f32.mxu0 0.0
      %3548 = vmatmul.mubr.f32.gmra.mrb[0].mxu0 %v2409
      %v3549 = vpop.f32.mrb[0].mxu0
      %v3550 = vadd.f32 0.0, %v3549
      %v3551 = vpop.f32.mrb[0].mxu0
      %3552 = vmatprep.mubr.f32.mxu0 0.0
      %3553 = vmatmul.mubr.f32.gmra.mrb[0].mxu0 %v2412
      %v3554 = vpop.f32.mrb[0].mxu0
      %v3555 = vadd.f32 0.0, %v3554
      %v3556 = vpop.f32.mrb[0].mxu0
      %3557 = vmatprep.mubr.f32.mxu0 0.0
      %3558 = vmatmul.mubr.f32.gmra.mrb[0].mxu0 %v2415
      %v3559 = vpop.f32.mrb[0].mxu0
      %v3560 = vadd.f32 0.0, %v3559
      %v3561 = vpop.f32.mrb[0].mxu0
      %3562 = vmatprep.mubr.f32.mxu0 0.0
      %3563 = vmatmul.mubr.f32.gmra.mrb[0].mxu0 %v2418
      %v3564 = vpop.f32.mrb[0].mxu0
      %v3565 = vadd.f32 0.0, %v3564
      %v3566 = vpop.f32.mrb[0].mxu0
      %3567 = vmatprep.mubr.f32.mxu0 0.0
      %3568 = vmatmul.mubr.f32.gmra.mrb[0].mxu0 %v2421
      %v3569 = vpop.f32.mrb[0].mxu0
      %v3570 = vadd.f32 0.0, %v3569
      %v3571 = vpop.f32.mrb[0].mxu0
      %3572 = vmatprep.mubr.f32.mxu0 0.0
      %3573 = vmatmul.mubr.f32.gmra.mrb[0].mxu0 %v2424
      %v3574 = vpop.f32.mrb[0].mxu0
      %v3575 = vadd.f32 0.0, %v3574
      %v3576 = vpop.f32.mrb[0].mxu0
      %3577 = vmatprep.mubr.f32.mxu0 0.0
      %3578 = vmatmul.mubr.f32.gmra.mrb[0].mxu0 %v2427
      %v3579 = vpop.f32.mrb[0].mxu0
      %v3580 = vadd.f32 0.0, %v3579
      %v3581 = vpop.f32.mrb[0].mxu0
      %3582 = vmatprep.mubr.f32.mxu0 0.0
      %3583 = vmatmul.mubr.f32.gmra.mrb[0].mxu0 %v2430
      %v3584 = vpop.f32.mrb[0].mxu0
      %v3585 = vadd.f32 0.0, %v3584
      %v3586 = vpop.f32.mrb[0].mxu0
      %3587 = vmatprep.mubr.f32.mxu0 0.0
      %3588 = vmatmul.mubr.f32.gmra.mrb[0].mxu0 %v2433
      %v3589 = vpop.f32.mrb[0].mxu0
      %v3590 = vadd.f32 0.0, %v3589
      %v3591 = vpop.f32.mrb[0].mxu0
      %3592 = vmatprep.mubr.f32.mxu0 0.0
      %3593 = vmatmul.mubr.f32.gmra.mrb[0].mxu0 %v2436
      %v3594 = vpop.f32.mrb[0].mxu0
      %v3595 = vadd.f32 0.0, %v3594
      %v3596 = vpop.f32.mrb[0].mxu0
      %3597 = vmatprep.mubr.f32.mxu0 0.0
      %3598 = vmatmul.mubr.f32.gmra.mrb[0].mxu0 %v2439
      %v3599 = vpop.f32.mrb[0].mxu0
      %v3600 = vadd.f32 0.0, %v3599
      %v3601 = vpop.f32.mrb[0].mxu0
      %3602 = vmatprep.mubr.f32.mxu0 0.0
      %3603 = vmatmul.mubr.f32.gmra.mrb[0].mxu0 %v2442
      %v3604 = vpop.f32.mrb[0].mxu0
      %v3605 = vadd.f32 0.0, %v3604
      %v3606 = vpop.f32.mrb[0].mxu0
      %3607 = vmatprep.mubr.f32.mxu0 0.0
      %3608 = vmatmul.mubr.f32.gmra.mrb[0].mxu0 %v2445
      %v3609 = vpop.f32.mrb[0].mxu0
      %v3610 = vadd.f32 0.0, %v3609
      %v3611 = vpop.f32.mrb[0].mxu0
      %3612 = vmatprep.mubr.f32.mxu0 0.0
      %3613 = vmatmul.mubr.f32.gmra.mrb[0].mxu0 %v2448
      %v3614 = vpop.f32.mrb[0].mxu0
      %v3615 = vadd.f32 0.0, %v3614
      %v3616 = vpop.f32.mrb[0].mxu0
      %3617 = vmatprep.mubr.f32.mxu0 0.0
      %3618 = vmatmul.mubr.f32.gmra.mrb[0].mxu0 %v2451
      %v3619 = vpop.f32.mrb[0].mxu0
      %v3620 = vadd.f32 0.0, %v3619
      %v3621 = vpop.f32.mrb[0].mxu0
      %3622 = vdwg.mxu0
      %v3623 = vadd.f32 %v3458, %v3545
      %v3624 = vadd.f32 %v3459, %v3550
      %v3625 = vadd.f32 %v3460, %v3555
      %v3626 = vadd.f32 %v3461, %v3560
      %v3627 = vadd.f32 %v3462, %v3565
      %v3628 = vadd.f32 %v3463, %v3570
      %v3629 = vadd.f32 %v3464, %v3575
      %v3630 = vadd.f32 %v3465, %v3580
      %v3631 = vadd.f32 %v3466, %v3585
      %v3632 = vadd.f32 %v3467, %v3590
      %v3633 = vadd.f32 %v3468, %v3595
      %v3634 = vadd.f32 %v3469, %v3600
      %v3635 = vadd.f32 %v3470, %v3605
      %v3636 = vadd.f32 %v3471, %v3610
      %v3637 = vadd.f32 %v3472, %v3615
      %v3638 = vadd.f32 %v3473, %v3620
      %v3639 = vld [vmem:[%s9] sm:$0x7]
      %v3641 = vsel %vm979, %v3639, 0
      %3643 = vmatprep.subr.mxu0 0.0
      %3644 = vmatpush1.msra.mxu0 %v3641
      %3645 = vmatprep.subr.mxu0 0.0
      %3646 = vmatpush1.msra.mxu0 0.0
      %3647 = vmatprep.subr.mxu0 0.0
      %3648 = vmatpush1.msra.mxu0 0.0
      %3649 = vmatprep.subr.mxu0 0.0
      %3650 = vmatpush1.msra.mxu0 0.0
      %3651 = vmatprep.subr.mxu0 0.0
      %3652 = vmatpush1.msra.mxu0 0.0
      %3653 = vmatprep.subr.mxu0 0.0
      %3654 = vmatpush1.msra.mxu0 0.0
      %3655 = vmatprep.subr.mxu0 0.0
      %3656 = vmatpush1.msra.mxu0 0.0
      %3657 = vmatprep.subr.mxu0 0.0
      %3658 = vmatpush1.msra.mxu0 0.0
      %3659 = vmatprep.subr.mxu0 0.0
      %3660 = vmatpush1.msra.mxu0 0.0
      %3661 = vmatprep.subr.mxu0 0.0
      %3662 = vmatpush1.msra.mxu0 0.0
      %3663 = vmatprep.subr.mxu0 0.0
      %3664 = vmatpush1.msra.mxu0 0.0
      %3665 = vmatprep.subr.mxu0 0.0
      %3666 = vmatpush1.msra.mxu0 0.0
      %3667 = vmatprep.subr.mxu0 0.0
      %3668 = vmatpush1.msra.mxu0 0.0
      %3669 = vmatprep.subr.mxu0 0.0
      %3670 = vmatpush1.msra.mxu0 0.0
      %3671 = vmatprep.subr.mxu0 0.0
      %3672 = vmatpush1.msra.mxu0 0.0
      %3673 = vmatprep.subr.mxu0 0.0
      %3674 = vmatpush1.msra.mxu0 0.0
      %3675 = vmatprep.subr.mxu0 0.0
      %3676 = vmatpush1.msra.mxu0 0.0
      %3677 = vmatprep.subr.mxu0 0.0
      %3678 = vmatpush1.msra.mxu0 0.0
      %3679 = vmatprep.subr.mxu0 0.0
      %3680 = vmatpush1.msra.mxu0 0.0
      %3681 = vmatprep.subr.mxu0 0.0
      %3682 = vmatpush1.msra.mxu0 0.0
      %3683 = vmatprep.subr.mxu0 0.0
      %3684 = vmatpush1.msra.mxu0 0.0
      %3685 = vmatprep.subr.mxu0 0.0
      %3686 = vmatpush1.msra.mxu0 0.0
      %3687 = vmatprep.subr.mxu0 0.0
      %3688 = vmatpush1.msra.mxu0 0.0
      %3689 = vmatprep.subr.mxu0 0.0
      %3690 = vmatpush1.msra.mxu0 0.0
      %3691 = vmatprep.subr.mxu0 0.0
      %3692 = vmatpush1.msra.mxu0 0.0
      %3693 = vmatprep.subr.mxu0 0.0
      %3694 = vmatpush1.msra.mxu0 0.0
      %3695 = vmatprep.subr.mxu0 0.0
      %3696 = vmatpush1.msra.mxu0 0.0
      %3697 = vmatprep.subr.mxu0 0.0
      %3698 = vmatpush1.msra.mxu0 0.0
      %3699 = vmatprep.subr.mxu0 0.0
      %3700 = vmatpush1.msra.mxu0 0.0
      %3701 = vmatprep.subr.mxu0 0.0
      %3702 = vmatpush1.msra.mxu0 0.0
      %3703 = vmatprep.subr.mxu0 0.0
      %3704 = vmatpush1.msra.mxu0 0.0
      %3705 = vmatprep.subr.mxu0 0.0
      %3706 = vmatpush1.msra.mxu0 0.0
      %3707 = vmatprep.mubr.f32.mxu0 0.0
      %3708 = vmatmul.mubr.f32.gmra.mrb[0].mxu0 %v2210
      %v3709 = vpop.f32.mrb[0].mxu0
      %v3710 = vadd.f32 0.0, %v3709
      %v3711 = vpop.f32.mrb[0].mxu0
      %3712 = vmatprep.mubr.f32.mxu0 0.0
      %3713 = vmatmul.mubr.f32.gmra.mrb[0].mxu0 %v2213
      %v3714 = vpop.f32.mrb[0].mxu0
      %v3715 = vadd.f32 0.0, %v3714
      %v3716 = vpop.f32.mrb[0].mxu0
      %3717 = vmatprep.mubr.f32.mxu0 0.0
      %3718 = vmatmul.mubr.f32.gmra.mrb[0].mxu0 %v2216
      %v3719 = vpop.f32.mrb[0].mxu0
      %v3720 = vadd.f32 0.0, %v3719
      %v3721 = vpop.f32.mrb[0].mxu0
      %3722 = vmatprep.mubr.f32.mxu0 0.0
      %3723 = vmatmul.mubr.f32.gmra.mrb[0].mxu0 %v2219
      %v3724 = vpop.f32.mrb[0].mxu0
      %v3725 = vadd.f32 0.0, %v3724
      %v3726 = vpop.f32.mrb[0].mxu0
      %3727 = vmatprep.mubr.f32.mxu0 0.0
      %3728 = vmatmul.mubr.f32.gmra.mrb[0].mxu0 %v2222
      %v3729 = vpop.f32.mrb[0].mxu0
      %v3730 = vadd.f32 0.0, %v3729
      %v3731 = vpop.f32.mrb[0].mxu0
      %3732 = vmatprep.mubr.f32.mxu0 0.0
      %3733 = vmatmul.mubr.f32.gmra.mrb[0].mxu0 %v2225
      %v3734 = vpop.f32.mrb[0].mxu0
      %v3735 = vadd.f32 0.0, %v3734
      %v3736 = vpop.f32.mrb[0].mxu0
      %3737 = vmatprep.mubr.f32.mxu0 0.0
      %3738 = vmatmul.mubr.f32.gmra.mrb[0].mxu0 %v2228
      %v3739 = vpop.f32.mrb[0].mxu0
      %v3740 = vadd.f32 0.0, %v3739
      %v3741 = vpop.f32.mrb[0].mxu0
      %3742 = vmatprep.mubr.f32.mxu0 0.0
      %3743 = vmatmul.mubr.f32.gmra.mrb[0].mxu0 %v2231
      %v3744 = vpop.f32.mrb[0].mxu0
      %v3745 = vadd.f32 0.0, %v3744
      %v3746 = vpop.f32.mrb[0].mxu0
      %3747 = vmatprep.mubr.f32.mxu0 0.0
      %3748 = vmatmul.mubr.f32.gmra.mrb[0].mxu0 %v2234
      %v3749 = vpop.f32.mrb[0].mxu0
      %v3750 = vadd.f32 0.0, %v3749
      %v3751 = vpop.f32.mrb[0].mxu0
      %3752 = vmatprep.mubr.f32.mxu0 0.0
      %3753 = vmatmul.mubr.f32.gmra.mrb[0].mxu0 %v2237
      %v3754 = vpop.f32.mrb[0].mxu0
      %v3755 = vadd.f32 0.0, %v3754
      %v3756 = vpop.f32.mrb[0].mxu0
      %3757 = vmatprep.mubr.f32.mxu0 0.0
      %3758 = vmatmul.mubr.f32.gmra.mrb[0].mxu0 %v2240
      %v3759 = vpop.f32.mrb[0].mxu0
      %v3760 = vadd.f32 0.0, %v3759
      %v3761 = vpop.f32.mrb[0].mxu0
      %3762 = vmatprep.mubr.f32.mxu0 0.0
      %3763 = vmatmul.mubr.f32.gmra.mrb[0].mxu0 %v2243
      %v3764 = vpop.f32.mrb[0].mxu0
      %v3765 = vadd.f32 0.0, %v3764
      %v3766 = vpop.f32.mrb[0].mxu0
      %3767 = vmatprep.mubr.f32.mxu0 0.0
      %3768 = vmatmul.mubr.f32.gmra.mrb[0].mxu0 %v2246
      %v3769 = vpop.f32.mrb[0].mxu0
      %v3770 = vadd.f32 0.0, %v3769
      %v3771 = vpop.f32.mrb[0].mxu0
      %3772 = vmatprep.mubr.f32.mxu0 0.0
      %3773 = vmatmul.mubr.f32.gmra.mrb[0].mxu0 %v2249
      %v3774 = vpop.f32.mrb[0].mxu0
      %v3775 = vadd.f32 0.0, %v3774
      %v3776 = vpop.f32.mrb[0].mxu0
      %3777 = vmatprep.mubr.f32.mxu0 0.0
      %3778 = vmatmul.mubr.f32.gmra.mrb[0].mxu0 %v2252
      %v3779 = vpop.f32.mrb[0].mxu0
      %v3780 = vadd.f32 0.0, %v3779
      %v3781 = vpop.f32.mrb[0].mxu0
      %3782 = vmatprep.mubr.f32.mxu0 0.0
      %3783 = vmatmul.mubr.f32.gmra.mrb[0].mxu0 %v2255
      %v3784 = vpop.f32.mrb[0].mxu0
      %v3785 = vadd.f32 0.0, %v3784
      %v3786 = vpop.f32.mrb[0].mxu0
      %3787 = vdwg.mxu0
      %v3788 = vadd.f32 %v3623, %v3710
      %v3789 = vadd.f32 %v3624, %v3715
      %v3790 = vadd.f32 %v3625, %v3720
      %v3791 = vadd.f32 %v3626, %v3725
      %v3792 = vadd.f32 %v3627, %v3730
      %v3793 = vadd.f32 %v3628, %v3735
      %v3794 = vadd.f32 %v3629, %v3740
      %v3795 = vadd.f32 %v3630, %v3745
      %v3796 = vadd.f32 %v3631, %v3750
      %v3797 = vadd.f32 %v3632, %v3755
      %v3798 = vadd.f32 %v3633, %v3760
      %v3799 = vadd.f32 %v3634, %v3765
      %v3800 = vadd.f32 %v3635, %v3770
      %v3801 = vadd.f32 %v3636, %v3775
      %v3802 = vadd.f32 %v3637, %v3780
      %v3803 = vadd.f32 %v3638, %v3785
      %v3804 = vld [vmem:[%s10] sm:$0xff]
      %v3805 = vld [vmem:[%s10 + $0x8] sm:$0x1]
      %v3807 = vsel %vm1598, %v3805, 0
      %3809 = vmatprep.subr.mxu0 0.0
      %3810 = vmatpush1.msra.mxu0 %v3804
      %3811 = vmatprep.subr.mxu0 0.0
      %3812 = vmatpush1.msra.mxu0 %v3807
      %3813 = vmatprep.subr.mxu0 0.0
      %3814 = vmatpush1.msra.mxu0 0.0
      %3815 = vmatprep.subr.mxu0 0.0
      %3816 = vmatpush1.msra.mxu0 0.0
      %3817 = vmatprep.subr.mxu0 0.0
      %3818 = vmatpush1.msra.mxu0 0.0
      %3819 = vmatprep.subr.mxu0 0.0
      %3820 = vmatpush1.msra.mxu0 0.0
      %3821 = vmatprep.subr.mxu0 0.0
      %3822 = vmatpush1.msra.mxu0 0.0
      %3823 = vmatprep.subr.mxu0 0.0
      %3824 = vmatpush1.msra.mxu0 0.0
      %3825 = vmatprep.subr.mxu0 0.0
      %3826 = vmatpush1.msra.mxu0 0.0
      %3827 = vmatprep.subr.mxu0 0.0
      %3828 = vmatpush1.msra.mxu0 0.0
      %3829 = vmatprep.subr.mxu0 0.0
      %3830 = vmatpush1.msra.mxu0 0.0
      %3831 = vmatprep.subr.mxu0 0.0
      %3832 = vmatpush1.msra.mxu0 0.0
      %3833 = vmatprep.subr.mxu0 0.0
      %3834 = vmatpush1.msra.mxu0 0.0
      %3835 = vmatprep.subr.mxu0 0.0
      %3836 = vmatpush1.msra.mxu0 0.0
      %3837 = vmatprep.subr.mxu0 0.0
      %3838 = vmatpush1.msra.mxu0 0.0
      %3839 = vmatprep.subr.mxu0 0.0
      %3840 = vmatpush1.msra.mxu0 0.0
      %3841 = vmatprep.subr.mxu0 0.0
      %3842 = vmatpush1.msra.mxu0 0.0
      %3843 = vmatprep.subr.mxu0 0.0
      %3844 = vmatpush1.msra.mxu0 0.0
      %3845 = vmatprep.subr.mxu0 0.0
      %3846 = vmatpush1.msra.mxu0 0.0
      %3847 = vmatprep.subr.mxu0 0.0
      %3848 = vmatpush1.msra.mxu0 0.0
      %3849 = vmatprep.subr.mxu0 0.0
      %3850 = vmatpush1.msra.mxu0 0.0
      %3851 = vmatprep.subr.mxu0 0.0
      %3852 = vmatpush1.msra.mxu0 0.0
      %3853 = vmatprep.subr.mxu0 0.0
      %3854 = vmatpush1.msra.mxu0 0.0
      %3855 = vmatprep.subr.mxu0 0.0
      %3856 = vmatpush1.msra.mxu0 0.0
      %3857 = vmatprep.subr.mxu0 0.0
      %3858 = vmatpush1.msra.mxu0 0.0
      %3859 = vmatprep.subr.mxu0 0.0
      %3860 = vmatpush1.msra.mxu0 0.0
      %3861 = vmatprep.subr.mxu0 0.0
      %3862 = vmatpush1.msra.mxu0 0.0
      %3863 = vmatprep.subr.mxu0 0.0
      %3864 = vmatpush1.msra.mxu0 0.0
      %3865 = vmatprep.subr.mxu0 0.0
      %3866 = vmatpush1.msra.mxu0 0.0
      %3867 = vmatprep.subr.mxu0 0.0
      %3868 = vmatpush1.msra.mxu0 0.0
      %3869 = vmatprep.subr.mxu0 0.0
      %3870 = vmatpush1.msra.mxu0 0.0
      %3871 = vmatprep.subr.mxu0 0.0
      %3872 = vmatpush1.msra.mxu0 0.0
      %3873 = vmatprep.mubr.f32.mxu0 0.0
      %3874 = vmatmul.mubr.f32.gmra.mrb[0].mxu0 %v2604
      %v3875 = vpop.f32.mrb[0].mxu0
      %v3876 = vadd.f32 0.0, %v3875
      %v3877 = vpop.f32.mrb[0].mxu0
      %3878 = vmatprep.mubr.f32.mxu0 0.0
      %3879 = vmatmul.mubr.f32.gmra.mrb[0].mxu0 %v2607
      %v3880 = vpop.f32.mrb[0].mxu0
      %v3881 = vadd.f32 0.0, %v3880
      %v3882 = vpop.f32.mrb[0].mxu0
      %3883 = vmatprep.mubr.f32.mxu0 0.0
      %3884 = vmatmul.mubr.f32.gmra.mrb[0].mxu0 %v2610
      %v3885 = vpop.f32.mrb[0].mxu0
      %v3886 = vadd.f32 0.0, %v3885
      %v3887 = vpop.f32.mrb[0].mxu0
      %3888 = vmatprep.mubr.f32.mxu0 0.0
      %3889 = vmatmul.mubr.f32.gmra.mrb[0].mxu0 %v2613
      %v3890 = vpop.f32.mrb[0].mxu0
      %v3891 = vadd.f32 0.0, %v3890
      %v3892 = vpop.f32.mrb[0].mxu0
      %3893 = vmatprep.mubr.f32.mxu0 0.0
      %3894 = vmatmul.mubr.f32.gmra.mrb[0].mxu0 %v2616
      %v3895 = vpop.f32.mrb[0].mxu0
      %v3896 = vadd.f32 0.0, %v3895
      %v3897 = vpop.f32.mrb[0].mxu0
      %3898 = vmatprep.mubr.f32.mxu0 0.0
      %3899 = vmatmul.mubr.f32.gmra.mrb[0].mxu0 %v2619
      %v3900 = vpop.f32.mrb[0].mxu0
      %v3901 = vadd.f32 0.0, %v3900
      %v3902 = vpop.f32.mrb[0].mxu0
      %3903 = vmatprep.mubr.f32.mxu0 0.0
      %3904 = vmatmul.mubr.f32.gmra.mrb[0].mxu0 %v2622
      %v3905 = vpop.f32.mrb[0].mxu0
      %v3906 = vadd.f32 0.0, %v3905
      %v3907 = vpop.f32.mrb[0].mxu0
      %3908 = vmatprep.mubr.f32.mxu0 0.0
      %3909 = vmatmul.mubr.f32.gmra.mrb[0].mxu0 %v2625
      %v3910 = vpop.f32.mrb[0].mxu0
      %v3911 = vadd.f32 0.0, %v3910
      %v3912 = vpop.f32.mrb[0].mxu0
      %3913 = vmatprep.mubr.f32.mxu0 0.0
      %3914 = vmatmul.mubr.f32.gmra.mrb[0].mxu0 %v2628
      %v3915 = vpop.f32.mrb[0].mxu0
      %v3916 = vadd.f32 0.0, %v3915
      %v3917 = vpop.f32.mrb[0].mxu0
      %3918 = vmatprep.mubr.f32.mxu0 0.0
      %3919 = vmatmul.mubr.f32.gmra.mrb[0].mxu0 %v2631
      %v3920 = vpop.f32.mrb[0].mxu0
      %v3921 = vadd.f32 0.0, %v3920
      %v3922 = vpop.f32.mrb[0].mxu0
      %3923 = vmatprep.mubr.f32.mxu0 0.0
      %3924 = vmatmul.mubr.f32.gmra.mrb[0].mxu0 %v2634
      %v3925 = vpop.f32.mrb[0].mxu0
      %v3926 = vadd.f32 0.0, %v3925
      %v3927 = vpop.f32.mrb[0].mxu0
      %3928 = vmatprep.mubr.f32.mxu0 0.0
      %3929 = vmatmul.mubr.f32.gmra.mrb[0].mxu0 %v2637
      %v3930 = vpop.f32.mrb[0].mxu0
      %v3931 = vadd.f32 0.0, %v3930
      %v3932 = vpop.f32.mrb[0].mxu0
      %3933 = vmatprep.mubr.f32.mxu0 0.0
      %3934 = vmatmul.mubr.f32.gmra.mrb[0].mxu0 %v2640
      %v3935 = vpop.f32.mrb[0].mxu0
      %v3936 = vadd.f32 0.0, %v3935
      %v3937 = vpop.f32.mrb[0].mxu0
      %3938 = vmatprep.mubr.f32.mxu0 0.0
      %3939 = vmatmul.mubr.f32.gmra.mrb[0].mxu0 %v2643
      %v3940 = vpop.f32.mrb[0].mxu0
      %v3941 = vadd.f32 0.0, %v3940
      %v3942 = vpop.f32.mrb[0].mxu0
      %3943 = vmatprep.mubr.f32.mxu0 0.0
      %3944 = vmatmul.mubr.f32.gmra.mrb[0].mxu0 %v2646
      %v3945 = vpop.f32.mrb[0].mxu0
      %v3946 = vadd.f32 0.0, %v3945
      %v3947 = vpop.f32.mrb[0].mxu0
      %3948 = vmatprep.mubr.f32.mxu0 0.0
      %3949 = vmatmul.mubr.f32.gmra.mrb[0].mxu0 %v2649
      %v3950 = vpop.f32.mrb[0].mxu0
      %v3951 = vadd.f32 0.0, %v3950
      %v3952 = vpop.f32.mrb[0].mxu0
      %3953 = vdwg.mxu0
      %v3954 = vadd.f32 %v3788, %v3876
      %v3955 = vadd.f32 %v3789, %v3881
      %v3956 = vadd.f32 %v3790, %v3886
      %v3957 = vadd.f32 %v3791, %v3891
      %v3958 = vadd.f32 %v3792, %v3896
      %v3959 = vadd.f32 %v3793, %v3901
      %v3960 = vadd.f32 %v3794, %v3906
      %v3961 = vadd.f32 %v3795, %v3911
      %v3962 = vadd.f32 %v3796, %v3916
      %v3963 = vadd.f32 %v3797, %v3921
      %v3964 = vadd.f32 %v3798, %v3926
      %v3965 = vadd.f32 %v3799, %v3931
      %v3966 = vadd.f32 %v3800, %v3936
      %v3967 = vadd.f32 %v3801, %v3941
      %v3968 = vadd.f32 %v3802, %v3946
      %v3969 = vadd.f32 %v3803, %v3951
      %v3970 = vlaneseq
      %v3971 = vshrl.u32 %v3970, 7
      %v3972 = vsub.s32 0, %v3971
      %v3973 = vrot.slane %v625, %v3972
      %v3974 = vadd.f32 %v3954, %v3973
      %v3975 = vadd.f32 %v3955, %v3973
      %v3976 = vadd.f32 %v3956, %v3973
      %v3977 = vadd.f32 %v3957, %v3973
      %v3978 = vadd.f32 %v3958, %v3973
      %v3979 = vadd.f32 %v3959, %v3973
      %v3980 = vadd.f32 %v3960, %v3973
      %v3981 = vadd.f32 %v3961, %v3973
      %v3982 = vadd.f32 %v3962, %v3973
      %v3983 = vadd.f32 %v3963, %v3973
      %v3984 = vadd.f32 %v3964, %v3973
      %v3985 = vadd.f32 %v3965, %v3973
      %v3986 = vadd.f32 %v3966, %v3973
      %v3987 = vadd.f32 %v3967, %v3973
      %v3988 = vadd.f32 %v3968, %v3973
      %v3989 = vadd.f32 %v3969, %v3973
      %v3990 = vtanh.pop %v3974
      %v3991 = vtanh.pop %v3975
      %v3992 = vtanh.pop %v3976
      %v3993 = vtanh.pop %v3977
      %v3994 = vtanh.pop %v3978
      %v3995 = vtanh.pop %v3979
      %v3996 = vtanh.pop %v3980
      %v3997 = vtanh.pop %v3981
      %v3998 = vtanh.pop %v3982
      %v3999 = vtanh.pop %v3983
      %v4000 = vtanh.pop %v3984
      %v4001 = vtanh.pop %v3985
      %v4002 = vtanh.pop %v3986
      %v4003 = vtanh.pop %v3987
      %v4004 = vtanh.pop %v3988
      %v4005 = vtanh.pop %v3989
      %v4006 = vld [vmem:[%s11] sm:$0xff]
      %v4007 = vld [vmem:[%s11 + $0x8] sm:$0xff]
      %v4008 = vld [vmem:[%s11 + $0x10] sm:$0xff]
      %v4009 = vld [vmem:[%s11 + $0x18] sm:$0xff]
      %v4010 = vld [vmem:[%s11 + $0x20] sm:$0xff]
      %v4011 = vld [vmem:[%s11 + $0x28] sm:$0xff]
      %v4012 = vld [vmem:[%s11 + $0x30] sm:$0xff]
      %v4013 = vld [vmem:[%s11 + $0x38] sm:$0xff]
      %v4014 = vlaneseq
      %v4015 = vshrl.u32 %v4014, 7
      %v4016 = vsub.s32 0, %v4015
      %v4017 = vrot.slane %v626, %v4016
      %vm4018 = vcmask 523264
      %v4020 = vsel %vm4018, %v3990, 0
      %v4023 = vsel %vm4018, %v3991, 0
      %v4026 = vsel %vm4018, %v3992, 0
      %v4029 = vsel %vm4018, %v3993, 0
      %v4032 = vsel %vm4018, %v3994, 0
      %v4035 = vsel %vm4018, %v3995, 0
      %v4038 = vsel %vm4018, %v3996, 0
      %v4041 = vsel %vm4018, %v3997, 0
      %v4044 = vsel %vm4018, %v3998, 0
      %v4047 = vsel %vm4018, %v3999, 0
      %v4050 = vsel %vm4018, %v4000, 0
      %v4053 = vsel %vm4018, %v4001, 0
      %v4056 = vsel %vm4018, %v4002, 0
      %v4059 = vsel %vm4018, %v4003, 0
      %v4062 = vsel %vm4018, %v4004, 0
      %v4065 = vsel %vm4018, %v4005, 0
      %4067 = vmatprep.subr.mxu0 0.0
      %4068 = vmatpush1.msra.mxu0 %v4006
      %4069 = vmatprep.subr.mxu0 0.0
      %4070 = vmatpush1.msra.mxu0 %v4007
      %4071 = vmatprep.subr.mxu0 0.0
      %4072 = vmatpush1.msra.mxu0 %v4008
      %4073 = vmatprep.subr.mxu0 0.0
      %4074 = vmatpush1.msra.mxu0 %v4009
      %4075 = vmatprep.subr.mxu0 0.0
      %4076 = vmatpush1.msra.mxu0 %v4010
      %4077 = vmatprep.subr.mxu0 0.0
      %4078 = vmatpush1.msra.mxu0 %v4011
      %4079 = vmatprep.subr.mxu0 0.0
      %4080 = vmatpush1.msra.mxu0 %v4012
      %4081 = vmatprep.subr.mxu0 0.0
      %4082 = vmatpush1.msra.mxu0 %v4013
      %4083 = vmatprep.subr.mxu0 0.0
      %4084 = vmatpush1.msra.mxu0 0.0
      %4085 = vmatprep.subr.mxu0 0.0
      %4086 = vmatpush1.msra.mxu0 0.0
      %4087 = vmatprep.subr.mxu0 0.0
      %4088 = vmatpush1.msra.mxu0 0.0
      %4089 = vmatprep.subr.mxu0 0.0
      %4090 = vmatpush1.msra.mxu0 0.0
      %4091 = vmatprep.subr.mxu0 0.0
      %4092 = vmatpush1.msra.mxu0 0.0
      %4093 = vmatprep.subr.mxu0 0.0
      %4094 = vmatpush1.msra.mxu0 0.0
      %4095 = vmatprep.subr.mxu0 0.0
      %4096 = vmatpush1.msra.mxu0 0.0
      %4097 = vmatprep.subr.mxu0 0.0
      %4098 = vmatpush1.msra.mxu0 0.0
      %4099 = vmatprep.subr.mxu0 0.0
      %4100 = vmatpush1.msra.mxu0 0.0
      %4101 = vmatprep.subr.mxu0 0.0
      %4102 = vmatpush1.msra.mxu0 0.0
      %4103 = vmatprep.subr.mxu0 0.0
      %4104 = vmatpush1.msra.mxu0 0.0
      %4105 = vmatprep.subr.mxu0 0.0
      %4106 = vmatpush1.msra.mxu0 0.0
      %4107 = vmatprep.subr.mxu0 0.0
      %4108 = vmatpush1.msra.mxu0 0.0
      %4109 = vmatprep.subr.mxu0 0.0
      %4110 = vmatpush1.msra.mxu0 0.0
      %4111 = vmatprep.subr.mxu0 0.0
      %4112 = vmatpush1.msra.mxu0 0.0
      %4113 = vmatprep.subr.mxu0 0.0
      %4114 = vmatpush1.msra.mxu0 0.0
      %4115 = vmatprep.subr.mxu0 0.0
      %4116 = vmatpush1.msra.mxu0 0.0
      %4117 = vmatprep.subr.mxu0 0.0
      %4118 = vmatpush1.msra.mxu0 0.0
      %4119 = vmatprep.subr.mxu0 0.0
      %4120 = vmatpush1.msra.mxu0 0.0
      %4121 = vmatprep.subr.mxu0 0.0
      %4122 = vmatpush1.msra.mxu0 0.0
      %4123 = vmatprep.subr.mxu0 0.0
      %4124 = vmatpush1.msra.mxu0 0.0
      %4125 = vmatprep.subr.mxu0 0.0
      %4126 = vmatpush1.msra.mxu0 0.0
      %4127 = vmatprep.subr.mxu0 0.0
      %4128 = vmatpush1.msra.mxu0 0.0
      %4129 = vmatprep.subr.mxu0 0.0
      %4130 = vmatpush1.msra.mxu0 0.0
      %4131 = vmatprep.mubr.f32.mxu0 0.0
      %4132 = vmatmul.mubr.f32.gmra.mrb[0].mxu0 %v4020
      %v4133 = vpop.f32.mrb[0].mxu0
      %v4134 = vadd.f32 %v4017, %v4133
      %v4135 = vpop.f32.mrb[0].mxu0
      %4136 = vmatprep.mubr.f32.mxu0 0.0
      %4137 = vmatmul.mubr.f32.gmra.mrb[0].mxu0 %v4023
      %v4138 = vpop.f32.mrb[0].mxu0
      %v4139 = vadd.f32 %v4017, %v4138
      %v4140 = vpop.f32.mrb[0].mxu0
      %4141 = vmatprep.mubr.f32.mxu0 0.0
      %4142 = vmatmul.mubr.f32.gmra.mrb[0].mxu0 %v4026
      %v4143 = vpop.f32.mrb[0].mxu0
      %v4144 = vadd.f32 %v4017, %v4143
      %v4145 = vpop.f32.mrb[0].mxu0
      %4146 = vmatprep.mubr.f32.mxu0 0.0
      %4147 = vmatmul.mubr.f32.gmra.mrb[0].mxu0 %v4029
      %v4148 = vpop.f32.mrb[0].mxu0
      %v4149 = vadd.f32 %v4017, %v4148
      %v4150 = vpop.f32.mrb[0].mxu0
      %4151 = vmatprep.mubr.f32.mxu0 0.0
      %4152 = vmatmul.mubr.f32.gmra.mrb[0].mxu0 %v4032
      %v4153 = vpop.f32.mrb[0].mxu0
      %v4154 = vadd.f32 %v4017, %v4153
      %v4155 = vpop.f32.mrb[0].mxu0
      %4156 = vmatprep.mubr.f32.mxu0 0.0
      %4157 = vmatmul.mubr.f32.gmra.mrb[0].mxu0 %v4035
      %v4158 = vpop.f32.mrb[0].mxu0
      %v4159 = vadd.f32 %v4017, %v4158
      %v4160 = vpop.f32.mrb[0].mxu0
      %4161 = vmatprep.mubr.f32.mxu0 0.0
      %4162 = vmatmul.mubr.f32.gmra.mrb[0].mxu0 %v4038
      %v4163 = vpop.f32.mrb[0].mxu0
      %v4164 = vadd.f32 %v4017, %v4163
      %v4165 = vpop.f32.mrb[0].mxu0
      %4166 = vmatprep.mubr.f32.mxu0 0.0
      %4167 = vmatmul.mubr.f32.gmra.mrb[0].mxu0 %v4041
      %v4168 = vpop.f32.mrb[0].mxu0
      %v4169 = vadd.f32 %v4017, %v4168
      %v4170 = vpop.f32.mrb[0].mxu0
      %4171 = vmatprep.mubr.f32.mxu0 0.0
      %4172 = vmatmul.mubr.f32.gmra.mrb[0].mxu0 %v4044
      %v4173 = vpop.f32.mrb[0].mxu0
      %v4174 = vadd.f32 %v4017, %v4173
      %v4175 = vpop.f32.mrb[0].mxu0
      %4176 = vmatprep.mubr.f32.mxu0 0.0
      %4177 = vmatmul.mubr.f32.gmra.mrb[0].mxu0 %v4047
      %v4178 = vpop.f32.mrb[0].mxu0
      %v4179 = vadd.f32 %v4017, %v4178
      %v4180 = vpop.f32.mrb[0].mxu0
      %4181 = vmatprep.mubr.f32.mxu0 0.0
      %4182 = vmatmul.mubr.f32.gmra.mrb[0].mxu0 %v4050
      %v4183 = vpop.f32.mrb[0].mxu0
      %v4184 = vadd.f32 %v4017, %v4183
      %v4185 = vpop.f32.mrb[0].mxu0
      %4186 = vmatprep.mubr.f32.mxu0 0.0
      %4187 = vmatmul.mubr.f32.gmra.mrb[0].mxu0 %v4053
      %v4188 = vpop.f32.mrb[0].mxu0
      %v4189 = vadd.f32 %v4017, %v4188
      %v4190 = vpop.f32.mrb[0].mxu0
      %4191 = vmatprep.mubr.f32.mxu0 0.0
      %4192 = vmatmul.mubr.f32.gmra.mrb[0].mxu0 %v4056
      %v4193 = vpop.f32.mrb[0].mxu0
      %v4194 = vadd.f32 %v4017, %v4193
      %v4195 = vpop.f32.mrb[0].mxu0
      %4196 = vmatprep.mubr.f32.mxu0 0.0
      %4197 = vmatmul.mubr.f32.gmra.mrb[0].mxu0 %v4059
      %v4198 = vpop.f32.mrb[0].mxu0
      %v4199 = vadd.f32 %v4017, %v4198
      %v4200 = vpop.f32.mrb[0].mxu0
      %4201 = vmatprep.mubr.f32.mxu0 0.0
      %4202 = vmatmul.mubr.f32.gmra.mrb[0].mxu0 %v4062
      %v4203 = vpop.f32.mrb[0].mxu0
      %v4204 = vadd.f32 %v4017, %v4203
      %v4205 = vpop.f32.mrb[0].mxu0
      %4206 = vmatprep.mubr.f32.mxu0 0.0
      %4207 = vmatmul.mubr.f32.gmra.mrb[0].mxu0 %v4065
      %v4208 = vpop.f32.mrb[0].mxu0
      %v4209 = vadd.f32 %v4017, %v4208
      %v4210 = vpop.f32.mrb[0].mxu0
      %4211 = vdwg.mxu0
      %v4212 = vtanh.pop %v4134
      %v4213 = vtanh.pop %v4139
      %v4214 = vtanh.pop %v4144
      %v4215 = vtanh.pop %v4149
      %v4216 = vtanh.pop %v4154
      %v4217 = vtanh.pop %v4159
      %v4218 = vtanh.pop %v4164
      %v4219 = vtanh.pop %v4169
      %v4220 = vtanh.pop %v4174
      %v4221 = vtanh.pop %v4179
      %v4222 = vtanh.pop %v4184
      %v4223 = vtanh.pop %v4189
      %v4224 = vtanh.pop %v4194
      %v4225 = vtanh.pop %v4199
      %v4226 = vtanh.pop %v4204
      %v4227 = vtanh.pop %v4209
      %v4228 = vlaneseq
      %v4229 = vshrl.u32 %v4228, 7
      %v4230 = vsub.s32 0, %v4229
      %v4231 = vrot.slane %v630, %v4230
      %v4232 = vmul.f32 %v4212, %v4231
      %v4233 = vmul.f32 %v4213, %v4231
      %v4234 = vmul.f32 %v4214, %v4231
      %v4235 = vmul.f32 %v4215, %v4231
      %v4236 = vmul.f32 %v4216, %v4231
      %v4237 = vmul.f32 %v4217, %v4231
      %v4238 = vmul.f32 %v4218, %v4231
      %v4239 = vmul.f32 %v4219, %v4231
      %v4240 = vmul.f32 %v4220, %v4231
      %v4241 = vmul.f32 %v4221, %v4231
      %v4242 = vmul.f32 %v4222, %v4231
      %v4243 = vmul.f32 %v4223, %v4231
      %v4244 = vmul.f32 %v4224, %v4231
      %v4245 = vmul.f32 %v4225, %v4231
      %v4246 = vmul.f32 %v4226, %v4231
      %v4247 = vmul.f32 %v4227, %v4231
      %v4248 = vsel %vm4018, %v4232, 0.0
      %4249 = vadd.xlane.f32.xlu0 %v4248
      %v4250 = vpop.xlane.xlu0 %4249
      %v4251 = vsel %vm4018, %v4233, 0.0
      %4252 = vadd.xlane.f32.xlu0 %v4251
      %v4253 = vpop.xlane.xlu0 %4252
      %v4254 = vsel %vm4018, %v4234, 0.0
      %4255 = vadd.xlane.f32.xlu0 %v4254
      %v4256 = vpop.xlane.xlu0 %4255
      %v4257 = vsel %vm4018, %v4235, 0.0
      %4258 = vadd.xlane.f32.xlu0 %v4257
      %v4259 = vpop.xlane.xlu0 %4258
      %v4260 = vsel %vm4018, %v4236, 0.0
      %4261 = vadd.xlane.f32.xlu0 %v4260
      %v4262 = vpop.xlane.xlu0 %4261
      %v4263 = vsel %vm4018, %v4237, 0.0
      %4264 = vadd.xlane.f32.xlu0 %v4263
      %v4265 = vpop.xlane.xlu0 %4264
      %v4266 = vsel %vm4018, %v4238, 0.0
      %4267 = vadd.xlane.f32.xlu0 %v4266
      %v4268 = vpop.xlane.xlu0 %4267
      %v4269 = vsel %vm4018, %v4239, 0.0
      %4270 = vadd.xlane.f32.xlu0 %v4269
      %v4271 = vpop.xlane.xlu0 %4270
      %v4272 = vsel %vm4018, %v4240, 0.0
      %4273 = vadd.xlane.f32.xlu0 %v4272
      %v4274 = vpop.xlane.xlu0 %4273
      %v4275 = vsel %vm4018, %v4241, 0.0
      %4276 = vadd.xlane.f32.xlu0 %v4275
      %v4277 = vpop.xlane.xlu0 %4276
      %v4278 = vsel %vm4018, %v4242, 0.0
      %4279 = vadd.xlane.f32.xlu0 %v4278
      %v4280 = vpop.xlane.xlu0 %4279
      %v4281 = vsel %vm4018, %v4243, 0.0
      %4282 = vadd.xlane.f32.xlu0 %v4281
      %v4283 = vpop.xlane.xlu0 %4282
      %v4284 = vsel %vm4018, %v4244, 0.0
      %4285 = vadd.xlane.f32.xlu0 %v4284
      %v4286 = vpop.xlane.xlu0 %4285
      %v4287 = vsel %vm4018, %v4245, 0.0
      %4288 = vadd.xlane.f32.xlu0 %v4287
      %v4289 = vpop.xlane.xlu0 %4288
      %v4290 = vsel %vm4018, %v4246, 0.0
      %4291 = vadd.xlane.f32.xlu0 %v4290
      %v4292 = vpop.xlane.xlu0 %4291
      %v4293 = vsel %vm4018, %v4247, 0.0
      %4294 = vadd.xlane.f32.xlu0 %v4293
      %v4295 = vpop.xlane.xlu0 %4294
      %v4296 = vlaneseq
      %v4297 = vshrl.u32 %v4296, 7
      %v4298 = vsub.s32 0, %v4297
      %v4299 = vrot.slane %v633, %v4298
      %v4300 = vadd.f32 %v4250, %v4299
      %v4301 = vadd.f32 %v4253, %v4299
      %v4302 = vadd.f32 %v4256, %v4299
      %v4303 = vadd.f32 %v4259, %v4299
      %v4304 = vadd.f32 %v4262, %v4299
      %v4305 = vadd.f32 %v4265, %v4299
      %v4306 = vadd.f32 %v4268, %v4299
      %v4307 = vadd.f32 %v4271, %v4299
      %v4308 = vadd.f32 %v4274, %v4299
      %v4309 = vadd.f32 %v4277, %v4299
      %v4310 = vadd.f32 %v4280, %v4299
      %v4311 = vadd.f32 %v4283, %v4299
      %v4312 = vadd.f32 %v4286, %v4299
      %v4313 = vadd.f32 %v4289, %v4299
      %v4314 = vadd.f32 %v4292, %v4299
      %v4315 = vadd.f32 %v4295, %v4299
      %v4316 = vmul.f32 %v630, 64.0
      %v4317 = vmul.f32 %v4212, %v4212
      %v4318 = vmul.f32 %v4213, %v4213
      %v4319 = vmul.f32 %v4214, %v4214
      %v4320 = vmul.f32 %v4215, %v4215
      %v4321 = vmul.f32 %v4216, %v4216
      %v4322 = vmul.f32 %v4217, %v4217
      %v4323 = vmul.f32 %v4218, %v4218
      %v4324 = vmul.f32 %v4219, %v4219
      %v4325 = vmul.f32 %v4220, %v4220
      %v4326 = vmul.f32 %v4221, %v4221
      %v4327 = vmul.f32 %v4222, %v4222
      %v4328 = vmul.f32 %v4223, %v4223
      %v4329 = vmul.f32 %v4224, %v4224
      %v4330 = vmul.f32 %v4225, %v4225
      %v4331 = vmul.f32 %v4226, %v4226
      %v4332 = vmul.f32 %v4227, %v4227
      %v4333 = vsub.f32 1.0, %v4317
      %v4334 = vsub.f32 1.0, %v4318
      %v4335 = vsub.f32 1.0, %v4319
      %v4336 = vsub.f32 1.0, %v4320
      %v4337 = vsub.f32 1.0, %v4321
      %v4338 = vsub.f32 1.0, %v4322
      %v4339 = vsub.f32 1.0, %v4323
      %v4340 = vsub.f32 1.0, %v4324
      %v4341 = vsub.f32 1.0, %v4325
      %v4342 = vsub.f32 1.0, %v4326
      %v4343 = vsub.f32 1.0, %v4327
      %v4344 = vsub.f32 1.0, %v4328
      %v4345 = vsub.f32 1.0, %v4329
      %v4346 = vsub.f32 1.0, %v4330
      %v4347 = vsub.f32 1.0, %v4331
      %v4348 = vsub.f32 1.0, %v4332
      %v4349 = vlaneseq
      %v4350 = vshrl.u32 %v4349, 7
      %v4351 = vsub.s32 0, %v4350
      %v4352 = vrot.slane %v4316, %v4351
      %v4353 = vmul.f32 %v4352, %v4333
      %v4354 = vmul.f32 %v4352, %v4334
      %v4355 = vmul.f32 %v4352, %v4335
      %v4356 = vmul.f32 %v4352, %v4336
      %v4357 = vmul.f32 %v4352, %v4337
      %v4358 = vmul.f32 %v4352, %v4338
      %v4359 = vmul.f32 %v4352, %v4339
      %v4360 = vmul.f32 %v4352, %v4340
      %v4361 = vmul.f32 %v4352, %v4341
      %v4362 = vmul.f32 %v4352, %v4342
      %v4363 = vmul.f32 %v4352, %v4343
      %v4364 = vmul.f32 %v4352, %v4344
      %v4365 = vmul.f32 %v4352, %v4345
      %v4366 = vmul.f32 %v4352, %v4346
      %v4367 = vmul.f32 %v4352, %v4347
      %v4368 = vmul.f32 %v4352, %v4348
      %v4370 = vsel %vm4018, %v4353, 0
      %v4373 = vsel %vm4018, %v4354, 0
      %v4376 = vsel %vm4018, %v4355, 0
      %v4379 = vsel %vm4018, %v4356, 0
      %v4382 = vsel %vm4018, %v4357, 0
      %v4385 = vsel %vm4018, %v4358, 0
      %v4388 = vsel %vm4018, %v4359, 0
      %v4391 = vsel %vm4018, %v4360, 0
      %v4394 = vsel %vm4018, %v4361, 0
      %v4397 = vsel %vm4018, %v4362, 0
      %v4400 = vsel %vm4018, %v4363, 0
      %v4403 = vsel %vm4018, %v4364, 0
      %v4406 = vsel %vm4018, %v4365, 0
      %v4409 = vsel %vm4018, %v4366, 0
      %v4412 = vsel %vm4018, %v4367, 0
      %v4415 = vsel %vm4018, %v4368, 0
      %v4418 = vsel %vm4018, %v4006, 0
      %v4421 = vsel %vm4018, %v4007, 0
      %v4424 = vsel %vm4018, %v4008, 0
      %v4427 = vsel %vm4018, %v4009, 0
      %v4430 = vsel %vm4018, %v4010, 0
      %v4433 = vsel %vm4018, %v4011, 0
      %v4436 = vsel %vm4018, %v4012, 0
      %v4439 = vsel %vm4018, %v4013, 0
      %4441 = vmatprep.subr.mxu0 0.0
      %4442 = vmatpush1.xpose.msra.mxu0 %v4418
      %4443 = vmatprep.subr.mxu0 0.0
      %4444 = vmatpush1.xpose.msra.mxu0 %v4421
      %4445 = vmatprep.subr.mxu0 0.0
      %4446 = vmatpush1.xpose.msra.mxu0 %v4424
      %4447 = vmatprep.subr.mxu0 0.0
      %4448 = vmatpush1.xpose.msra.mxu0 %v4427
      %4449 = vmatprep.subr.mxu0 0.0
      %4450 = vmatpush1.xpose.msra.mxu0 %v4430
      %4451 = vmatprep.subr.mxu0 0.0
      %4452 = vmatpush1.xpose.msra.mxu0 %v4433
      %4453 = vmatprep.subr.mxu0 0.0
      %4454 = vmatpush1.xpose.msra.mxu0 %v4436
      %4455 = vmatprep.subr.mxu0 0.0
      %4456 = vmatpush1.xpose.msra.mxu0 %v4439
      %4457 = vmatprep.subr.mxu0 0.0
      %4458 = vmatpush1.xpose.msra.mxu0 0.0
      %4459 = vmatprep.subr.mxu0 0.0
      %4460 = vmatpush1.xpose.msra.mxu0 0.0
      %4461 = vmatprep.subr.mxu0 0.0
      %4462 = vmatpush1.xpose.msra.mxu0 0.0
      %4463 = vmatprep.subr.mxu0 0.0
      %4464 = vmatpush1.xpose.msra.mxu0 0.0
      %4465 = vmatprep.subr.mxu0 0.0
      %4466 = vmatpush1.xpose.msra.mxu0 0.0
      %4467 = vmatprep.subr.mxu0 0.0
      %4468 = vmatpush1.xpose.msra.mxu0 0.0
      %4469 = vmatprep.subr.mxu0 0.0
      %4470 = vmatpush1.xpose.msra.mxu0 0.0
      %4471 = vmatprep.subr.mxu0 0.0
      %4472 = vmatpush1.xpose.msra.mxu0 0.0
      %4473 = vmatprep.subr.mxu0 0.0
      %4474 = vmatpush1.xpose.msra.mxu0 0.0
      %4475 = vmatprep.subr.mxu0 0.0
      %4476 = vmatpush1.xpose.msra.mxu0 0.0
      %4477 = vmatprep.subr.mxu0 0.0
      %4478 = vmatpush1.xpose.msra.mxu0 0.0
      %4479 = vmatprep.subr.mxu0 0.0
      %4480 = vmatpush1.xpose.msra.mxu0 0.0
      %4481 = vmatprep.subr.mxu0 0.0
      %4482 = vmatpush1.xpose.msra.mxu0 0.0
      %4483 = vmatprep.subr.mxu0 0.0
      %4484 = vmatpush1.xpose.msra.mxu0 0.0
      %4485 = vmatprep.subr.mxu0 0.0
      %4486 = vmatpush1.xpose.msra.mxu0 0.0
      %4487 = vmatprep.subr.mxu0 0.0
      %4488 = vmatpush1.xpose.msra.mxu0 0.0
      %4489 = vmatprep.subr.mxu0 0.0
      %4490 = vmatpush1.xpose.msra.mxu0 0.0
      %4491 = vmatprep.subr.mxu0 0.0
      %4492 = vmatpush1.xpose.msra.mxu0 0.0
      %4493 = vmatprep.subr.mxu0 0.0
      %4494 = vmatpush1.xpose.msra.mxu0 0.0
      %4495 = vmatprep.subr.mxu0 0.0
      %4496 = vmatpush1.xpose.msra.mxu0 0.0
      %4497 = vmatprep.subr.mxu0 0.0
      %4498 = vmatpush1.xpose.msra.mxu0 0.0
      %4499 = vmatprep.subr.mxu0 0.0
      %4500 = vmatpush1.xpose.msra.mxu0 0.0
      %4501 = vmatprep.subr.mxu0 0.0
      %4502 = vmatpush1.xpose.msra.mxu0 0.0
      %4503 = vmatprep.subr.mxu0 0.0
      %4504 = vmatpush1.xpose.msra.mxu0 0.0
      %4505 = vmatprep.mubr.f32.mxu0 0.0
      %4506 = vmatmul.mubr.f32.gmra.mrb[0].mxu0 %v4370
      %v4507 = vpop.f32.mrb[0].mxu0
      %v4508 = vadd.f32 0.0, %v4507
      %v4509 = vpop.f32.mrb[0].mxu0
      %4510 = vmatprep.mubr.f32.mxu0 0.0
      %4511 = vmatmul.mubr.f32.gmra.mrb[0].mxu0 %v4373
      %v4512 = vpop.f32.mrb[0].mxu0
      %v4513 = vadd.f32 0.0, %v4512
      %v4514 = vpop.f32.mrb[0].mxu0
      %4515 = vmatprep.mubr.f32.mxu0 0.0
      %4516 = vmatmul.mubr.f32.gmra.mrb[0].mxu0 %v4376
      %v4517 = vpop.f32.mrb[0].mxu0
      %v4518 = vadd.f32 0.0, %v4517
      %v4519 = vpop.f32.mrb[0].mxu0
      %4520 = vmatprep.mubr.f32.mxu0 0.0
      %4521 = vmatmul.mubr.f32.gmra.mrb[0].mxu0 %v4379
      %v4522 = vpop.f32.mrb[0].mxu0
      %v4523 = vadd.f32 0.0, %v4522
      %v4524 = vpop.f32.mrb[0].mxu0
      %4525 = vmatprep.mubr.f32.mxu0 0.0
      %4526 = vmatmul.mubr.f32.gmra.mrb[0].mxu0 %v4382
      %v4527 = vpop.f32.mrb[0].mxu0
      %v4528 = vadd.f32 0.0, %v4527
      %v4529 = vpop.f32.mrb[0].mxu0
      %4530 = vmatprep.mubr.f32.mxu0 0.0
      %4531 = vmatmul.mubr.f32.gmra.mrb[0].mxu0 %v4385
      %v4532 = vpop.f32.mrb[0].mxu0
      %v4533 = vadd.f32 0.0, %v4532
      %v4534 = vpop.f32.mrb[0].mxu0
      %4535 = vmatprep.mubr.f32.mxu0 0.0
      %4536 = vmatmul.mubr.f32.gmra.mrb[0].mxu0 %v4388
      %v4537 = vpop.f32.mrb[0].mxu0
      %v4538 = vadd.f32 0.0, %v4537
      %v4539 = vpop.f32.mrb[0].mxu0
      %4540 = vmatprep.mubr.f32.mxu0 0.0
      %4541 = vmatmul.mubr.f32.gmra.mrb[0].mxu0 %v4391
      %v4542 = vpop.f32.mrb[0].mxu0
      %v4543 = vadd.f32 0.0, %v4542
      %v4544 = vpop.f32.mrb[0].mxu0
      %4545 = vmatprep.mubr.f32.mxu0 0.0
      %4546 = vmatmul.mubr.f32.gmra.mrb[0].mxu0 %v4394
      %v4547 = vpop.f32.mrb[0].mxu0
      %v4548 = vadd.f32 0.0, %v4547
      %v4549 = vpop.f32.mrb[0].mxu0
      %4550 = vmatprep.mubr.f32.mxu0 0.0
      %4551 = vmatmul.mubr.f32.gmra.mrb[0].mxu0 %v4397
      %v4552 = vpop.f32.mrb[0].mxu0
      %v4553 = vadd.f32 0.0, %v4552
      %v4554 = vpop.f32.mrb[0].mxu0
      %4555 = vmatprep.mubr.f32.mxu0 0.0
      %4556 = vmatmul.mubr.f32.gmra.mrb[0].mxu0 %v4400
      %v4557 = vpop.f32.mrb[0].mxu0
      %v4558 = vadd.f32 0.0, %v4557
      %v4559 = vpop.f32.mrb[0].mxu0
      %4560 = vmatprep.mubr.f32.mxu0 0.0
      %4561 = vmatmul.mubr.f32.gmra.mrb[0].mxu0 %v4403
      %v4562 = vpop.f32.mrb[0].mxu0
      %v4563 = vadd.f32 0.0, %v4562
      %v4564 = vpop.f32.mrb[0].mxu0
      %4565 = vmatprep.mubr.f32.mxu0 0.0
      %4566 = vmatmul.mubr.f32.gmra.mrb[0].mxu0 %v4406
      %v4567 = vpop.f32.mrb[0].mxu0
      %v4568 = vadd.f32 0.0, %v4567
      %v4569 = vpop.f32.mrb[0].mxu0
      %4570 = vmatprep.mubr.f32.mxu0 0.0
      %4571 = vmatmul.mubr.f32.gmra.mrb[0].mxu0 %v4409
      %v4572 = vpop.f32.mrb[0].mxu0
      %v4573 = vadd.f32 0.0, %v4572
      %v4574 = vpop.f32.mrb[0].mxu0
      %4575 = vmatprep.mubr.f32.mxu0 0.0
      %4576 = vmatmul.mubr.f32.gmra.mrb[0].mxu0 %v4412
      %v4577 = vpop.f32.mrb[0].mxu0
      %v4578 = vadd.f32 0.0, %v4577
      %v4579 = vpop.f32.mrb[0].mxu0
      %4580 = vmatprep.mubr.f32.mxu0 0.0
      %4581 = vmatmul.mubr.f32.gmra.mrb[0].mxu0 %v4415
      %v4582 = vpop.f32.mrb[0].mxu0
      %v4583 = vadd.f32 0.0, %v4582
      %v4584 = vpop.f32.mrb[0].mxu0
      %4585 = vdwg.mxu0
      %v4586 = vmul.f32 %v3990, %v3990
      %v4587 = vmul.f32 %v3991, %v3991
      %v4588 = vmul.f32 %v3992, %v3992
      %v4589 = vmul.f32 %v3993, %v3993
      %v4590 = vmul.f32 %v3994, %v3994
      %v4591 = vmul.f32 %v3995, %v3995
      %v4592 = vmul.f32 %v3996, %v3996
      %v4593 = vmul.f32 %v3997, %v3997
      %v4594 = vmul.f32 %v3998, %v3998
      %v4595 = vmul.f32 %v3999, %v3999
      %v4596 = vmul.f32 %v4000, %v4000
      %v4597 = vmul.f32 %v4001, %v4001
      %v4598 = vmul.f32 %v4002, %v4002
      %v4599 = vmul.f32 %v4003, %v4003
      %v4600 = vmul.f32 %v4004, %v4004
      %v4601 = vmul.f32 %v4005, %v4005
      %v4602 = vsub.f32 1.0, %v4586
      %v4603 = vsub.f32 1.0, %v4587
      %v4604 = vsub.f32 1.0, %v4588
      %v4605 = vsub.f32 1.0, %v4589
      %v4606 = vsub.f32 1.0, %v4590
      %v4607 = vsub.f32 1.0, %v4591
      %v4608 = vsub.f32 1.0, %v4592
      %v4609 = vsub.f32 1.0, %v4593
      %v4610 = vsub.f32 1.0, %v4594
      %v4611 = vsub.f32 1.0, %v4595
      %v4612 = vsub.f32 1.0, %v4596
      %v4613 = vsub.f32 1.0, %v4597
      %v4614 = vsub.f32 1.0, %v4598
      %v4615 = vsub.f32 1.0, %v4599
      %v4616 = vsub.f32 1.0, %v4600
      %v4617 = vsub.f32 1.0, %v4601
      %v4618 = vmul.f32 %v4508, %v4602
      %v4619 = vmul.f32 %v4513, %v4603
      %v4620 = vmul.f32 %v4518, %v4604
      %v4621 = vmul.f32 %v4523, %v4605
      %v4622 = vmul.f32 %v4528, %v4606
      %v4623 = vmul.f32 %v4533, %v4607
      %v4624 = vmul.f32 %v4538, %v4608
      %v4625 = vmul.f32 %v4543, %v4609
      %v4626 = vmul.f32 %v4548, %v4610
      %v4627 = vmul.f32 %v4553, %v4611
      %v4628 = vmul.f32 %v4558, %v4612
      %v4629 = vmul.f32 %v4563, %v4613
      %v4630 = vmul.f32 %v4568, %v4614
      %v4631 = vmul.f32 %v4573, %v4615
      %v4632 = vmul.f32 %v4578, %v4616
      %v4633 = vmul.f32 %v4583, %v4617
      %v4634 = vmul.f32 %v4618, %v3457
      %v4635 = vmul.f32 %v4619, %v3457
      %v4636 = vmul.f32 %v4620, %v3457
      %v4637 = vmul.f32 %v4621, %v3457
      %v4638 = vmul.f32 %v4622, %v3457
      %v4639 = vmul.f32 %v4623, %v3457
      %v4640 = vmul.f32 %v4624, %v3457
      %v4641 = vmul.f32 %v4625, %v3457
      %v4642 = vmul.f32 %v4626, %v3457
      %v4643 = vmul.f32 %v4627, %v3457
      %v4644 = vmul.f32 %v4628, %v3457
      %v4645 = vmul.f32 %v4629, %v3457
      %v4646 = vmul.f32 %v4630, %v3457
      %v4647 = vmul.f32 %v4631, %v3457
      %v4648 = vmul.f32 %v4632, %v3457
      %v4649 = vmul.f32 %v4633, %v3457
      %v4650 = vsel %vm4018, %v4634, 0.0
      %4651 = vadd.xlane.f32.xlu0 %v4650
      %v4652 = vpop.xlane.xlu0 %4651
      %v4653 = vsel %vm4018, %v4635, 0.0
      %4654 = vadd.xlane.f32.xlu0 %v4653
      %v4655 = vpop.xlane.xlu0 %4654
      %v4656 = vsel %vm4018, %v4636, 0.0
      %4657 = vadd.xlane.f32.xlu0 %v4656
      %v4658 = vpop.xlane.xlu0 %4657
      %v4659 = vsel %vm4018, %v4637, 0.0
      %4660 = vadd.xlane.f32.xlu0 %v4659
      %v4661 = vpop.xlane.xlu0 %4660
      %v4662 = vsel %vm4018, %v4638, 0.0
      %4663 = vadd.xlane.f32.xlu0 %v4662
      %v4664 = vpop.xlane.xlu0 %4663
      %v4665 = vsel %vm4018, %v4639, 0.0
      %4666 = vadd.xlane.f32.xlu0 %v4665
      %v4667 = vpop.xlane.xlu0 %4666
      %v4668 = vsel %vm4018, %v4640, 0.0
      %4669 = vadd.xlane.f32.xlu0 %v4668
      %v4670 = vpop.xlane.xlu0 %4669
      %v4671 = vsel %vm4018, %v4641, 0.0
      %4672 = vadd.xlane.f32.xlu0 %v4671
      %v4673 = vpop.xlane.xlu0 %4672
      %v4674 = vsel %vm4018, %v4642, 0.0
      %4675 = vadd.xlane.f32.xlu0 %v4674
      %v4676 = vpop.xlane.xlu0 %4675
      %v4677 = vsel %vm4018, %v4643, 0.0
      %4678 = vadd.xlane.f32.xlu0 %v4677
      %v4679 = vpop.xlane.xlu0 %4678
      %v4680 = vsel %vm4018, %v4644, 0.0
      %4681 = vadd.xlane.f32.xlu0 %v4680
      %v4682 = vpop.xlane.xlu0 %4681
      %v4683 = vsel %vm4018, %v4645, 0.0
      %4684 = vadd.xlane.f32.xlu0 %v4683
      %v4685 = vpop.xlane.xlu0 %4684
      %v4686 = vsel %vm4018, %v4646, 0.0
      %4687 = vadd.xlane.f32.xlu0 %v4686
      %v4688 = vpop.xlane.xlu0 %4687
      %v4689 = vsel %vm4018, %v4647, 0.0
      %4690 = vadd.xlane.f32.xlu0 %v4689
      %v4691 = vpop.xlane.xlu0 %4690
      %v4692 = vsel %vm4018, %v4648, 0.0
      %4693 = vadd.xlane.f32.xlu0 %v4692
      %v4694 = vpop.xlane.xlu0 %4693
      %v4695 = vsel %vm4018, %v4649, 0.0
      %4696 = vadd.xlane.f32.xlu0 %v4695
      %v4697 = vpop.xlane.xlu0 %4696
      %v4698 = vlaneseq
      %v4699 = vshrl.u32 %v4698, 7
      %v4700 = vsub.s32 0, %v4699
      %v4701 = vrot.slane %v628, %v4700
      %v4702 = vmul.f32 %v3375, %v4701
      %v4703 = vmul.f32 %v3377, %v4701
      %v4704 = vmul.f32 %v3379, %v4701
      %v4705 = vmul.f32 %v3381, %v4701
      %v4706 = vmul.f32 %v3383, %v4701
      %v4707 = vmul.f32 %v3385, %v4701
      %v4708 = vmul.f32 %v3387, %v4701
      %v4709 = vmul.f32 %v3389, %v4701
      %v4710 = vmul.f32 %v3391, %v4701
      %v4711 = vmul.f32 %v3393, %v4701
      %v4712 = vmul.f32 %v3395, %v4701
      %v4713 = vmul.f32 %v3397, %v4701
      %v4714 = vmul.f32 %v3399, %v4701
      %v4715 = vmul.f32 %v3401, %v4701
      %v4716 = vmul.f32 %v3403, %v4701
      %v4717 = vmul.f32 %v3405, %v4701
      %v4718 = vsel %vm722, %v4702, 0.0
      %4719 = vadd.xlane.f32.xlu0 %v4718
      %v4720 = vpop.xlane.xlu0 %4719
      %v4721 = vsel %vm722, %v4703, 0.0
      %4722 = vadd.xlane.f32.xlu0 %v4721
      %v4723 = vpop.xlane.xlu0 %4722
      %v4724 = vsel %vm722, %v4704, 0.0
      %4725 = vadd.xlane.f32.xlu0 %v4724
      %v4726 = vpop.xlane.xlu0 %4725
      %v4727 = vsel %vm722, %v4705, 0.0
      %4728 = vadd.xlane.f32.xlu0 %v4727
      %v4729 = vpop.xlane.xlu0 %4728
      %v4730 = vsel %vm722, %v4706, 0.0
      %4731 = vadd.xlane.f32.xlu0 %v4730
      %v4732 = vpop.xlane.xlu0 %4731
      %v4733 = vsel %vm722, %v4707, 0.0
      %4734 = vadd.xlane.f32.xlu0 %v4733
      %v4735 = vpop.xlane.xlu0 %4734
      %v4736 = vsel %vm722, %v4708, 0.0
      %4737 = vadd.xlane.f32.xlu0 %v4736
      %v4738 = vpop.xlane.xlu0 %4737
      %v4739 = vsel %vm722, %v4709, 0.0
      %4740 = vadd.xlane.f32.xlu0 %v4739
      %v4741 = vpop.xlane.xlu0 %4740
      %v4742 = vsel %vm722, %v4710, 0.0
      %4743 = vadd.xlane.f32.xlu0 %v4742
      %v4744 = vpop.xlane.xlu0 %4743
      %v4745 = vsel %vm722, %v4711, 0.0
      %4746 = vadd.xlane.f32.xlu0 %v4745
      %v4747 = vpop.xlane.xlu0 %4746
      %v4748 = vsel %vm722, %v4712, 0.0
      %4749 = vadd.xlane.f32.xlu0 %v4748
      %v4750 = vpop.xlane.xlu0 %4749
      %v4751 = vsel %vm722, %v4713, 0.0
      %4752 = vadd.xlane.f32.xlu0 %v4751
      %v4753 = vpop.xlane.xlu0 %4752
      %v4754 = vsel %vm722, %v4714, 0.0
      %4755 = vadd.xlane.f32.xlu0 %v4754
      %v4756 = vpop.xlane.xlu0 %4755
      %v4757 = vsel %vm722, %v4715, 0.0
      %4758 = vadd.xlane.f32.xlu0 %v4757
      %v4759 = vpop.xlane.xlu0 %4758
      %v4760 = vsel %vm722, %v4716, 0.0
      %4761 = vadd.xlane.f32.xlu0 %v4760
      %v4762 = vpop.xlane.xlu0 %4761
      %v4763 = vsel %vm722, %v4717, 0.0
      %4764 = vadd.xlane.f32.xlu0 %v4763
      %v4765 = vpop.xlane.xlu0 %4764
      %v4766 = vsub.f32 0.0, %v4720
      %v4767 = vsub.f32 0.0, %v4723
      %v4768 = vsub.f32 0.0, %v4726
      %v4769 = vsub.f32 0.0, %v4729
      %v4770 = vsub.f32 0.0, %v4732
      %v4771 = vsub.f32 0.0, %v4735
      %v4772 = vsub.f32 0.0, %v4738
      %v4773 = vsub.f32 0.0, %v4741
      %v4774 = vsub.f32 0.0, %v4744
      %v4775 = vsub.f32 0.0, %v4747
      %v4776 = vsub.f32 0.0, %v4750
      %v4777 = vsub.f32 0.0, %v4753
      %v4778 = vsub.f32 0.0, %v4756
      %v4779 = vsub.f32 0.0, %v4759
      %v4780 = vsub.f32 0.0, %v4762
      %v4781 = vsub.f32 0.0, %v4765
      %v4782 = vrcp.pop %v3205
      %v4783 = vmul.f32 %v4766, %v4782
      %v4784 = vrcp.pop %v3206
      %v4785 = vmul.f32 %v4767, %v4784
      %v4786 = vrcp.pop %v3207
      %v4787 = vmul.f32 %v4768, %v4786
      %v4788 = vrcp.pop %v3208
      %v4789 = vmul.f32 %v4769, %v4788
      %v4790 = vrcp.pop %v3209
      %v4791 = vmul.f32 %v4770, %v4790
      %v4792 = vrcp.pop %v3210
      %v4793 = vmul.f32 %v4771, %v4792
      %v4794 = vrcp.pop %v3211
      %v4795 = vmul.f32 %v4772, %v4794
      %v4796 = vrcp.pop %v3212
      %v4797 = vmul.f32 %v4773, %v4796
      %v4798 = vrcp.pop %v3213
      %v4799 = vmul.f32 %v4774, %v4798
      %v4800 = vrcp.pop %v3214
      %v4801 = vmul.f32 %v4775, %v4800
      %v4802 = vrcp.pop %v3215
      %v4803 = vmul.f32 %v4776, %v4802
      %v4804 = vrcp.pop %v3216
      %v4805 = vmul.f32 %v4777, %v4804
      %v4806 = vrcp.pop %v3217
      %v4807 = vmul.f32 %v4778, %v4806
      %v4808 = vrcp.pop %v3218
      %v4809 = vmul.f32 %v4779, %v4808
      %v4810 = vrcp.pop %v3219
      %v4811 = vmul.f32 %v4780, %v4810
      %v4812 = vrcp.pop %v3220
      %v4813 = vmul.f32 %v4781, %v4812
      %v4814 = vmul.f32 %v3157, -2.0
      %v4815 = vmul.f32 %v3158, -2.0
      %v4816 = vmul.f32 %v3159, -2.0
      %v4817 = vmul.f32 %v3160, -2.0
      %v4818 = vmul.f32 %v3161, -2.0
      %v4819 = vmul.f32 %v3162, -2.0
      %v4820 = vmul.f32 %v3163, -2.0
      %v4821 = vmul.f32 %v3164, -2.0
      %v4822 = vmul.f32 %v3165, -2.0
      %v4823 = vmul.f32 %v3166, -2.0
      %v4824 = vmul.f32 %v3167, -2.0
      %v4825 = vmul.f32 %v3168, -2.0
      %v4826 = vmul.f32 %v3169, -2.0
      %v4827 = vmul.f32 %v3170, -2.0
      %v4828 = vmul.f32 %v3171, -2.0
      %v4829 = vmul.f32 %v3172, -2.0
      %v4830 = vmul.f32 %v4814, %v4783
      %v4831 = vmul.f32 %v4815, %v4785
      %v4832 = vmul.f32 %v4816, %v4787
      %v4833 = vmul.f32 %v4817, %v4789
      %v4834 = vmul.f32 %v4818, %v4791
      %v4835 = vmul.f32 %v4819, %v4793
      %v4836 = vmul.f32 %v4820, %v4795
      %v4837 = vmul.f32 %v4821, %v4797
      %v4838 = vmul.f32 %v4822, %v4799
      %v4839 = vmul.f32 %v4823, %v4801
      %v4840 = vmul.f32 %v4824, %v4803
      %v4841 = vmul.f32 %v4825, %v4805
      %v4842 = vmul.f32 %v4826, %v4807
      %v4843 = vmul.f32 %v4827, %v4809
      %v4844 = vmul.f32 %v4828, %v4811
      %v4845 = vmul.f32 %v4829, %v4813
      %v4846 = vsub.f32 1.0, %v3173
      %v4847 = vsub.f32 1.0, %v3174
      %v4848 = vsub.f32 1.0, %v3175
      %v4849 = vsub.f32 1.0, %v3176
      %v4850 = vsub.f32 1.0, %v3177
      %v4851 = vsub.f32 1.0, %v3178
      %v4852 = vsub.f32 1.0, %v3179
      %v4853 = vsub.f32 1.0, %v3180
      %v4854 = vsub.f32 1.0, %v3181
      %v4855 = vsub.f32 1.0, %v3182
      %v4856 = vsub.f32 1.0, %v3183
      %v4857 = vsub.f32 1.0, %v3184
      %v4858 = vsub.f32 1.0, %v3185
      %v4859 = vsub.f32 1.0, %v3186
      %v4860 = vsub.f32 1.0, %v3187
      %v4861 = vsub.f32 1.0, %v3188
      %v4862 = vmul.f32 %v4830, %v4846
      %v4863 = vmul.f32 %v4831, %v4847
      %v4864 = vmul.f32 %v4832, %v4848
      %v4865 = vmul.f32 %v4833, %v4849
      %v4866 = vmul.f32 %v4834, %v4850
      %v4867 = vmul.f32 %v4835, %v4851
      %v4868 = vmul.f32 %v4836, %v4852
      %v4869 = vmul.f32 %v4837, %v4853
      %v4870 = vmul.f32 %v4838, %v4854
      %v4871 = vmul.f32 %v4839, %v4855
      %v4872 = vmul.f32 %v4840, %v4856
      %v4873 = vmul.f32 %v4841, %v4857
      %v4874 = vmul.f32 %v4842, %v4858
      %v4875 = vmul.f32 %v4843, %v4859
      %v4876 = vmul.f32 %v4844, %v4860
      %v4877 = vmul.f32 %v4845, %v4861
      %4879 = vset.pattern.permute.xlu0 0
      %4880 = vperm.xlu0 %4879, %v4862
      %v4881 = vpop.permute.xlu0 %4880
      %4884 = vset.pattern.permute.xlu0 0
      %4885 = vperm.xlu0 %4884, %v4863
      %v4886 = vpop.permute.xlu0 %4885
      %4889 = vset.pattern.permute.xlu0 0
      %4890 = vperm.xlu0 %4889, %v4864
      %v4891 = vpop.permute.xlu0 %4890
      %4894 = vset.pattern.permute.xlu0 0
      %4895 = vperm.xlu0 %4894, %v4865
      %v4896 = vpop.permute.xlu0 %4895
      %4899 = vset.pattern.permute.xlu0 0
      %4900 = vperm.xlu0 %4899, %v4866
      %v4901 = vpop.permute.xlu0 %4900
      %4904 = vset.pattern.permute.xlu0 0
      %4905 = vperm.xlu0 %4904, %v4867
      %v4906 = vpop.permute.xlu0 %4905
      %4909 = vset.pattern.permute.xlu0 0
      %4910 = vperm.xlu0 %4909, %v4868
      %v4911 = vpop.permute.xlu0 %4910
      %4914 = vset.pattern.permute.xlu0 0
      %4915 = vperm.xlu0 %4914, %v4869
      %v4916 = vpop.permute.xlu0 %4915
      %4919 = vset.pattern.permute.xlu0 0
      %4920 = vperm.xlu0 %4919, %v4870
      %v4921 = vpop.permute.xlu0 %4920
      %4924 = vset.pattern.permute.xlu0 0
      %4925 = vperm.xlu0 %4924, %v4871
      %v4926 = vpop.permute.xlu0 %4925
      %4929 = vset.pattern.permute.xlu0 0
      %4930 = vperm.xlu0 %4929, %v4872
      %v4931 = vpop.permute.xlu0 %4930
      %4934 = vset.pattern.permute.xlu0 0
      %4935 = vperm.xlu0 %4934, %v4873
      %v4936 = vpop.permute.xlu0 %4935
      %4939 = vset.pattern.permute.xlu0 0
      %4940 = vperm.xlu0 %4939, %v4874
      %v4941 = vpop.permute.xlu0 %4940
      %4944 = vset.pattern.permute.xlu0 0
      %4945 = vperm.xlu0 %4944, %v4875
      %v4946 = vpop.permute.xlu0 %4945
      %4949 = vset.pattern.permute.xlu0 0
      %4950 = vperm.xlu0 %4949, %v4876
      %v4951 = vpop.permute.xlu0 %4950
      %4954 = vset.pattern.permute.xlu0 0
      %4955 = vperm.xlu0 %4954, %v4877
      %v4956 = vpop.permute.xlu0 %4955
      %v4958 = vmul.f32 %v4881, %v3072
      %v4959 = vmul.f32 %v4886, %v3072
      %v4960 = vmul.f32 %v4891, %v3072
      %v4961 = vmul.f32 %v4896, %v3072
      %v4962 = vmul.f32 %v4901, %v3072
      %v4963 = vmul.f32 %v4906, %v3072
      %v4964 = vmul.f32 %v4911, %v3072
      %v4965 = vmul.f32 %v4916, %v3072
      %v4966 = vmul.f32 %v4921, %v3072
      %v4967 = vmul.f32 %v4926, %v3072
      %v4968 = vmul.f32 %v4931, %v3072
      %v4969 = vmul.f32 %v4936, %v3072
      %v4970 = vmul.f32 %v4941, %v3072
      %v4971 = vmul.f32 %v4946, %v3072
      %v4972 = vmul.f32 %v4951, %v3072
      %v4973 = vmul.f32 %v4956, %v3072
      %v4974 = vmul.f32 %v3053, %v3053
      %v4975 = vmul.f32 %v3054, %v3054
      %v4976 = vmul.f32 %v3055, %v3055
      %v4977 = vmul.f32 %v3056, %v3056
      %v4978 = vmul.f32 %v3057, %v3057
      %v4979 = vmul.f32 %v3058, %v3058
      %v4980 = vmul.f32 %v3059, %v3059
      %v4981 = vmul.f32 %v3060, %v3060
      %v4982 = vmul.f32 %v3061, %v3061
      %v4983 = vmul.f32 %v3062, %v3062
      %v4984 = vmul.f32 %v3063, %v3063
      %v4985 = vmul.f32 %v3064, %v3064
      %v4986 = vmul.f32 %v3065, %v3065
      %v4987 = vmul.f32 %v3066, %v3066
      %v4988 = vmul.f32 %v3067, %v3067
      %v4989 = vmul.f32 %v3068, %v3068
      %v4990 = vsub.f32 1.0, %v4974
      %v4991 = vsub.f32 1.0, %v4975
      %v4992 = vsub.f32 1.0, %v4976
      %v4993 = vsub.f32 1.0, %v4977
      %v4994 = vsub.f32 1.0, %v4978
      %v4995 = vsub.f32 1.0, %v4979
      %v4996 = vsub.f32 1.0, %v4980
      %v4997 = vsub.f32 1.0, %v4981
      %v4998 = vsub.f32 1.0, %v4982
      %v4999 = vsub.f32 1.0, %v4983
      %v5000 = vsub.f32 1.0, %v4984
      %v5001 = vsub.f32 1.0, %v4985
      %v5002 = vsub.f32 1.0, %v4986
      %v5003 = vsub.f32 1.0, %v4987
      %v5004 = vsub.f32 1.0, %v4988
      %v5005 = vsub.f32 1.0, %v4989
      %v5006 = vmul.f32 %v4958, %v4990
      %v5007 = vmul.f32 %v4959, %v4991
      %v5008 = vmul.f32 %v4960, %v4992
      %v5009 = vmul.f32 %v4961, %v4993
      %v5010 = vmul.f32 %v4962, %v4994
      %v5011 = vmul.f32 %v4963, %v4995
      %v5012 = vmul.f32 %v4964, %v4996
      %v5013 = vmul.f32 %v4965, %v4997
      %v5014 = vmul.f32 %v4966, %v4998
      %v5015 = vmul.f32 %v4967, %v4999
      %v5016 = vmul.f32 %v4968, %v5000
      %v5017 = vmul.f32 %v4969, %v5001
      %v5018 = vmul.f32 %v4970, %v5002
      %v5019 = vmul.f32 %v4971, %v5003
      %v5020 = vmul.f32 %v4972, %v5004
      %v5021 = vmul.f32 %v4973, %v5005
      %v5023 = vsel %vm2859, %v5006, 0
      %v5026 = vsel %vm2859, %v5007, 0
      %v5029 = vsel %vm2859, %v5008, 0
      %v5032 = vsel %vm2859, %v5009, 0
      %v5035 = vsel %vm2859, %v5010, 0
      %v5038 = vsel %vm2859, %v5011, 0
      %v5041 = vsel %vm2859, %v5012, 0
      %v5044 = vsel %vm2859, %v5013, 0
      %v5047 = vsel %vm2859, %v5014, 0
      %v5050 = vsel %vm2859, %v5015, 0
      %v5053 = vsel %vm2859, %v5016, 0
      %v5056 = vsel %vm2859, %v5017, 0
      %v5059 = vsel %vm2859, %v5018, 0
      %v5062 = vsel %vm2859, %v5019, 0
      %v5065 = vsel %vm2859, %v5020, 0
      %v5068 = vsel %vm2859, %v5021, 0
      %v5071 = vsel %vm2859, %v2851, 0
      %v5074 = vsel %vm2859, %v2852, 0
      %v5077 = vsel %vm2859, %v2853, 0
      %v5080 = vsel %vm2859, %v2854, 0
      %5082 = vmatprep.subr.mxu0 0.0
      %5083 = vmatpush1.xpose.msra.mxu0 %v5071
      %5084 = vmatprep.subr.mxu0 0.0
      %5085 = vmatpush1.xpose.msra.mxu0 %v5074
      %5086 = vmatprep.subr.mxu0 0.0
      %5087 = vmatpush1.xpose.msra.mxu0 %v5077
      %5088 = vmatprep.subr.mxu0 0.0
      %5089 = vmatpush1.xpose.msra.mxu0 %v5080
      %5090 = vmatprep.subr.mxu0 0.0
      %5091 = vmatpush1.xpose.msra.mxu0 0.0
      %5092 = vmatprep.subr.mxu0 0.0
      %5093 = vmatpush1.xpose.msra.mxu0 0.0
      %5094 = vmatprep.subr.mxu0 0.0
      %5095 = vmatpush1.xpose.msra.mxu0 0.0
      %5096 = vmatprep.subr.mxu0 0.0
      %5097 = vmatpush1.xpose.msra.mxu0 0.0
      %5098 = vmatprep.subr.mxu0 0.0
      %5099 = vmatpush1.xpose.msra.mxu0 0.0
      %5100 = vmatprep.subr.mxu0 0.0
      %5101 = vmatpush1.xpose.msra.mxu0 0.0
      %5102 = vmatprep.subr.mxu0 0.0
      %5103 = vmatpush1.xpose.msra.mxu0 0.0
      %5104 = vmatprep.subr.mxu0 0.0
      %5105 = vmatpush1.xpose.msra.mxu0 0.0
      %5106 = vmatprep.subr.mxu0 0.0
      %5107 = vmatpush1.xpose.msra.mxu0 0.0
      %5108 = vmatprep.subr.mxu0 0.0
      %5109 = vmatpush1.xpose.msra.mxu0 0.0
      %5110 = vmatprep.subr.mxu0 0.0
      %5111 = vmatpush1.xpose.msra.mxu0 0.0
      %5112 = vmatprep.subr.mxu0 0.0
      %5113 = vmatpush1.xpose.msra.mxu0 0.0
      %5114 = vmatprep.subr.mxu0 0.0
      %5115 = vmatpush1.xpose.msra.mxu0 0.0
      %5116 = vmatprep.subr.mxu0 0.0
      %5117 = vmatpush1.xpose.msra.mxu0 0.0
      %5118 = vmatprep.subr.mxu0 0.0
      %5119 = vmatpush1.xpose.msra.mxu0 0.0
      %5120 = vmatprep.subr.mxu0 0.0
      %5121 = vmatpush1.xpose.msra.mxu0 0.0
      %5122 = vmatprep.subr.mxu0 0.0
      %5123 = vmatpush1.xpose.msra.mxu0 0.0
      %5124 = vmatprep.subr.mxu0 0.0
      %5125 = vmatpush1.xpose.msra.mxu0 0.0
      %5126 = vmatprep.subr.mxu0 0.0
      %5127 = vmatpush1.xpose.msra.mxu0 0.0
      %5128 = vmatprep.subr.mxu0 0.0
      %5129 = vmatpush1.xpose.msra.mxu0 0.0
      %5130 = vmatprep.subr.mxu0 0.0
      %5131 = vmatpush1.xpose.msra.mxu0 0.0
      %5132 = vmatprep.subr.mxu0 0.0
      %5133 = vmatpush1.xpose.msra.mxu0 0.0
      %5134 = vmatprep.subr.mxu0 0.0
      %5135 = vmatpush1.xpose.msra.mxu0 0.0
      %5136 = vmatprep.subr.mxu0 0.0
      %5137 = vmatpush1.xpose.msra.mxu0 0.0
      %5138 = vmatprep.subr.mxu0 0.0
      %5139 = vmatpush1.xpose.msra.mxu0 0.0
      %5140 = vmatprep.subr.mxu0 0.0
      %5141 = vmatpush1.xpose.msra.mxu0 0.0
      %5142 = vmatprep.subr.mxu0 0.0
      %5143 = vmatpush1.xpose.msra.mxu0 0.0
      %5144 = vmatprep.subr.mxu0 0.0
      %5145 = vmatpush1.xpose.msra.mxu0 0.0
      %5146 = vmatprep.mubr.f32.mxu0 0.0
      %5147 = vmatmul.mubr.f32.gmra.mrb[0].mxu0 %v5023
      %v5148 = vpop.f32.mrb[0].mxu0
      %v5149 = vadd.f32 0.0, %v5148
      %v5150 = vpop.f32.mrb[0].mxu0
      %5151 = vmatprep.mubr.f32.mxu0 0.0
      %5152 = vmatmul.mubr.f32.gmra.mrb[0].mxu0 %v5026
      %v5153 = vpop.f32.mrb[0].mxu0
      %v5154 = vadd.f32 0.0, %v5153
      %v5155 = vpop.f32.mrb[0].mxu0
      %5156 = vmatprep.mubr.f32.mxu0 0.0
      %5157 = vmatmul.mubr.f32.gmra.mrb[0].mxu0 %v5029
      %v5158 = vpop.f32.mrb[0].mxu0
      %v5159 = vadd.f32 0.0, %v5158
      %v5160 = vpop.f32.mrb[0].mxu0
      %5161 = vmatprep.mubr.f32.mxu0 0.0
      %5162 = vmatmul.mubr.f32.gmra.mrb[0].mxu0 %v5032
      %v5163 = vpop.f32.mrb[0].mxu0
      %v5164 = vadd.f32 0.0, %v5163
      %v5165 = vpop.f32.mrb[0].mxu0
      %5166 = vmatprep.mubr.f32.mxu0 0.0
      %5167 = vmatmul.mubr.f32.gmra.mrb[0].mxu0 %v5035
      %v5168 = vpop.f32.mrb[0].mxu0
      %v5169 = vadd.f32 0.0, %v5168
      %v5170 = vpop.f32.mrb[0].mxu0
      %5171 = vmatprep.mubr.f32.mxu0 0.0
      %5172 = vmatmul.mubr.f32.gmra.mrb[0].mxu0 %v5038
      %v5173 = vpop.f32.mrb[0].mxu0
      %v5174 = vadd.f32 0.0, %v5173
      %v5175 = vpop.f32.mrb[0].mxu0
      %5176 = vmatprep.mubr.f32.mxu0 0.0
      %5177 = vmatmul.mubr.f32.gmra.mrb[0].mxu0 %v5041
      %v5178 = vpop.f32.mrb[0].mxu0
      %v5179 = vadd.f32 0.0, %v5178
      %v5180 = vpop.f32.mrb[0].mxu0
      %5181 = vmatprep.mubr.f32.mxu0 0.0
      %5182 = vmatmul.mubr.f32.gmra.mrb[0].mxu0 %v5044
      %v5183 = vpop.f32.mrb[0].mxu0
      %v5184 = vadd.f32 0.0, %v5183
      %v5185 = vpop.f32.mrb[0].mxu0
      %5186 = vmatprep.mubr.f32.mxu0 0.0
      %5187 = vmatmul.mubr.f32.gmra.mrb[0].mxu0 %v5047
      %v5188 = vpop.f32.mrb[0].mxu0
      %v5189 = vadd.f32 0.0, %v5188
      %v5190 = vpop.f32.mrb[0].mxu0
      %5191 = vmatprep.mubr.f32.mxu0 0.0
      %5192 = vmatmul.mubr.f32.gmra.mrb[0].mxu0 %v5050
      %v5193 = vpop.f32.mrb[0].mxu0
      %v5194 = vadd.f32 0.0, %v5193
      %v5195 = vpop.f32.mrb[0].mxu0
      %5196 = vmatprep.mubr.f32.mxu0 0.0
      %5197 = vmatmul.mubr.f32.gmra.mrb[0].mxu0 %v5053
      %v5198 = vpop.f32.mrb[0].mxu0
      %v5199 = vadd.f32 0.0, %v5198
      %v5200 = vpop.f32.mrb[0].mxu0
      %5201 = vmatprep.mubr.f32.mxu0 0.0
      %5202 = vmatmul.mubr.f32.gmra.mrb[0].mxu0 %v5056
      %v5203 = vpop.f32.mrb[0].mxu0
      %v5204 = vadd.f32 0.0, %v5203
      %v5205 = vpop.f32.mrb[0].mxu0
      %5206 = vmatprep.mubr.f32.mxu0 0.0
      %5207 = vmatmul.mubr.f32.gmra.mrb[0].mxu0 %v5059
      %v5208 = vpop.f32.mrb[0].mxu0
      %v5209 = vadd.f32 0.0, %v5208
      %v5210 = vpop.f32.mrb[0].mxu0
      %5211 = vmatprep.mubr.f32.mxu0 0.0
      %5212 = vmatmul.mubr.f32.gmra.mrb[0].mxu0 %v5062
      %v5213 = vpop.f32.mrb[0].mxu0
      %v5214 = vadd.f32 0.0, %v5213
      %v5215 = vpop.f32.mrb[0].mxu0
      %5216 = vmatprep.mubr.f32.mxu0 0.0
      %5217 = vmatmul.mubr.f32.gmra.mrb[0].mxu0 %v5065
      %v5218 = vpop.f32.mrb[0].mxu0
      %v5219 = vadd.f32 0.0, %v5218
      %v5220 = vpop.f32.mrb[0].mxu0
      %5221 = vmatprep.mubr.f32.mxu0 0.0
      %5222 = vmatmul.mubr.f32.gmra.mrb[0].mxu0 %v5068
      %v5223 = vpop.f32.mrb[0].mxu0
      %v5224 = vadd.f32 0.0, %v5223
      %v5225 = vpop.f32.mrb[0].mxu0
      %5226 = vdwg.mxu0
      %v5227 = vmul.f32 %v2835, %v2835
      %v5228 = vmul.f32 %v2836, %v2836
      %v5229 = vmul.f32 %v2837, %v2837
      %v5230 = vmul.f32 %v2838, %v2838
      %v5231 = vmul.f32 %v2839, %v2839
      %v5232 = vmul.f32 %v2840, %v2840
      %v5233 = vmul.f32 %v2841, %v2841
      %v5234 = vmul.f32 %v2842, %v2842
      %v5235 = vmul.f32 %v2843, %v2843
      %v5236 = vmul.f32 %v2844, %v2844
      %v5237 = vmul.f32 %v2845, %v2845
      %v5238 = vmul.f32 %v2846, %v2846
      %v5239 = vmul.f32 %v2847, %v2847
      %v5240 = vmul.f32 %v2848, %v2848
      %v5241 = vmul.f32 %v2849, %v2849
      %v5242 = vmul.f32 %v2850, %v2850
      %v5243 = vsub.f32 1.0, %v5227
      %v5244 = vsub.f32 1.0, %v5228
      %v5245 = vsub.f32 1.0, %v5229
      %v5246 = vsub.f32 1.0, %v5230
      %v5247 = vsub.f32 1.0, %v5231
      %v5248 = vsub.f32 1.0, %v5232
      %v5249 = vsub.f32 1.0, %v5233
      %v5250 = vsub.f32 1.0, %v5234
      %v5251 = vsub.f32 1.0, %v5235
      %v5252 = vsub.f32 1.0, %v5236
      %v5253 = vsub.f32 1.0, %v5237
      %v5254 = vsub.f32 1.0, %v5238
      %v5255 = vsub.f32 1.0, %v5239
      %v5256 = vsub.f32 1.0, %v5240
      %v5257 = vsub.f32 1.0, %v5241
      %v5258 = vsub.f32 1.0, %v5242
      %v5259 = vmul.f32 %v5149, %v5243
      %v5260 = vmul.f32 %v5154, %v5244
      %v5261 = vmul.f32 %v5159, %v5245
      %v5262 = vmul.f32 %v5164, %v5246
      %v5263 = vmul.f32 %v5169, %v5247
      %v5264 = vmul.f32 %v5174, %v5248
      %v5265 = vmul.f32 %v5179, %v5249
      %v5266 = vmul.f32 %v5184, %v5250
      %v5267 = vmul.f32 %v5189, %v5251
      %v5268 = vmul.f32 %v5194, %v5252
      %v5269 = vmul.f32 %v5199, %v5253
      %v5270 = vmul.f32 %v5204, %v5254
      %v5271 = vmul.f32 %v5209, %v5255
      %v5272 = vmul.f32 %v5214, %v5256
      %v5273 = vmul.f32 %v5219, %v5257
      %v5274 = vmul.f32 %v5224, %v5258
      %v5275 = vmul.f32 %v1263, 2.0
      %v5276 = vmul.f32 %v1268, 2.0
      %v5277 = vmul.f32 %v1273, 2.0
      %v5278 = vmul.f32 %v1278, 2.0
      %v5279 = vmul.f32 %v1283, 2.0
      %v5280 = vmul.f32 %v1288, 2.0
      %v5281 = vmul.f32 %v1293, 2.0
      %v5282 = vmul.f32 %v1298, 2.0
      %v5283 = vmul.f32 %v1303, 2.0
      %v5284 = vmul.f32 %v1308, 2.0
      %v5285 = vmul.f32 %v1313, 2.0
      %v5286 = vmul.f32 %v1318, 2.0
      %v5287 = vmul.f32 %v1323, 2.0
      %v5288 = vmul.f32 %v1328, 2.0
      %v5289 = vmul.f32 %v1333, 2.0
      %v5290 = vmul.f32 %v1338, 2.0
      %v5292 = vsel %vm4018, %v4618, 0
      %v5295 = vsel %vm4018, %v4619, 0
      %v5298 = vsel %vm4018, %v4620, 0
      %v5301 = vsel %vm4018, %v4621, 0
      %v5304 = vsel %vm4018, %v4622, 0
      %v5307 = vsel %vm4018, %v4623, 0
      %v5310 = vsel %vm4018, %v4624, 0
      %v5313 = vsel %vm4018, %v4625, 0
      %v5316 = vsel %vm4018, %v4626, 0
      %v5319 = vsel %vm4018, %v4627, 0
      %v5322 = vsel %vm4018, %v4628, 0
      %v5325 = vsel %vm4018, %v4629, 0
      %v5328 = vsel %vm4018, %v4630, 0
      %v5331 = vsel %vm4018, %v4631, 0
      %v5334 = vsel %vm4018, %v4632, 0
      %v5337 = vsel %vm4018, %v4633, 0
      %v5339 = vsel %vm4018, %v3474, 0
      %5341 = vmatprep.subr.mxu0 0.0
      %5342 = vmatpush1.xpose.msra.mxu0 %v5339
      %5343 = vmatprep.subr.mxu0 0.0
      %5344 = vmatpush1.xpose.msra.mxu0 0.0
      %5345 = vmatprep.subr.mxu0 0.0
      %5346 = vmatpush1.xpose.msra.mxu0 0.0
      %5347 = vmatprep.subr.mxu0 0.0
      %5348 = vmatpush1.xpose.msra.mxu0 0.0
      %5349 = vmatprep.subr.mxu0 0.0
      %5350 = vmatpush1.xpose.msra.mxu0 0.0
      %5351 = vmatprep.subr.mxu0 0.0
      %5352 = vmatpush1.xpose.msra.mxu0 0.0
      %5353 = vmatprep.subr.mxu0 0.0
      %5354 = vmatpush1.xpose.msra.mxu0 0.0
      %5355 = vmatprep.subr.mxu0 0.0
      %5356 = vmatpush1.xpose.msra.mxu0 0.0
      %5357 = vmatprep.subr.mxu0 0.0
      %5358 = vmatpush1.xpose.msra.mxu0 0.0
      %5359 = vmatprep.subr.mxu0 0.0
      %5360 = vmatpush1.xpose.msra.mxu0 0.0
      %5361 = vmatprep.subr.mxu0 0.0
      %5362 = vmatpush1.xpose.msra.mxu0 0.0
      %5363 = vmatprep.subr.mxu0 0.0
      %5364 = vmatpush1.xpose.msra.mxu0 0.0
      %5365 = vmatprep.subr.mxu0 0.0
      %5366 = vmatpush1.xpose.msra.mxu0 0.0
      %5367 = vmatprep.subr.mxu0 0.0
      %5368 = vmatpush1.xpose.msra.mxu0 0.0
      %5369 = vmatprep.subr.mxu0 0.0
      %5370 = vmatpush1.xpose.msra.mxu0 0.0
      %5371 = vmatprep.subr.mxu0 0.0
      %5372 = vmatpush1.xpose.msra.mxu0 0.0
      %5373 = vmatprep.subr.mxu0 0.0
      %5374 = vmatpush1.xpose.msra.mxu0 0.0
      %5375 = vmatprep.subr.mxu0 0.0
      %5376 = vmatpush1.xpose.msra.mxu0 0.0
      %5377 = vmatprep.subr.mxu0 0.0
      %5378 = vmatpush1.xpose.msra.mxu0 0.0
      %5379 = vmatprep.subr.mxu0 0.0
      %5380 = vmatpush1.xpose.msra.mxu0 0.0
      %5381 = vmatprep.subr.mxu0 0.0
      %5382 = vmatpush1.xpose.msra.mxu0 0.0
      %5383 = vmatprep.subr.mxu0 0.0
      %5384 = vmatpush1.xpose.msra.mxu0 0.0
      %5385 = vmatprep.subr.mxu0 0.0
      %5386 = vmatpush1.xpose.msra.mxu0 0.0
      %5387 = vmatprep.subr.mxu0 0.0
      %5388 = vmatpush1.xpose.msra.mxu0 0.0
      %5389 = vmatprep.subr.mxu0 0.0
      %5390 = vmatpush1.xpose.msra.mxu0 0.0
      %5391 = vmatprep.subr.mxu0 0.0
      %5392 = vmatpush1.xpose.msra.mxu0 0.0
      %5393 = vmatprep.subr.mxu0 0.0
      %5394 = vmatpush1.xpose.msra.mxu0 0.0
      %5395 = vmatprep.subr.mxu0 0.0
      %5396 = vmatpush1.xpose.msra.mxu0 0.0
      %5397 = vmatprep.subr.mxu0 0.0
      %5398 = vmatpush1.xpose.msra.mxu0 0.0
      %5399 = vmatprep.subr.mxu0 0.0
      %5400 = vmatpush1.xpose.msra.mxu0 0.0
      %5401 = vmatprep.subr.mxu0 0.0
      %5402 = vmatpush1.xpose.msra.mxu0 0.0
      %5403 = vmatprep.subr.mxu0 0.0
      %5404 = vmatpush1.xpose.msra.mxu0 0.0
      %5405 = vmatprep.mubr.f32.mxu0 0.0
      %5406 = vmatmul.mubr.f32.gmra.mrb[0].mxu0 %v5292
      %v5407 = vpop.f32.mrb[0].mxu0
      %v5408 = vadd.f32 0.0, %v5407
      %v5409 = vpop.f32.mrb[0].mxu0
      %5410 = vmatprep.mubr.f32.mxu0 0.0
      %5411 = vmatmul.mubr.f32.gmra.mrb[0].mxu0 %v5295
      %v5412 = vpop.f32.mrb[0].mxu0
      %v5413 = vadd.f32 0.0, %v5412
      %v5414 = vpop.f32.mrb[0].mxu0
      %5415 = vmatprep.mubr.f32.mxu0 0.0
      %5416 = vmatmul.mubr.f32.gmra.mrb[0].mxu0 %v5298
      %v5417 = vpop.f32.mrb[0].mxu0
      %v5418 = vadd.f32 0.0, %v5417
      %v5419 = vpop.f32.mrb[0].mxu0
      %5420 = vmatprep.mubr.f32.mxu0 0.0
      %5421 = vmatmul.mubr.f32.gmra.mrb[0].mxu0 %v5301
      %v5422 = vpop.f32.mrb[0].mxu0
      %v5423 = vadd.f32 0.0, %v5422
      %v5424 = vpop.f32.mrb[0].mxu0
      %5425 = vmatprep.mubr.f32.mxu0 0.0
      %5426 = vmatmul.mubr.f32.gmra.mrb[0].mxu0 %v5304
      %v5427 = vpop.f32.mrb[0].mxu0
      %v5428 = vadd.f32 0.0, %v5427
      %v5429 = vpop.f32.mrb[0].mxu0
      %5430 = vmatprep.mubr.f32.mxu0 0.0
      %5431 = vmatmul.mubr.f32.gmra.mrb[0].mxu0 %v5307
      %v5432 = vpop.f32.mrb[0].mxu0
      %v5433 = vadd.f32 0.0, %v5432
      %v5434 = vpop.f32.mrb[0].mxu0
      %5435 = vmatprep.mubr.f32.mxu0 0.0
      %5436 = vmatmul.mubr.f32.gmra.mrb[0].mxu0 %v5310
      %v5437 = vpop.f32.mrb[0].mxu0
      %v5438 = vadd.f32 0.0, %v5437
      %v5439 = vpop.f32.mrb[0].mxu0
      %5440 = vmatprep.mubr.f32.mxu0 0.0
      %5441 = vmatmul.mubr.f32.gmra.mrb[0].mxu0 %v5313
      %v5442 = vpop.f32.mrb[0].mxu0
      %v5443 = vadd.f32 0.0, %v5442
      %v5444 = vpop.f32.mrb[0].mxu0
      %5445 = vmatprep.mubr.f32.mxu0 0.0
      %5446 = vmatmul.mubr.f32.gmra.mrb[0].mxu0 %v5316
      %v5447 = vpop.f32.mrb[0].mxu0
      %v5448 = vadd.f32 0.0, %v5447
      %v5449 = vpop.f32.mrb[0].mxu0
      %5450 = vmatprep.mubr.f32.mxu0 0.0
      %5451 = vmatmul.mubr.f32.gmra.mrb[0].mxu0 %v5319
      %v5452 = vpop.f32.mrb[0].mxu0
      %v5453 = vadd.f32 0.0, %v5452
      %v5454 = vpop.f32.mrb[0].mxu0
      %5455 = vmatprep.mubr.f32.mxu0 0.0
      %5456 = vmatmul.mubr.f32.gmra.mrb[0].mxu0 %v5322
      %v5457 = vpop.f32.mrb[0].mxu0
      %v5458 = vadd.f32 0.0, %v5457
      %v5459 = vpop.f32.mrb[0].mxu0
      %5460 = vmatprep.mubr.f32.mxu0 0.0
      %5461 = vmatmul.mubr.f32.gmra.mrb[0].mxu0 %v5325
      %v5462 = vpop.f32.mrb[0].mxu0
      %v5463 = vadd.f32 0.0, %v5462
      %v5464 = vpop.f32.mrb[0].mxu0
      %5465 = vmatprep.mubr.f32.mxu0 0.0
      %5466 = vmatmul.mubr.f32.gmra.mrb[0].mxu0 %v5328
      %v5467 = vpop.f32.mrb[0].mxu0
      %v5468 = vadd.f32 0.0, %v5467
      %v5469 = vpop.f32.mrb[0].mxu0
      %5470 = vmatprep.mubr.f32.mxu0 0.0
      %5471 = vmatmul.mubr.f32.gmra.mrb[0].mxu0 %v5331
      %v5472 = vpop.f32.mrb[0].mxu0
      %v5473 = vadd.f32 0.0, %v5472
      %v5474 = vpop.f32.mrb[0].mxu0
      %5475 = vmatprep.mubr.f32.mxu0 0.0
      %5476 = vmatmul.mubr.f32.gmra.mrb[0].mxu0 %v5334
      %v5477 = vpop.f32.mrb[0].mxu0
      %v5478 = vadd.f32 0.0, %v5477
      %v5479 = vpop.f32.mrb[0].mxu0
      %5480 = vmatprep.mubr.f32.mxu0 0.0
      %5481 = vmatmul.mubr.f32.gmra.mrb[0].mxu0 %v5337
      %v5482 = vpop.f32.mrb[0].mxu0
      %v5483 = vadd.f32 0.0, %v5482
      %v5484 = vpop.f32.mrb[0].mxu0
      %5485 = vdwg.mxu0
      %v5487 = vsel %vm2859, %v5259, 0
      %v5490 = vsel %vm2859, %v5260, 0
      %v5493 = vsel %vm2859, %v5261, 0
      %v5496 = vsel %vm2859, %v5262, 0
      %v5499 = vsel %vm2859, %v5263, 0
      %v5502 = vsel %vm2859, %v5264, 0
      %v5505 = vsel %vm2859, %v5265, 0
      %v5508 = vsel %vm2859, %v5266, 0
      %v5511 = vsel %vm2859, %v5267, 0
      %v5514 = vsel %vm2859, %v5268, 0
      %v5517 = vsel %vm2859, %v5269, 0
      %v5520 = vsel %vm2859, %v5270, 0
      %v5523 = vsel %vm2859, %v5271, 0
      %v5526 = vsel %vm2859, %v5272, 0
      %v5529 = vsel %vm2859, %v5273, 0
      %v5532 = vsel %vm2859, %v5274, 0
      %v5534 = vsel %vm2859, %v2207, 0
      %5536 = vmatprep.subr.mxu0 0.0
      %5537 = vmatpush1.xpose.msra.mxu0 %v5534
      %5538 = vmatprep.subr.mxu0 0.0
      %5539 = vmatpush1.xpose.msra.mxu0 0.0
      %5540 = vmatprep.subr.mxu0 0.0
      %5541 = vmatpush1.xpose.msra.mxu0 0.0
      %5542 = vmatprep.subr.mxu0 0.0
      %5543 = vmatpush1.xpose.msra.mxu0 0.0
      %5544 = vmatprep.subr.mxu0 0.0
      %5545 = vmatpush1.xpose.msra.mxu0 0.0
      %5546 = vmatprep.subr.mxu0 0.0
      %5547 = vmatpush1.xpose.msra.mxu0 0.0
      %5548 = vmatprep.subr.mxu0 0.0
      %5549 = vmatpush1.xpose.msra.mxu0 0.0
      %5550 = vmatprep.subr.mxu0 0.0
      %5551 = vmatpush1.xpose.msra.mxu0 0.0
      %5552 = vmatprep.subr.mxu0 0.0
      %5553 = vmatpush1.xpose.msra.mxu0 0.0
      %5554 = vmatprep.subr.mxu0 0.0
      %5555 = vmatpush1.xpose.msra.mxu0 0.0
      %5556 = vmatprep.subr.mxu0 0.0
      %5557 = vmatpush1.xpose.msra.mxu0 0.0
      %5558 = vmatprep.subr.mxu0 0.0
      %5559 = vmatpush1.xpose.msra.mxu0 0.0
      %5560 = vmatprep.subr.mxu0 0.0
      %5561 = vmatpush1.xpose.msra.mxu0 0.0
      %5562 = vmatprep.subr.mxu0 0.0
      %5563 = vmatpush1.xpose.msra.mxu0 0.0
      %5564 = vmatprep.subr.mxu0 0.0
      %5565 = vmatpush1.xpose.msra.mxu0 0.0
      %5566 = vmatprep.subr.mxu0 0.0
      %5567 = vmatpush1.xpose.msra.mxu0 0.0
      %5568 = vmatprep.subr.mxu0 0.0
      %5569 = vmatpush1.xpose.msra.mxu0 0.0
      %5570 = vmatprep.subr.mxu0 0.0
      %5571 = vmatpush1.xpose.msra.mxu0 0.0
      %5572 = vmatprep.subr.mxu0 0.0
      %5573 = vmatpush1.xpose.msra.mxu0 0.0
      %5574 = vmatprep.subr.mxu0 0.0
      %5575 = vmatpush1.xpose.msra.mxu0 0.0
      %5576 = vmatprep.subr.mxu0 0.0
      %5577 = vmatpush1.xpose.msra.mxu0 0.0
      %5578 = vmatprep.subr.mxu0 0.0
      %5579 = vmatpush1.xpose.msra.mxu0 0.0
      %5580 = vmatprep.subr.mxu0 0.0
      %5581 = vmatpush1.xpose.msra.mxu0 0.0
      %5582 = vmatprep.subr.mxu0 0.0
      %5583 = vmatpush1.xpose.msra.mxu0 0.0
      %5584 = vmatprep.subr.mxu0 0.0
      %5585 = vmatpush1.xpose.msra.mxu0 0.0
      %5586 = vmatprep.subr.mxu0 0.0
      %5587 = vmatpush1.xpose.msra.mxu0 0.0
      %5588 = vmatprep.subr.mxu0 0.0
      %5589 = vmatpush1.xpose.msra.mxu0 0.0
      %5590 = vmatprep.subr.mxu0 0.0
      %5591 = vmatpush1.xpose.msra.mxu0 0.0
      %5592 = vmatprep.subr.mxu0 0.0
      %5593 = vmatpush1.xpose.msra.mxu0 0.0
      %5594 = vmatprep.subr.mxu0 0.0
      %5595 = vmatpush1.xpose.msra.mxu0 0.0
      %5596 = vmatprep.subr.mxu0 0.0
      %5597 = vmatpush1.xpose.msra.mxu0 0.0
      %5598 = vmatprep.subr.mxu0 0.0
      %5599 = vmatpush1.xpose.msra.mxu0 0.0
      %5600 = vmatprep.mubr.f32.mxu0 0.0
      %5601 = vmatmul.mubr.f32.gmra.mrb[0].mxu0 %v5487
      %v5602 = vpop.f32.mrb[0].mxu0
      %v5603 = vadd.f32 %v5408, %v5602
      %v5604 = vpop.f32.mrb[0].mxu0
      %5605 = vmatprep.mubr.f32.mxu0 0.0
      %5606 = vmatmul.mubr.f32.gmra.mrb[0].mxu0 %v5490
      %v5607 = vpop.f32.mrb[0].mxu0
      %v5608 = vadd.f32 %v5413, %v5607
      %v5609 = vpop.f32.mrb[0].mxu0
      %5610 = vmatprep.mubr.f32.mxu0 0.0
      %5611 = vmatmul.mubr.f32.gmra.mrb[0].mxu0 %v5493
      %v5612 = vpop.f32.mrb[0].mxu0
      %v5613 = vadd.f32 %v5418, %v5612
      %v5614 = vpop.f32.mrb[0].mxu0
      %5615 = vmatprep.mubr.f32.mxu0 0.0
      %5616 = vmatmul.mubr.f32.gmra.mrb[0].mxu0 %v5496
      %v5617 = vpop.f32.mrb[0].mxu0
      %v5618 = vadd.f32 %v5423, %v5617
      %v5619 = vpop.f32.mrb[0].mxu0
      %5620 = vmatprep.mubr.f32.mxu0 0.0
      %5621 = vmatmul.mubr.f32.gmra.mrb[0].mxu0 %v5499
      %v5622 = vpop.f32.mrb[0].mxu0
      %v5623 = vadd.f32 %v5428, %v5622
      %v5624 = vpop.f32.mrb[0].mxu0
      %5625 = vmatprep.mubr.f32.mxu0 0.0
      %5626 = vmatmul.mubr.f32.gmra.mrb[0].mxu0 %v5502
      %v5627 = vpop.f32.mrb[0].mxu0
      %v5628 = vadd.f32 %v5433, %v5627
      %v5629 = vpop.f32.mrb[0].mxu0
      %5630 = vmatprep.mubr.f32.mxu0 0.0
      %5631 = vmatmul.mubr.f32.gmra.mrb[0].mxu0 %v5505
      %v5632 = vpop.f32.mrb[0].mxu0
      %v5633 = vadd.f32 %v5438, %v5632
      %v5634 = vpop.f32.mrb[0].mxu0
      %5635 = vmatprep.mubr.f32.mxu0 0.0
      %5636 = vmatmul.mubr.f32.gmra.mrb[0].mxu0 %v5508
      %v5637 = vpop.f32.mrb[0].mxu0
      %v5638 = vadd.f32 %v5443, %v5637
      %v5639 = vpop.f32.mrb[0].mxu0
      %5640 = vmatprep.mubr.f32.mxu0 0.0
      %5641 = vmatmul.mubr.f32.gmra.mrb[0].mxu0 %v5511
      %v5642 = vpop.f32.mrb[0].mxu0
      %v5643 = vadd.f32 %v5448, %v5642
      %v5644 = vpop.f32.mrb[0].mxu0
      %5645 = vmatprep.mubr.f32.mxu0 0.0
      %5646 = vmatmul.mubr.f32.gmra.mrb[0].mxu0 %v5514
      %v5647 = vpop.f32.mrb[0].mxu0
      %v5648 = vadd.f32 %v5453, %v5647
      %v5649 = vpop.f32.mrb[0].mxu0
      %5650 = vmatprep.mubr.f32.mxu0 0.0
      %5651 = vmatmul.mubr.f32.gmra.mrb[0].mxu0 %v5517
      %v5652 = vpop.f32.mrb[0].mxu0
      %v5653 = vadd.f32 %v5458, %v5652
      %v5654 = vpop.f32.mrb[0].mxu0
      %5655 = vmatprep.mubr.f32.mxu0 0.0
      %5656 = vmatmul.mubr.f32.gmra.mrb[0].mxu0 %v5520
      %v5657 = vpop.f32.mrb[0].mxu0
      %v5658 = vadd.f32 %v5463, %v5657
      %v5659 = vpop.f32.mrb[0].mxu0
      %5660 = vmatprep.mubr.f32.mxu0 0.0
      %5661 = vmatmul.mubr.f32.gmra.mrb[0].mxu0 %v5523
      %v5662 = vpop.f32.mrb[0].mxu0
      %v5663 = vadd.f32 %v5468, %v5662
      %v5664 = vpop.f32.mrb[0].mxu0
      %5665 = vmatprep.mubr.f32.mxu0 0.0
      %5666 = vmatmul.mubr.f32.gmra.mrb[0].mxu0 %v5526
      %v5667 = vpop.f32.mrb[0].mxu0
      %v5668 = vadd.f32 %v5473, %v5667
      %v5669 = vpop.f32.mrb[0].mxu0
      %5670 = vmatprep.mubr.f32.mxu0 0.0
      %5671 = vmatmul.mubr.f32.gmra.mrb[0].mxu0 %v5529
      %v5672 = vpop.f32.mrb[0].mxu0
      %v5673 = vadd.f32 %v5478, %v5672
      %v5674 = vpop.f32.mrb[0].mxu0
      %5675 = vmatprep.mubr.f32.mxu0 0.0
      %5676 = vmatmul.mubr.f32.gmra.mrb[0].mxu0 %v5532
      %v5677 = vpop.f32.mrb[0].mxu0
      %v5678 = vadd.f32 %v5483, %v5677
      %v5679 = vpop.f32.mrb[0].mxu0
      %5680 = vdwg.mxu0
      %v5681 = vmul.f32 %v5275, %v5603
      %v5682 = vmul.f32 %v5276, %v5608
      %v5683 = vmul.f32 %v5277, %v5613
      %v5684 = vmul.f32 %v5278, %v5618
      %v5685 = vmul.f32 %v5279, %v5623
      %v5686 = vmul.f32 %v5280, %v5628
      %v5687 = vmul.f32 %v5281, %v5633
      %v5688 = vmul.f32 %v5282, %v5638
      %v5689 = vmul.f32 %v5283, %v5643
      %v5690 = vmul.f32 %v5284, %v5648
      %v5691 = vmul.f32 %v5285, %v5653
      %v5692 = vmul.f32 %v5286, %v5658
      %v5693 = vmul.f32 %v5287, %v5663
      %v5694 = vmul.f32 %v5288, %v5668
      %v5695 = vmul.f32 %v5289, %v5673
      %v5696 = vmul.f32 %v5290, %v5678
      %v5697 = vmul.f32 %v1472, 2.0
      %v5698 = vmul.f32 %v1477, 2.0
      %v5699 = vmul.f32 %v1482, 2.0
      %v5700 = vmul.f32 %v1487, 2.0
      %v5701 = vmul.f32 %v1492, 2.0
      %v5702 = vmul.f32 %v1497, 2.0
      %v5703 = vmul.f32 %v1502, 2.0
      %v5704 = vmul.f32 %v1507, 2.0
      %v5705 = vmul.f32 %v1512, 2.0
      %v5706 = vmul.f32 %v1517, 2.0
      %v5707 = vmul.f32 %v1522, 2.0
      %v5708 = vmul.f32 %v1527, 2.0
      %v5709 = vmul.f32 %v1532, 2.0
      %v5710 = vmul.f32 %v1537, 2.0
      %v5711 = vmul.f32 %v1542, 2.0
      %v5712 = vmul.f32 %v1547, 2.0
      %v5713 = vsel %vm4018, %v3639, 0
      %5715 = vmatprep.subr.mxu0 0.0
      %5716 = vmatpush1.xpose.msra.mxu0 %v5713
      %5717 = vmatprep.subr.mxu0 0.0
      %5718 = vmatpush1.xpose.msra.mxu0 0.0
      %5719 = vmatprep.subr.mxu0 0.0
      %5720 = vmatpush1.xpose.msra.mxu0 0.0
      %5721 = vmatprep.subr.mxu0 0.0
      %5722 = vmatpush1.xpose.msra.mxu0 0.0
      %5723 = vmatprep.subr.mxu0 0.0
      %5724 = vmatpush1.xpose.msra.mxu0 0.0
      %5725 = vmatprep.subr.mxu0 0.0
      %5726 = vmatpush1.xpose.msra.mxu0 0.0
      %5727 = vmatprep.subr.mxu0 0.0
      %5728 = vmatpush1.xpose.msra.mxu0 0.0
      %5729 = vmatprep.subr.mxu0 0.0
      %5730 = vmatpush1.xpose.msra.mxu0 0.0
      %5731 = vmatprep.subr.mxu0 0.0
      %5732 = vmatpush1.xpose.msra.mxu0 0.0
      %5733 = vmatprep.subr.mxu0 0.0
      %5734 = vmatpush1.xpose.msra.mxu0 0.0
      %5735 = vmatprep.subr.mxu0 0.0
      %5736 = vmatpush1.xpose.msra.mxu0 0.0
      %5737 = vmatprep.subr.mxu0 0.0
      %5738 = vmatpush1.xpose.msra.mxu0 0.0
      %5739 = vmatprep.subr.mxu0 0.0
      %5740 = vmatpush1.xpose.msra.mxu0 0.0
      %5741 = vmatprep.subr.mxu0 0.0
      %5742 = vmatpush1.xpose.msra.mxu0 0.0
      %5743 = vmatprep.subr.mxu0 0.0
      %5744 = vmatpush1.xpose.msra.mxu0 0.0
      %5745 = vmatprep.subr.mxu0 0.0
      %5746 = vmatpush1.xpose.msra.mxu0 0.0
      %5747 = vmatprep.subr.mxu0 0.0
      %5748 = vmatpush1.xpose.msra.mxu0 0.0
      %5749 = vmatprep.subr.mxu0 0.0
      %5750 = vmatpush1.xpose.msra.mxu0 0.0
      %5751 = vmatprep.subr.mxu0 0.0
      %5752 = vmatpush1.xpose.msra.mxu0 0.0
      %5753 = vmatprep.subr.mxu0 0.0
      %5754 = vmatpush1.xpose.msra.mxu0 0.0
      %5755 = vmatprep.subr.mxu0 0.0
      %5756 = vmatpush1.xpose.msra.mxu0 0.0
      %5757 = vmatprep.subr.mxu0 0.0
      %5758 = vmatpush1.xpose.msra.mxu0 0.0
      %5759 = vmatprep.subr.mxu0 0.0
      %5760 = vmatpush1.xpose.msra.mxu0 0.0
      %5761 = vmatprep.subr.mxu0 0.0
      %5762 = vmatpush1.xpose.msra.mxu0 0.0
      %5763 = vmatprep.subr.mxu0 0.0
      %5764 = vmatpush1.xpose.msra.mxu0 0.0
      %5765 = vmatprep.subr.mxu0 0.0
      %5766 = vmatpush1.xpose.msra.mxu0 0.0
      %5767 = vmatprep.subr.mxu0 0.0
      %5768 = vmatpush1.xpose.msra.mxu0 0.0
      %5769 = vmatprep.subr.mxu0 0.0
      %5770 = vmatpush1.xpose.msra.mxu0 0.0
      %5771 = vmatprep.subr.mxu0 0.0
      %5772 = vmatpush1.xpose.msra.mxu0 0.0
      %5773 = vmatprep.subr.mxu0 0.0
      %5774 = vmatpush1.xpose.msra.mxu0 0.0
      %5775 = vmatprep.subr.mxu0 0.0
      %5776 = vmatpush1.xpose.msra.mxu0 0.0
      %5777 = vmatprep.subr.mxu0 0.0
      %5778 = vmatpush1.xpose.msra.mxu0 0.0
      %5779 = vmatprep.mubr.f32.mxu0 0.0
      %5780 = vmatmul.mubr.f32.gmra.mrb[0].mxu0 %v5292
      %v5781 = vpop.f32.mrb[0].mxu0
      %v5782 = vadd.f32 0.0, %v5781
      %v5783 = vpop.f32.mrb[0].mxu0
      %5784 = vmatprep.mubr.f32.mxu0 0.0
      %5785 = vmatmul.mubr.f32.gmra.mrb[0].mxu0 %v5295
      %v5786 = vpop.f32.mrb[0].mxu0
      %v5787 = vadd.f32 0.0, %v5786
      %v5788 = vpop.f32.mrb[0].mxu0
      %5789 = vmatprep.mubr.f32.mxu0 0.0
      %5790 = vmatmul.mubr.f32.gmra.mrb[0].mxu0 %v5298
      %v5791 = vpop.f32.mrb[0].mxu0
      %v5792 = vadd.f32 0.0, %v5791
      %v5793 = vpop.f32.mrb[0].mxu0
      %5794 = vmatprep.mubr.f32.mxu0 0.0
      %5795 = vmatmul.mubr.f32.gmra.mrb[0].mxu0 %v5301
      %v5796 = vpop.f32.mrb[0].mxu0
      %v5797 = vadd.f32 0.0, %v5796
      %v5798 = vpop.f32.mrb[0].mxu0
      %5799 = vmatprep.mubr.f32.mxu0 0.0
      %5800 = vmatmul.mubr.f32.gmra.mrb[0].mxu0 %v5304
      %v5801 = vpop.f32.mrb[0].mxu0
      %v5802 = vadd.f32 0.0, %v5801
      %v5803 = vpop.f32.mrb[0].mxu0
      %5804 = vmatprep.mubr.f32.mxu0 0.0
      %5805 = vmatmul.mubr.f32.gmra.mrb[0].mxu0 %v5307
      %v5806 = vpop.f32.mrb[0].mxu0
      %v5807 = vadd.f32 0.0, %v5806
      %v5808 = vpop.f32.mrb[0].mxu0
      %5809 = vmatprep.mubr.f32.mxu0 0.0
      %5810 = vmatmul.mubr.f32.gmra.mrb[0].mxu0 %v5310
      %v5811 = vpop.f32.mrb[0].mxu0
      %v5812 = vadd.f32 0.0, %v5811
      %v5813 = vpop.f32.mrb[0].mxu0
      %5814 = vmatprep.mubr.f32.mxu0 0.0
      %5815 = vmatmul.mubr.f32.gmra.mrb[0].mxu0 %v5313
      %v5816 = vpop.f32.mrb[0].mxu0
      %v5817 = vadd.f32 0.0, %v5816
      %v5818 = vpop.f32.mrb[0].mxu0
      %5819 = vmatprep.mubr.f32.mxu0 0.0
      %5820 = vmatmul.mubr.f32.gmra.mrb[0].mxu0 %v5316
      %v5821 = vpop.f32.mrb[0].mxu0
      %v5822 = vadd.f32 0.0, %v5821
      %v5823 = vpop.f32.mrb[0].mxu0
      %5824 = vmatprep.mubr.f32.mxu0 0.0
      %5825 = vmatmul.mubr.f32.gmra.mrb[0].mxu0 %v5319
      %v5826 = vpop.f32.mrb[0].mxu0
      %v5827 = vadd.f32 0.0, %v5826
      %v5828 = vpop.f32.mrb[0].mxu0
      %5829 = vmatprep.mubr.f32.mxu0 0.0
      %5830 = vmatmul.mubr.f32.gmra.mrb[0].mxu0 %v5322
      %v5831 = vpop.f32.mrb[0].mxu0
      %v5832 = vadd.f32 0.0, %v5831
      %v5833 = vpop.f32.mrb[0].mxu0
      %5834 = vmatprep.mubr.f32.mxu0 0.0
      %5835 = vmatmul.mubr.f32.gmra.mrb[0].mxu0 %v5325
      %v5836 = vpop.f32.mrb[0].mxu0
      %v5837 = vadd.f32 0.0, %v5836
      %v5838 = vpop.f32.mrb[0].mxu0
      %5839 = vmatprep.mubr.f32.mxu0 0.0
      %5840 = vmatmul.mubr.f32.gmra.mrb[0].mxu0 %v5328
      %v5841 = vpop.f32.mrb[0].mxu0
      %v5842 = vadd.f32 0.0, %v5841
      %v5843 = vpop.f32.mrb[0].mxu0
      %5844 = vmatprep.mubr.f32.mxu0 0.0
      %5845 = vmatmul.mubr.f32.gmra.mrb[0].mxu0 %v5331
      %v5846 = vpop.f32.mrb[0].mxu0
      %v5847 = vadd.f32 0.0, %v5846
      %v5848 = vpop.f32.mrb[0].mxu0
      %5849 = vmatprep.mubr.f32.mxu0 0.0
      %5850 = vmatmul.mubr.f32.gmra.mrb[0].mxu0 %v5334
      %v5851 = vpop.f32.mrb[0].mxu0
      %v5852 = vadd.f32 0.0, %v5851
      %v5853 = vpop.f32.mrb[0].mxu0
      %5854 = vmatprep.mubr.f32.mxu0 0.0
      %5855 = vmatmul.mubr.f32.gmra.mrb[0].mxu0 %v5337
      %v5856 = vpop.f32.mrb[0].mxu0
      %v5857 = vadd.f32 0.0, %v5856
      %v5858 = vpop.f32.mrb[0].mxu0
      %5859 = vdwg.mxu0
      %v5860 = vsel %vm2859, %v2208, 0
      %5862 = vmatprep.subr.mxu0 0.0
      %5863 = vmatpush1.xpose.msra.mxu0 %v5860
      %5864 = vmatprep.subr.mxu0 0.0
      %5865 = vmatpush1.xpose.msra.mxu0 0.0
      %5866 = vmatprep.subr.mxu0 0.0
      %5867 = vmatpush1.xpose.msra.mxu0 0.0
      %5868 = vmatprep.subr.mxu0 0.0
      %5869 = vmatpush1.xpose.msra.mxu0 0.0
      %5870 = vmatprep.subr.mxu0 0.0
      %5871 = vmatpush1.xpose.msra.mxu0 0.0
      %5872 = vmatprep.subr.mxu0 0.0
      %5873 = vmatpush1.xpose.msra.mxu0 0.0
      %5874 = vmatprep.subr.mxu0 0.0
      %5875 = vmatpush1.xpose.msra.mxu0 0.0
      %5876 = vmatprep.subr.mxu0 0.0
      %5877 = vmatpush1.xpose.msra.mxu0 0.0
      %5878 = vmatprep.subr.mxu0 0.0
      %5879 = vmatpush1.xpose.msra.mxu0 0.0
      %5880 = vmatprep.subr.mxu0 0.0
      %5881 = vmatpush1.xpose.msra.mxu0 0.0
      %5882 = vmatprep.subr.mxu0 0.0
      %5883 = vmatpush1.xpose.msra.mxu0 0.0
      %5884 = vmatprep.subr.mxu0 0.0
      %5885 = vmatpush1.xpose.msra.mxu0 0.0
      %5886 = vmatprep.subr.mxu0 0.0
      %5887 = vmatpush1.xpose.msra.mxu0 0.0
      %5888 = vmatprep.subr.mxu0 0.0
      %5889 = vmatpush1.xpose.msra.mxu0 0.0
      %5890 = vmatprep.subr.mxu0 0.0
      %5891 = vmatpush1.xpose.msra.mxu0 0.0
      %5892 = vmatprep.subr.mxu0 0.0
      %5893 = vmatpush1.xpose.msra.mxu0 0.0
      %5894 = vmatprep.subr.mxu0 0.0
      %5895 = vmatpush1.xpose.msra.mxu0 0.0
      %5896 = vmatprep.subr.mxu0 0.0
      %5897 = vmatpush1.xpose.msra.mxu0 0.0
      %5898 = vmatprep.subr.mxu0 0.0
      %5899 = vmatpush1.xpose.msra.mxu0 0.0
      %5900 = vmatprep.subr.mxu0 0.0
      %5901 = vmatpush1.xpose.msra.mxu0 0.0
      %5902 = vmatprep.subr.mxu0 0.0
      %5903 = vmatpush1.xpose.msra.mxu0 0.0
      %5904 = vmatprep.subr.mxu0 0.0
      %5905 = vmatpush1.xpose.msra.mxu0 0.0
      %5906 = vmatprep.subr.mxu0 0.0
      %5907 = vmatpush1.xpose.msra.mxu0 0.0
      %5908 = vmatprep.subr.mxu0 0.0
      %5909 = vmatpush1.xpose.msra.mxu0 0.0
      %5910 = vmatprep.subr.mxu0 0.0
      %5911 = vmatpush1.xpose.msra.mxu0 0.0
      %5912 = vmatprep.subr.mxu0 0.0
      %5913 = vmatpush1.xpose.msra.mxu0 0.0
      %5914 = vmatprep.subr.mxu0 0.0
      %5915 = vmatpush1.xpose.msra.mxu0 0.0
      %5916 = vmatprep.subr.mxu0 0.0
      %5917 = vmatpush1.xpose.msra.mxu0 0.0
      %5918 = vmatprep.subr.mxu0 0.0
      %5919 = vmatpush1.xpose.msra.mxu0 0.0
      %5920 = vmatprep.subr.mxu0 0.0
      %5921 = vmatpush1.xpose.msra.mxu0 0.0
      %5922 = vmatprep.subr.mxu0 0.0
      %5923 = vmatpush1.xpose.msra.mxu0 0.0
      %5924 = vmatprep.subr.mxu0 0.0
      %5925 = vmatpush1.xpose.msra.mxu0 0.0
      %5926 = vmatprep.mubr.f32.mxu0 0.0
      %5927 = vmatmul.mubr.f32.gmra.mrb[0].mxu0 %v5487
      %v5928 = vpop.f32.mrb[0].mxu0
      %v5929 = vadd.f32 %v5782, %v5928
      %v5930 = vpop.f32.mrb[0].mxu0
      %5931 = vmatprep.mubr.f32.mxu0 0.0
      %5932 = vmatmul.mubr.f32.gmra.mrb[0].mxu0 %v5490
      %v5933 = vpop.f32.mrb[0].mxu0
      %v5934 = vadd.f32 %v5787, %v5933
      %v5935 = vpop.f32.mrb[0].mxu0
      %5936 = vmatprep.mubr.f32.mxu0 0.0
      %5937 = vmatmul.mubr.f32.gmra.mrb[0].mxu0 %v5493
      %v5938 = vpop.f32.mrb[0].mxu0
      %v5939 = vadd.f32 %v5792, %v5938
      %v5940 = vpop.f32.mrb[0].mxu0
      %5941 = vmatprep.mubr.f32.mxu0 0.0
      %5942 = vmatmul.mubr.f32.gmra.mrb[0].mxu0 %v5496
      %v5943 = vpop.f32.mrb[0].mxu0
      %v5944 = vadd.f32 %v5797, %v5943
      %v5945 = vpop.f32.mrb[0].mxu0
      %5946 = vmatprep.mubr.f32.mxu0 0.0
      %5947 = vmatmul.mubr.f32.gmra.mrb[0].mxu0 %v5499
      %v5948 = vpop.f32.mrb[0].mxu0
      %v5949 = vadd.f32 %v5802, %v5948
      %v5950 = vpop.f32.mrb[0].mxu0
      %5951 = vmatprep.mubr.f32.mxu0 0.0
      %5952 = vmatmul.mubr.f32.gmra.mrb[0].mxu0 %v5502
      %v5953 = vpop.f32.mrb[0].mxu0
      %v5954 = vadd.f32 %v5807, %v5953
      %v5955 = vpop.f32.mrb[0].mxu0
      %5956 = vmatprep.mubr.f32.mxu0 0.0
      %5957 = vmatmul.mubr.f32.gmra.mrb[0].mxu0 %v5505
      %v5958 = vpop.f32.mrb[0].mxu0
      %v5959 = vadd.f32 %v5812, %v5958
      %v5960 = vpop.f32.mrb[0].mxu0
      %5961 = vmatprep.mubr.f32.mxu0 0.0
      %5962 = vmatmul.mubr.f32.gmra.mrb[0].mxu0 %v5508
      %v5963 = vpop.f32.mrb[0].mxu0
      %v5964 = vadd.f32 %v5817, %v5963
      %v5965 = vpop.f32.mrb[0].mxu0
      %5966 = vmatprep.mubr.f32.mxu0 0.0
      %5967 = vmatmul.mubr.f32.gmra.mrb[0].mxu0 %v5511
      %v5968 = vpop.f32.mrb[0].mxu0
      %v5969 = vadd.f32 %v5822, %v5968
      %v5970 = vpop.f32.mrb[0].mxu0
      %5971 = vmatprep.mubr.f32.mxu0 0.0
      %5972 = vmatmul.mubr.f32.gmra.mrb[0].mxu0 %v5514
      %v5973 = vpop.f32.mrb[0].mxu0
      %v5974 = vadd.f32 %v5827, %v5973
      %v5975 = vpop.f32.mrb[0].mxu0
      %5976 = vmatprep.mubr.f32.mxu0 0.0
      %5977 = vmatmul.mubr.f32.gmra.mrb[0].mxu0 %v5517
      %v5978 = vpop.f32.mrb[0].mxu0
      %v5979 = vadd.f32 %v5832, %v5978
      %v5980 = vpop.f32.mrb[0].mxu0
      %5981 = vmatprep.mubr.f32.mxu0 0.0
      %5982 = vmatmul.mubr.f32.gmra.mrb[0].mxu0 %v5520
      %v5983 = vpop.f32.mrb[0].mxu0
      %v5984 = vadd.f32 %v5837, %v5983
      %v5985 = vpop.f32.mrb[0].mxu0
      %5986 = vmatprep.mubr.f32.mxu0 0.0
      %5987 = vmatmul.mubr.f32.gmra.mrb[0].mxu0 %v5523
      %v5988 = vpop.f32.mrb[0].mxu0
      %v5989 = vadd.f32 %v5842, %v5988
      %v5990 = vpop.f32.mrb[0].mxu0
      %5991 = vmatprep.mubr.f32.mxu0 0.0
      %5992 = vmatmul.mubr.f32.gmra.mrb[0].mxu0 %v5526
      %v5993 = vpop.f32.mrb[0].mxu0
      %v5994 = vadd.f32 %v5847, %v5993
      %v5995 = vpop.f32.mrb[0].mxu0
      %5996 = vmatprep.mubr.f32.mxu0 0.0
      %5997 = vmatmul.mubr.f32.gmra.mrb[0].mxu0 %v5529
      %v5998 = vpop.f32.mrb[0].mxu0
      %v5999 = vadd.f32 %v5852, %v5998
      %v6000 = vpop.f32.mrb[0].mxu0
      %6001 = vmatprep.mubr.f32.mxu0 0.0
      %6002 = vmatmul.mubr.f32.gmra.mrb[0].mxu0 %v5532
      %v6003 = vpop.f32.mrb[0].mxu0
      %v6004 = vadd.f32 %v5857, %v6003
      %v6005 = vpop.f32.mrb[0].mxu0
      %6006 = vdwg.mxu0
      %v6007 = vmul.f32 %v5697, %v5929
      %v6008 = vmul.f32 %v5698, %v5934
      %v6009 = vmul.f32 %v5699, %v5939
      %v6010 = vmul.f32 %v5700, %v5944
      %v6011 = vmul.f32 %v5701, %v5949
      %v6012 = vmul.f32 %v5702, %v5954
      %v6013 = vmul.f32 %v5703, %v5959
      %v6014 = vmul.f32 %v5704, %v5964
      %v6015 = vmul.f32 %v5705, %v5969
      %v6016 = vmul.f32 %v5706, %v5974
      %v6017 = vmul.f32 %v5707, %v5979
      %v6018 = vmul.f32 %v5708, %v5984
      %v6019 = vmul.f32 %v5709, %v5989
      %v6020 = vmul.f32 %v5710, %v5994
      %v6021 = vmul.f32 %v5711, %v5999
      %v6022 = vmul.f32 %v5712, %v6004
      %v6023 = vmul.f32 %v2081, 2.0
      %v6024 = vmul.f32 %v2086, 2.0
      %v6025 = vmul.f32 %v2091, 2.0
      %v6026 = vmul.f32 %v2096, 2.0
      %v6027 = vmul.f32 %v2101, 2.0
      %v6028 = vmul.f32 %v2106, 2.0
      %v6029 = vmul.f32 %v2111, 2.0
      %v6030 = vmul.f32 %v2116, 2.0
      %v6031 = vmul.f32 %v2121, 2.0
      %v6032 = vmul.f32 %v2126, 2.0
      %v6033 = vmul.f32 %v2131, 2.0
      %v6034 = vmul.f32 %v2136, 2.0
      %v6035 = vmul.f32 %v2141, 2.0
      %v6036 = vmul.f32 %v2146, 2.0
      %v6037 = vmul.f32 %v2151, 2.0
      %v6038 = vmul.f32 %v2156, 2.0
      %v6040 = vsel %vm4018, %v3804, 0
      %v6042 = vsel %vm4018, %v3805, 0
      %6044 = vmatprep.subr.mxu0 0.0
      %6045 = vmatpush1.xpose.msra.mxu0 %v6040
      %6046 = vmatprep.subr.mxu0 0.0
      %6047 = vmatpush1.xpose.msra.mxu0 %v6042
      %6048 = vmatprep.subr.mxu0 0.0
      %6049 = vmatpush1.xpose.msra.mxu0 0.0
      %6050 = vmatprep.subr.mxu0 0.0
      %6051 = vmatpush1.xpose.msra.mxu0 0.0
      %6052 = vmatprep.subr.mxu0 0.0
      %6053 = vmatpush1.xpose.msra.mxu0 0.0
      %6054 = vmatprep.subr.mxu0 0.0
      %6055 = vmatpush1.xpose.msra.mxu0 0.0
      %6056 = vmatprep.subr.mxu0 0.0
      %6057 = vmatpush1.xpose.msra.mxu0 0.0
      %6058 = vmatprep.subr.mxu0 0.0
      %6059 = vmatpush1.xpose.msra.mxu0 0.0
      %6060 = vmatprep.subr.mxu0 0.0
      %6061 = vmatpush1.xpose.msra.mxu0 0.0
      %6062 = vmatprep.subr.mxu0 0.0
      %6063 = vmatpush1.xpose.msra.mxu0 0.0
      %6064 = vmatprep.subr.mxu0 0.0
      %6065 = vmatpush1.xpose.msra.mxu0 0.0
      %6066 = vmatprep.subr.mxu0 0.0
      %6067 = vmatpush1.xpose.msra.mxu0 0.0
      %6068 = vmatprep.subr.mxu0 0.0
      %6069 = vmatpush1.xpose.msra.mxu0 0.0
      %6070 = vmatprep.subr.mxu0 0.0
      %6071 = vmatpush1.xpose.msra.mxu0 0.0
      %6072 = vmatprep.subr.mxu0 0.0
      %6073 = vmatpush1.xpose.msra.mxu0 0.0
      %6074 = vmatprep.subr.mxu0 0.0
      %6075 = vmatpush1.xpose.msra.mxu0 0.0
      %6076 = vmatprep.subr.mxu0 0.0
      %6077 = vmatpush1.xpose.msra.mxu0 0.0
      %6078 = vmatprep.subr.mxu0 0.0
      %6079 = vmatpush1.xpose.msra.mxu0 0.0
      %6080 = vmatprep.subr.mxu0 0.0
      %6081 = vmatpush1.xpose.msra.mxu0 0.0
      %6082 = vmatprep.subr.mxu0 0.0
      %6083 = vmatpush1.xpose.msra.mxu0 0.0
      %6084 = vmatprep.subr.mxu0 0.0
      %6085 = vmatpush1.xpose.msra.mxu0 0.0
      %6086 = vmatprep.subr.mxu0 0.0
      %6087 = vmatpush1.xpose.msra.mxu0 0.0
      %6088 = vmatprep.subr.mxu0 0.0
      %6089 = vmatpush1.xpose.msra.mxu0 0.0
      %6090 = vmatprep.subr.mxu0 0.0
      %6091 = vmatpush1.xpose.msra.mxu0 0.0
      %6092 = vmatprep.subr.mxu0 0.0
      %6093 = vmatpush1.xpose.msra.mxu0 0.0
      %6094 = vmatprep.subr.mxu0 0.0
      %6095 = vmatpush1.xpose.msra.mxu0 0.0
      %6096 = vmatprep.subr.mxu0 0.0
      %6097 = vmatpush1.xpose.msra.mxu0 0.0
      %6098 = vmatprep.subr.mxu0 0.0
      %6099 = vmatpush1.xpose.msra.mxu0 0.0
      %6100 = vmatprep.subr.mxu0 0.0
      %6101 = vmatpush1.xpose.msra.mxu0 0.0
      %6102 = vmatprep.subr.mxu0 0.0
      %6103 = vmatpush1.xpose.msra.mxu0 0.0
      %6104 = vmatprep.subr.mxu0 0.0
      %6105 = vmatpush1.xpose.msra.mxu0 0.0
      %6106 = vmatprep.subr.mxu0 0.0
      %6107 = vmatpush1.xpose.msra.mxu0 0.0
      %6108 = vmatprep.mubr.f32.mxu0 0.0
      %6109 = vmatmul.mubr.f32.gmra.mrb[0].mxu0 %v5292
      %v6110 = vpop.f32.mrb[0].mxu0
      %v6111 = vadd.f32 0.0, %v6110
      %v6112 = vpop.f32.mrb[0].mxu0
      %6113 = vmatprep.mubr.f32.mxu0 0.0
      %6114 = vmatmul.mubr.f32.gmra.mrb[0].mxu0 %v5295
      %v6115 = vpop.f32.mrb[0].mxu0
      %v6116 = vadd.f32 0.0, %v6115
      %v6117 = vpop.f32.mrb[0].mxu0
      %6118 = vmatprep.mubr.f32.mxu0 0.0
      %6119 = vmatmul.mubr.f32.gmra.mrb[0].mxu0 %v5298
      %v6120 = vpop.f32.mrb[0].mxu0
      %v6121 = vadd.f32 0.0, %v6120
      %v6122 = vpop.f32.mrb[0].mxu0
      %6123 = vmatprep.mubr.f32.mxu0 0.0
      %6124 = vmatmul.mubr.f32.gmra.mrb[0].mxu0 %v5301
      %v6125 = vpop.f32.mrb[0].mxu0
      %v6126 = vadd.f32 0.0, %v6125
      %v6127 = vpop.f32.mrb[0].mxu0
      %6128 = vmatprep.mubr.f32.mxu0 0.0
      %6129 = vmatmul.mubr.f32.gmra.mrb[0].mxu0 %v5304
      %v6130 = vpop.f32.mrb[0].mxu0
      %v6131 = vadd.f32 0.0, %v6130
      %v6132 = vpop.f32.mrb[0].mxu0
      %6133 = vmatprep.mubr.f32.mxu0 0.0
      %6134 = vmatmul.mubr.f32.gmra.mrb[0].mxu0 %v5307
      %v6135 = vpop.f32.mrb[0].mxu0
      %v6136 = vadd.f32 0.0, %v6135
      %v6137 = vpop.f32.mrb[0].mxu0
      %6138 = vmatprep.mubr.f32.mxu0 0.0
      %6139 = vmatmul.mubr.f32.gmra.mrb[0].mxu0 %v5310
      %v6140 = vpop.f32.mrb[0].mxu0
      %v6141 = vadd.f32 0.0, %v6140
      %v6142 = vpop.f32.mrb[0].mxu0
      %6143 = vmatprep.mubr.f32.mxu0 0.0
      %6144 = vmatmul.mubr.f32.gmra.mrb[0].mxu0 %v5313
      %v6145 = vpop.f32.mrb[0].mxu0
      %v6146 = vadd.f32 0.0, %v6145
      %v6147 = vpop.f32.mrb[0].mxu0
      %6148 = vmatprep.mubr.f32.mxu0 0.0
      %6149 = vmatmul.mubr.f32.gmra.mrb[0].mxu0 %v5316
      %v6150 = vpop.f32.mrb[0].mxu0
      %v6151 = vadd.f32 0.0, %v6150
      %v6152 = vpop.f32.mrb[0].mxu0
      %6153 = vmatprep.mubr.f32.mxu0 0.0
      %6154 = vmatmul.mubr.f32.gmra.mrb[0].mxu0 %v5319
      %v6155 = vpop.f32.mrb[0].mxu0
      %v6156 = vadd.f32 0.0, %v6155
      %v6157 = vpop.f32.mrb[0].mxu0
      %6158 = vmatprep.mubr.f32.mxu0 0.0
      %6159 = vmatmul.mubr.f32.gmra.mrb[0].mxu0 %v5322
      %v6160 = vpop.f32.mrb[0].mxu0
      %v6161 = vadd.f32 0.0, %v6160
      %v6162 = vpop.f32.mrb[0].mxu0
      %6163 = vmatprep.mubr.f32.mxu0 0.0
      %6164 = vmatmul.mubr.f32.gmra.mrb[0].mxu0 %v5325
      %v6165 = vpop.f32.mrb[0].mxu0
      %v6166 = vadd.f32 0.0, %v6165
      %v6167 = vpop.f32.mrb[0].mxu0
      %6168 = vmatprep.mubr.f32.mxu0 0.0
      %6169 = vmatmul.mubr.f32.gmra.mrb[0].mxu0 %v5328
      %v6170 = vpop.f32.mrb[0].mxu0
      %v6171 = vadd.f32 0.0, %v6170
      %v6172 = vpop.f32.mrb[0].mxu0
      %6173 = vmatprep.mubr.f32.mxu0 0.0
      %6174 = vmatmul.mubr.f32.gmra.mrb[0].mxu0 %v5331
      %v6175 = vpop.f32.mrb[0].mxu0
      %v6176 = vadd.f32 0.0, %v6175
      %v6177 = vpop.f32.mrb[0].mxu0
      %6178 = vmatprep.mubr.f32.mxu0 0.0
      %6179 = vmatmul.mubr.f32.gmra.mrb[0].mxu0 %v5334
      %v6180 = vpop.f32.mrb[0].mxu0
      %v6181 = vadd.f32 0.0, %v6180
      %v6182 = vpop.f32.mrb[0].mxu0
      %6183 = vmatprep.mubr.f32.mxu0 0.0
      %6184 = vmatmul.mubr.f32.gmra.mrb[0].mxu0 %v5337
      %v6185 = vpop.f32.mrb[0].mxu0
      %v6186 = vadd.f32 0.0, %v6185
      %v6187 = vpop.f32.mrb[0].mxu0
      %6188 = vdwg.mxu0
      %v6190 = vsel %vm2859, %v2601, 0
      %v6192 = vsel %vm2859, %v2602, 0
      %6194 = vmatprep.subr.mxu0 0.0
      %6195 = vmatpush1.xpose.msra.mxu0 %v6190
      %6196 = vmatprep.subr.mxu0 0.0
      %6197 = vmatpush1.xpose.msra.mxu0 %v6192
      %6198 = vmatprep.subr.mxu0 0.0
      %6199 = vmatpush1.xpose.msra.mxu0 0.0
      %6200 = vmatprep.subr.mxu0 0.0
      %6201 = vmatpush1.xpose.msra.mxu0 0.0
      %6202 = vmatprep.subr.mxu0 0.0
      %6203 = vmatpush1.xpose.msra.mxu0 0.0
      %6204 = vmatprep.subr.mxu0 0.0
      %6205 = vmatpush1.xpose.msra.mxu0 0.0
      %6206 = vmatprep.subr.mxu0 0.0
      %6207 = vmatpush1.xpose.msra.mxu0 0.0
      %6208 = vmatprep.subr.mxu0 0.0
      %6209 = vmatpush1.xpose.msra.mxu0 0.0
      %6210 = vmatprep.subr.mxu0 0.0
      %6211 = vmatpush1.xpose.msra.mxu0 0.0
      %6212 = vmatprep.subr.mxu0 0.0
      %6213 = vmatpush1.xpose.msra.mxu0 0.0
      %6214 = vmatprep.subr.mxu0 0.0
      %6215 = vmatpush1.xpose.msra.mxu0 0.0
      %6216 = vmatprep.subr.mxu0 0.0
      %6217 = vmatpush1.xpose.msra.mxu0 0.0
      %6218 = vmatprep.subr.mxu0 0.0
      %6219 = vmatpush1.xpose.msra.mxu0 0.0
      %6220 = vmatprep.subr.mxu0 0.0
      %6221 = vmatpush1.xpose.msra.mxu0 0.0
      %6222 = vmatprep.subr.mxu0 0.0
      %6223 = vmatpush1.xpose.msra.mxu0 0.0
      %6224 = vmatprep.subr.mxu0 0.0
      %6225 = vmatpush1.xpose.msra.mxu0 0.0
      %6226 = vmatprep.subr.mxu0 0.0
      %6227 = vmatpush1.xpose.msra.mxu0 0.0
      %6228 = vmatprep.subr.mxu0 0.0
      %6229 = vmatpush1.xpose.msra.mxu0 0.0
      %6230 = vmatprep.subr.mxu0 0.0
      %6231 = vmatpush1.xpose.msra.mxu0 0.0
      %6232 = vmatprep.subr.mxu0 0.0
      %6233 = vmatpush1.xpose.msra.mxu0 0.0
      %6234 = vmatprep.subr.mxu0 0.0
      %6235 = vmatpush1.xpose.msra.mxu0 0.0
      %6236 = vmatprep.subr.mxu0 0.0
      %6237 = vmatpush1.xpose.msra.mxu0 0.0
      %6238 = vmatprep.subr.mxu0 0.0
      %6239 = vmatpush1.xpose.msra.mxu0 0.0
      %6240 = vmatprep.subr.mxu0 0.0
      %6241 = vmatpush1.xpose.msra.mxu0 0.0
      %6242 = vmatprep.subr.mxu0 0.0
      %6243 = vmatpush1.xpose.msra.mxu0 0.0
      %6244 = vmatprep.subr.mxu0 0.0
      %6245 = vmatpush1.xpose.msra.mxu0 0.0
      %6246 = vmatprep.subr.mxu0 0.0
      %6247 = vmatpush1.xpose.msra.mxu0 0.0
      %6248 = vmatprep.subr.mxu0 0.0
      %6249 = vmatpush1.xpose.msra.mxu0 0.0
      %6250 = vmatprep.subr.mxu0 0.0
      %6251 = vmatpush1.xpose.msra.mxu0 0.0
      %6252 = vmatprep.subr.mxu0 0.0
      %6253 = vmatpush1.xpose.msra.mxu0 0.0
      %6254 = vmatprep.subr.mxu0 0.0
      %6255 = vmatpush1.xpose.msra.mxu0 0.0
      %6256 = vmatprep.subr.mxu0 0.0
      %6257 = vmatpush1.xpose.msra.mxu0 0.0
      %6258 = vmatprep.mubr.f32.mxu0 0.0
      %6259 = vmatmul.mubr.f32.gmra.mrb[0].mxu0 %v5487
      %v6260 = vpop.f32.mrb[0].mxu0
      %v6261 = vadd.f32 %v6111, %v6260
      %v6262 = vpop.f32.mrb[0].mxu0
      %6263 = vmatprep.mubr.f32.mxu0 0.0
      %6264 = vmatmul.mubr.f32.gmra.mrb[0].mxu0 %v5490
      %v6265 = vpop.f32.mrb[0].mxu0
      %v6266 = vadd.f32 %v6116, %v6265
      %v6267 = vpop.f32.mrb[0].mxu0
      %6268 = vmatprep.mubr.f32.mxu0 0.0
      %6269 = vmatmul.mubr.f32.gmra.mrb[0].mxu0 %v5493
      %v6270 = vpop.f32.mrb[0].mxu0
      %v6271 = vadd.f32 %v6121, %v6270
      %v6272 = vpop.f32.mrb[0].mxu0
      %6273 = vmatprep.mubr.f32.mxu0 0.0
      %6274 = vmatmul.mubr.f32.gmra.mrb[0].mxu0 %v5496
      %v6275 = vpop.f32.mrb[0].mxu0
      %v6276 = vadd.f32 %v6126, %v6275
      %v6277 = vpop.f32.mrb[0].mxu0
      %6278 = vmatprep.mubr.f32.mxu0 0.0
      %6279 = vmatmul.mubr.f32.gmra.mrb[0].mxu0 %v5499
      %v6280 = vpop.f32.mrb[0].mxu0
      %v6281 = vadd.f32 %v6131, %v6280
      %v6282 = vpop.f32.mrb[0].mxu0
      %6283 = vmatprep.mubr.f32.mxu0 0.0
      %6284 = vmatmul.mubr.f32.gmra.mrb[0].mxu0 %v5502
      %v6285 = vpop.f32.mrb[0].mxu0
      %v6286 = vadd.f32 %v6136, %v6285
      %v6287 = vpop.f32.mrb[0].mxu0
      %6288 = vmatprep.mubr.f32.mxu0 0.0
      %6289 = vmatmul.mubr.f32.gmra.mrb[0].mxu0 %v5505
      %v6290 = vpop.f32.mrb[0].mxu0
      %v6291 = vadd.f32 %v6141, %v6290
      %v6292 = vpop.f32.mrb[0].mxu0
      %6293 = vmatprep.mubr.f32.mxu0 0.0
      %6294 = vmatmul.mubr.f32.gmra.mrb[0].mxu0 %v5508
      %v6295 = vpop.f32.mrb[0].mxu0
      %v6296 = vadd.f32 %v6146, %v6295
      %v6297 = vpop.f32.mrb[0].mxu0
      %6298 = vmatprep.mubr.f32.mxu0 0.0
      %6299 = vmatmul.mubr.f32.gmra.mrb[0].mxu0 %v5511
      %v6300 = vpop.f32.mrb[0].mxu0
      %v6301 = vadd.f32 %v6151, %v6300
      %v6302 = vpop.f32.mrb[0].mxu0
      %6303 = vmatprep.mubr.f32.mxu0 0.0
      %6304 = vmatmul.mubr.f32.gmra.mrb[0].mxu0 %v5514
      %v6305 = vpop.f32.mrb[0].mxu0
      %v6306 = vadd.f32 %v6156, %v6305
      %v6307 = vpop.f32.mrb[0].mxu0
      %6308 = vmatprep.mubr.f32.mxu0 0.0
      %6309 = vmatmul.mubr.f32.gmra.mrb[0].mxu0 %v5517
      %v6310 = vpop.f32.mrb[0].mxu0
      %v6311 = vadd.f32 %v6161, %v6310
      %v6312 = vpop.f32.mrb[0].mxu0
      %6313 = vmatprep.mubr.f32.mxu0 0.0
      %6314 = vmatmul.mubr.f32.gmra.mrb[0].mxu0 %v5520
      %v6315 = vpop.f32.mrb[0].mxu0
      %v6316 = vadd.f32 %v6166, %v6315
      %v6317 = vpop.f32.mrb[0].mxu0
      %6318 = vmatprep.mubr.f32.mxu0 0.0
      %6319 = vmatmul.mubr.f32.gmra.mrb[0].mxu0 %v5523
      %v6320 = vpop.f32.mrb[0].mxu0
      %v6321 = vadd.f32 %v6171, %v6320
      %v6322 = vpop.f32.mrb[0].mxu0
      %6323 = vmatprep.mubr.f32.mxu0 0.0
      %6324 = vmatmul.mubr.f32.gmra.mrb[0].mxu0 %v5526
      %v6325 = vpop.f32.mrb[0].mxu0
      %v6326 = vadd.f32 %v6176, %v6325
      %v6327 = vpop.f32.mrb[0].mxu0
      %6328 = vmatprep.mubr.f32.mxu0 0.0
      %6329 = vmatmul.mubr.f32.gmra.mrb[0].mxu0 %v5529
      %v6330 = vpop.f32.mrb[0].mxu0
      %v6331 = vadd.f32 %v6181, %v6330
      %v6332 = vpop.f32.mrb[0].mxu0
      %6333 = vmatprep.mubr.f32.mxu0 0.0
      %6334 = vmatmul.mubr.f32.gmra.mrb[0].mxu0 %v5532
      %v6335 = vpop.f32.mrb[0].mxu0
      %v6336 = vadd.f32 %v6186, %v6335
      %v6337 = vpop.f32.mrb[0].mxu0
      %6338 = vdwg.mxu0
      %v6339 = vmul.f32 %v6023, %v6261
      %v6340 = vmul.f32 %v6024, %v6266
      %v6341 = vmul.f32 %v6025, %v6271
      %v6342 = vmul.f32 %v6026, %v6276
      %v6343 = vmul.f32 %v6027, %v6281
      %v6344 = vmul.f32 %v6028, %v6286
      %v6345 = vmul.f32 %v6029, %v6291
      %v6346 = vmul.f32 %v6030, %v6296
      %v6347 = vmul.f32 %v6031, %v6301
      %v6348 = vmul.f32 %v6032, %v6306
      %v6349 = vmul.f32 %v6033, %v6311
      %v6350 = vmul.f32 %v6034, %v6316
      %v6351 = vmul.f32 %v6035, %v6321
      %v6352 = vmul.f32 %v6036, %v6326
      %v6353 = vmul.f32 %v6037, %v6331
      %v6354 = vmul.f32 %v6038, %v6336
      %v6355 = vadd.f32 %v4652, %v4783
      %v6356 = vadd.f32 %v4655, %v4785
      %v6357 = vadd.f32 %v4658, %v4787
      %v6358 = vadd.f32 %v4661, %v4789
      %v6359 = vadd.f32 %v4664, %v4791
      %v6360 = vadd.f32 %v4667, %v4793
      %v6361 = vadd.f32 %v4670, %v4795
      %v6362 = vadd.f32 %v4673, %v4797
      %v6363 = vadd.f32 %v4676, %v4799
      %v6364 = vadd.f32 %v4679, %v4801
      %v6365 = vadd.f32 %v4682, %v4803
      %v6366 = vadd.f32 %v4685, %v4805
      %v6367 = vadd.f32 %v4688, %v4807
      %v6368 = vadd.f32 %v4691, %v4809
      %v6369 = vadd.f32 %v4694, %v4811
      %v6370 = vadd.f32 %v4697, %v4813
      %v6372 = vsel %vm722, %v5681, 0
      %v6375 = vsel %vm722, %v5682, 0
      %v6378 = vsel %vm722, %v5683, 0
      %v6381 = vsel %vm722, %v5684, 0
      %v6384 = vsel %vm722, %v5685, 0
      %v6387 = vsel %vm722, %v5686, 0
      %v6390 = vsel %vm722, %v5687, 0
      %v6393 = vsel %vm722, %v5688, 0
      %v6396 = vsel %vm722, %v5689, 0
      %v6399 = vsel %vm722, %v5690, 0
      %v6402 = vsel %vm722, %v5691, 0
      %v6405 = vsel %vm722, %v5692, 0
      %v6408 = vsel %vm722, %v5693, 0
      %v6411 = vsel %vm722, %v5694, 0
      %v6414 = vsel %vm722, %v5695, 0
      %v6417 = vsel %vm722, %v5696, 0
      %v6419 = vsel %vm979, %v635, 0
      %6421 = vmatprep.subr.mxu0 0.0
      %6422 = vmatpush1.msra.mxu0 %v6419
      %6423 = vmatprep.subr.mxu0 0.0
      %6424 = vmatpush1.msra.mxu0 0.0
      %6425 = vmatprep.subr.mxu0 0.0
      %6426 = vmatpush1.msra.mxu0 0.0
      %6427 = vmatprep.subr.mxu0 0.0
      %6428 = vmatpush1.msra.mxu0 0.0
      %6429 = vmatprep.subr.mxu0 0.0
      %6430 = vmatpush1.msra.mxu0 0.0
      %6431 = vmatprep.subr.mxu0 0.0
      %6432 = vmatpush1.msra.mxu0 0.0
      %6433 = vmatprep.subr.mxu0 0.0
      %6434 = vmatpush1.msra.mxu0 0.0
      %6435 = vmatprep.subr.mxu0 0.0
      %6436 = vmatpush1.msra.mxu0 0.0
      %6437 = vmatprep.subr.mxu0 0.0
      %6438 = vmatpush1.msra.mxu0 0.0
      %6439 = vmatprep.subr.mxu0 0.0
      %6440 = vmatpush1.msra.mxu0 0.0
      %6441 = vmatprep.subr.mxu0 0.0
      %6442 = vmatpush1.msra.mxu0 0.0
      %6443 = vmatprep.subr.mxu0 0.0
      %6444 = vmatpush1.msra.mxu0 0.0
      %6445 = vmatprep.subr.mxu0 0.0
      %6446 = vmatpush1.msra.mxu0 0.0
      %6447 = vmatprep.subr.mxu0 0.0
      %6448 = vmatpush1.msra.mxu0 0.0
      %6449 = vmatprep.subr.mxu0 0.0
      %6450 = vmatpush1.msra.mxu0 0.0
      %6451 = vmatprep.subr.mxu0 0.0
      %6452 = vmatpush1.msra.mxu0 0.0
      %6453 = vmatprep.subr.mxu0 0.0
      %6454 = vmatpush1.msra.mxu0 0.0
      %6455 = vmatprep.subr.mxu0 0.0
      %6456 = vmatpush1.msra.mxu0 0.0
      %6457 = vmatprep.subr.mxu0 0.0
      %6458 = vmatpush1.msra.mxu0 0.0
      %6459 = vmatprep.subr.mxu0 0.0
      %6460 = vmatpush1.msra.mxu0 0.0
      %6461 = vmatprep.subr.mxu0 0.0
      %6462 = vmatpush1.msra.mxu0 0.0
      %6463 = vmatprep.subr.mxu0 0.0
      %6464 = vmatpush1.msra.mxu0 0.0
      %6465 = vmatprep.subr.mxu0 0.0
      %6466 = vmatpush1.msra.mxu0 0.0
      %6467 = vmatprep.subr.mxu0 0.0
      %6468 = vmatpush1.msra.mxu0 0.0
      %6469 = vmatprep.subr.mxu0 0.0
      %6470 = vmatpush1.msra.mxu0 0.0
      %6471 = vmatprep.subr.mxu0 0.0
      %6472 = vmatpush1.msra.mxu0 0.0
      %6473 = vmatprep.subr.mxu0 0.0
      %6474 = vmatpush1.msra.mxu0 0.0
      %6475 = vmatprep.subr.mxu0 0.0
      %6476 = vmatpush1.msra.mxu0 0.0
      %6477 = vmatprep.subr.mxu0 0.0
      %6478 = vmatpush1.msra.mxu0 0.0
      %6479 = vmatprep.subr.mxu0 0.0
      %6480 = vmatpush1.msra.mxu0 0.0
      %6481 = vmatprep.subr.mxu0 0.0
      %6482 = vmatpush1.msra.mxu0 0.0
      %6483 = vmatprep.subr.mxu0 0.0
      %6484 = vmatpush1.msra.mxu0 0.0
      %6485 = vmatprep.mubr.f32.mxu0 0.0
      %6486 = vmatmul.mubr.f32.gmra.mrb[0].mxu0 %v6372
      %v6487 = vpop.f32.mrb[0].mxu0
      %v6488 = vadd.f32 0.0, %v6487
      %v6489 = vpop.f32.mrb[0].mxu0
      %6490 = vmatprep.mubr.f32.mxu0 0.0
      %6491 = vmatmul.mubr.f32.gmra.mrb[0].mxu0 %v6375
      %v6492 = vpop.f32.mrb[0].mxu0
      %v6493 = vadd.f32 0.0, %v6492
      %v6494 = vpop.f32.mrb[0].mxu0
      %6495 = vmatprep.mubr.f32.mxu0 0.0
      %6496 = vmatmul.mubr.f32.gmra.mrb[0].mxu0 %v6378
      %v6497 = vpop.f32.mrb[0].mxu0
      %v6498 = vadd.f32 0.0, %v6497
      %v6499 = vpop.f32.mrb[0].mxu0
      %6500 = vmatprep.mubr.f32.mxu0 0.0
      %6501 = vmatmul.mubr.f32.gmra.mrb[0].mxu0 %v6381
      %v6502 = vpop.f32.mrb[0].mxu0
      %v6503 = vadd.f32 0.0, %v6502
      %v6504 = vpop.f32.mrb[0].mxu0
      %6505 = vmatprep.mubr.f32.mxu0 0.0
      %6506 = vmatmul.mubr.f32.gmra.mrb[0].mxu0 %v6384
      %v6507 = vpop.f32.mrb[0].mxu0
      %v6508 = vadd.f32 0.0, %v6507
      %v6509 = vpop.f32.mrb[0].mxu0
      %6510 = vmatprep.mubr.f32.mxu0 0.0
      %6511 = vmatmul.mubr.f32.gmra.mrb[0].mxu0 %v6387
      %v6512 = vpop.f32.mrb[0].mxu0
      %v6513 = vadd.f32 0.0, %v6512
      %v6514 = vpop.f32.mrb[0].mxu0
      %6515 = vmatprep.mubr.f32.mxu0 0.0
      %6516 = vmatmul.mubr.f32.gmra.mrb[0].mxu0 %v6390
      %v6517 = vpop.f32.mrb[0].mxu0
      %v6518 = vadd.f32 0.0, %v6517
      %v6519 = vpop.f32.mrb[0].mxu0
      %6520 = vmatprep.mubr.f32.mxu0 0.0
      %6521 = vmatmul.mubr.f32.gmra.mrb[0].mxu0 %v6393
      %v6522 = vpop.f32.mrb[0].mxu0
      %v6523 = vadd.f32 0.0, %v6522
      %v6524 = vpop.f32.mrb[0].mxu0
      %6525 = vmatprep.mubr.f32.mxu0 0.0
      %6526 = vmatmul.mubr.f32.gmra.mrb[0].mxu0 %v6396
      %v6527 = vpop.f32.mrb[0].mxu0
      %v6528 = vadd.f32 0.0, %v6527
      %v6529 = vpop.f32.mrb[0].mxu0
      %6530 = vmatprep.mubr.f32.mxu0 0.0
      %6531 = vmatmul.mubr.f32.gmra.mrb[0].mxu0 %v6399
      %v6532 = vpop.f32.mrb[0].mxu0
      %v6533 = vadd.f32 0.0, %v6532
      %v6534 = vpop.f32.mrb[0].mxu0
      %6535 = vmatprep.mubr.f32.mxu0 0.0
      %6536 = vmatmul.mubr.f32.gmra.mrb[0].mxu0 %v6402
      %v6537 = vpop.f32.mrb[0].mxu0
      %v6538 = vadd.f32 0.0, %v6537
      %v6539 = vpop.f32.mrb[0].mxu0
      %6540 = vmatprep.mubr.f32.mxu0 0.0
      %6541 = vmatmul.mubr.f32.gmra.mrb[0].mxu0 %v6405
      %v6542 = vpop.f32.mrb[0].mxu0
      %v6543 = vadd.f32 0.0, %v6542
      %v6544 = vpop.f32.mrb[0].mxu0
      %6545 = vmatprep.mubr.f32.mxu0 0.0
      %6546 = vmatmul.mubr.f32.gmra.mrb[0].mxu0 %v6408
      %v6547 = vpop.f32.mrb[0].mxu0
      %v6548 = vadd.f32 0.0, %v6547
      %v6549 = vpop.f32.mrb[0].mxu0
      %6550 = vmatprep.mubr.f32.mxu0 0.0
      %6551 = vmatmul.mubr.f32.gmra.mrb[0].mxu0 %v6411
      %v6552 = vpop.f32.mrb[0].mxu0
      %v6553 = vadd.f32 0.0, %v6552
      %v6554 = vpop.f32.mrb[0].mxu0
      %6555 = vmatprep.mubr.f32.mxu0 0.0
      %6556 = vmatmul.mubr.f32.gmra.mrb[0].mxu0 %v6414
      %v6557 = vpop.f32.mrb[0].mxu0
      %v6558 = vadd.f32 0.0, %v6557
      %v6559 = vpop.f32.mrb[0].mxu0
      %6560 = vmatprep.mubr.f32.mxu0 0.0
      %6561 = vmatmul.mubr.f32.gmra.mrb[0].mxu0 %v6417
      %v6562 = vpop.f32.mrb[0].mxu0
      %v6563 = vadd.f32 0.0, %v6562
      %v6564 = vpop.f32.mrb[0].mxu0
      %6565 = vdwg.mxu0
      %v6566 = vmul.f32 %v6488, %v674
      %v6567 = vmul.f32 %v6493, %v675
      %v6568 = vmul.f32 %v6498, %v676
      %v6569 = vmul.f32 %v6503, %v677
      %v6570 = vmul.f32 %v6508, %v678
      %v6571 = vmul.f32 %v6513, %v679
      %v6572 = vmul.f32 %v6518, %v680
      %v6573 = vmul.f32 %v6523, %v681
      %v6574 = vmul.f32 %v6528, %v682
      %v6575 = vmul.f32 %v6533, %v683
      %v6576 = vmul.f32 %v6538, %v684
      %v6577 = vmul.f32 %v6543, %v685
      %v6578 = vmul.f32 %v6548, %v686
      %v6579 = vmul.f32 %v6553, %v687
      %v6580 = vmul.f32 %v6558, %v688
      %v6581 = vmul.f32 %v6563, %v689
      %v6583 = vsel %vm722, %v6007, 0
      %v6586 = vsel %vm722, %v6008, 0
      %v6589 = vsel %vm722, %v6009, 0
      %v6592 = vsel %vm722, %v6010, 0
      %v6595 = vsel %vm722, %v6011, 0
      %v6598 = vsel %vm722, %v6012, 0
      %v6601 = vsel %vm722, %v6013, 0
      %v6604 = vsel %vm722, %v6014, 0
      %v6607 = vsel %vm722, %v6015, 0
      %v6610 = vsel %vm722, %v6016, 0
      %v6613 = vsel %vm722, %v6017, 0
      %v6616 = vsel %vm722, %v6018, 0
      %v6619 = vsel %vm722, %v6019, 0
      %v6622 = vsel %vm722, %v6020, 0
      %v6625 = vsel %vm722, %v6021, 0
      %v6628 = vsel %vm722, %v6022, 0
      %6630 = vmatprep.subr.mxu0 0.0
      %6631 = vmatpush1.msra.mxu0 %v6419
      %6632 = vmatprep.subr.mxu0 0.0
      %6633 = vmatpush1.msra.mxu0 0.0
      %6634 = vmatprep.subr.mxu0 0.0
      %6635 = vmatpush1.msra.mxu0 0.0
      %6636 = vmatprep.subr.mxu0 0.0
      %6637 = vmatpush1.msra.mxu0 0.0
      %6638 = vmatprep.subr.mxu0 0.0
      %6639 = vmatpush1.msra.mxu0 0.0
      %6640 = vmatprep.subr.mxu0 0.0
      %6641 = vmatpush1.msra.mxu0 0.0
      %6642 = vmatprep.subr.mxu0 0.0
      %6643 = vmatpush1.msra.mxu0 0.0
      %6644 = vmatprep.subr.mxu0 0.0
      %6645 = vmatpush1.msra.mxu0 0.0
      %6646 = vmatprep.subr.mxu0 0.0
      %6647 = vmatpush1.msra.mxu0 0.0
      %6648 = vmatprep.subr.mxu0 0.0
      %6649 = vmatpush1.msra.mxu0 0.0
      %6650 = vmatprep.subr.mxu0 0.0
      %6651 = vmatpush1.msra.mxu0 0.0
      %6652 = vmatprep.subr.mxu0 0.0
      %6653 = vmatpush1.msra.mxu0 0.0
      %6654 = vmatprep.subr.mxu0 0.0
      %6655 = vmatpush1.msra.mxu0 0.0
      %6656 = vmatprep.subr.mxu0 0.0
      %6657 = vmatpush1.msra.mxu0 0.0
      %6658 = vmatprep.subr.mxu0 0.0
      %6659 = vmatpush1.msra.mxu0 0.0
      %6660 = vmatprep.subr.mxu0 0.0
      %6661 = vmatpush1.msra.mxu0 0.0
      %6662 = vmatprep.subr.mxu0 0.0
      %6663 = vmatpush1.msra.mxu0 0.0
      %6664 = vmatprep.subr.mxu0 0.0
      %6665 = vmatpush1.msra.mxu0 0.0
      %6666 = vmatprep.subr.mxu0 0.0
      %6667 = vmatpush1.msra.mxu0 0.0
      %6668 = vmatprep.subr.mxu0 0.0
      %6669 = vmatpush1.msra.mxu0 0.0
      %6670 = vmatprep.subr.mxu0 0.0
      %6671 = vmatpush1.msra.mxu0 0.0
      %6672 = vmatprep.subr.mxu0 0.0
      %6673 = vmatpush1.msra.mxu0 0.0
      %6674 = vmatprep.subr.mxu0 0.0
      %6675 = vmatpush1.msra.mxu0 0.0
      %6676 = vmatprep.subr.mxu0 0.0
      %6677 = vmatpush1.msra.mxu0 0.0
      %6678 = vmatprep.subr.mxu0 0.0
      %6679 = vmatpush1.msra.mxu0 0.0
      %6680 = vmatprep.subr.mxu0 0.0
      %6681 = vmatpush1.msra.mxu0 0.0
      %6682 = vmatprep.subr.mxu0 0.0
      %6683 = vmatpush1.msra.mxu0 0.0
      %6684 = vmatprep.subr.mxu0 0.0
      %6685 = vmatpush1.msra.mxu0 0.0
      %6686 = vmatprep.subr.mxu0 0.0
      %6687 = vmatpush1.msra.mxu0 0.0
      %6688 = vmatprep.subr.mxu0 0.0
      %6689 = vmatpush1.msra.mxu0 0.0
      %6690 = vmatprep.subr.mxu0 0.0
      %6691 = vmatpush1.msra.mxu0 0.0
      %6692 = vmatprep.subr.mxu0 0.0
      %6693 = vmatpush1.msra.mxu0 0.0
      %6694 = vmatprep.mubr.f32.mxu0 0.0
      %6695 = vmatmul.mubr.f32.gmra.mrb[0].mxu0 %v6583
      %v6696 = vpop.f32.mrb[0].mxu0
      %v6697 = vadd.f32 0.0, %v6696
      %v6698 = vpop.f32.mrb[0].mxu0
      %6699 = vmatprep.mubr.f32.mxu0 0.0
      %6700 = vmatmul.mubr.f32.gmra.mrb[0].mxu0 %v6586
      %v6701 = vpop.f32.mrb[0].mxu0
      %v6702 = vadd.f32 0.0, %v6701
      %v6703 = vpop.f32.mrb[0].mxu0
      %6704 = vmatprep.mubr.f32.mxu0 0.0
      %6705 = vmatmul.mubr.f32.gmra.mrb[0].mxu0 %v6589
      %v6706 = vpop.f32.mrb[0].mxu0
      %v6707 = vadd.f32 0.0, %v6706
      %v6708 = vpop.f32.mrb[0].mxu0
      %6709 = vmatprep.mubr.f32.mxu0 0.0
      %6710 = vmatmul.mubr.f32.gmra.mrb[0].mxu0 %v6592
      %v6711 = vpop.f32.mrb[0].mxu0
      %v6712 = vadd.f32 0.0, %v6711
      %v6713 = vpop.f32.mrb[0].mxu0
      %6714 = vmatprep.mubr.f32.mxu0 0.0
      %6715 = vmatmul.mubr.f32.gmra.mrb[0].mxu0 %v6595
      %v6716 = vpop.f32.mrb[0].mxu0
      %v6717 = vadd.f32 0.0, %v6716
      %v6718 = vpop.f32.mrb[0].mxu0
      %6719 = vmatprep.mubr.f32.mxu0 0.0
      %6720 = vmatmul.mubr.f32.gmra.mrb[0].mxu0 %v6598
      %v6721 = vpop.f32.mrb[0].mxu0
      %v6722 = vadd.f32 0.0, %v6721
      %v6723 = vpop.f32.mrb[0].mxu0
      %6724 = vmatprep.mubr.f32.mxu0 0.0
      %6725 = vmatmul.mubr.f32.gmra.mrb[0].mxu0 %v6601
      %v6726 = vpop.f32.mrb[0].mxu0
      %v6727 = vadd.f32 0.0, %v6726
      %v6728 = vpop.f32.mrb[0].mxu0
      %6729 = vmatprep.mubr.f32.mxu0 0.0
      %6730 = vmatmul.mubr.f32.gmra.mrb[0].mxu0 %v6604
      %v6731 = vpop.f32.mrb[0].mxu0
      %v6732 = vadd.f32 0.0, %v6731
      %v6733 = vpop.f32.mrb[0].mxu0
      %6734 = vmatprep.mubr.f32.mxu0 0.0
      %6735 = vmatmul.mubr.f32.gmra.mrb[0].mxu0 %v6607
      %v6736 = vpop.f32.mrb[0].mxu0
      %v6737 = vadd.f32 0.0, %v6736
      %v6738 = vpop.f32.mrb[0].mxu0
      %6739 = vmatprep.mubr.f32.mxu0 0.0
      %6740 = vmatmul.mubr.f32.gmra.mrb[0].mxu0 %v6610
      %v6741 = vpop.f32.mrb[0].mxu0
      %v6742 = vadd.f32 0.0, %v6741
      %v6743 = vpop.f32.mrb[0].mxu0
      %6744 = vmatprep.mubr.f32.mxu0 0.0
      %6745 = vmatmul.mubr.f32.gmra.mrb[0].mxu0 %v6613
      %v6746 = vpop.f32.mrb[0].mxu0
      %v6747 = vadd.f32 0.0, %v6746
      %v6748 = vpop.f32.mrb[0].mxu0
      %6749 = vmatprep.mubr.f32.mxu0 0.0
      %6750 = vmatmul.mubr.f32.gmra.mrb[0].mxu0 %v6616
      %v6751 = vpop.f32.mrb[0].mxu0
      %v6752 = vadd.f32 0.0, %v6751
      %v6753 = vpop.f32.mrb[0].mxu0
      %6754 = vmatprep.mubr.f32.mxu0 0.0
      %6755 = vmatmul.mubr.f32.gmra.mrb[0].mxu0 %v6619
      %v6756 = vpop.f32.mrb[0].mxu0
      %v6757 = vadd.f32 0.0, %v6756
      %v6758 = vpop.f32.mrb[0].mxu0
      %6759 = vmatprep.mubr.f32.mxu0 0.0
      %6760 = vmatmul.mubr.f32.gmra.mrb[0].mxu0 %v6622
      %v6761 = vpop.f32.mrb[0].mxu0
      %v6762 = vadd.f32 0.0, %v6761
      %v6763 = vpop.f32.mrb[0].mxu0
      %6764 = vmatprep.mubr.f32.mxu0 0.0
      %6765 = vmatmul.mubr.f32.gmra.mrb[0].mxu0 %v6625
      %v6766 = vpop.f32.mrb[0].mxu0
      %v6767 = vadd.f32 0.0, %v6766
      %v6768 = vpop.f32.mrb[0].mxu0
      %6769 = vmatprep.mubr.f32.mxu0 0.0
      %6770 = vmatmul.mubr.f32.gmra.mrb[0].mxu0 %v6628
      %v6771 = vpop.f32.mrb[0].mxu0
      %v6772 = vadd.f32 0.0, %v6771
      %v6773 = vpop.f32.mrb[0].mxu0
      %6774 = vdwg.mxu0
      %v6775 = vmul.f32 %v6697, %v690
      %v6776 = vmul.f32 %v6702, %v691
      %v6777 = vmul.f32 %v6707, %v692
      %v6778 = vmul.f32 %v6712, %v693
      %v6779 = vmul.f32 %v6717, %v694
      %v6780 = vmul.f32 %v6722, %v695
      %v6781 = vmul.f32 %v6727, %v696
      %v6782 = vmul.f32 %v6732, %v697
      %v6783 = vmul.f32 %v6737, %v698
      %v6784 = vmul.f32 %v6742, %v699
      %v6785 = vmul.f32 %v6747, %v700
      %v6786 = vmul.f32 %v6752, %v701
      %v6787 = vmul.f32 %v6757, %v702
      %v6788 = vmul.f32 %v6762, %v703
      %v6789 = vmul.f32 %v6767, %v704
      %v6790 = vmul.f32 %v6772, %v705
      %v6792 = vsel %vm1144, %v6775, 0
      %v6795 = vsel %vm1144, %v6776, 0
      %v6798 = vsel %vm1144, %v6777, 0
      %v6801 = vsel %vm1144, %v6778, 0
      %v6804 = vsel %vm1144, %v6779, 0
      %v6807 = vsel %vm1144, %v6780, 0
      %v6810 = vsel %vm1144, %v6781, 0
      %v6813 = vsel %vm1144, %v6782, 0
      %v6816 = vsel %vm1144, %v6783, 0
      %v6819 = vsel %vm1144, %v6784, 0
      %v6822 = vsel %vm1144, %v6785, 0
      %v6825 = vsel %vm1144, %v6786, 0
      %v6828 = vsel %vm1144, %v6787, 0
      %v6831 = vsel %vm1144, %v6788, 0
      %v6834 = vsel %vm1144, %v6789, 0
      %v6837 = vsel %vm1144, %v6790, 0
      %v6839 = vsel %vm1144, %v634, 0
      %6841 = vmatprep.subr.mxu0 0.0
      %6842 = vmatpush1.xpose.msra.mxu0 %v6839
      %6843 = vmatprep.subr.mxu0 0.0
      %6844 = vmatpush1.xpose.msra.mxu0 0.0
      %6845 = vmatprep.subr.mxu0 0.0
      %6846 = vmatpush1.xpose.msra.mxu0 0.0
      %6847 = vmatprep.subr.mxu0 0.0
      %6848 = vmatpush1.xpose.msra.mxu0 0.0
      %6849 = vmatprep.subr.mxu0 0.0
      %6850 = vmatpush1.xpose.msra.mxu0 0.0
      %6851 = vmatprep.subr.mxu0 0.0
      %6852 = vmatpush1.xpose.msra.mxu0 0.0
      %6853 = vmatprep.subr.mxu0 0.0
      %6854 = vmatpush1.xpose.msra.mxu0 0.0
      %6855 = vmatprep.subr.mxu0 0.0
      %6856 = vmatpush1.xpose.msra.mxu0 0.0
      %6857 = vmatprep.subr.mxu0 0.0
      %6858 = vmatpush1.xpose.msra.mxu0 0.0
      %6859 = vmatprep.subr.mxu0 0.0
      %6860 = vmatpush1.xpose.msra.mxu0 0.0
      %6861 = vmatprep.subr.mxu0 0.0
      %6862 = vmatpush1.xpose.msra.mxu0 0.0
      %6863 = vmatprep.subr.mxu0 0.0
      %6864 = vmatpush1.xpose.msra.mxu0 0.0
      %6865 = vmatprep.subr.mxu0 0.0
      %6866 = vmatpush1.xpose.msra.mxu0 0.0
      %6867 = vmatprep.subr.mxu0 0.0
      %6868 = vmatpush1.xpose.msra.mxu0 0.0
      %6869 = vmatprep.subr.mxu0 0.0
      %6870 = vmatpush1.xpose.msra.mxu0 0.0
      %6871 = vmatprep.subr.mxu0 0.0
      %6872 = vmatpush1.xpose.msra.mxu0 0.0
      %6873 = vmatprep.subr.mxu0 0.0
      %6874 = vmatpush1.xpose.msra.mxu0 0.0
      %6875 = vmatprep.subr.mxu0 0.0
      %6876 = vmatpush1.xpose.msra.mxu0 0.0
      %6877 = vmatprep.subr.mxu0 0.0
      %6878 = vmatpush1.xpose.msra.mxu0 0.0
      %6879 = vmatprep.subr.mxu0 0.0
      %6880 = vmatpush1.xpose.msra.mxu0 0.0
      %6881 = vmatprep.subr.mxu0 0.0
      %6882 = vmatpush1.xpose.msra.mxu0 0.0
      %6883 = vmatprep.subr.mxu0 0.0
      %6884 = vmatpush1.xpose.msra.mxu0 0.0
      %6885 = vmatprep.subr.mxu0 0.0
      %6886 = vmatpush1.xpose.msra.mxu0 0.0
      %6887 = vmatprep.subr.mxu0 0.0
      %6888 = vmatpush1.xpose.msra.mxu0 0.0
      %6889 = vmatprep.subr.mxu0 0.0
      %6890 = vmatpush1.xpose.msra.mxu0 0.0
      %6891 = vmatprep.subr.mxu0 0.0
      %6892 = vmatpush1.xpose.msra.mxu0 0.0
      %6893 = vmatprep.subr.mxu0 0.0
      %6894 = vmatpush1.xpose.msra.mxu0 0.0
      %6895 = vmatprep.subr.mxu0 0.0
      %6896 = vmatpush1.xpose.msra.mxu0 0.0
      %6897 = vmatprep.subr.mxu0 0.0
      %6898 = vmatpush1.xpose.msra.mxu0 0.0
      %6899 = vmatprep.subr.mxu0 0.0
      %6900 = vmatpush1.xpose.msra.mxu0 0.0
      %6901 = vmatprep.subr.mxu0 0.0
      %6902 = vmatpush1.xpose.msra.mxu0 0.0
      %6903 = vmatprep.subr.mxu0 0.0
      %6904 = vmatpush1.xpose.msra.mxu0 0.0
      %6905 = vmatprep.mubr.f32.mxu0 0.0
      %6906 = vmatmul.mubr.f32.gmra.mrb[0].mxu0 %v6792
      %v6907 = vpop.f32.mrb[0].mxu0
      %v6908 = vadd.f32 0.0, %v6907
      %v6909 = vpop.f32.mrb[0].mxu0
      %6910 = vmatprep.mubr.f32.mxu0 0.0
      %6911 = vmatmul.mubr.f32.gmra.mrb[0].mxu0 %v6795
      %v6912 = vpop.f32.mrb[0].mxu0
      %v6913 = vadd.f32 0.0, %v6912
      %v6914 = vpop.f32.mrb[0].mxu0
      %6915 = vmatprep.mubr.f32.mxu0 0.0
      %6916 = vmatmul.mubr.f32.gmra.mrb[0].mxu0 %v6798
      %v6917 = vpop.f32.mrb[0].mxu0
      %v6918 = vadd.f32 0.0, %v6917
      %v6919 = vpop.f32.mrb[0].mxu0
      %6920 = vmatprep.mubr.f32.mxu0 0.0
      %6921 = vmatmul.mubr.f32.gmra.mrb[0].mxu0 %v6801
      %v6922 = vpop.f32.mrb[0].mxu0
      %v6923 = vadd.f32 0.0, %v6922
      %v6924 = vpop.f32.mrb[0].mxu0
      %6925 = vmatprep.mubr.f32.mxu0 0.0
      %6926 = vmatmul.mubr.f32.gmra.mrb[0].mxu0 %v6804
      %v6927 = vpop.f32.mrb[0].mxu0
      %v6928 = vadd.f32 0.0, %v6927
      %v6929 = vpop.f32.mrb[0].mxu0
      %6930 = vmatprep.mubr.f32.mxu0 0.0
      %6931 = vmatmul.mubr.f32.gmra.mrb[0].mxu0 %v6807
      %v6932 = vpop.f32.mrb[0].mxu0
      %v6933 = vadd.f32 0.0, %v6932
      %v6934 = vpop.f32.mrb[0].mxu0
      %6935 = vmatprep.mubr.f32.mxu0 0.0
      %6936 = vmatmul.mubr.f32.gmra.mrb[0].mxu0 %v6810
      %v6937 = vpop.f32.mrb[0].mxu0
      %v6938 = vadd.f32 0.0, %v6937
      %v6939 = vpop.f32.mrb[0].mxu0
      %6940 = vmatprep.mubr.f32.mxu0 0.0
      %6941 = vmatmul.mubr.f32.gmra.mrb[0].mxu0 %v6813
      %v6942 = vpop.f32.mrb[0].mxu0
      %v6943 = vadd.f32 0.0, %v6942
      %v6944 = vpop.f32.mrb[0].mxu0
      %6945 = vmatprep.mubr.f32.mxu0 0.0
      %6946 = vmatmul.mubr.f32.gmra.mrb[0].mxu0 %v6816
      %v6947 = vpop.f32.mrb[0].mxu0
      %v6948 = vadd.f32 0.0, %v6947
      %v6949 = vpop.f32.mrb[0].mxu0
      %6950 = vmatprep.mubr.f32.mxu0 0.0
      %6951 = vmatmul.mubr.f32.gmra.mrb[0].mxu0 %v6819
      %v6952 = vpop.f32.mrb[0].mxu0
      %v6953 = vadd.f32 0.0, %v6952
      %v6954 = vpop.f32.mrb[0].mxu0
      %6955 = vmatprep.mubr.f32.mxu0 0.0
      %6956 = vmatmul.mubr.f32.gmra.mrb[0].mxu0 %v6822
      %v6957 = vpop.f32.mrb[0].mxu0
      %v6958 = vadd.f32 0.0, %v6957
      %v6959 = vpop.f32.mrb[0].mxu0
      %6960 = vmatprep.mubr.f32.mxu0 0.0
      %6961 = vmatmul.mubr.f32.gmra.mrb[0].mxu0 %v6825
      %v6962 = vpop.f32.mrb[0].mxu0
      %v6963 = vadd.f32 0.0, %v6962
      %v6964 = vpop.f32.mrb[0].mxu0
      %6965 = vmatprep.mubr.f32.mxu0 0.0
      %6966 = vmatmul.mubr.f32.gmra.mrb[0].mxu0 %v6828
      %v6967 = vpop.f32.mrb[0].mxu0
      %v6968 = vadd.f32 0.0, %v6967
      %v6969 = vpop.f32.mrb[0].mxu0
      %6970 = vmatprep.mubr.f32.mxu0 0.0
      %6971 = vmatmul.mubr.f32.gmra.mrb[0].mxu0 %v6831
      %v6972 = vpop.f32.mrb[0].mxu0
      %v6973 = vadd.f32 0.0, %v6972
      %v6974 = vpop.f32.mrb[0].mxu0
      %6975 = vmatprep.mubr.f32.mxu0 0.0
      %6976 = vmatmul.mubr.f32.gmra.mrb[0].mxu0 %v6834
      %v6977 = vpop.f32.mrb[0].mxu0
      %v6978 = vadd.f32 0.0, %v6977
      %v6979 = vpop.f32.mrb[0].mxu0
      %6980 = vmatprep.mubr.f32.mxu0 0.0
      %6981 = vmatmul.mubr.f32.gmra.mrb[0].mxu0 %v6837
      %v6982 = vpop.f32.mrb[0].mxu0
      %v6983 = vadd.f32 0.0, %v6982
      %v6984 = vpop.f32.mrb[0].mxu0
      %6985 = vdwg.mxu0
      %v6987 = vsel %vm1144, %v6566, 0
      %v6990 = vsel %vm1144, %v6567, 0
      %v6993 = vsel %vm1144, %v6568, 0
      %v6996 = vsel %vm1144, %v6569, 0
      %v6999 = vsel %vm1144, %v6570, 0
      %v7002 = vsel %vm1144, %v6571, 0
      %v7005 = vsel %vm1144, %v6572, 0
      %v7008 = vsel %vm1144, %v6573, 0
      %v7011 = vsel %vm1144, %v6574, 0
      %v7014 = vsel %vm1144, %v6575, 0
      %v7017 = vsel %vm1144, %v6576, 0
      %v7020 = vsel %vm1144, %v6577, 0
      %v7023 = vsel %vm1144, %v6578, 0
      %v7026 = vsel %vm1144, %v6579, 0
      %v7029 = vsel %vm1144, %v6580, 0
      %v7032 = vsel %vm1144, %v6581, 0
      %7034 = vmatprep.subr.mxu0 0.0
      %7035 = vmatpush1.xpose.msra.mxu0 %v6839
      %7036 = vmatprep.subr.mxu0 0.0
      %7037 = vmatpush1.xpose.msra.mxu0 0.0
      %7038 = vmatprep.subr.mxu0 0.0
      %7039 = vmatpush1.xpose.msra.mxu0 0.0
      %7040 = vmatprep.subr.mxu0 0.0
      %7041 = vmatpush1.xpose.msra.mxu0 0.0
      %7042 = vmatprep.subr.mxu0 0.0
      %7043 = vmatpush1.xpose.msra.mxu0 0.0
      %7044 = vmatprep.subr.mxu0 0.0
      %7045 = vmatpush1.xpose.msra.mxu0 0.0
      %7046 = vmatprep.subr.mxu0 0.0
      %7047 = vmatpush1.xpose.msra.mxu0 0.0
      %7048 = vmatprep.subr.mxu0 0.0
      %7049 = vmatpush1.xpose.msra.mxu0 0.0
      %7050 = vmatprep.subr.mxu0 0.0
      %7051 = vmatpush1.xpose.msra.mxu0 0.0
      %7052 = vmatprep.subr.mxu0 0.0
      %7053 = vmatpush1.xpose.msra.mxu0 0.0
      %7054 = vmatprep.subr.mxu0 0.0
      %7055 = vmatpush1.xpose.msra.mxu0 0.0
      %7056 = vmatprep.subr.mxu0 0.0
      %7057 = vmatpush1.xpose.msra.mxu0 0.0
      %7058 = vmatprep.subr.mxu0 0.0
      %7059 = vmatpush1.xpose.msra.mxu0 0.0
      %7060 = vmatprep.subr.mxu0 0.0
      %7061 = vmatpush1.xpose.msra.mxu0 0.0
      %7062 = vmatprep.subr.mxu0 0.0
      %7063 = vmatpush1.xpose.msra.mxu0 0.0
      %7064 = vmatprep.subr.mxu0 0.0
      %7065 = vmatpush1.xpose.msra.mxu0 0.0
      %7066 = vmatprep.subr.mxu0 0.0
      %7067 = vmatpush1.xpose.msra.mxu0 0.0
      %7068 = vmatprep.subr.mxu0 0.0
      %7069 = vmatpush1.xpose.msra.mxu0 0.0
      %7070 = vmatprep.subr.mxu0 0.0
      %7071 = vmatpush1.xpose.msra.mxu0 0.0
      %7072 = vmatprep.subr.mxu0 0.0
      %7073 = vmatpush1.xpose.msra.mxu0 0.0
      %7074 = vmatprep.subr.mxu0 0.0
      %7075 = vmatpush1.xpose.msra.mxu0 0.0
      %7076 = vmatprep.subr.mxu0 0.0
      %7077 = vmatpush1.xpose.msra.mxu0 0.0
      %7078 = vmatprep.subr.mxu0 0.0
      %7079 = vmatpush1.xpose.msra.mxu0 0.0
      %7080 = vmatprep.subr.mxu0 0.0
      %7081 = vmatpush1.xpose.msra.mxu0 0.0
      %7082 = vmatprep.subr.mxu0 0.0
      %7083 = vmatpush1.xpose.msra.mxu0 0.0
      %7084 = vmatprep.subr.mxu0 0.0
      %7085 = vmatpush1.xpose.msra.mxu0 0.0
      %7086 = vmatprep.subr.mxu0 0.0
      %7087 = vmatpush1.xpose.msra.mxu0 0.0
      %7088 = vmatprep.subr.mxu0 0.0
      %7089 = vmatpush1.xpose.msra.mxu0 0.0
      %7090 = vmatprep.subr.mxu0 0.0
      %7091 = vmatpush1.xpose.msra.mxu0 0.0
      %7092 = vmatprep.subr.mxu0 0.0
      %7093 = vmatpush1.xpose.msra.mxu0 0.0
      %7094 = vmatprep.subr.mxu0 0.0
      %7095 = vmatpush1.xpose.msra.mxu0 0.0
      %7096 = vmatprep.subr.mxu0 0.0
      %7097 = vmatpush1.xpose.msra.mxu0 0.0
      %7098 = vmatprep.mubr.f32.mxu0 0.0
      %7099 = vmatmul.mubr.f32.gmra.mrb[0].mxu0 %v6987
      %v7100 = vpop.f32.mrb[0].mxu0
      %v7101 = vadd.f32 %v6908, %v7100
      %v7102 = vpop.f32.mrb[0].mxu0
      %7103 = vmatprep.mubr.f32.mxu0 0.0
      %7104 = vmatmul.mubr.f32.gmra.mrb[0].mxu0 %v6990
      %v7105 = vpop.f32.mrb[0].mxu0
      %v7106 = vadd.f32 %v6913, %v7105
      %v7107 = vpop.f32.mrb[0].mxu0
      %7108 = vmatprep.mubr.f32.mxu0 0.0
      %7109 = vmatmul.mubr.f32.gmra.mrb[0].mxu0 %v6993
      %v7110 = vpop.f32.mrb[0].mxu0
      %v7111 = vadd.f32 %v6918, %v7110
      %v7112 = vpop.f32.mrb[0].mxu0
      %7113 = vmatprep.mubr.f32.mxu0 0.0
      %7114 = vmatmul.mubr.f32.gmra.mrb[0].mxu0 %v6996
      %v7115 = vpop.f32.mrb[0].mxu0
      %v7116 = vadd.f32 %v6923, %v7115
      %v7117 = vpop.f32.mrb[0].mxu0
      %7118 = vmatprep.mubr.f32.mxu0 0.0
      %7119 = vmatmul.mubr.f32.gmra.mrb[0].mxu0 %v6999
      %v7120 = vpop.f32.mrb[0].mxu0
      %v7121 = vadd.f32 %v6928, %v7120
      %v7122 = vpop.f32.mrb[0].mxu0
      %7123 = vmatprep.mubr.f32.mxu0 0.0
      %7124 = vmatmul.mubr.f32.gmra.mrb[0].mxu0 %v7002
      %v7125 = vpop.f32.mrb[0].mxu0
      %v7126 = vadd.f32 %v6933, %v7125
      %v7127 = vpop.f32.mrb[0].mxu0
      %7128 = vmatprep.mubr.f32.mxu0 0.0
      %7129 = vmatmul.mubr.f32.gmra.mrb[0].mxu0 %v7005
      %v7130 = vpop.f32.mrb[0].mxu0
      %v7131 = vadd.f32 %v6938, %v7130
      %v7132 = vpop.f32.mrb[0].mxu0
      %7133 = vmatprep.mubr.f32.mxu0 0.0
      %7134 = vmatmul.mubr.f32.gmra.mrb[0].mxu0 %v7008
      %v7135 = vpop.f32.mrb[0].mxu0
      %v7136 = vadd.f32 %v6943, %v7135
      %v7137 = vpop.f32.mrb[0].mxu0
      %7138 = vmatprep.mubr.f32.mxu0 0.0
      %7139 = vmatmul.mubr.f32.gmra.mrb[0].mxu0 %v7011
      %v7140 = vpop.f32.mrb[0].mxu0
      %v7141 = vadd.f32 %v6948, %v7140
      %v7142 = vpop.f32.mrb[0].mxu0
      %7143 = vmatprep.mubr.f32.mxu0 0.0
      %7144 = vmatmul.mubr.f32.gmra.mrb[0].mxu0 %v7014
      %v7145 = vpop.f32.mrb[0].mxu0
      %v7146 = vadd.f32 %v6953, %v7145
      %v7147 = vpop.f32.mrb[0].mxu0
      %7148 = vmatprep.mubr.f32.mxu0 0.0
      %7149 = vmatmul.mubr.f32.gmra.mrb[0].mxu0 %v7017
      %v7150 = vpop.f32.mrb[0].mxu0
      %v7151 = vadd.f32 %v6958, %v7150
      %v7152 = vpop.f32.mrb[0].mxu0
      %7153 = vmatprep.mubr.f32.mxu0 0.0
      %7154 = vmatmul.mubr.f32.gmra.mrb[0].mxu0 %v7020
      %v7155 = vpop.f32.mrb[0].mxu0
      %v7156 = vadd.f32 %v6963, %v7155
      %v7157 = vpop.f32.mrb[0].mxu0
      %7158 = vmatprep.mubr.f32.mxu0 0.0
      %7159 = vmatmul.mubr.f32.gmra.mrb[0].mxu0 %v7023
      %v7160 = vpop.f32.mrb[0].mxu0
      %v7161 = vadd.f32 %v6968, %v7160
      %v7162 = vpop.f32.mrb[0].mxu0
      %7163 = vmatprep.mubr.f32.mxu0 0.0
      %7164 = vmatmul.mubr.f32.gmra.mrb[0].mxu0 %v7026
      %v7165 = vpop.f32.mrb[0].mxu0
      %v7166 = vadd.f32 %v6973, %v7165
      %v7167 = vpop.f32.mrb[0].mxu0
      %7168 = vmatprep.mubr.f32.mxu0 0.0
      %7169 = vmatmul.mubr.f32.gmra.mrb[0].mxu0 %v7029
      %v7170 = vpop.f32.mrb[0].mxu0
      %v7171 = vadd.f32 %v6978, %v7170
      %v7172 = vpop.f32.mrb[0].mxu0
      %7173 = vmatprep.mubr.f32.mxu0 0.0
      %7174 = vmatmul.mubr.f32.gmra.mrb[0].mxu0 %v7032
      %v7175 = vpop.f32.mrb[0].mxu0
      %v7176 = vadd.f32 %v6983, %v7175
      %v7177 = vpop.f32.mrb[0].mxu0
      %7178 = vdwg.mxu0
      %v7179 = vmul.f32 %v6488, %v1050
      %v7180 = vmul.f32 %v6493, %v1055
      %v7181 = vmul.f32 %v6498, %v1060
      %v7182 = vmul.f32 %v6503, %v1065
      %v7183 = vmul.f32 %v6508, %v1070
      %v7184 = vmul.f32 %v6513, %v1075
      %v7185 = vmul.f32 %v6518, %v1080
      %v7186 = vmul.f32 %v6523, %v1085
      %v7187 = vmul.f32 %v6528, %v1090
      %v7188 = vmul.f32 %v6533, %v1095
      %v7189 = vmul.f32 %v6538, %v1100
      %v7190 = vmul.f32 %v6543, %v1105
      %v7191 = vmul.f32 %v6548, %v1110
      %v7192 = vmul.f32 %v6553, %v1115
      %v7193 = vmul.f32 %v6558, %v1120
      %v7194 = vmul.f32 %v6563, %v1125
      %v7196 = vsel %vm1144, %v6339, 0
      %v7199 = vsel %vm1144, %v6340, 0
      %v7202 = vsel %vm1144, %v6341, 0
      %v7205 = vsel %vm1144, %v6342, 0
      %v7208 = vsel %vm1144, %v6343, 0
      %v7211 = vsel %vm1144, %v6344, 0
      %v7214 = vsel %vm1144, %v6345, 0
      %v7217 = vsel %vm1144, %v6346, 0
      %v7220 = vsel %vm1144, %v6347, 0
      %v7223 = vsel %vm1144, %v6348, 0
      %v7226 = vsel %vm1144, %v6349, 0
      %v7229 = vsel %vm1144, %v6350, 0
      %v7232 = vsel %vm1144, %v6351, 0
      %v7235 = vsel %vm1144, %v6352, 0
      %v7238 = vsel %vm1144, %v6353, 0
      %v7241 = vsel %vm1144, %v6354, 0
      %v7243 = vsel %vm1598, %v641, 0
      %7245 = vmatprep.subr.mxu0 0.0
      %7246 = vmatpush1.msra.mxu0 %v640
      %7247 = vmatprep.subr.mxu0 0.0
      %7248 = vmatpush1.msra.mxu0 %v7243
      %7249 = vmatprep.subr.mxu0 0.0
      %7250 = vmatpush1.msra.mxu0 0.0
      %7251 = vmatprep.subr.mxu0 0.0
      %7252 = vmatpush1.msra.mxu0 0.0
      %7253 = vmatprep.subr.mxu0 0.0
      %7254 = vmatpush1.msra.mxu0 0.0
      %7255 = vmatprep.subr.mxu0 0.0
      %7256 = vmatpush1.msra.mxu0 0.0
      %7257 = vmatprep.subr.mxu0 0.0
      %7258 = vmatpush1.msra.mxu0 0.0
      %7259 = vmatprep.subr.mxu0 0.0
      %7260 = vmatpush1.msra.mxu0 0.0
      %7261 = vmatprep.subr.mxu0 0.0
      %7262 = vmatpush1.msra.mxu0 0.0
      %7263 = vmatprep.subr.mxu0 0.0
      %7264 = vmatpush1.msra.mxu0 0.0
      %7265 = vmatprep.subr.mxu0 0.0
      %7266 = vmatpush1.msra.mxu0 0.0
      %7267 = vmatprep.subr.mxu0 0.0
      %7268 = vmatpush1.msra.mxu0 0.0
      %7269 = vmatprep.subr.mxu0 0.0
      %7270 = vmatpush1.msra.mxu0 0.0
      %7271 = vmatprep.subr.mxu0 0.0
      %7272 = vmatpush1.msra.mxu0 0.0
      %7273 = vmatprep.subr.mxu0 0.0
      %7274 = vmatpush1.msra.mxu0 0.0
      %7275 = vmatprep.subr.mxu0 0.0
      %7276 = vmatpush1.msra.mxu0 0.0
      %7277 = vmatprep.subr.mxu0 0.0
      %7278 = vmatpush1.msra.mxu0 0.0
      %7279 = vmatprep.subr.mxu0 0.0
      %7280 = vmatpush1.msra.mxu0 0.0
      %7281 = vmatprep.subr.mxu0 0.0
      %7282 = vmatpush1.msra.mxu0 0.0
      %7283 = vmatprep.subr.mxu0 0.0
      %7284 = vmatpush1.msra.mxu0 0.0
      %7285 = vmatprep.subr.mxu0 0.0
      %7286 = vmatpush1.msra.mxu0 0.0
      %7287 = vmatprep.subr.mxu0 0.0
      %7288 = vmatpush1.msra.mxu0 0.0
      %7289 = vmatprep.subr.mxu0 0.0
      %7290 = vmatpush1.msra.mxu0 0.0
      %7291 = vmatprep.subr.mxu0 0.0
      %7292 = vmatpush1.msra.mxu0 0.0
      %7293 = vmatprep.subr.mxu0 0.0
      %7294 = vmatpush1.msra.mxu0 0.0
      %7295 = vmatprep.subr.mxu0 0.0
      %7296 = vmatpush1.msra.mxu0 0.0
      %7297 = vmatprep.subr.mxu0 0.0
      %7298 = vmatpush1.msra.mxu0 0.0
      %7299 = vmatprep.subr.mxu0 0.0
      %7300 = vmatpush1.msra.mxu0 0.0
      %7301 = vmatprep.subr.mxu0 0.0
      %7302 = vmatpush1.msra.mxu0 0.0
      %7303 = vmatprep.subr.mxu0 0.0
      %7304 = vmatpush1.msra.mxu0 0.0
      %7305 = vmatprep.subr.mxu0 0.0
      %7306 = vmatpush1.msra.mxu0 0.0
      %7307 = vmatprep.subr.mxu0 0.0
      %7308 = vmatpush1.msra.mxu0 0.0
      %7309 = vmatprep.mubr.f32.mxu0 0.0
      %7310 = vmatmul.mubr.f32.gmra.mrb[0].mxu0 %v7196
      %v7311 = vpop.f32.mrb[0].mxu0
      %v7312 = vadd.f32 0.0, %v7311
      %v7313 = vpop.f32.mrb[0].mxu0
      %7314 = vmatprep.mubr.f32.mxu0 0.0
      %7315 = vmatmul.mubr.f32.gmra.mrb[0].mxu0 %v7199
      %v7316 = vpop.f32.mrb[0].mxu0
      %v7317 = vadd.f32 0.0, %v7316
      %v7318 = vpop.f32.mrb[0].mxu0
      %7319 = vmatprep.mubr.f32.mxu0 0.0
      %7320 = vmatmul.mubr.f32.gmra.mrb[0].mxu0 %v7202
      %v7321 = vpop.f32.mrb[0].mxu0
      %v7322 = vadd.f32 0.0, %v7321
      %v7323 = vpop.f32.mrb[0].mxu0
      %7324 = vmatprep.mubr.f32.mxu0 0.0
      %7325 = vmatmul.mubr.f32.gmra.mrb[0].mxu0 %v7205
      %v7326 = vpop.f32.mrb[0].mxu0
      %v7327 = vadd.f32 0.0, %v7326
      %v7328 = vpop.f32.mrb[0].mxu0
      %7329 = vmatprep.mubr.f32.mxu0 0.0
      %7330 = vmatmul.mubr.f32.gmra.mrb[0].mxu0 %v7208
      %v7331 = vpop.f32.mrb[0].mxu0
      %v7332 = vadd.f32 0.0, %v7331
      %v7333 = vpop.f32.mrb[0].mxu0
      %7334 = vmatprep.mubr.f32.mxu0 0.0
      %7335 = vmatmul.mubr.f32.gmra.mrb[0].mxu0 %v7211
      %v7336 = vpop.f32.mrb[0].mxu0
      %v7337 = vadd.f32 0.0, %v7336
      %v7338 = vpop.f32.mrb[0].mxu0
      %7339 = vmatprep.mubr.f32.mxu0 0.0
      %7340 = vmatmul.mubr.f32.gmra.mrb[0].mxu0 %v7214
      %v7341 = vpop.f32.mrb[0].mxu0
      %v7342 = vadd.f32 0.0, %v7341
      %v7343 = vpop.f32.mrb[0].mxu0
      %7344 = vmatprep.mubr.f32.mxu0 0.0
      %7345 = vmatmul.mubr.f32.gmra.mrb[0].mxu0 %v7217
      %v7346 = vpop.f32.mrb[0].mxu0
      %v7347 = vadd.f32 0.0, %v7346
      %v7348 = vpop.f32.mrb[0].mxu0
      %7349 = vmatprep.mubr.f32.mxu0 0.0
      %7350 = vmatmul.mubr.f32.gmra.mrb[0].mxu0 %v7220
      %v7351 = vpop.f32.mrb[0].mxu0
      %v7352 = vadd.f32 0.0, %v7351
      %v7353 = vpop.f32.mrb[0].mxu0
      %7354 = vmatprep.mubr.f32.mxu0 0.0
      %7355 = vmatmul.mubr.f32.gmra.mrb[0].mxu0 %v7223
      %v7356 = vpop.f32.mrb[0].mxu0
      %v7357 = vadd.f32 0.0, %v7356
      %v7358 = vpop.f32.mrb[0].mxu0
      %7359 = vmatprep.mubr.f32.mxu0 0.0
      %7360 = vmatmul.mubr.f32.gmra.mrb[0].mxu0 %v7226
      %v7361 = vpop.f32.mrb[0].mxu0
      %v7362 = vadd.f32 0.0, %v7361
      %v7363 = vpop.f32.mrb[0].mxu0
      %7364 = vmatprep.mubr.f32.mxu0 0.0
      %7365 = vmatmul.mubr.f32.gmra.mrb[0].mxu0 %v7229
      %v7366 = vpop.f32.mrb[0].mxu0
      %v7367 = vadd.f32 0.0, %v7366
      %v7368 = vpop.f32.mrb[0].mxu0
      %7369 = vmatprep.mubr.f32.mxu0 0.0
      %7370 = vmatmul.mubr.f32.gmra.mrb[0].mxu0 %v7232
      %v7371 = vpop.f32.mrb[0].mxu0
      %v7372 = vadd.f32 0.0, %v7371
      %v7373 = vpop.f32.mrb[0].mxu0
      %7374 = vmatprep.mubr.f32.mxu0 0.0
      %7375 = vmatmul.mubr.f32.gmra.mrb[0].mxu0 %v7235
      %v7376 = vpop.f32.mrb[0].mxu0
      %v7377 = vadd.f32 0.0, %v7376
      %v7378 = vpop.f32.mrb[0].mxu0
      %7379 = vmatprep.mubr.f32.mxu0 0.0
      %7380 = vmatmul.mubr.f32.gmra.mrb[0].mxu0 %v7238
      %v7381 = vpop.f32.mrb[0].mxu0
      %v7382 = vadd.f32 0.0, %v7381
      %v7383 = vpop.f32.mrb[0].mxu0
      %7384 = vmatprep.mubr.f32.mxu0 0.0
      %7385 = vmatmul.mubr.f32.gmra.mrb[0].mxu0 %v7241
      %v7386 = vpop.f32.mrb[0].mxu0
      %v7387 = vadd.f32 0.0, %v7386
      %v7388 = vpop.f32.mrb[0].mxu0
      %7389 = vdwg.mxu0
      %v7390 = vmul.f32 %v7312, %v1865
      %v7391 = vmul.f32 %v7317, %v1870
      %v7392 = vmul.f32 %v7322, %v1875
      %v7393 = vmul.f32 %v7327, %v1880
      %v7394 = vmul.f32 %v7332, %v1885
      %v7395 = vmul.f32 %v7337, %v1890
      %v7396 = vmul.f32 %v7342, %v1895
      %v7397 = vmul.f32 %v7347, %v1900
      %v7398 = vmul.f32 %v7352, %v1905
      %v7399 = vmul.f32 %v7357, %v1910
      %v7400 = vmul.f32 %v7362, %v1915
      %v7401 = vmul.f32 %v7367, %v1920
      %v7402 = vmul.f32 %v7372, %v1925
      %v7403 = vmul.f32 %v7377, %v1930
      %v7404 = vmul.f32 %v7382, %v1935
      %v7405 = vmul.f32 %v7387, %v1940
      %v7407 = vsel %vm1959, %v7390, 0
      %v7410 = vsel %vm1959, %v7391, 0
      %v7413 = vsel %vm1959, %v7392, 0
      %v7416 = vsel %vm1959, %v7393, 0
      %v7419 = vsel %vm1959, %v7394, 0
      %v7422 = vsel %vm1959, %v7395, 0
      %v7425 = vsel %vm1959, %v7396, 0
      %v7428 = vsel %vm1959, %v7397, 0
      %v7431 = vsel %vm1959, %v7398, 0
      %v7434 = vsel %vm1959, %v7399, 0
      %v7437 = vsel %vm1959, %v7400, 0
      %v7440 = vsel %vm1959, %v7401, 0
      %v7443 = vsel %vm1959, %v7402, 0
      %v7446 = vsel %vm1959, %v7403, 0
      %v7449 = vsel %vm1959, %v7404, 0
      %v7452 = vsel %vm1959, %v7405, 0
      %v7455 = vsel %vm1959, %v636, 0
      %v7457 = vsel %vm1959, %v637, 0
      %7459 = vmatprep.subr.mxu0 0.0
      %7460 = vmatpush1.xpose.msra.mxu0 %v7455
      %7461 = vmatprep.subr.mxu0 0.0
      %7462 = vmatpush1.xpose.msra.mxu0 %v7457
      %7463 = vmatprep.subr.mxu0 0.0
      %7464 = vmatpush1.xpose.msra.mxu0 0.0
      %7465 = vmatprep.subr.mxu0 0.0
      %7466 = vmatpush1.xpose.msra.mxu0 0.0
      %7467 = vmatprep.subr.mxu0 0.0
      %7468 = vmatpush1.xpose.msra.mxu0 0.0
      %7469 = vmatprep.subr.mxu0 0.0
      %7470 = vmatpush1.xpose.msra.mxu0 0.0
      %7471 = vmatprep.subr.mxu0 0.0
      %7472 = vmatpush1.xpose.msra.mxu0 0.0
      %7473 = vmatprep.subr.mxu0 0.0
      %7474 = vmatpush1.xpose.msra.mxu0 0.0
      %7475 = vmatprep.subr.mxu0 0.0
      %7476 = vmatpush1.xpose.msra.mxu0 0.0
      %7477 = vmatprep.subr.mxu0 0.0
      %7478 = vmatpush1.xpose.msra.mxu0 0.0
      %7479 = vmatprep.subr.mxu0 0.0
      %7480 = vmatpush1.xpose.msra.mxu0 0.0
      %7481 = vmatprep.subr.mxu0 0.0
      %7482 = vmatpush1.xpose.msra.mxu0 0.0
      %7483 = vmatprep.subr.mxu0 0.0
      %7484 = vmatpush1.xpose.msra.mxu0 0.0
      %7485 = vmatprep.subr.mxu0 0.0
      %7486 = vmatpush1.xpose.msra.mxu0 0.0
      %7487 = vmatprep.subr.mxu0 0.0
      %7488 = vmatpush1.xpose.msra.mxu0 0.0
      %7489 = vmatprep.subr.mxu0 0.0
      %7490 = vmatpush1.xpose.msra.mxu0 0.0
      %7491 = vmatprep.subr.mxu0 0.0
      %7492 = vmatpush1.xpose.msra.mxu0 0.0
      %7493 = vmatprep.subr.mxu0 0.0
      %7494 = vmatpush1.xpose.msra.mxu0 0.0
      %7495 = vmatprep.subr.mxu0 0.0
      %7496 = vmatpush1.xpose.msra.mxu0 0.0
      %7497 = vmatprep.subr.mxu0 0.0
      %7498 = vmatpush1.xpose.msra.mxu0 0.0
      %7499 = vmatprep.subr.mxu0 0.0
      %7500 = vmatpush1.xpose.msra.mxu0 0.0
      %7501 = vmatprep.subr.mxu0 0.0
      %7502 = vmatpush1.xpose.msra.mxu0 0.0
      %7503 = vmatprep.subr.mxu0 0.0
      %7504 = vmatpush1.xpose.msra.mxu0 0.0
      %7505 = vmatprep.subr.mxu0 0.0
      %7506 = vmatpush1.xpose.msra.mxu0 0.0
      %7507 = vmatprep.subr.mxu0 0.0
      %7508 = vmatpush1.xpose.msra.mxu0 0.0
      %7509 = vmatprep.subr.mxu0 0.0
      %7510 = vmatpush1.xpose.msra.mxu0 0.0
      %7511 = vmatprep.subr.mxu0 0.0
      %7512 = vmatpush1.xpose.msra.mxu0 0.0
      %7513 = vmatprep.subr.mxu0 0.0
      %7514 = vmatpush1.xpose.msra.mxu0 0.0
      %7515 = vmatprep.subr.mxu0 0.0
      %7516 = vmatpush1.xpose.msra.mxu0 0.0
      %7517 = vmatprep.subr.mxu0 0.0
      %7518 = vmatpush1.xpose.msra.mxu0 0.0
      %7519 = vmatprep.subr.mxu0 0.0
      %7520 = vmatpush1.xpose.msra.mxu0 0.0
      %7521 = vmatprep.subr.mxu0 0.0
      %7522 = vmatpush1.xpose.msra.mxu0 0.0
      %7523 = vmatprep.mubr.f32.mxu0 0.0
      %7524 = vmatmul.mubr.f32.gmra.mrb[0].mxu0 %v7407
      %v7525 = vpop.f32.mrb[0].mxu0
      %v7526 = vadd.f32 0.0, %v7525
      %v7527 = vpop.f32.mrb[0].mxu0
      %7528 = vmatprep.mubr.f32.mxu0 0.0
      %7529 = vmatmul.mubr.f32.gmra.mrb[0].mxu0 %v7410
      %v7530 = vpop.f32.mrb[0].mxu0
      %v7531 = vadd.f32 0.0, %v7530
      %v7532 = vpop.f32.mrb[0].mxu0
      %7533 = vmatprep.mubr.f32.mxu0 0.0
      %7534 = vmatmul.mubr.f32.gmra.mrb[0].mxu0 %v7413
      %v7535 = vpop.f32.mrb[0].mxu0
      %v7536 = vadd.f32 0.0, %v7535
      %v7537 = vpop.f32.mrb[0].mxu0
      %7538 = vmatprep.mubr.f32.mxu0 0.0
      %7539 = vmatmul.mubr.f32.gmra.mrb[0].mxu0 %v7416
      %v7540 = vpop.f32.mrb[0].mxu0
      %v7541 = vadd.f32 0.0, %v7540
      %v7542 = vpop.f32.mrb[0].mxu0
      %7543 = vmatprep.mubr.f32.mxu0 0.0
      %7544 = vmatmul.mubr.f32.gmra.mrb[0].mxu0 %v7419
      %v7545 = vpop.f32.mrb[0].mxu0
      %v7546 = vadd.f32 0.0, %v7545
      %v7547 = vpop.f32.mrb[0].mxu0
      %7548 = vmatprep.mubr.f32.mxu0 0.0
      %7549 = vmatmul.mubr.f32.gmra.mrb[0].mxu0 %v7422
      %v7550 = vpop.f32.mrb[0].mxu0
      %v7551 = vadd.f32 0.0, %v7550
      %v7552 = vpop.f32.mrb[0].mxu0
      %7553 = vmatprep.mubr.f32.mxu0 0.0
      %7554 = vmatmul.mubr.f32.gmra.mrb[0].mxu0 %v7425
      %v7555 = vpop.f32.mrb[0].mxu0
      %v7556 = vadd.f32 0.0, %v7555
      %v7557 = vpop.f32.mrb[0].mxu0
      %7558 = vmatprep.mubr.f32.mxu0 0.0
      %7559 = vmatmul.mubr.f32.gmra.mrb[0].mxu0 %v7428
      %v7560 = vpop.f32.mrb[0].mxu0
      %v7561 = vadd.f32 0.0, %v7560
      %v7562 = vpop.f32.mrb[0].mxu0
      %7563 = vmatprep.mubr.f32.mxu0 0.0
      %7564 = vmatmul.mubr.f32.gmra.mrb[0].mxu0 %v7431
      %v7565 = vpop.f32.mrb[0].mxu0
      %v7566 = vadd.f32 0.0, %v7565
      %v7567 = vpop.f32.mrb[0].mxu0
      %7568 = vmatprep.mubr.f32.mxu0 0.0
      %7569 = vmatmul.mubr.f32.gmra.mrb[0].mxu0 %v7434
      %v7570 = vpop.f32.mrb[0].mxu0
      %v7571 = vadd.f32 0.0, %v7570
      %v7572 = vpop.f32.mrb[0].mxu0
      %7573 = vmatprep.mubr.f32.mxu0 0.0
      %7574 = vmatmul.mubr.f32.gmra.mrb[0].mxu0 %v7437
      %v7575 = vpop.f32.mrb[0].mxu0
      %v7576 = vadd.f32 0.0, %v7575
      %v7577 = vpop.f32.mrb[0].mxu0
      %7578 = vmatprep.mubr.f32.mxu0 0.0
      %7579 = vmatmul.mubr.f32.gmra.mrb[0].mxu0 %v7440
      %v7580 = vpop.f32.mrb[0].mxu0
      %v7581 = vadd.f32 0.0, %v7580
      %v7582 = vpop.f32.mrb[0].mxu0
      %7583 = vmatprep.mubr.f32.mxu0 0.0
      %7584 = vmatmul.mubr.f32.gmra.mrb[0].mxu0 %v7443
      %v7585 = vpop.f32.mrb[0].mxu0
      %v7586 = vadd.f32 0.0, %v7585
      %v7587 = vpop.f32.mrb[0].mxu0
      %7588 = vmatprep.mubr.f32.mxu0 0.0
      %7589 = vmatmul.mubr.f32.gmra.mrb[0].mxu0 %v7446
      %v7590 = vpop.f32.mrb[0].mxu0
      %v7591 = vadd.f32 0.0, %v7590
      %v7592 = vpop.f32.mrb[0].mxu0
      %7593 = vmatprep.mubr.f32.mxu0 0.0
      %7594 = vmatmul.mubr.f32.gmra.mrb[0].mxu0 %v7449
      %v7595 = vpop.f32.mrb[0].mxu0
      %v7596 = vadd.f32 0.0, %v7595
      %v7597 = vpop.f32.mrb[0].mxu0
      %7598 = vmatprep.mubr.f32.mxu0 0.0
      %7599 = vmatmul.mubr.f32.gmra.mrb[0].mxu0 %v7452
      %v7600 = vpop.f32.mrb[0].mxu0
      %v7601 = vadd.f32 0.0, %v7600
      %v7602 = vpop.f32.mrb[0].mxu0
      %7603 = vdwg.mxu0
      %v7604 = vadd.f32 %v7179, %v7526
      %v7605 = vadd.f32 %v7180, %v7531
      %v7606 = vadd.f32 %v7181, %v7536
      %v7607 = vadd.f32 %v7182, %v7541
      %v7608 = vadd.f32 %v7183, %v7546
      %v7609 = vadd.f32 %v7184, %v7551
      %v7610 = vadd.f32 %v7185, %v7556
      %v7611 = vadd.f32 %v7186, %v7561
      %v7612 = vadd.f32 %v7187, %v7566
      %v7613 = vadd.f32 %v7188, %v7571
      %v7614 = vadd.f32 %v7189, %v7576
      %v7615 = vadd.f32 %v7190, %v7581
      %v7616 = vadd.f32 %v7191, %v7586
      %v7617 = vadd.f32 %v7192, %v7591
      %v7618 = vadd.f32 %v7193, %v7596
      %v7619 = vadd.f32 %v7194, %v7601
      %7621 = vset.pattern.permute.xlu0 0
      %7622 = vperm.xlu0 %7621, %v6355
      %v7623 = vpop.permute.xlu0 %7622
      %7626 = vset.pattern.permute.xlu0 0
      %7627 = vperm.xlu0 %7626, %v6356
      %v7628 = vpop.permute.xlu0 %7627
      %7631 = vset.pattern.permute.xlu0 0
      %7632 = vperm.xlu0 %7631, %v6357
      %v7633 = vpop.permute.xlu0 %7632
      %7636 = vset.pattern.permute.xlu0 0
      %7637 = vperm.xlu0 %7636, %v6358
      %v7638 = vpop.permute.xlu0 %7637
      %7641 = vset.pattern.permute.xlu0 0
      %7642 = vperm.xlu0 %7641, %v6359
      %v7643 = vpop.permute.xlu0 %7642
      %7646 = vset.pattern.permute.xlu0 0
      %7647 = vperm.xlu0 %7646, %v6360
      %v7648 = vpop.permute.xlu0 %7647
      %7651 = vset.pattern.permute.xlu0 0
      %7652 = vperm.xlu0 %7651, %v6361
      %v7653 = vpop.permute.xlu0 %7652
      %7656 = vset.pattern.permute.xlu0 0
      %7657 = vperm.xlu0 %7656, %v6362
      %v7658 = vpop.permute.xlu0 %7657
      %7661 = vset.pattern.permute.xlu0 0
      %7662 = vperm.xlu0 %7661, %v6363
      %v7663 = vpop.permute.xlu0 %7662
      %7666 = vset.pattern.permute.xlu0 0
      %7667 = vperm.xlu0 %7666, %v6364
      %v7668 = vpop.permute.xlu0 %7667
      %7671 = vset.pattern.permute.xlu0 0
      %7672 = vperm.xlu0 %7671, %v6365
      %v7673 = vpop.permute.xlu0 %7672
      %7676 = vset.pattern.permute.xlu0 0
      %7677 = vperm.xlu0 %7676, %v6366
      %v7678 = vpop.permute.xlu0 %7677
      %7681 = vset.pattern.permute.xlu0 0
      %7682 = vperm.xlu0 %7681, %v6367
      %v7683 = vpop.permute.xlu0 %7682
      %7686 = vset.pattern.permute.xlu0 0
      %7687 = vperm.xlu0 %7686, %v6368
      %v7688 = vpop.permute.xlu0 %7687
      %7691 = vset.pattern.permute.xlu0 0
      %7692 = vperm.xlu0 %7691, %v6369
      %v7693 = vpop.permute.xlu0 %7692
      %7696 = vset.pattern.permute.xlu0 0
      %7697 = vperm.xlu0 %7696, %v6370
      %v7698 = vpop.permute.xlu0 %7697
      %v7700 = vmul.f32 %v7623, %v915
      %v7701 = vmul.f32 %v7628, %v916
      %v7702 = vmul.f32 %v7633, %v917
      %v7703 = vmul.f32 %v7638, %v918
      %v7704 = vmul.f32 %v7643, %v919
      %v7705 = vmul.f32 %v7648, %v920
      %v7706 = vmul.f32 %v7653, %v921
      %v7707 = vmul.f32 %v7658, %v922
      %v7708 = vmul.f32 %v7663, %v923
      %v7709 = vmul.f32 %v7668, %v924
      %v7710 = vmul.f32 %v7673, %v925
      %v7711 = vmul.f32 %v7678, %v926
      %v7712 = vmul.f32 %v7683, %v927
      %v7713 = vmul.f32 %v7688, %v928
      %v7714 = vmul.f32 %v7693, %v929
      %v7715 = vmul.f32 %v7698, %v930
      %v7716 = vmul.f32 %v7101, %v915
      %v7717 = vmul.f32 %v7106, %v916
      %v7718 = vmul.f32 %v7111, %v917
      %v7719 = vmul.f32 %v7116, %v918
      %v7720 = vmul.f32 %v7121, %v919
      %v7721 = vmul.f32 %v7126, %v920
      %v7722 = vmul.f32 %v7131, %v921
      %v7723 = vmul.f32 %v7136, %v922
      %v7724 = vmul.f32 %v7141, %v923
      %v7725 = vmul.f32 %v7146, %v924
      %v7726 = vmul.f32 %v7151, %v925
      %v7727 = vmul.f32 %v7156, %v926
      %v7728 = vmul.f32 %v7161, %v927
      %v7729 = vmul.f32 %v7166, %v928
      %v7730 = vmul.f32 %v7171, %v929
      %v7731 = vmul.f32 %v7176, %v930
      %v7732 = vsel %vm722, %v7716, 0.0
      %7733 = vadd.xlane.f32.xlu0 %v7732
      %v7734 = vpop.xlane.xlu0 %7733
      %v7735 = vsel %vm722, %v7717, 0.0
      %7736 = vadd.xlane.f32.xlu0 %v7735
      %v7737 = vpop.xlane.xlu0 %7736
      %v7738 = vsel %vm722, %v7718, 0.0
      %7739 = vadd.xlane.f32.xlu0 %v7738
      %v7740 = vpop.xlane.xlu0 %7739
      %v7741 = vsel %vm722, %v7719, 0.0
      %7742 = vadd.xlane.f32.xlu0 %v7741
      %v7743 = vpop.xlane.xlu0 %7742
      %v7744 = vsel %vm722, %v7720, 0.0
      %7745 = vadd.xlane.f32.xlu0 %v7744
      %v7746 = vpop.xlane.xlu0 %7745
      %v7747 = vsel %vm722, %v7721, 0.0
      %7748 = vadd.xlane.f32.xlu0 %v7747
      %v7749 = vpop.xlane.xlu0 %7748
      %v7750 = vsel %vm722, %v7722, 0.0
      %7751 = vadd.xlane.f32.xlu0 %v7750
      %v7752 = vpop.xlane.xlu0 %7751
      %v7753 = vsel %vm722, %v7723, 0.0
      %7754 = vadd.xlane.f32.xlu0 %v7753
      %v7755 = vpop.xlane.xlu0 %7754
      %v7756 = vsel %vm722, %v7724, 0.0
      %7757 = vadd.xlane.f32.xlu0 %v7756
      %v7758 = vpop.xlane.xlu0 %7757
      %v7759 = vsel %vm722, %v7725, 0.0
      %7760 = vadd.xlane.f32.xlu0 %v7759
      %v7761 = vpop.xlane.xlu0 %7760
      %v7762 = vsel %vm722, %v7726, 0.0
      %7763 = vadd.xlane.f32.xlu0 %v7762
      %v7764 = vpop.xlane.xlu0 %7763
      %v7765 = vsel %vm722, %v7727, 0.0
      %7766 = vadd.xlane.f32.xlu0 %v7765
      %v7767 = vpop.xlane.xlu0 %7766
      %v7768 = vsel %vm722, %v7728, 0.0
      %7769 = vadd.xlane.f32.xlu0 %v7768
      %v7770 = vpop.xlane.xlu0 %7769
      %v7771 = vsel %vm722, %v7729, 0.0
      %7772 = vadd.xlane.f32.xlu0 %v7771
      %v7773 = vpop.xlane.xlu0 %7772
      %v7774 = vsel %vm722, %v7730, 0.0
      %7775 = vadd.xlane.f32.xlu0 %v7774
      %v7776 = vpop.xlane.xlu0 %7775
      %v7777 = vsel %vm722, %v7731, 0.0
      %7778 = vadd.xlane.f32.xlu0 %v7777
      %v7779 = vpop.xlane.xlu0 %7778
      %v7780 = vmul.f32 %v7734, %v915
      %v7781 = vmul.f32 %v7737, %v916
      %v7782 = vmul.f32 %v7740, %v917
      %v7783 = vmul.f32 %v7743, %v918
      %v7784 = vmul.f32 %v7746, %v919
      %v7785 = vmul.f32 %v7749, %v920
      %v7786 = vmul.f32 %v7752, %v921
      %v7787 = vmul.f32 %v7755, %v922
      %v7788 = vmul.f32 %v7758, %v923
      %v7789 = vmul.f32 %v7761, %v924
      %v7790 = vmul.f32 %v7764, %v925
      %v7791 = vmul.f32 %v7767, %v926
      %v7792 = vmul.f32 %v7770, %v927
      %v7793 = vmul.f32 %v7773, %v928
      %v7794 = vmul.f32 %v7776, %v929
      %v7795 = vmul.f32 %v7779, %v930
      %v7796 = vsub.f32 %v7101, %v7780
      %v7797 = vsub.f32 %v7106, %v7781
      %v7798 = vsub.f32 %v7111, %v7782
      %v7799 = vsub.f32 %v7116, %v7783
      %v7800 = vsub.f32 %v7121, %v7784
      %v7801 = vsub.f32 %v7126, %v7785
      %v7802 = vsub.f32 %v7131, %v7786
      %v7803 = vsub.f32 %v7136, %v7787
      %v7804 = vsub.f32 %v7141, %v7788
      %v7805 = vsub.f32 %v7146, %v7789
      %v7806 = vsub.f32 %v7151, %v7790
      %v7807 = vsub.f32 %v7156, %v7791
      %v7808 = vsub.f32 %v7161, %v7792
      %v7809 = vsub.f32 %v7166, %v7793
      %v7810 = vsub.f32 %v7171, %v7794
      %v7811 = vsub.f32 %v7176, %v7795
      %v7812 = vmul.f32 %v7796, %v884
      %v7813 = vmul.f32 %v7797, %v886
      %v7814 = vmul.f32 %v7798, %v888
      %v7815 = vmul.f32 %v7799, %v890
      %v7816 = vmul.f32 %v7800, %v892
      %v7817 = vmul.f32 %v7801, %v894
      %v7818 = vmul.f32 %v7802, %v896
      %v7819 = vmul.f32 %v7803, %v898
      %v7820 = vmul.f32 %v7804, %v900
      %v7821 = vmul.f32 %v7805, %v902
      %v7822 = vmul.f32 %v7806, %v904
      %v7823 = vmul.f32 %v7807, %v906
      %v7824 = vmul.f32 %v7808, %v908
      %v7825 = vmul.f32 %v7809, %v910
      %v7826 = vmul.f32 %v7810, %v912
      %v7827 = vmul.f32 %v7811, %v914
      %v7828 = vadd.f32 %v7700, %v7812
      %v7829 = vadd.f32 %v7701, %v7813
      %v7830 = vadd.f32 %v7702, %v7814
      %v7831 = vadd.f32 %v7703, %v7815
      %v7832 = vadd.f32 %v7704, %v7816
      %v7833 = vadd.f32 %v7705, %v7817
      %v7834 = vadd.f32 %v7706, %v7818
      %v7835 = vadd.f32 %v7707, %v7819
      %v7836 = vadd.f32 %v7708, %v7820
      %v7837 = vadd.f32 %v7709, %v7821
      %v7838 = vadd.f32 %v7710, %v7822
      %v7839 = vadd.f32 %v7711, %v7823
      %v7840 = vadd.f32 %v7712, %v7824
      %v7841 = vadd.f32 %v7713, %v7825
      %v7842 = vadd.f32 %v7714, %v7826
      %v7843 = vadd.f32 %v7715, %v7827
      %v7844 = vld [vmem:[%s3] sm:$0xff]
      %v7845 = vld [vmem:[%s3 + $0x8] sm:$0xff]
      %7846 = vmatprep.subr.mxu0 0.0
      %7847 = vmatpush1.msra.mxu0 %v3408
      %7848 = vmatprep.subr.mxu0 0.0
      %7849 = vmatpush1.msra.mxu0 %v3411
      %7850 = vmatprep.subr.mxu0 0.0
      %7851 = vmatpush1.msra.mxu0 %v3414
      %7852 = vmatprep.subr.mxu0 0.0
      %7853 = vmatpush1.msra.mxu0 %v3417
      %7854 = vmatprep.subr.mxu0 0.0
      %7855 = vmatpush1.msra.mxu0 %v3420
      %7856 = vmatprep.subr.mxu0 0.0
      %7857 = vmatpush1.msra.mxu0 %v3423
      %7858 = vmatprep.subr.mxu0 0.0
      %7859 = vmatpush1.msra.mxu0 %v3426
      %7860 = vmatprep.subr.mxu0 0.0
      %7861 = vmatpush1.msra.mxu0 %v3429
      %7862 = vmatprep.subr.mxu0 0.0
      %7863 = vmatpush1.msra.mxu0 %v3432
      %7864 = vmatprep.subr.mxu0 0.0
      %7865 = vmatpush1.msra.mxu0 %v3435
      %7866 = vmatprep.subr.mxu0 0.0
      %7867 = vmatpush1.msra.mxu0 %v3438
      %7868 = vmatprep.subr.mxu0 0.0
      %7869 = vmatpush1.msra.mxu0 %v3441
      %7870 = vmatprep.subr.mxu0 0.0
      %7871 = vmatpush1.msra.mxu0 %v3444
      %7872 = vmatprep.subr.mxu0 0.0
      %7873 = vmatpush1.msra.mxu0 %v3447
      %7874 = vmatprep.subr.mxu0 0.0
      %7875 = vmatpush1.msra.mxu0 %v3450
      %7876 = vmatprep.subr.mxu0 0.0
      %7877 = vmatpush1.msra.mxu0 %v3453
      %7878 = vmatprep.subr.mxu0 0.0
      %7879 = vmatpush1.msra.mxu0 0.0
      %7880 = vmatprep.subr.mxu0 0.0
      %7881 = vmatpush1.msra.mxu0 0.0
      %7882 = vmatprep.subr.mxu0 0.0
      %7883 = vmatpush1.msra.mxu0 0.0
      %7884 = vmatprep.subr.mxu0 0.0
      %7885 = vmatpush1.msra.mxu0 0.0
      %7886 = vmatprep.subr.mxu0 0.0
      %7887 = vmatpush1.msra.mxu0 0.0
      %7888 = vmatprep.subr.mxu0 0.0
      %7889 = vmatpush1.msra.mxu0 0.0
      %7890 = vmatprep.subr.mxu0 0.0
      %7891 = vmatpush1.msra.mxu0 0.0
      %7892 = vmatprep.subr.mxu0 0.0
      %7893 = vmatpush1.msra.mxu0 0.0
      %7894 = vmatprep.subr.mxu0 0.0
      %7895 = vmatpush1.msra.mxu0 0.0
      %7896 = vmatprep.subr.mxu0 0.0
      %7897 = vmatpush1.msra.mxu0 0.0
      %7898 = vmatprep.subr.mxu0 0.0
      %7899 = vmatpush1.msra.mxu0 0.0
      %7900 = vmatprep.subr.mxu0 0.0
      %7901 = vmatpush1.msra.mxu0 0.0
      %7902 = vmatprep.subr.mxu0 0.0
      %7903 = vmatpush1.msra.mxu0 0.0
      %7904 = vmatprep.subr.mxu0 0.0
      %7905 = vmatpush1.msra.mxu0 0.0
      %7906 = vmatprep.subr.mxu0 0.0
      %7907 = vmatpush1.msra.mxu0 0.0
      %7908 = vmatprep.subr.mxu0 0.0
      %7909 = vmatpush1.msra.mxu0 0.0
      %7910 = vmatprep.mubr.f32.mxu0 0.0
      %7911 = vmatmul.mubr.f32.gmra.mrb[0].mxu0 %v7844
      %v7912 = vpop.f32.mrb[0].mxu0
      %v7913 = vadd.f32 0.0, %v7912
      %v7914 = vpop.f32.mrb[0].mxu0
      %7915 = vmatprep.mubr.f32.mxu0 0.0
      %7916 = vmatmul.mubr.f32.gmra.mrb[0].mxu0 %v7845
      %v7917 = vpop.f32.mrb[0].mxu0
      %v7918 = vadd.f32 0.0, %v7917
      %v7919 = vpop.f32.mrb[0].mxu0
      %7920 = vdwg.mxu0
      %vm7921 = vcmask 7168
      %7922 = vst.msk [vmem:[%s621] sm:$0xff] %vm7921, %v7913
      %7923 = vst.msk [vmem:[%s621 + $0x8] sm:$0xff] %vm7921, %v7918
      %7924 = vmatprep.subr.mxu0 0.0
      %7925 = vmatpush1.msra.mxu0 %v4300
      %7926 = vmatprep.subr.mxu0 0.0
      %7927 = vmatpush1.msra.mxu0 %v4301
      %7928 = vmatprep.subr.mxu0 0.0
      %7929 = vmatpush1.msra.mxu0 %v4302
      %7930 = vmatprep.subr.mxu0 0.0
      %7931 = vmatpush1.msra.mxu0 %v4303
      %7932 = vmatprep.subr.mxu0 0.0
      %7933 = vmatpush1.msra.mxu0 %v4304
      %7934 = vmatprep.subr.mxu0 0.0
      %7935 = vmatpush1.msra.mxu0 %v4305
      %7936 = vmatprep.subr.mxu0 0.0
      %7937 = vmatpush1.msra.mxu0 %v4306
      %7938 = vmatprep.subr.mxu0 0.0
      %7939 = vmatpush1.msra.mxu0 %v4307
      %7940 = vmatprep.subr.mxu0 0.0
      %7941 = vmatpush1.msra.mxu0 %v4308
      %7942 = vmatprep.subr.mxu0 0.0
      %7943 = vmatpush1.msra.mxu0 %v4309
      %7944 = vmatprep.subr.mxu0 0.0
      %7945 = vmatpush1.msra.mxu0 %v4310
      %7946 = vmatprep.subr.mxu0 0.0
      %7947 = vmatpush1.msra.mxu0 %v4311
      %7948 = vmatprep.subr.mxu0 0.0
      %7949 = vmatpush1.msra.mxu0 %v4312
      %7950 = vmatprep.subr.mxu0 0.0
      %7951 = vmatpush1.msra.mxu0 %v4313
      %7952 = vmatprep.subr.mxu0 0.0
      %7953 = vmatpush1.msra.mxu0 %v4314
      %7954 = vmatprep.subr.mxu0 0.0
      %7955 = vmatpush1.msra.mxu0 %v4315
      %7956 = vmatprep.subr.mxu0 0.0
      %7957 = vmatpush1.msra.mxu0 0.0
      %7958 = vmatprep.subr.mxu0 0.0
      %7959 = vmatpush1.msra.mxu0 0.0
      %7960 = vmatprep.subr.mxu0 0.0
      %7961 = vmatpush1.msra.mxu0 0.0
      %7962 = vmatprep.subr.mxu0 0.0
      %7963 = vmatpush1.msra.mxu0 0.0
      %7964 = vmatprep.subr.mxu0 0.0
      %7965 = vmatpush1.msra.mxu0 0.0
      %7966 = vmatprep.subr.mxu0 0.0
      %7967 = vmatpush1.msra.mxu0 0.0
      %7968 = vmatprep.subr.mxu0 0.0
      %7969 = vmatpush1.msra.mxu0 0.0
      %7970 = vmatprep.subr.mxu0 0.0
      %7971 = vmatpush1.msra.mxu0 0.0
      %7972 = vmatprep.subr.mxu0 0.0
      %7973 = vmatpush1.msra.mxu0 0.0
      %7974 = vmatprep.subr.mxu0 0.0
      %7975 = vmatpush1.msra.mxu0 0.0
      %7976 = vmatprep.subr.mxu0 0.0
      %7977 = vmatpush1.msra.mxu0 0.0
      %7978 = vmatprep.subr.mxu0 0.0
      %7979 = vmatpush1.msra.mxu0 0.0
      %7980 = vmatprep.subr.mxu0 0.0
      %7981 = vmatpush1.msra.mxu0 0.0
      %7982 = vmatprep.subr.mxu0 0.0
      %7983 = vmatpush1.msra.mxu0 0.0
      %7984 = vmatprep.subr.mxu0 0.0
      %7985 = vmatpush1.msra.mxu0 0.0
      %7986 = vmatprep.subr.mxu0 0.0
      %7987 = vmatpush1.msra.mxu0 0.0
      %7988 = vmatprep.mubr.f32.mxu0 0.0
      %7989 = vmatmul.mubr.f32.gmra.mrb[0].mxu0 %v7844
      %v7990 = vpop.f32.mrb[0].mxu0
      %v7991 = vadd.f32 0.0, %v7990
      %v7992 = vpop.f32.mrb[0].mxu0
      %7993 = vmatprep.mubr.f32.mxu0 0.0
      %7994 = vmatmul.mubr.f32.gmra.mrb[0].mxu0 %v7845
      %v7995 = vpop.f32.mrb[0].mxu0
      %v7996 = vadd.f32 0.0, %v7995
      %v7997 = vpop.f32.mrb[0].mxu0
      %7998 = vdwg.mxu0
      %8001 = vrot.lane.b32.xlu0 %v7991, 1
      %v8002 = vpop.permute.xlu0 %8001
      %8003 = vrot.lane.b32.xlu0 %v7996, 1
      %v8004 = vpop.permute.xlu0 %8003
      %vm8007 = vcmask 15368
      %8008 = vst.msk [vmem:[%s621] sm:$0xff] %vm8007, %v8002
      %8009 = vst.msk [vmem:[%s621 + $0x8] sm:$0xff] %vm8007, %v8004
      %8010 = vmatprep.subr.mxu0 0.0
      %8011 = vmatpush1.msra.mxu0 %v7828
      %8012 = vmatprep.subr.mxu0 0.0
      %8013 = vmatpush1.msra.mxu0 %v7829
      %8014 = vmatprep.subr.mxu0 0.0
      %8015 = vmatpush1.msra.mxu0 %v7830
      %8016 = vmatprep.subr.mxu0 0.0
      %8017 = vmatpush1.msra.mxu0 %v7831
      %8018 = vmatprep.subr.mxu0 0.0
      %8019 = vmatpush1.msra.mxu0 %v7832
      %8020 = vmatprep.subr.mxu0 0.0
      %8021 = vmatpush1.msra.mxu0 %v7833
      %8022 = vmatprep.subr.mxu0 0.0
      %8023 = vmatpush1.msra.mxu0 %v7834
      %8024 = vmatprep.subr.mxu0 0.0
      %8025 = vmatpush1.msra.mxu0 %v7835
      %8026 = vmatprep.subr.mxu0 0.0
      %8027 = vmatpush1.msra.mxu0 %v7836
      %8028 = vmatprep.subr.mxu0 0.0
      %8029 = vmatpush1.msra.mxu0 %v7837
      %8030 = vmatprep.subr.mxu0 0.0
      %8031 = vmatpush1.msra.mxu0 %v7838
      %8032 = vmatprep.subr.mxu0 0.0
      %8033 = vmatpush1.msra.mxu0 %v7839
      %8034 = vmatprep.subr.mxu0 0.0
      %8035 = vmatpush1.msra.mxu0 %v7840
      %8036 = vmatprep.subr.mxu0 0.0
      %8037 = vmatpush1.msra.mxu0 %v7841
      %8038 = vmatprep.subr.mxu0 0.0
      %8039 = vmatpush1.msra.mxu0 %v7842
      %8040 = vmatprep.subr.mxu0 0.0
      %8041 = vmatpush1.msra.mxu0 %v7843
      %8042 = vmatprep.subr.mxu0 0.0
      %8043 = vmatpush1.msra.mxu0 0.0
      %8044 = vmatprep.subr.mxu0 0.0
      %8045 = vmatpush1.msra.mxu0 0.0
      %8046 = vmatprep.subr.mxu0 0.0
      %8047 = vmatpush1.msra.mxu0 0.0
      %8048 = vmatprep.subr.mxu0 0.0
      %8049 = vmatpush1.msra.mxu0 0.0
      %8050 = vmatprep.subr.mxu0 0.0
      %8051 = vmatpush1.msra.mxu0 0.0
      %8052 = vmatprep.subr.mxu0 0.0
      %8053 = vmatpush1.msra.mxu0 0.0
      %8054 = vmatprep.subr.mxu0 0.0
      %8055 = vmatpush1.msra.mxu0 0.0
      %8056 = vmatprep.subr.mxu0 0.0
      %8057 = vmatpush1.msra.mxu0 0.0
      %8058 = vmatprep.subr.mxu0 0.0
      %8059 = vmatpush1.msra.mxu0 0.0
      %8060 = vmatprep.subr.mxu0 0.0
      %8061 = vmatpush1.msra.mxu0 0.0
      %8062 = vmatprep.subr.mxu0 0.0
      %8063 = vmatpush1.msra.mxu0 0.0
      %8064 = vmatprep.subr.mxu0 0.0
      %8065 = vmatpush1.msra.mxu0 0.0
      %8066 = vmatprep.subr.mxu0 0.0
      %8067 = vmatpush1.msra.mxu0 0.0
      %8068 = vmatprep.subr.mxu0 0.0
      %8069 = vmatpush1.msra.mxu0 0.0
      %8070 = vmatprep.subr.mxu0 0.0
      %8071 = vmatpush1.msra.mxu0 0.0
      %8072 = vmatprep.subr.mxu0 0.0
      %8073 = vmatpush1.msra.mxu0 0.0
      %8074 = vmatprep.mubr.f32.mxu0 0.0
      %8075 = vmatmul.mubr.f32.gmra.mrb[0].mxu0 %v7844
      %v8076 = vpop.f32.mrb[0].mxu0
      %v8077 = vadd.f32 0.0, %v8076
      %v8078 = vpop.f32.mrb[0].mxu0
      %8079 = vmatprep.mubr.f32.mxu0 0.0
      %8080 = vmatmul.mubr.f32.gmra.mrb[0].mxu0 %v7845
      %v8081 = vpop.f32.mrb[0].mxu0
      %v8082 = vadd.f32 0.0, %v8081
      %v8083 = vpop.f32.mrb[0].mxu0
      %8084 = vdwg.mxu0
      %8087 = vrot.lane.b32.xlu0 %v8077, 2
      %v8088 = vpop.permute.xlu0 %8087
      %8089 = vrot.lane.b32.xlu0 %v8082, 2
      %v8090 = vpop.permute.xlu0 %8089
      %vm8093 = vcmask 39952
      %8094 = vst.msk [vmem:[%s621] sm:$0xff] %vm8093, %v8088
      %8095 = vst.msk [vmem:[%s621 + $0x8] sm:$0xff] %vm8093, %v8090
      %8096 = vmatprep.subr.mxu0 0.0
      %8097 = vmatpush1.msra.mxu0 %v7604
      %8098 = vmatprep.subr.mxu0 0.0
      %8099 = vmatpush1.msra.mxu0 %v7605
      %8100 = vmatprep.subr.mxu0 0.0
      %8101 = vmatpush1.msra.mxu0 %v7606
      %8102 = vmatprep.subr.mxu0 0.0
      %8103 = vmatpush1.msra.mxu0 %v7607
      %8104 = vmatprep.subr.mxu0 0.0
      %8105 = vmatpush1.msra.mxu0 %v7608
      %8106 = vmatprep.subr.mxu0 0.0
      %8107 = vmatpush1.msra.mxu0 %v7609
      %8108 = vmatprep.subr.mxu0 0.0
      %8109 = vmatpush1.msra.mxu0 %v7610
      %8110 = vmatprep.subr.mxu0 0.0
      %8111 = vmatpush1.msra.mxu0 %v7611
      %8112 = vmatprep.subr.mxu0 0.0
      %8113 = vmatpush1.msra.mxu0 %v7612
      %8114 = vmatprep.subr.mxu0 0.0
      %8115 = vmatpush1.msra.mxu0 %v7613
      %8116 = vmatprep.subr.mxu0 0.0
      %8117 = vmatpush1.msra.mxu0 %v7614
      %8118 = vmatprep.subr.mxu0 0.0
      %8119 = vmatpush1.msra.mxu0 %v7615
      %8120 = vmatprep.subr.mxu0 0.0
      %8121 = vmatpush1.msra.mxu0 %v7616
      %8122 = vmatprep.subr.mxu0 0.0
      %8123 = vmatpush1.msra.mxu0 %v7617
      %8124 = vmatprep.subr.mxu0 0.0
      %8125 = vmatpush1.msra.mxu0 %v7618
      %8126 = vmatprep.subr.mxu0 0.0
      %8127 = vmatpush1.msra.mxu0 %v7619
      %8128 = vmatprep.subr.mxu0 0.0
      %8129 = vmatpush1.msra.mxu0 0.0
      %8130 = vmatprep.subr.mxu0 0.0
      %8131 = vmatpush1.msra.mxu0 0.0
      %8132 = vmatprep.subr.mxu0 0.0
      %8133 = vmatpush1.msra.mxu0 0.0
      %8134 = vmatprep.subr.mxu0 0.0
      %8135 = vmatpush1.msra.mxu0 0.0
      %8136 = vmatprep.subr.mxu0 0.0
      %8137 = vmatpush1.msra.mxu0 0.0
      %8138 = vmatprep.subr.mxu0 0.0
      %8139 = vmatpush1.msra.mxu0 0.0
      %8140 = vmatprep.subr.mxu0 0.0
      %8141 = vmatpush1.msra.mxu0 0.0
      %8142 = vmatprep.subr.mxu0 0.0
      %8143 = vmatpush1.msra.mxu0 0.0
      %8144 = vmatprep.subr.mxu0 0.0
      %8145 = vmatpush1.msra.mxu0 0.0
      %8146 = vmatprep.subr.mxu0 0.0
      %8147 = vmatpush1.msra.mxu0 0.0
      %8148 = vmatprep.subr.mxu0 0.0
      %8149 = vmatpush1.msra.mxu0 0.0
      %8150 = vmatprep.subr.mxu0 0.0
      %8151 = vmatpush1.msra.mxu0 0.0
      %8152 = vmatprep.subr.mxu0 0.0
      %8153 = vmatpush1.msra.mxu0 0.0
      %8154 = vmatprep.subr.mxu0 0.0
      %8155 = vmatpush1.msra.mxu0 0.0
      %8156 = vmatprep.subr.mxu0 0.0
      %8157 = vmatpush1.msra.mxu0 0.0
      %8158 = vmatprep.subr.mxu0 0.0
      %8159 = vmatpush1.msra.mxu0 0.0
      %8160 = vmatprep.mubr.f32.mxu0 0.0
      %8161 = vmatmul.mubr.f32.gmra.mrb[0].mxu0 %v7844
      %v8162 = vpop.f32.mrb[0].mxu0
      %v8163 = vadd.f32 0.0, %v8162
      %v8164 = vpop.f32.mrb[0].mxu0
      %8165 = vmatprep.mubr.f32.mxu0 0.0
      %8166 = vmatmul.mubr.f32.gmra.mrb[0].mxu0 %v7845
      %v8167 = vpop.f32.mrb[0].mxu0
      %v8168 = vadd.f32 0.0, %v8167
      %v8169 = vpop.f32.mrb[0].mxu0
      %8170 = vdwg.mxu0
      %8173 = vrot.lane.b32.xlu0 %v8163, 5
      %v8174 = vpop.permute.xlu0 %8173
      %8175 = vrot.lane.b32.xlu0 %v8168, 5
      %v8176 = vpop.permute.xlu0 %8175
      %vm8179 = vcmask 113704
      %8180 = vst.msk [vmem:[%s621] sm:$0xff] %vm8179, %v8174
      %8181 = vst.msk [vmem:[%s621 + $0x8] sm:$0xff] %vm8179, %v8176
      %s8182 = smul.u32 2, %s29
      %p8183 = scmp.lt.s32.totalorder %s8182, 7
      %s8184 = scalar_select %p8183, %s8182, 7
      %s8185 = smul.addr %s8184, 8
      %s8186 = scalar_lea.vmem %s18, %s8185
      // Predicated region
      $region93: #{particle_energy_forward.1} parent=91 // pred_check
        %p8187 = pneg %p440
      $region94: #{particle_energy_forward.1} parent=91 // pred_check_branch
        %8189 = sbr.rel (%p8187) target = $region96
      $region95: #{particle_energy_forward.1} parent=91 // pred_region
        %s8190 = smul.u32 2, %s29
      $region96: #{particle_energy_forward.1} parent=91 // pred_fallthru
        _
    $region92: #{particle_energy_forward.1} parent=5 // pred_fallthru
      _
    %p8191 = scmp.le.s32.totalorder 2, %s24
    // Predicated region
    $region97: #{particle_energy_forward.1} parent=5 // pred_check
      %p8192 = pneg %p8191
    $region98: #{particle_energy_forward.1} parent=5 // pred_check_branch
      %8194 = sbr.rel (%p8192) target = $region100
    $region99: #{particle_energy_forward.1} parent=5 // pred_region
      %s8195 = ssub.s32 %s24, 2
      // Predicated region
      $region101: #{particle_energy_forward.1} parent=99 // pred_check
        %p8196 = pneg %p446
      $region102: #{particle_energy_forward.1} parent=99 // pred_check_branch
        %8198 = sbr.rel (%p8196) target = $region104
      $region103: #{particle_energy_forward.1} parent=99 // pred_region
        %s8199 = smul.u32 2, %s30
        %p8200 = scmp.lt.s32.totalorder %s8199, 7
        %s8201 = scalar_select %p8200, %s8199, 7
        %s8202 = smul.addr %s8201, 8
        %s8203 = scalar_lea.vmem %s18, %s8202
      $region104: #{particle_energy_forward.1} parent=99 // pred_fallthru
        _
    $region100: #{particle_energy_forward.1} parent=5 // pred_fallthru
      _
  $region6: #{particle_energy_forward.1} parent=0 // loop_footer
    %s28 = sadd.s32 1, %s24
  $region7: #{particle_energy_forward.1} parent=0 // loop_footer_branch
    %23 = sbr.rel target = $region3
  $region8: #{particle_energy_forward.1} parent=0 // loop_exit
    _

</llo_original>
